<compile_context>
chip_gen: v6e
topology: v6e:2x2x1
jax: 0.10.0
libtpu: 0.0.40
codegen_flags: <defaults>
</compile_context>

<pallas_src>
import functools

import jax
import jax.numpy as jnp
from jax import lax
from jax.experimental import pallas as pl
from jax.experimental.pallas import tpu as pltpu

# ----- scaled-down hyperparameters consistent with the module structure -----
VOCAB_SIZE = 65          # len(chars) for a char-level corpus
VOCAB_PAD = 128          # lm_head output padded to a full 128-lane tile
N_EMBD = 96              # original: 384
C_PAD = 128              # internal channel padding (lane-dense residual stream)
N_HEAD = 6
HEAD_SIZE = N_EMBD // N_HEAD
N_LAYER = 2              # original: 6
BLOCK_SIZE = 32          # original: 256 (max context)
HIDDEN = 4 * N_EMBD      # ffwd hidden dim (384, already a multiple of 128)
LN_EPS = 1e-5


# ------------------------ fused full-model forward kernel ------------------------
def gpt_forward_kernel(x_ref,
                       ln1_g_ref, ln1_b_ref,
                       wq_ref, wk_ref, wv_ref, wproj_ref, bproj_ref,
                       ln2_g_ref, ln2_b_ref,
                       w1_ref, b1_ref, w2_ref, b2_ref,
                       lm_w_ref, lm_b_ref,
                       out_ref,
                       *, n_layer, n_head, n_real):
    x = x_ref[...]                                   # (T, C_pad) f32, one batch element
    T, Cp = x.shape

    # plain causal mask for this batch element (no block-diagonal (B*T)^2 mask)
    r = lax.broadcasted_iota(jnp.int32, (T, T), 0)
    c = lax.broadcasted_iota(jnp.int32, (T, T), 1)
    causal = c <= r
    neg = jnp.float32(-1e30)                         # finite, NaN-safe mask value

    # mask over the padded channel lanes (1.0 for the real n_embd columns)
    col = lax.broadcasted_iota(jnp.int32, (1, Cp), 1)
    ch_mask = (col < n_real).astype(jnp.float32)
    inv_n = jnp.float32(1.0 / n_real)

    def layernorm(v, g, b):
        # statistics over the real n_real columns only; padded lanes of the
        # output are 0 because padded g/b entries are 0.
        vm = v * ch_mask
        mu = jnp.sum(vm, axis=-1, keepdims=True) * inv_n
        d = (v - mu) * ch_mask
        var = jnp.sum(d * d, axis=-1, keepdims=True) * inv_n
        return d * lax.rsqrt(var + LN_EPS) * g + b

    for l in range(n_layer):                         # N_LAYER is small -> static unroll
        # ---- multi-head causal self-attention: x + proj(heads(attn(ln1(x)))) ----
        h = layernorm(x, ln1_g_ref[l], ln1_b_ref[l])                 # (T, Cp) f32
        hb = jnp.broadcast_to(h.astype(jnp.bfloat16), (n_head, T, Cp))

        # head-batched projections: (n_head, T, hs); attention scale folded into Wq
        q = jnp.einsum('htc,hcd->htd', hb, wq_ref[l],
                       preferred_element_type=jnp.float32)
        k = jnp.einsum('htc,hcd->htd', hb, wk_ref[l],
                       preferred_element_type=jnp.float32)
        v = jnp.einsum('htc,hcd->htd', hb, wv_ref[l],
                       preferred_element_type=jnp.float32)

        wei = jnp.einsum('hqd,hkd->hqk', q.astype(jnp.bfloat16), k.astype(jnp.bfloat16),
                         preferred_element_type=jnp.float32)         # (nh, T, T)
        wei = jnp.where(causal[None], wei, neg)
        m = jnp.max(wei, axis=-1, keepdims=True)
        p = jnp.exp(wei - m)                                          # unnormalized probs
        inv_den = pl.reciprocal(jnp.sum(p, axis=-1, keepdims=True), approx=True)
        # TODO(synk): attention / proj / ffwd dropout omitted (identity in eval mode)

        att = jnp.einsum('hqk,hkd->hqd', p.astype(jnp.bfloat16), v.astype(jnp.bfloat16),
                         preferred_element_type=jnp.float32)          # (nh, T, hs)
        att = att * inv_den                   # softmax normalization deferred to (T, hs)

        # per-head output projection folded into a batched contraction + head-sum
        sa = jnp.einsum('hqd,hdc->hqc', att.astype(jnp.bfloat16), wproj_ref[l],
                        preferred_element_type=jnp.float32)           # (nh, T, Cp)
        x = x + jnp.sum(sa, axis=0) + bproj_ref[l]

        # ---- feed-forward sublayer: x + W2(relu(W1(ln2(x)))) ----
        h2 = layernorm(x, ln2_g_ref[l], ln2_b_ref[l])
        ff = jnp.dot(h2.astype(jnp.bfloat16), w1_ref[l],
                     preferred_element_type=jnp.float32) + b1_ref[l]
        ff = jnp.maximum(ff, 0.0)
        ff = jnp.dot(ff.astype(jnp.bfloat16), w2_ref[l],
                     preferred_element_type=jnp.float32) + b2_ref[l]
        x = x + ff

    # lm_head (the reference forward applies lm_head directly; ln_f is never used).
    out_ref[...] = (jnp.dot(x.astype(jnp.bfloat16), lm_w_ref[...],
                            preferred_element_type=jnp.float32) + lm_b_ref[...])


# ------------------------------- parameter init (deterministic) -------------------------------
def init_params(key):
    C, Cp, H, L, nh, hs = N_EMBD, C_PAD, HIDDEN, N_LAYER, N_HEAD, HEAD_SIZE

    def normal(k, shape, scale=0.02):
        return (scale * jax.random.normal(k, shape)).astype(jnp.float32)

    keys = iter(jax.random.split(key, 4 + 9 * L))

    raw = {
        "tok_emb": normal(next(keys), (VOCAB_SIZE, C)),
        "pos_emb": normal(next(keys), (BLOCK_SIZE, C)),
        "lm_w": normal(next(keys), (C, VOCAB_SIZE)),
        "lm_b": normal(next(keys), (VOCAB_SIZE,)),
        "wq": [], "wk": [], "wv": [], "wproj": [], "bproj": [],
        "w1": [], "b1": [], "w2": [], "b2": [],
        "ln1_g": [], "ln1_b": [], "ln2_g": [], "ln2_b": [],
    }
    for _ in range(L):
        raw["wq"].append(normal(next(keys), (nh, C, hs)))
        raw["wk"].append(normal(next(keys), (nh, C, hs)))
        raw["wv"].append(normal(next(keys), (nh, C, hs)))
        raw["wproj"].append(normal(next(keys), (C, C)))
        raw["bproj"].append(normal(next(keys), (C,)))
        raw["w1"].append(normal(next(keys), (C, H)))
        raw["b1"].append(normal(next(keys), (H,)))
        raw["w2"].append(normal(next(keys), (H, C)))
        raw["b2"].append(normal(next(keys), (C,)))
        raw["ln1_g"].append(jnp.ones((C,), jnp.float32))
        raw["ln1_b"].append(jnp.zeros((C,), jnp.float32))
        raw["ln2_g"].append(jnp.ones((C,), jnp.float32))
        raw["ln2_b"].append(jnp.zeros((C,), jnp.float32))

    scale = jnp.float32(C) ** -0.5                 # reference scales scores by n_embd**-0.5
    pc = Cp - C

    def pad_vec(v):                                # (C,) -> (Cp,) padded with zeros
        return jnp.pad(v, (0, pc))

    kp = {
        "tok_emb": raw["tok_emb"],
        "pos_emb": raw["pos_emb"],
        # LN params padded with ZEROS so padded lanes of the normalized activations are 0
        "ln1_g": jnp.stack([pad_vec(g) for g in raw["ln1_g"]])[:, None, :],
        "ln1_b": jnp.stack([pad_vec(b) for b in raw["ln1_b"]])[:, None, :],
        "ln2_g": jnp.stack([pad_vec(g) for g in raw["ln2_g"]])[:, None, :],
        "ln2_b": jnp.stack([pad_vec(b) for b in raw["ln2_b"]])[:, None, :],
        # per-head q/k/v weights (L, nh, Cp, hs); attention scale folded into Wq
        "wq": jnp.pad(jnp.stack(raw["wq"]) * scale,
                      ((0, 0), (0, 0), (0, pc), (0, 0))).astype(jnp.bfloat16),
        "wk": jnp.pad(jnp.stack(raw["wk"]),
                      ((0, 0), (0, 0), (0, pc), (0, 0))).astype(jnp.bfloat16),
        "wv": jnp.pad(jnp.stack(raw["wv"]),
                      ((0, 0), (0, 0), (0, pc), (0, 0))).astype(jnp.bfloat16),
        # output projection reshaped per head: (L, nh, hs, Cp), padded cols are zero
        "wproj": jnp.pad(jnp.stack([w.reshape(nh, hs, C) for w in raw["wproj"]]),
                         ((0, 0), (0, 0), (0, 0), (0, pc))).astype(jnp.bfloat16),
        "bproj": jnp.stack([pad_vec(b) for b in raw["bproj"]])[:, None, :],
        "w1": jnp.pad(jnp.stack(raw["w1"]), ((0, 0), (0, pc), (0, 0))).astype(jnp.bfloat16),
        "b1": jnp.stack(raw["b1"])[:, None, :],
        "w2": jnp.pad(jnp.stack(raw["w2"]), ((0, 0), (0, 0), (0, pc))).astype(jnp.bfloat16),
        "b2": jnp.stack([pad_vec(b) for b in raw["b2"]])[:, None, :],
        "lm_w": jnp.pad(raw["lm_w"], ((0, pc), (0, VOCAB_PAD - VOCAB_SIZE))).astype(jnp.bfloat16),
        "lm_b": jnp.pad(raw["lm_b"], (0, VOCAB_PAD - VOCAB_SIZE))[None, :],
        # ln_f exists in the module but is never used in forward(); kept for fidelity
        "ln_f_g": jnp.ones((1, C), jnp.float32),
        "ln_f_b": jnp.zeros((1, C), jnp.float32),
    }
    return kp, raw


# ------------------------------------ full forward ------------------------------------
def bigram_lm_forward(idx, kp):
    B, T = idx.shape
    # embedding lookups are glue (gather) done in plain JAX
    tok = jnp.take(kp["tok_emb"], idx, axis=0)                       # (B, T, C)
    pos = kp["pos_emb"][:T]                                          # (T, C)
    x = (tok + pos[None, :, :]).astype(jnp.float32)
    x = jnp.pad(x, ((0, 0), (0, 0), (0, C_PAD - N_EMBD)))            # lane-pad channels
    x2d = x.reshape(B * T, C_PAD)

    kern = functools.partial(gpt_forward_kernel,
                             n_layer=N_LAYER, n_head=N_HEAD, n_real=N_EMBD)

    weights = (kp["ln1_g"], kp["ln1_b"], kp["wq"], kp["wk"], kp["wv"],
               kp["wproj"], kp["bproj"], kp["ln2_g"], kp["ln2_b"],
               kp["w1"], kp["b1"], kp["w2"], kp["b2"], kp["lm_w"], kp["lm_b"])

    def resident(a):
        # full-array block, constant index -> loaded once, stays VMEM-resident
        nd = a.ndim
        return pl.BlockSpec(a.shape, lambda b, _n=nd: (0,) * _n)

    in_specs = [pl.BlockSpec((T, C_PAD), lambda b: (b, 0))] + [resident(w) for w in weights]

    flops = B * (N_LAYER * (
        3 * 2 * N_HEAD * T * C_PAD * HEAD_SIZE       # q/k/v projections
        + 2 * 2 * N_HEAD * T * T * HEAD_SIZE         # scores + PV
        + 2 * N_HEAD * T * HEAD_SIZE * C_PAD         # output projection
        + 2 * 2 * T * C_PAD * HIDDEN                 # ffwd
    ) + 2 * T * C_PAD * VOCAB_PAD)                   # lm_head
    transcendentals = B * N_LAYER * N_HEAD * T * T
    bytes_accessed = int(x2d.size * 4 + B * T * VOCAB_PAD * 4
                         + sum(int(w.size) * w.dtype.itemsize for w in weights))

    logits_padded = pl.pallas_call(
        kern,
        out_shape=jax.ShapeDtypeStruct((B * T, VOCAB_PAD), jnp.float32),
        grid=(B,),
        in_specs=in_specs,
        out_specs=pl.BlockSpec((T, VOCAB_PAD), lambda b: (b, 0)),
        compiler_params=pltpu.CompilerParams(
            dimension_semantics=("parallel",),
            vmem_limit_bytes=32 * 1024 * 1024),
        cost_estimate=pl.CostEstimate(flops=int(flops),
                                      transcendentals=int(transcendentals),
                                      bytes_accessed=bytes_accessed),
    )(x2d, *weights)

    # un-pad the vocab lanes and restore (B, T, V); loss = None (targets not given)
    return logits_padded[:, :VOCAB_SIZE].reshape(B, T, VOCAB_SIZE)


# ----------------------------- pure-JAX reference (f32) -----------------------------
def reference_forward(idx, raw):
    B, T = idx.shape
    C = N_EMBD
    x = jnp.take(raw["tok_emb"], idx, axis=0) + raw["pos_emb"][:T][None]
    causal = jnp.tril(jnp.ones((T, T), dtype=bool))
    scale = C ** -0.5

    def ln(v, g, b):
        mu = jnp.mean(v, -1, keepdims=True)
        var = jnp.mean((v - mu) ** 2, -1, keepdims=True)
        return (v - mu) / jnp.sqrt(var + LN_EPS) * g + b

    for l in range(N_LAYER):
        h = ln(x, raw["ln1_g"][l], raw["ln1_b"][l])
        q = jnp.einsum('btc,hcd->bhtd', h, raw["wq"][l])
        k = jnp.einsum('btc,hcd->bhtd', h, raw["wk"][l])
        v = jnp.einsum('btc,hcd->bhtd', h, raw["wv"][l])
        wei = jnp.einsum('bhqd,bhkd->bhqk', q, k) * scale
        wei = jnp.where(causal[None, None], wei, -jnp.inf)
        p = jax.nn.softmax(wei, axis=-1)
        att = jnp.einsum('bhqk,bhkd->bhqd', p, v)
        att = jnp.transpose(att, (0, 2, 1, 3)).reshape(B, T, C)
        x = x + att @ raw["wproj"][l] + raw["bproj"][l]
        h2 = ln(x, raw["ln2_g"][l], raw["ln2_b"][l])
        ff = jnp.maximum(h2 @ raw["w1"][l] + raw["b1"][l], 0.0)
        x = x + ff @ raw["w2"][l] + raw["b2"][l]
    return x @ raw["lm_w"] + raw["lm_b"]


if __name__ == "__main__":
    key = jax.random.PRNGKey(0)
    pkey, ikey = jax.random.split(key)
    kernel_params, raw_params = init_params(pkey)

    B, T = 4, 32
    idx = jax.random.randint(ikey, (B, T), 0, VOCAB_SIZE, dtype=jnp.int32)

    logits = jax.block_until_ready(bigram_lm_forward(idx, kernel_params))
    assert logits.shape == (B, T, VOCAB_SIZE)
    assert bool(jnp.all(jnp.isfinite(logits)))

    # sanity check against an f32 pure-JAX reference (kernel uses bf16 MXU operands
    # and an approx reciprocal -> compare with a relative tolerance)
    ref = reference_forward(idx, raw_params)
    rel_err = float(jnp.max(jnp.abs(logits - ref)) / (jnp.max(jnp.abs(ref)) + 1e-8))
    assert rel_err < 5e-2, f"relative error too high: {rel_err}"

    print("KERNEL_OK")
</pallas_src>

<mosaic_0001>
module attributes {stable_mosaic.version = 11 : i64} {
  func.func @gpt_forward_kernel(%arg0: i32, %arg1: memref<32x128xf32, #tpu.memory_space<vmem>>, %arg2: memref<2x1x128xf32, #tpu.memory_space<vmem>>, %arg3: memref<2x1x128xf32, #tpu.memory_space<vmem>>, %arg4: memref<2x6x128x16xbf16, #tpu.memory_space<vmem>>, %arg5: memref<2x6x128x16xbf16, #tpu.memory_space<vmem>>, %arg6: memref<2x6x128x16xbf16, #tpu.memory_space<vmem>>, %arg7: memref<2x6x16x128xbf16, #tpu.memory_space<vmem>>, %arg8: memref<2x1x128xf32, #tpu.memory_space<vmem>>, %arg9: memref<2x1x128xf32, #tpu.memory_space<vmem>>, %arg10: memref<2x1x128xf32, #tpu.memory_space<vmem>>, %arg11: memref<2x128x384xbf16, #tpu.memory_space<vmem>>, %arg12: memref<2x1x384xf32, #tpu.memory_space<vmem>>, %arg13: memref<2x384x128xbf16, #tpu.memory_space<vmem>>, %arg14: memref<2x1x128xf32, #tpu.memory_space<vmem>>, %arg15: memref<128x128xbf16, #tpu.memory_space<vmem>>, %arg16: memref<1x128xf32, #tpu.memory_space<vmem>>, %arg17: memref<32x128xf32, #tpu.memory_space<vmem>>) attributes {dimension_semantics = [#tpu.dimension_semantics<parallel>], iteration_bounds = array<i64: 4>, scalar_prefetch = 0 : i64, scratch_operands = 0 : i64, tpu.core_type = #tpu.core_type<tc>, window_params = [{transform_indices = @transform_0, window_bounds = array<i64: 32, 128>}, {pipeline_mode = #tpu.pipeline_mode<synchronous>, transform_indices = @transform_1, window_bounds = array<i64: 2, 1, 128>}, {pipeline_mode = #tpu.pipeline_mode<synchronous>, transform_indices = @transform_2, window_bounds = array<i64: 2, 1, 128>}, {pipeline_mode = #tpu.pipeline_mode<synchronous>, transform_indices = @transform_3, window_bounds = array<i64: 2, 6, 128, 16>}, {pipeline_mode = #tpu.pipeline_mode<synchronous>, transform_indices = @transform_4, window_bounds = array<i64: 2, 6, 128, 16>}, {pipeline_mode = #tpu.pipeline_mode<synchronous>, transform_indices = @transform_5, window_bounds = array<i64: 2, 6, 128, 16>}, {pipeline_mode = #tpu.pipeline_mode<synchronous>, transform_indices = @transform_6, window_bounds = array<i64: 2, 6, 16, 128>}, {pipeline_mode = #tpu.pipeline_mode<synchronous>, transform_indices = @transform_7, window_bounds = array<i64: 2, 1, 128>}, {pipeline_mode = #tpu.pipeline_mode<synchronous>, transform_indices = @transform_8, window_bounds = array<i64: 2, 1, 128>}, {pipeline_mode = #tpu.pipeline_mode<synchronous>, transform_indices = @transform_9, window_bounds = array<i64: 2, 1, 128>}, {pipeline_mode = #tpu.pipeline_mode<synchronous>, transform_indices = @transform_10, window_bounds = array<i64: 2, 128, 384>}, {pipeline_mode = #tpu.pipeline_mode<synchronous>, transform_indices = @transform_11, window_bounds = array<i64: 2, 1, 384>}, {pipeline_mode = #tpu.pipeline_mode<synchronous>, transform_indices = @transform_12, window_bounds = array<i64: 2, 384, 128>}, {pipeline_mode = #tpu.pipeline_mode<synchronous>, transform_indices = @transform_13, window_bounds = array<i64: 2, 1, 128>}, {pipeline_mode = #tpu.pipeline_mode<synchronous>, transform_indices = @transform_14, window_bounds = array<i64: 128, 128>}, {pipeline_mode = #tpu.pipeline_mode<synchronous>, transform_indices = @transform_15, window_bounds = array<i64: 1, 128>}, {transform_indices = @transform_16, window_bounds = array<i64: 32, 128>}]} {
    %c0 = arith.constant 0 : index
    %c0_0 = arith.constant 0 : index
    %0 = vector.load %arg1[%c0, %c0_0] : memref<32x128xf32, #tpu.memory_space<vmem>>, vector<32x128xf32>
    %1 = tpu.iota {dimensions = array<i32: 0>} : vector<32x32xi32>
    %2 = tpu.iota {dimensions = array<i32: 1>} : vector<32x32xi32>
    %3 = arith.cmpi sle, %2, %1 : vector<32x32xi32>
    %4 = tpu.iota {dimensions = array<i32: 1>} : vector<1x128xi32>
    %c96_i32 = arith.constant 96 : i32
    %5 = vector.broadcast %c96_i32 : i32 to vector<1x128xi32>
    %6 = arith.cmpi slt, %4, %5 : vector<1x128xi32>
    %7 = arith.extui %6 : vector<1x128xi1> to vector<1x128xi32>
    %8 = arith.sitofp %7 : vector<1x128xi32> to vector<1x128xf32>
    %c0_1 = arith.constant 0 : index
    %c0_2 = arith.constant 0 : index
    %c0_3 = arith.constant 0 : index
    %9 = vector.load %arg2[%c0_1, %c0_2, %c0_3] : memref<2x1x128xf32, #tpu.memory_space<vmem>>, vector<1x1x128xf32>
    %10 = vector.shape_cast %9 : vector<1x1x128xf32> to vector<1x128xf32>
    %c0_4 = arith.constant 0 : index
    %c0_5 = arith.constant 0 : index
    %c0_6 = arith.constant 0 : index
    %11 = vector.load %arg3[%c0_4, %c0_5, %c0_6] : memref<2x1x128xf32, #tpu.memory_space<vmem>>, vector<1x1x128xf32>
    %12 = vector.shape_cast %11 : vector<1x1x128xf32> to vector<1x128xf32>
    %13 = vector.broadcast %8 : vector<1x128xf32> to vector<32x128xf32>
    %14 = arith.mulf %0, %13 : vector<32x128xf32>
    %cst = arith.constant dense<0.000000e+00> : vector<32xf32>
    %15 = vector.multi_reduction <add>, %14, %cst [1] : vector<32x128xf32> to vector<32xf32>
    %16 = vector.shape_cast %15 : vector<32xf32> to vector<32x1xf32>
    %cst_7 = arith.constant 0.010416667 : f32
    %17 = vector.broadcast %cst_7 : f32 to vector<32x1xf32>
    %18 = arith.mulf %16, %17 : vector<32x1xf32>
    %19 = vector.broadcast %18 : vector<32x1xf32> to vector<32x128xf32>
    %20 = arith.subf %0, %19 : vector<32x128xf32>
    %21 = vector.broadcast %8 : vector<1x128xf32> to vector<32x128xf32>
    %22 = arith.mulf %20, %21 : vector<32x128xf32>
    %23 = arith.mulf %22, %22 : vector<32x128xf32>
    %cst_8 = arith.constant dense<0.000000e+00> : vector<32xf32>
    %24 = vector.multi_reduction <add>, %23, %cst_8 [1] : vector<32x128xf32> to vector<32xf32>
    %25 = vector.shape_cast %24 : vector<32xf32> to vector<32x1xf32>
    %cst_9 = arith.constant 0.010416667 : f32
    %26 = vector.broadcast %cst_9 : f32 to vector<32x1xf32>
    %27 = arith.mulf %25, %26 : vector<32x1xf32>
    %cst_10 = arith.constant 9.99999974E-6 : f32
    %28 = vector.broadcast %cst_10 : f32 to vector<32x1xf32>
    %29 = arith.addf %27, %28 : vector<32x1xf32>
    %30 = math.rsqrt %29 : vector<32x1xf32>
    %31 = vector.broadcast %30 : vector<32x1xf32> to vector<32x128xf32>
    %32 = arith.mulf %22, %31 : vector<32x128xf32>
    %33 = vector.broadcast %10 : vector<1x128xf32> to vector<32x128xf32>
    %34 = arith.mulf %32, %33 : vector<32x128xf32>
    %35 = vector.broadcast %12 : vector<1x128xf32> to vector<32x128xf32>
    %36 = arith.addf %34, %35 : vector<32x128xf32>
    %37 = arith.truncf %36 : vector<32x128xf32> to vector<32x128xbf16>
    %38 = vector.shape_cast %37 : vector<32x128xbf16> to vector<1x32x128xbf16>
    %39 = vector.broadcast %38 : vector<1x32x128xbf16> to vector<6x32x128xbf16>
    %c0_11 = arith.constant 0 : index
    %c0_12 = arith.constant 0 : index
    %c0_13 = arith.constant 0 : index
    %c0_14 = arith.constant 0 : index
    %40 = vector.load %arg4[%c0_11, %c0_12, %c0_13, %c0_14] : memref<2x6x128x16xbf16, #tpu.memory_space<vmem>>, vector<1x6x128x16xbf16>
    %41 = vector.shape_cast %40 : vector<1x6x128x16xbf16> to vector<6x128x16xbf16>
    "tpu.trace_start"() <{level = 10 : i32, message = "htc,hcd->htd"}> : () -> ()
    %cst_15 = arith.constant dense<0.000000e+00> : vector<6x32x16xf32>
    %42 = tpu.matmul %39, %41, %cst_15 {dimension_numbers = #tpu.dot_dimension_numbers<[2], [1], [1], [2], [0, 0, 0, 1, 1, 2], [0], [0]>} : vector<6x32x128xbf16>, vector<6x128x16xbf16>, vector<6x32x16xf32> -> vector<6x32x16xf32>
    "tpu.trace_stop"() : () -> ()
    %c0_16 = arith.constant 0 : index
    %c0_17 = arith.constant 0 : index
    %c0_18 = arith.constant 0 : index
    %c0_19 = arith.constant 0 : index
    %43 = vector.load %arg5[%c0_16, %c0_17, %c0_18, %c0_19] : memref<2x6x128x16xbf16, #tpu.memory_space<vmem>>, vector<1x6x128x16xbf16>
    %44 = vector.shape_cast %43 : vector<1x6x128x16xbf16> to vector<6x128x16xbf16>
    "tpu.trace_start"() <{level = 10 : i32, message = "htc,hcd->htd"}> : () -> ()
    %cst_20 = arith.constant dense<0.000000e+00> : vector<6x32x16xf32>
    %45 = tpu.matmul %39, %44, %cst_20 {dimension_numbers = #tpu.dot_dimension_numbers<[2], [1], [1], [2], [0, 0, 0, 1, 1, 2], [0], [0]>} : vector<6x32x128xbf16>, vector<6x128x16xbf16>, vector<6x32x16xf32> -> vector<6x32x16xf32>
    "tpu.trace_stop"() : () -> ()
    %c0_21 = arith.constant 0 : index
    %c0_22 = arith.constant 0 : index
    %c0_23 = arith.constant 0 : index
    %c0_24 = arith.constant 0 : index
    %46 = vector.load %arg6[%c0_21, %c0_22, %c0_23, %c0_24] : memref<2x6x128x16xbf16, #tpu.memory_space<vmem>>, vector<1x6x128x16xbf16>
    %47 = vector.shape_cast %46 : vector<1x6x128x16xbf16> to vector<6x128x16xbf16>
    "tpu.trace_start"() <{level = 10 : i32, message = "htc,hcd->htd"}> : () -> ()
    %cst_25 = arith.constant dense<0.000000e+00> : vector<6x32x16xf32>
    %48 = tpu.matmul %39, %47, %cst_25 {dimension_numbers = #tpu.dot_dimension_numbers<[2], [1], [1], [2], [0, 0, 0, 1, 1, 2], [0], [0]>} : vector<6x32x128xbf16>, vector<6x128x16xbf16>, vector<6x32x16xf32> -> vector<6x32x16xf32>
    "tpu.trace_stop"() : () -> ()
    %49 = arith.truncf %42 : vector<6x32x16xf32> to vector<6x32x16xbf16>
    %50 = arith.truncf %45 : vector<6x32x16xf32> to vector<6x32x16xbf16>
    "tpu.trace_start"() <{level = 10 : i32, message = "hqd,hkd->hqk"}> : () -> ()
    %cst_26 = arith.constant dense<0.000000e+00> : vector<6x32x32xf32>
    %51 = tpu.matmul %49, %50, %cst_26 {dimension_numbers = #tpu.dot_dimension_numbers<[2], [2], [1], [1], [0, 0, 0, 1, 1, 1], [0], [0]>} : vector<6x32x16xbf16>, vector<6x32x16xbf16>, vector<6x32x32xf32> -> vector<6x32x32xf32>
    "tpu.trace_stop"() : () -> ()
    %52 = vector.shape_cast %3 : vector<32x32xi1> to vector<1x32x32xi1>
    %cst_27 = arith.constant -1.000000e+30 : f32
    %53 = vector.shape_cast %52 : vector<1x32x32xi1> to vector<1x32x32xi1>
    %54 = vector.broadcast %53 : vector<1x32x32xi1> to vector<6x32x32xi1>
    %55 = vector.broadcast %cst_27 : f32 to vector<6x32x32xf32>
    %56 = arith.select %54, %51, %55 : vector<6x32x32xi1>, vector<6x32x32xf32>
    %cst_28 = arith.constant dense<0xFF800000> : vector<6x32xf32>
    %57 = vector.multi_reduction <maximumf>, %56, %cst_28 [2] : vector<6x32x32xf32> to vector<6x32xf32>
    %58 = vector.shape_cast %57 : vector<6x32xf32> to vector<6x32x1xf32>
    %59 = vector.broadcast %58 : vector<6x32x1xf32> to vector<6x32x32xf32>
    %60 = arith.subf %56, %59 : vector<6x32x32xf32>
    %61 = math.exp %60 : vector<6x32x32xf32>
    %cst_29 = arith.constant dense<0.000000e+00> : vector<6x32xf32>
    %62 = vector.multi_reduction <add>, %61, %cst_29 [2] : vector<6x32x32xf32> to vector<6x32xf32>
    %63 = vector.shape_cast %62 : vector<6x32xf32> to vector<6x32x1xf32>
    %64 = tpu.reciprocal %63 {approx = true} : vector<6x32x1xf32> -> vector<6x32x1xf32>
    %65 = arith.truncf %61 : vector<6x32x32xf32> to vector<6x32x32xbf16>
    %66 = arith.truncf %48 : vector<6x32x16xf32> to vector<6x32x16xbf16>
    "tpu.trace_start"() <{level = 10 : i32, message = "hqk,hkd->hqd"}> : () -> ()
    %cst_30 = arith.constant dense<0.000000e+00> : vector<6x32x16xf32>
    %67 = tpu.matmul %65, %66, %cst_30 {dimension_numbers = #tpu.dot_dimension_numbers<[2], [1], [1], [2], [0, 0, 0, 1, 1, 2], [0], [0]>} : vector<6x32x32xbf16>, vector<6x32x16xbf16>, vector<6x32x16xf32> -> vector<6x32x16xf32>
    "tpu.trace_stop"() : () -> ()
    %68 = vector.broadcast %64 : vector<6x32x1xf32> to vector<6x32x16xf32>
    %69 = arith.mulf %67, %68 : vector<6x32x16xf32>
    %70 = arith.truncf %69 : vector<6x32x16xf32> to vector<6x32x16xbf16>
    %c0_31 = arith.constant 0 : index
    %c0_32 = arith.constant 0 : index
    %c0_33 = arith.constant 0 : index
    %c0_34 = arith.constant 0 : index
    %71 = vector.load %arg7[%c0_31, %c0_32, %c0_33, %c0_34] : memref<2x6x16x128xbf16, #tpu.memory_space<vmem>>, vector<1x6x16x128xbf16>
    %72 = vector.shape_cast %71 : vector<1x6x16x128xbf16> to vector<6x16x128xbf16>
    "tpu.trace_start"() <{level = 10 : i32, message = "hqd,hdc->hqc"}> : () -> ()
    %cst_35 = arith.constant dense<0.000000e+00> : vector<6x32x128xf32>
    %73 = tpu.matmul %70, %72, %cst_35 {dimension_numbers = #tpu.dot_dimension_numbers<[2], [1], [1], [2], [0, 0, 0, 1, 1, 2], [0], [0]>} : vector<6x32x16xbf16>, vector<6x16x128xbf16>, vector<6x32x128xf32> -> vector<6x32x128xf32>
    "tpu.trace_stop"() : () -> ()
    %cst_36 = arith.constant dense<0.000000e+00> : vector<32x128xf32>
    %74 = vector.multi_reduction <add>, %73, %cst_36 [0] : vector<6x32x128xf32> to vector<32x128xf32>
    %75 = arith.addf %0, %74 : vector<32x128xf32>
    %c0_37 = arith.constant 0 : index
    %c0_38 = arith.constant 0 : index
    %c0_39 = arith.constant 0 : index
    %76 = vector.load %arg8[%c0_37, %c0_38, %c0_39] : memref<2x1x128xf32, #tpu.memory_space<vmem>>, vector<1x1x128xf32>
    %77 = vector.shape_cast %76 : vector<1x1x128xf32> to vector<1x128xf32>
    %78 = vector.broadcast %77 : vector<1x128xf32> to vector<32x128xf32>
    %79 = arith.addf %75, %78 : vector<32x128xf32>
    %c0_40 = arith.constant 0 : index
    %c0_41 = arith.constant 0 : index
    %c0_42 = arith.constant 0 : index
    %80 = vector.load %arg9[%c0_40, %c0_41, %c0_42] : memref<2x1x128xf32, #tpu.memory_space<vmem>>, vector<1x1x128xf32>
    %81 = vector.shape_cast %80 : vector<1x1x128xf32> to vector<1x128xf32>
    %c0_43 = arith.constant 0 : index
    %c0_44 = arith.constant 0 : index
    %c0_45 = arith.constant 0 : index
    %82 = vector.load %arg10[%c0_43, %c0_44, %c0_45] : memref<2x1x128xf32, #tpu.memory_space<vmem>>, vector<1x1x128xf32>
    %83 = vector.shape_cast %82 : vector<1x1x128xf32> to vector<1x128xf32>
    %84 = vector.broadcast %8 : vector<1x128xf32> to vector<32x128xf32>
    %85 = arith.mulf %79, %84 : vector<32x128xf32>
    %cst_46 = arith.constant dense<0.000000e+00> : vector<32xf32>
    %86 = vector.multi_reduction <add>, %85, %cst_46 [1] : vector<32x128xf32> to vector<32xf32>
    %87 = vector.shape_cast %86 : vector<32xf32> to vector<32x1xf32>
    %cst_47 = arith.constant 0.010416667 : f32
    %88 = vector.broadcast %cst_47 : f32 to vector<32x1xf32>
    %89 = arith.mulf %87, %88 : vector<32x1xf32>
    %90 = vector.broadcast %89 : vector<32x1xf32> to vector<32x128xf32>
    %91 = arith.subf %79, %90 : vector<32x128xf32>
    %92 = vector.broadcast %8 : vector<1x128xf32> to vector<32x128xf32>
    %93 = arith.mulf %91, %92 : vector<32x128xf32>
    %94 = arith.mulf %93, %93 : vector<32x128xf32>
    %cst_48 = arith.constant dense<0.000000e+00> : vector<32xf32>
    %95 = vector.multi_reduction <add>, %94, %cst_48 [1] : vector<32x128xf32> to vector<32xf32>
    %96 = vector.shape_cast %95 : vector<32xf32> to vector<32x1xf32>
    %cst_49 = arith.constant 0.010416667 : f32
    %97 = vector.broadcast %cst_49 : f32 to vector<32x1xf32>
    %98 = arith.mulf %96, %97 : vector<32x1xf32>
    %cst_50 = arith.constant 9.99999974E-6 : f32
    %99 = vector.broadcast %cst_50 : f32 to vector<32x1xf32>
    %100 = arith.addf %98, %99 : vector<32x1xf32>
    %101 = math.rsqrt %100 : vector<32x1xf32>
    %102 = vector.broadcast %101 : vector<32x1xf32> to vector<32x128xf32>
    %103 = arith.mulf %93, %102 : vector<32x128xf32>
    %104 = vector.broadcast %81 : vector<1x128xf32> to vector<32x128xf32>
    %105 = arith.mulf %103, %104 : vector<32x128xf32>
    %106 = vector.broadcast %83 : vector<1x128xf32> to vector<32x128xf32>
    %107 = arith.addf %105, %106 : vector<32x128xf32>
    %108 = arith.truncf %107 : vector<32x128xf32> to vector<32x128xbf16>
    %c0_51 = arith.constant 0 : index
    %c0_52 = arith.constant 0 : index
    %c0_53 = arith.constant 0 : index
    %109 = vector.load %arg11[%c0_51, %c0_52, %c0_53] : memref<2x128x384xbf16, #tpu.memory_space<vmem>>, vector<1x128x384xbf16>
    %110 = vector.shape_cast %109 : vector<1x128x384xbf16> to vector<128x384xbf16>
    %cst_54 = arith.constant dense<0.000000e+00> : vector<32x384xf32>
    %111 = tpu.matmul %108, %110, %cst_54 {dimension_numbers = #tpu.dot_dimension_numbers<[1], [0], [0], [1], [0, 0, 1, 1], [], []>} : vector<32x128xbf16>, vector<128x384xbf16>, vector<32x384xf32> -> vector<32x384xf32>
    %c0_55 = arith.constant 0 : index
    %c0_56 = arith.constant 0 : index
    %c0_57 = arith.constant 0 : index
    %112 = vector.load %arg12[%c0_55, %c0_56, %c0_57] : memref<2x1x384xf32, #tpu.memory_space<vmem>>, vector<1x1x384xf32>
    %113 = vector.shape_cast %112 : vector<1x1x384xf32> to vector<1x384xf32>
    %114 = vector.broadcast %113 : vector<1x384xf32> to vector<32x384xf32>
    %115 = arith.addf %111, %114 : vector<32x384xf32>
    %cst_58 = arith.constant 0.000000e+00 : f32
    %116 = vector.broadcast %cst_58 : f32 to vector<32x384xf32>
    %117 = arith.maximumf %115, %116 : vector<32x384xf32>
    %118 = arith.truncf %117 : vector<32x384xf32> to vector<32x384xbf16>
    %c0_59 = arith.constant 0 : index
    %c0_60 = arith.constant 0 : index
    %c0_61 = arith.constant 0 : index
    %119 = vector.load %arg13[%c0_59, %c0_60, %c0_61] : memref<2x384x128xbf16, #tpu.memory_space<vmem>>, vector<1x384x128xbf16>
    %120 = vector.shape_cast %119 : vector<1x384x128xbf16> to vector<384x128xbf16>
    %cst_62 = arith.constant dense<0.000000e+00> : vector<32x128xf32>
    %121 = tpu.matmul %118, %120, %cst_62 {dimension_numbers = #tpu.dot_dimension_numbers<[1], [0], [0], [1], [0, 0, 1, 1], [], []>} : vector<32x384xbf16>, vector<384x128xbf16>, vector<32x128xf32> -> vector<32x128xf32>
    %c0_63 = arith.constant 0 : index
    %c0_64 = arith.constant 0 : index
    %c0_65 = arith.constant 0 : index
    %122 = vector.load %arg14[%c0_63, %c0_64, %c0_65] : memref<2x1x128xf32, #tpu.memory_space<vmem>>, vector<1x1x128xf32>
    %123 = vector.shape_cast %122 : vector<1x1x128xf32> to vector<1x128xf32>
    %124 = vector.broadcast %123 : vector<1x128xf32> to vector<32x128xf32>
    %125 = arith.addf %121, %124 : vector<32x128xf32>
    %126 = arith.addf %79, %125 : vector<32x128xf32>
    %c1 = arith.constant 1 : index
    %c0_66 = arith.constant 0 : index
    %c0_67 = arith.constant 0 : index
    %127 = vector.load %arg2[%c1, %c0_66, %c0_67] : memref<2x1x128xf32, #tpu.memory_space<vmem>>, vector<1x1x128xf32>
    %128 = vector.shape_cast %127 : vector<1x1x128xf32> to vector<1x128xf32>
    %c1_68 = arith.constant 1 : index
    %c0_69 = arith.constant 0 : index
    %c0_70 = arith.constant 0 : index
    %129 = vector.load %arg3[%c1_68, %c0_69, %c0_70] : memref<2x1x128xf32, #tpu.memory_space<vmem>>, vector<1x1x128xf32>
    %130 = vector.shape_cast %129 : vector<1x1x128xf32> to vector<1x128xf32>
    %131 = vector.broadcast %8 : vector<1x128xf32> to vector<32x128xf32>
    %132 = arith.mulf %126, %131 : vector<32x128xf32>
    %cst_71 = arith.constant dense<0.000000e+00> : vector<32xf32>
    %133 = vector.multi_reduction <add>, %132, %cst_71 [1] : vector<32x128xf32> to vector<32xf32>
    %134 = vector.shape_cast %133 : vector<32xf32> to vector<32x1xf32>
    %cst_72 = arith.constant 0.010416667 : f32
    %135 = vector.broadcast %cst_72 : f32 to vector<32x1xf32>
    %136 = arith.mulf %134, %135 : vector<32x1xf32>
    %137 = vector.broadcast %136 : vector<32x1xf32> to vector<32x128xf32>
    %138 = arith.subf %126, %137 : vector<32x128xf32>
    %139 = vector.broadcast %8 : vector<1x128xf32> to vector<32x128xf32>
    %140 = arith.mulf %138, %139 : vector<32x128xf32>
    %141 = arith.mulf %140, %140 : vector<32x128xf32>
    %cst_73 = arith.constant dense<0.000000e+00> : vector<32xf32>
    %142 = vector.multi_reduction <add>, %141, %cst_73 [1] : vector<32x128xf32> to vector<32xf32>
    %143 = vector.shape_cast %142 : vector<32xf32> to vector<32x1xf32>
    %cst_74 = arith.constant 0.010416667 : f32
    %144 = vector.broadcast %cst_74 : f32 to vector<32x1xf32>
    %145 = arith.mulf %143, %144 : vector<32x1xf32>
    %cst_75 = arith.constant 9.99999974E-6 : f32
    %146 = vector.broadcast %cst_75 : f32 to vector<32x1xf32>
    %147 = arith.addf %145, %146 : vector<32x1xf32>
    %148 = math.rsqrt %147 : vector<32x1xf32>
    %149 = vector.broadcast %148 : vector<32x1xf32> to vector<32x128xf32>
    %150 = arith.mulf %140, %149 : vector<32x128xf32>
    %151 = vector.broadcast %128 : vector<1x128xf32> to vector<32x128xf32>
    %152 = arith.mulf %150, %151 : vector<32x128xf32>
    %153 = vector.broadcast %130 : vector<1x128xf32> to vector<32x128xf32>
    %154 = arith.addf %152, %153 : vector<32x128xf32>
    %155 = arith.truncf %154 : vector<32x128xf32> to vector<32x128xbf16>
    %156 = vector.shape_cast %155 : vector<32x128xbf16> to vector<1x32x128xbf16>
    %157 = vector.broadcast %156 : vector<1x32x128xbf16> to vector<6x32x128xbf16>
    %c1_76 = arith.constant 1 : index
    %c0_77 = arith.constant 0 : index
    %c0_78 = arith.constant 0 : index
    %c0_79 = arith.constant 0 : index
    %158 = vector.load %arg4[%c1_76, %c0_77, %c0_78, %c0_79] : memref<2x6x128x16xbf16, #tpu.memory_space<vmem>>, vector<1x6x128x16xbf16>
    %159 = vector.shape_cast %158 : vector<1x6x128x16xbf16> to vector<6x128x16xbf16>
    "tpu.trace_start"() <{level = 10 : i32, message = "htc,hcd->htd"}> : () -> ()
    %cst_80 = arith.constant dense<0.000000e+00> : vector<6x32x16xf32>
    %160 = tpu.matmul %157, %159, %cst_80 {dimension_numbers = #tpu.dot_dimension_numbers<[2], [1], [1], [2], [0, 0, 0, 1, 1, 2], [0], [0]>} : vector<6x32x128xbf16>, vector<6x128x16xbf16>, vector<6x32x16xf32> -> vector<6x32x16xf32>
    "tpu.trace_stop"() : () -> ()
    %c1_81 = arith.constant 1 : index
    %c0_82 = arith.constant 0 : index
    %c0_83 = arith.constant 0 : index
    %c0_84 = arith.constant 0 : index
    %161 = vector.load %arg5[%c1_81, %c0_82, %c0_83, %c0_84] : memref<2x6x128x16xbf16, #tpu.memory_space<vmem>>, vector<1x6x128x16xbf16>
    %162 = vector.shape_cast %161 : vector<1x6x128x16xbf16> to vector<6x128x16xbf16>
    "tpu.trace_start"() <{level = 10 : i32, message = "htc,hcd->htd"}> : () -> ()
    %cst_85 = arith.constant dense<0.000000e+00> : vector<6x32x16xf32>
    %163 = tpu.matmul %157, %162, %cst_85 {dimension_numbers = #tpu.dot_dimension_numbers<[2], [1], [1], [2], [0, 0, 0, 1, 1, 2], [0], [0]>} : vector<6x32x128xbf16>, vector<6x128x16xbf16>, vector<6x32x16xf32> -> vector<6x32x16xf32>
    "tpu.trace_stop"() : () -> ()
    %c1_86 = arith.constant 1 : index
    %c0_87 = arith.constant 0 : index
    %c0_88 = arith.constant 0 : index
    %c0_89 = arith.constant 0 : index
    %164 = vector.load %arg6[%c1_86, %c0_87, %c0_88, %c0_89] : memref<2x6x128x16xbf16, #tpu.memory_space<vmem>>, vector<1x6x128x16xbf16>
    %165 = vector.shape_cast %164 : vector<1x6x128x16xbf16> to vector<6x128x16xbf16>
    "tpu.trace_start"() <{level = 10 : i32, message = "htc,hcd->htd"}> : () -> ()
    %cst_90 = arith.constant dense<0.000000e+00> : vector<6x32x16xf32>
    %166 = tpu.matmul %157, %165, %cst_90 {dimension_numbers = #tpu.dot_dimension_numbers<[2], [1], [1], [2], [0, 0, 0, 1, 1, 2], [0], [0]>} : vector<6x32x128xbf16>, vector<6x128x16xbf16>, vector<6x32x16xf32> -> vector<6x32x16xf32>
    "tpu.trace_stop"() : () -> ()
    %167 = arith.truncf %160 : vector<6x32x16xf32> to vector<6x32x16xbf16>
    %168 = arith.truncf %163 : vector<6x32x16xf32> to vector<6x32x16xbf16>
    "tpu.trace_start"() <{level = 10 : i32, message = "hqd,hkd->hqk"}> : () -> ()
    %cst_91 = arith.constant dense<0.000000e+00> : vector<6x32x32xf32>
    %169 = tpu.matmul %167, %168, %cst_91 {dimension_numbers = #tpu.dot_dimension_numbers<[2], [2], [1], [1], [0, 0, 0, 1, 1, 1], [0], [0]>} : vector<6x32x16xbf16>, vector<6x32x16xbf16>, vector<6x32x32xf32> -> vector<6x32x32xf32>
    "tpu.trace_stop"() : () -> ()
    %170 = vector.shape_cast %3 : vector<32x32xi1> to vector<1x32x32xi1>
    %cst_92 = arith.constant -1.000000e+30 : f32
    %171 = vector.shape_cast %170 : vector<1x32x32xi1> to vector<1x32x32xi1>
    %172 = vector.broadcast %171 : vector<1x32x32xi1> to vector<6x32x32xi1>
    %173 = vector.broadcast %cst_92 : f32 to vector<6x32x32xf32>
    %174 = arith.select %172, %169, %173 : vector<6x32x32xi1>, vector<6x32x32xf32>
    %cst_93 = arith.constant dense<0xFF800000> : vector<6x32xf32>
    %175 = vector.multi_reduction <maximumf>, %174, %cst_93 [2] : vector<6x32x32xf32> to vector<6x32xf32>
    %176 = vector.shape_cast %175 : vector<6x32xf32> to vector<6x32x1xf32>
    %177 = vector.broadcast %176 : vector<6x32x1xf32> to vector<6x32x32xf32>
    %178 = arith.subf %174, %177 : vector<6x32x32xf32>
    %179 = math.exp %178 : vector<6x32x32xf32>
    %cst_94 = arith.constant dense<0.000000e+00> : vector<6x32xf32>
    %180 = vector.multi_reduction <add>, %179, %cst_94 [2] : vector<6x32x32xf32> to vector<6x32xf32>
    %181 = vector.shape_cast %180 : vector<6x32xf32> to vector<6x32x1xf32>
    %182 = tpu.reciprocal %181 {approx = true} : vector<6x32x1xf32> -> vector<6x32x1xf32>
    %183 = arith.truncf %179 : vector<6x32x32xf32> to vector<6x32x32xbf16>
    %184 = arith.truncf %166 : vector<6x32x16xf32> to vector<6x32x16xbf16>
    "tpu.trace_start"() <{level = 10 : i32, message = "hqk,hkd->hqd"}> : () -> ()
    %cst_95 = arith.constant dense<0.000000e+00> : vector<6x32x16xf32>
    %185 = tpu.matmul %183, %184, %cst_95 {dimension_numbers = #tpu.dot_dimension_numbers<[2], [1], [1], [2], [0, 0, 0, 1, 1, 2], [0], [0]>} : vector<6x32x32xbf16>, vector<6x32x16xbf16>, vector<6x32x16xf32> -> vector<6x32x16xf32>
    "tpu.trace_stop"() : () -> ()
    %186 = vector.broadcast %182 : vector<6x32x1xf32> to vector<6x32x16xf32>
    %187 = arith.mulf %185, %186 : vector<6x32x16xf32>
    %188 = arith.truncf %187 : vector<6x32x16xf32> to vector<6x32x16xbf16>
    %c1_96 = arith.constant 1 : index
    %c0_97 = arith.constant 0 : index
    %c0_98 = arith.constant 0 : index
    %c0_99 = arith.constant 0 : index
    %189 = vector.load %arg7[%c1_96, %c0_97, %c0_98, %c0_99] : memref<2x6x16x128xbf16, #tpu.memory_space<vmem>>, vector<1x6x16x128xbf16>
    %190 = vector.shape_cast %189 : vector<1x6x16x128xbf16> to vector<6x16x128xbf16>
    "tpu.trace_start"() <{level = 10 : i32, message = "hqd,hdc->hqc"}> : () -> ()
    %cst_100 = arith.constant dense<0.000000e+00> : vector<6x32x128xf32>
    %191 = tpu.matmul %188, %190, %cst_100 {dimension_numbers = #tpu.dot_dimension_numbers<[2], [1], [1], [2], [0, 0, 0, 1, 1, 2], [0], [0]>} : vector<6x32x16xbf16>, vector<6x16x128xbf16>, vector<6x32x128xf32> -> vector<6x32x128xf32>
    "tpu.trace_stop"() : () -> ()
    %cst_101 = arith.constant dense<0.000000e+00> : vector<32x128xf32>
    %192 = vector.multi_reduction <add>, %191, %cst_101 [0] : vector<6x32x128xf32> to vector<32x128xf32>
    %193 = arith.addf %126, %192 : vector<32x128xf32>
    %c1_102 = arith.constant 1 : index
    %c0_103 = arith.constant 0 : index
    %c0_104 = arith.constant 0 : index
    %194 = vector.load %arg8[%c1_102, %c0_103, %c0_104] : memref<2x1x128xf32, #tpu.memory_space<vmem>>, vector<1x1x128xf32>
    %195 = vector.shape_cast %194 : vector<1x1x128xf32> to vector<1x128xf32>
    %196 = vector.broadcast %195 : vector<1x128xf32> to vector<32x128xf32>
    %197 = arith.addf %193, %196 : vector<32x128xf32>
    %c1_105 = arith.constant 1 : index
    %c0_106 = arith.constant 0 : index
    %c0_107 = arith.constant 0 : index
    %198 = vector.load %arg9[%c1_105, %c0_106, %c0_107] : memref<2x1x128xf32, #tpu.memory_space<vmem>>, vector<1x1x128xf32>
    %199 = vector.shape_cast %198 : vector<1x1x128xf32> to vector<1x128xf32>
    %c1_108 = arith.constant 1 : index
    %c0_109 = arith.constant 0 : index
    %c0_110 = arith.constant 0 : index
    %200 = vector.load %arg10[%c1_108, %c0_109, %c0_110] : memref<2x1x128xf32, #tpu.memory_space<vmem>>, vector<1x1x128xf32>
    %201 = vector.shape_cast %200 : vector<1x1x128xf32> to vector<1x128xf32>
    %202 = vector.broadcast %8 : vector<1x128xf32> to vector<32x128xf32>
    %203 = arith.mulf %197, %202 : vector<32x128xf32>
    %cst_111 = arith.constant dense<0.000000e+00> : vector<32xf32>
    %204 = vector.multi_reduction <add>, %203, %cst_111 [1] : vector<32x128xf32> to vector<32xf32>
    %205 = vector.shape_cast %204 : vector<32xf32> to vector<32x1xf32>
    %cst_112 = arith.constant 0.010416667 : f32
    %206 = vector.broadcast %cst_112 : f32 to vector<32x1xf32>
    %207 = arith.mulf %205, %206 : vector<32x1xf32>
    %208 = vector.broadcast %207 : vector<32x1xf32> to vector<32x128xf32>
    %209 = arith.subf %197, %208 : vector<32x128xf32>
    %210 = vector.broadcast %8 : vector<1x128xf32> to vector<32x128xf32>
    %211 = arith.mulf %209, %210 : vector<32x128xf32>
    %212 = arith.mulf %211, %211 : vector<32x128xf32>
    %cst_113 = arith.constant dense<0.000000e+00> : vector<32xf32>
    %213 = vector.multi_reduction <add>, %212, %cst_113 [1] : vector<32x128xf32> to vector<32xf32>
    %214 = vector.shape_cast %213 : vector<32xf32> to vector<32x1xf32>
    %cst_114 = arith.constant 0.010416667 : f32
    %215 = vector.broadcast %cst_114 : f32 to vector<32x1xf32>
    %216 = arith.mulf %214, %215 : vector<32x1xf32>
    %cst_115 = arith.constant 9.99999974E-6 : f32
    %217 = vector.broadcast %cst_115 : f32 to vector<32x1xf32>
    %218 = arith.addf %216, %217 : vector<32x1xf32>
    %219 = math.rsqrt %218 : vector<32x1xf32>
    %220 = vector.broadcast %219 : vector<32x1xf32> to vector<32x128xf32>
    %221 = arith.mulf %211, %220 : vector<32x128xf32>
    %222 = vector.broadcast %199 : vector<1x128xf32> to vector<32x128xf32>
    %223 = arith.mulf %221, %222 : vector<32x128xf32>
    %224 = vector.broadcast %201 : vector<1x128xf32> to vector<32x128xf32>
    %225 = arith.addf %223, %224 : vector<32x128xf32>
    %226 = arith.truncf %225 : vector<32x128xf32> to vector<32x128xbf16>
    %c1_116 = arith.constant 1 : index
    %c0_117 = arith.constant 0 : index
    %c0_118 = arith.constant 0 : index
    %227 = vector.load %arg11[%c1_116, %c0_117, %c0_118] : memref<2x128x384xbf16, #tpu.memory_space<vmem>>, vector<1x128x384xbf16>
    %228 = vector.shape_cast %227 : vector<1x128x384xbf16> to vector<128x384xbf16>
    %cst_119 = arith.constant dense<0.000000e+00> : vector<32x384xf32>
    %229 = tpu.matmul %226, %228, %cst_119 {dimension_numbers = #tpu.dot_dimension_numbers<[1], [0], [0], [1], [0, 0, 1, 1], [], []>} : vector<32x128xbf16>, vector<128x384xbf16>, vector<32x384xf32> -> vector<32x384xf32>
    %c1_120 = arith.constant 1 : index
    %c0_121 = arith.constant 0 : index
    %c0_122 = arith.constant 0 : index
    %230 = vector.load %arg12[%c1_120, %c0_121, %c0_122] : memref<2x1x384xf32, #tpu.memory_space<vmem>>, vector<1x1x384xf32>
    %231 = vector.shape_cast %230 : vector<1x1x384xf32> to vector<1x384xf32>
    %232 = vector.broadcast %231 : vector<1x384xf32> to vector<32x384xf32>
    %233 = arith.addf %229, %232 : vector<32x384xf32>
    %cst_123 = arith.constant 0.000000e+00 : f32
    %234 = vector.broadcast %cst_123 : f32 to vector<32x384xf32>
    %235 = arith.maximumf %233, %234 : vector<32x384xf32>
    %236 = arith.truncf %235 : vector<32x384xf32> to vector<32x384xbf16>
    %c1_124 = arith.constant 1 : index
    %c0_125 = arith.constant 0 : index
    %c0_126 = arith.constant 0 : index
    %237 = vector.load %arg13[%c1_124, %c0_125, %c0_126] : memref<2x384x128xbf16, #tpu.memory_space<vmem>>, vector<1x384x128xbf16>
    %238 = vector.shape_cast %237 : vector<1x384x128xbf16> to vector<384x128xbf16>
    %cst_127 = arith.constant dense<0.000000e+00> : vector<32x128xf32>
    %239 = tpu.matmul %236, %238, %cst_127 {dimension_numbers = #tpu.dot_dimension_numbers<[1], [0], [0], [1], [0, 0, 1, 1], [], []>} : vector<32x384xbf16>, vector<384x128xbf16>, vector<32x128xf32> -> vector<32x128xf32>
    %c1_128 = arith.constant 1 : index
    %c0_129 = arith.constant 0 : index
    %c0_130 = arith.constant 0 : index
    %240 = vector.load %arg14[%c1_128, %c0_129, %c0_130] : memref<2x1x128xf32, #tpu.memory_space<vmem>>, vector<1x1x128xf32>
    %241 = vector.shape_cast %240 : vector<1x1x128xf32> to vector<1x128xf32>
    %242 = vector.broadcast %241 : vector<1x128xf32> to vector<32x128xf32>
    %243 = arith.addf %239, %242 : vector<32x128xf32>
    %244 = arith.addf %197, %243 : vector<32x128xf32>
    %245 = arith.truncf %244 : vector<32x128xf32> to vector<32x128xbf16>
    %c0_131 = arith.constant 0 : index
    %c0_132 = arith.constant 0 : index
    %246 = vector.load %arg15[%c0_131, %c0_132] : memref<128x128xbf16, #tpu.memory_space<vmem>>, vector<128x128xbf16>
    %cst_133 = arith.constant dense<0.000000e+00> : vector<32x128xf32>
    %247 = tpu.matmul %245, %246, %cst_133 {dimension_numbers = #tpu.dot_dimension_numbers<[1], [0], [0], [1], [0, 0, 1, 1], [], []>} : vector<32x128xbf16>, vector<128x128xbf16>, vector<32x128xf32> -> vector<32x128xf32>
    %c0_134 = arith.constant 0 : index
    %c0_135 = arith.constant 0 : index
    %248 = vector.load %arg16[%c0_134, %c0_135] : memref<1x128xf32, #tpu.memory_space<vmem>>, vector<1x128xf32>
    %249 = vector.broadcast %248 : vector<1x128xf32> to vector<32x128xf32>
    %250 = arith.addf %247, %249 : vector<32x128xf32>
    %c0_136 = arith.constant 0 : index
    %c0_137 = arith.constant 0 : index
    %251 = vector.load %arg17[%c0_136, %c0_137] : memref<32x128xf32, #tpu.memory_space<vmem>>, vector<32x128xf32>
    tpu.vector_store %arg17[%c0_136, %c0_137], %250 {strides = array<i32>} : memref<32x128xf32, #tpu.memory_space<vmem>>, vector<32x128xf32>,
    return
  }
  func.func @transform_0(%arg0: i32) -> (i32, i32) {
    %c0_i32 = arith.constant 0 : i32
    %c0_i32_0 = arith.constant 0 : i32
    return %arg0, %c0_i32 : i32, i32
  }
  func.func @transform_1(%arg0: i32) -> (i32, i32, i32) {
    %c0_i32 = arith.constant 0 : i32
    %c0_i32_0 = arith.constant 0 : i32
    %c0_i32_1 = arith.constant 0 : i32
    %c0_i32_2 = arith.constant 0 : i32
    return %c0_i32, %c0_i32_0, %c0_i32_1 : i32, i32, i32
  }
  func.func @transform_2(%arg0: i32) -> (i32, i32, i32) {
    %c0_i32 = arith.constant 0 : i32
    %c0_i32_0 = arith.constant 0 : i32
    %c0_i32_1 = arith.constant 0 : i32
    %c0_i32_2 = arith.constant 0 : i32
    return %c0_i32, %c0_i32_0, %c0_i32_1 : i32, i32, i32
  }
  func.func @transform_3(%arg0: i32) -> (i32, i32, i32, i32) {
    %c0_i32 = arith.constant 0 : i32
    %c0_i32_0 = arith.constant 0 : i32
    %c0_i32_1 = arith.constant 0 : i32
    %c0_i32_2 = arith.constant 0 : i32
    %c0_i32_3 = arith.constant 0 : i32
    return %c0_i32, %c0_i32_0, %c0_i32_1, %c0_i32_2 : i32, i32, i32, i32
  }
  func.func @transform_4(%arg0: i32) -> (i32, i32, i32, i32) {
    %c0_i32 = arith.constant 0 : i32
    %c0_i32_0 = arith.constant 0 : i32
    %c0_i32_1 = arith.constant 0 : i32
    %c0_i32_2 = arith.constant 0 : i32
    %c0_i32_3 = arith.constant 0 : i32
    return %c0_i32, %c0_i32_0, %c0_i32_1, %c0_i32_2 : i32, i32, i32, i32
  }
  func.func @transform_5(%arg0: i32) -> (i32, i32, i32, i32) {
    %c0_i32 = arith.constant 0 : i32
    %c0_i32_0 = arith.constant 0 : i32
    %c0_i32_1 = arith.constant 0 : i32
    %c0_i32_2 = arith.constant 0 : i32
    %c0_i32_3 = arith.constant 0 : i32
    return %c0_i32, %c0_i32_0, %c0_i32_1, %c0_i32_2 : i32, i32, i32, i32
  }
  func.func @transform_6(%arg0: i32) -> (i32, i32, i32, i32) {
    %c0_i32 = arith.constant 0 : i32
    %c0_i32_0 = arith.constant 0 : i32
    %c0_i32_1 = arith.constant 0 : i32
    %c0_i32_2 = arith.constant 0 : i32
    %c0_i32_3 = arith.constant 0 : i32
    return %c0_i32, %c0_i32_0, %c0_i32_1, %c0_i32_2 : i32, i32, i32, i32
  }
  func.func @transform_7(%arg0: i32) -> (i32, i32, i32) {
    %c0_i32 = arith.constant 0 : i32
    %c0_i32_0 = arith.constant 0 : i32
    %c0_i32_1 = arith.constant 0 : i32
    %c0_i32_2 = arith.constant 0 : i32
    return %c0_i32, %c0_i32_0, %c0_i32_1 : i32, i32, i32
  }
  func.func @transform_8(%arg0: i32) -> (i32, i32, i32) {
    %c0_i32 = arith.constant 0 : i32
    %c0_i32_0 = arith.constant 0 : i32
    %c0_i32_1 = arith.constant 0 : i32
    %c0_i32_2 = arith.constant 0 : i32
    return %c0_i32, %c0_i32_0, %c0_i32_1 : i32, i32, i32
  }
  func.func @transform_9(%arg0: i32) -> (i32, i32, i32) {
    %c0_i32 = arith.constant 0 : i32
    %c0_i32_0 = arith.constant 0 : i32
    %c0_i32_1 = arith.constant 0 : i32
    %c0_i32_2 = arith.constant 0 : i32
    return %c0_i32, %c0_i32_0, %c0_i32_1 : i32, i32, i32
  }
  func.func @transform_10(%arg0: i32) -> (i32, i32, i32) {
    %c0_i32 = arith.constant 0 : i32
    %c0_i32_0 = arith.constant 0 : i32
    %c0_i32_1 = arith.constant 0 : i32
    %c0_i32_2 = arith.constant 0 : i32
    return %c0_i32, %c0_i32_0, %c0_i32_1 : i32, i32, i32
  }
  func.func @transform_11(%arg0: i32) -> (i32, i32, i32) {
    %c0_i32 = arith.constant 0 : i32
    %c0_i32_0 = arith.constant 0 : i32
    %c0_i32_1 = arith.constant 0 : i32
    %c0_i32_2 = arith.constant 0 : i32
    return %c0_i32, %c0_i32_0, %c0_i32_1 : i32, i32, i32
  }
  func.func @transform_12(%arg0: i32) -> (i32, i32, i32) {
    %c0_i32 = arith.constant 0 : i32
    %c0_i32_0 = arith.constant 0 : i32
    %c0_i32_1 = arith.constant 0 : i32
    %c0_i32_2 = arith.constant 0 : i32
    return %c0_i32, %c0_i32_0, %c0_i32_1 : i32, i32, i32
  }
  func.func @transform_13(%arg0: i32) -> (i32, i32, i32) {
    %c0_i32 = arith.constant 0 : i32
    %c0_i32_0 = arith.constant 0 : i32
    %c0_i32_1 = arith.constant 0 : i32
    %c0_i32_2 = arith.constant 0 : i32
    return %c0_i32, %c0_i32_0, %c0_i32_1 : i32, i32, i32
  }
  func.func @transform_14(%arg0: i32) -> (i32, i32) {
    %c0_i32 = arith.constant 0 : i32
    %c0_i32_0 = arith.constant 0 : i32
    %c0_i32_1 = arith.constant 0 : i32
    return %c0_i32, %c0_i32_0 : i32, i32
  }
  func.func @transform_15(%arg0: i32) -> (i32, i32) {
    %c0_i32 = arith.constant 0 : i32
    %c0_i32_0 = arith.constant 0 : i32
    %c0_i32_1 = arith.constant 0 : i32
    return %c0_i32, %c0_i32_0 : i32, i32
  }
  func.func @transform_16(%arg0: i32) -> (i32, i32) {
    %c0_i32 = arith.constant 0 : i32
    %c0_i32_0 = arith.constant 0 : i32
    return %arg0, %c0_i32 : i32, i32
  }
}

</mosaic_0001>

<llo_original>
// kernel: tpu_custom_call.1
$region0: #{tpu_custom_call.1}
  #allocation0 [shape = 'u32[]', space=smem, size = 0x4, offset = 0x4, fixed_abs, tag = 'smem constant byte address 0x4 - core index']
  #allocation1 [shape = 'u32[144,128]{1,0:T(1,128)}', space=vmem, size = 0x12000, scoped, tag = 'internal scratch']
  %s0 = inlined_call_operand.vmem [shape: f32[128,128], index: 0, kind: input, shape index: {}]
  %s1 = inlined_call_operand.vmem [shape: f32[2,1,128], index: 1, kind: input, shape index: {}]
  %s2 = inlined_call_operand.vmem [shape: f32[2,1,128], index: 2, kind: input, shape index: {}]
  %s3 = inlined_call_operand.vmem [shape: bf16[2,6,128,16], index: 3, kind: input, shape index: {}]
  %s4 = inlined_call_operand.vmem [shape: bf16[2,6,128,16], index: 4, kind: input, shape index: {}]
  %s5 = inlined_call_operand.vmem [shape: bf16[2,6,128,16], index: 5, kind: input, shape index: {}]
  %s6 = inlined_call_operand.vmem [shape: bf16[2,6,16,128], index: 6, kind: input, shape index: {}]
  %s7 = inlined_call_operand.vmem [shape: f32[2,1,128], index: 7, kind: input, shape index: {}]
  %s8 = inlined_call_operand.vmem [shape: f32[2,1,128], index: 8, kind: input, shape index: {}]
  %s9 = inlined_call_operand.vmem [shape: f32[2,1,128], index: 9, kind: input, shape index: {}]
  %s10 = inlined_call_operand.vmem [shape: bf16[2,128,384], index: 10, kind: input, shape index: {}]
  %s11 = inlined_call_operand.vmem [shape: f32[2,1,384], index: 11, kind: input, shape index: {}]
  %s12 = inlined_call_operand.vmem [shape: bf16[2,384,128], index: 12, kind: input, shape index: {}]
  %s13 = inlined_call_operand.vmem [shape: f32[2,1,128], index: 13, kind: input, shape index: {}]
  %s14 = inlined_call_operand.vmem [shape: bf16[128,128], index: 14, kind: input, shape index: {}]
  %s15 = inlined_call_operand.vmem [shape: f32[1,128], index: 15, kind: input, shape index: {}]
  %s16 = inlined_call_operand.hbm [shape: f32[128,128], index: 16, kind: output, shape index: {}]
  %s17 = sld [smem:[#allocation0]]
  $region97: #{tpu_custom_call.1} parent=0
    _
  %s19 = ssub.s32 1, %s17
  %s20 = scalar_select 0, %s19, %s17
  $region1: #{tpu_custom_call.1} parent=0
    #allocation2 [shape = 'u8[32768]{0}', space=vmem, size = 0x8000, scoped, tag = 'output window, operand 0']
    #allocation3 [shape = 's32[2]{0}', space=sflag, size = 0x8, scoped, tag = 'scoped memory for tpu_custom_call.1']
    %21 = vsyncpa [#allocation3], 0
    %s22 = scalar_lea.sflag [#allocation3], 1
    %23 = vsyncpa %s22, 0
    loop: start=0, step=1, limit=6
    $region2: #{tpu_custom_call.1} parent=1 // loop_pre_header
      _
    $region3: #{tpu_custom_call.1} parent=1 // loop_header
      %s25 = sphi 0, %s29
      %p26 = scmp.ge.s32.totalorder %s25, 6
      %s35 = sphi 0, %s37
      %s38 = sphi 0, %s35
      %s39 = sphi 0, %s38
      %s55 = sphi 0, %s39
      %s59 = sphi 0, %s59
      %s61 = sphi 0, %s59
      %s62 = sphi 0, %s61
      %s76 = sphi 0, %s62
      %s80 = sphi 0, %s80
      %s82 = sphi 0, %s80
      %s83 = sphi 0, %s82
      %s97 = sphi 0, %s83
      %s101 = sphi 0, %s101
      %s103 = sphi 0, %s101
      %s104 = sphi 0, %s103
      %s118 = sphi 0, %s104
      %s122 = sphi 0, %s122
      %s124 = sphi 0, %s122
      %s125 = sphi 0, %s124
      %s139 = sphi 0, %s125
      %s143 = sphi 0, %s143
      %s145 = sphi 0, %s143
      %s146 = sphi 0, %s145
      %s160 = sphi 0, %s146
      %s164 = sphi 0, %s164
      %s166 = sphi 0, %s164
      %s167 = sphi 0, %s166
      %s181 = sphi 0, %s167
      %s185 = sphi 0, %s185
      %s187 = sphi 0, %s185
      %s188 = sphi 0, %s187
      %s202 = sphi 0, %s188
      %s206 = sphi 0, %s206
      %s208 = sphi 0, %s206
      %s209 = sphi 0, %s208
      %s223 = sphi 0, %s209
      %s227 = sphi 0, %s227
      %s229 = sphi 0, %s227
      %s230 = sphi 0, %s229
      %s244 = sphi 0, %s230
      %s248 = sphi 0, %s248
      %s250 = sphi 0, %s248
      %s251 = sphi 0, %s250
      %s265 = sphi 0, %s251
      %s269 = sphi 0, %s269
      %s271 = sphi 0, %s269
      %s272 = sphi 0, %s271
      %s286 = sphi 0, %s272
      %s290 = sphi 0, %s290
      %s292 = sphi 0, %s290
      %s293 = sphi 0, %s292
      %s307 = sphi 0, %s293
      %s311 = sphi 0, %s311
      %s313 = sphi 0, %s311
      %s314 = sphi 0, %s313
      %s328 = sphi 0, %s314
      %s332 = sphi 0, %s332
      %s334 = sphi 0, %s332
      %s335 = sphi 0, %s334
      %s349 = sphi 0, %s335
      %s353 = sphi 0, %s353
      %s355 = sphi 0, %s353
      %s356 = sphi 0, %s355
      %s370 = sphi 0, %s356
      %s376 = sphi 0, %s378
      %s379 = sphi 0, %s376
      %s380 = sphi 0, %s379
      %s396 = sphi 0, %s380
    $region4: #{tpu_custom_call.1} parent=1 // loop_header_branch
      %28 = sbr.rel (%p26) target = $region8
    $region5: #{tpu_custom_call.1} parent=1 // loop_body
      %s30 = ssub.s32 %s25, 1
      %s31 = ssub.s32 %s25, 2
      %s32 = sadd.s32 %s25, 1
      %s33 = ssub.s32 %s25, %s32
      %p34 = scmp.eq.s32.totalorder %s33, 0
      %s36 = sadd.s32 %s35, 1
      %s37 = scalar_select %p34, %s35, %s36
      %p40 = pneg %p34
      %p41 = scmp.eq.s32.totalorder %s25, 3
      %p42 = por %p40, %p41
      %p43 = scmp.ne.s32.totalorder %s35, %s38
      %p44 = scmp.eq.s32.totalorder %s25, 0
      %p45 = por %p43, %p44
      %p46 = scmp.ne.s32.totalorder %s35, %s38
      %p47 = scmp.eq.s32.totalorder %s30, 3
      %p48 = por %p46, %p47
      %p49 = scmp.ne.s32.totalorder %s38, %s39
      %p50 = scmp.eq.s32.totalorder %s30, 0
      %p51 = por %p49, %p50
      %p52 = scmp.ne.s32.totalorder %s38, %s39
      %p53 = scmp.eq.s32.totalorder %s31, 3
      %p54 = por %p52, %p53
      %p56 = scmp.ne.s32.totalorder %s39, %s55
      %p57 = scmp.eq.s32.totalorder %s31, 0
      %p58 = por %p56, %p57
      %s60 = sadd.s32 %s59, 1
      %p63 = scmp.eq.s32.totalorder %s25, 3
      %p64 = scmp.ne.s32.totalorder %s59, %s61
      %p65 = scmp.eq.s32.totalorder %s25, 0
      %p66 = por %p64, %p65
      %p67 = scmp.ne.s32.totalorder %s59, %s61
      %p68 = scmp.eq.s32.totalorder %s30, 3
      %p69 = por %p67, %p68
      %p70 = scmp.ne.s32.totalorder %s61, %s62
      %p71 = scmp.eq.s32.totalorder %s30, 0
      %p72 = por %p70, %p71
      %p73 = scmp.ne.s32.totalorder %s61, %s62
      %p74 = scmp.eq.s32.totalorder %s31, 3
      %p75 = por %p73, %p74
      %p77 = scmp.ne.s32.totalorder %s62, %s76
      %p78 = scmp.eq.s32.totalorder %s31, 0
      %p79 = por %p77, %p78
      %s81 = sadd.s32 %s80, 1
      %p84 = scmp.eq.s32.totalorder %s25, 3
      %p85 = scmp.ne.s32.totalorder %s80, %s82
      %p86 = scmp.eq.s32.totalorder %s25, 0
      %p87 = por %p85, %p86
      %p88 = scmp.ne.s32.totalorder %s80, %s82
      %p89 = scmp.eq.s32.totalorder %s30, 3
      %p90 = por %p88, %p89
      %p91 = scmp.ne.s32.totalorder %s82, %s83
      %p92 = scmp.eq.s32.totalorder %s30, 0
      %p93 = por %p91, %p92
      %p94 = scmp.ne.s32.totalorder %s82, %s83
      %p95 = scmp.eq.s32.totalorder %s31, 3
      %p96 = por %p94, %p95
      %p98 = scmp.ne.s32.totalorder %s83, %s97
      %p99 = scmp.eq.s32.totalorder %s31, 0
      %p100 = por %p98, %p99
      %s102 = sadd.s32 %s101, 1
      %p105 = scmp.eq.s32.totalorder %s25, 3
      %p106 = scmp.ne.s32.totalorder %s101, %s103
      %p107 = scmp.eq.s32.totalorder %s25, 0
      %p108 = por %p106, %p107
      %p109 = scmp.ne.s32.totalorder %s101, %s103
      %p110 = scmp.eq.s32.totalorder %s30, 3
      %p111 = por %p109, %p110
      %p112 = scmp.ne.s32.totalorder %s103, %s104
      %p113 = scmp.eq.s32.totalorder %s30, 0
      %p114 = por %p112, %p113
      %p115 = scmp.ne.s32.totalorder %s103, %s104
      %p116 = scmp.eq.s32.totalorder %s31, 3
      %p117 = por %p115, %p116
      %p119 = scmp.ne.s32.totalorder %s104, %s118
      %p120 = scmp.eq.s32.totalorder %s31, 0
      %p121 = por %p119, %p120
      %s123 = sadd.s32 %s122, 1
      %p126 = scmp.eq.s32.totalorder %s25, 3
      %p127 = scmp.ne.s32.totalorder %s122, %s124
      %p128 = scmp.eq.s32.totalorder %s25, 0
      %p129 = por %p127, %p128
      %p130 = scmp.ne.s32.totalorder %s122, %s124
      %p131 = scmp.eq.s32.totalorder %s30, 3
      %p132 = por %p130, %p131
      %p133 = scmp.ne.s32.totalorder %s124, %s125
      %p134 = scmp.eq.s32.totalorder %s30, 0
      %p135 = por %p133, %p134
      %p136 = scmp.ne.s32.totalorder %s124, %s125
      %p137 = scmp.eq.s32.totalorder %s31, 3
      %p138 = por %p136, %p137
      %p140 = scmp.ne.s32.totalorder %s125, %s139
      %p141 = scmp.eq.s32.totalorder %s31, 0
      %p142 = por %p140, %p141
      %s144 = sadd.s32 %s143, 1
      %p147 = scmp.eq.s32.totalorder %s25, 3
      %p148 = scmp.ne.s32.totalorder %s143, %s145
      %p149 = scmp.eq.s32.totalorder %s25, 0
      %p150 = por %p148, %p149
      %p151 = scmp.ne.s32.totalorder %s143, %s145
      %p152 = scmp.eq.s32.totalorder %s30, 3
      %p153 = por %p151, %p152
      %p154 = scmp.ne.s32.totalorder %s145, %s146
      %p155 = scmp.eq.s32.totalorder %s30, 0
      %p156 = por %p154, %p155
      %p157 = scmp.ne.s32.totalorder %s145, %s146
      %p158 = scmp.eq.s32.totalorder %s31, 3
      %p159 = por %p157, %p158
      %p161 = scmp.ne.s32.totalorder %s146, %s160
      %p162 = scmp.eq.s32.totalorder %s31, 0
      %p163 = por %p161, %p162
      %s165 = sadd.s32 %s164, 1
      %p168 = scmp.eq.s32.totalorder %s25, 3
      %p169 = scmp.ne.s32.totalorder %s164, %s166
      %p170 = scmp.eq.s32.totalorder %s25, 0
      %p171 = por %p169, %p170
      %p172 = scmp.ne.s32.totalorder %s164, %s166
      %p173 = scmp.eq.s32.totalorder %s30, 3
      %p174 = por %p172, %p173
      %p175 = scmp.ne.s32.totalorder %s166, %s167
      %p176 = scmp.eq.s32.totalorder %s30, 0
      %p177 = por %p175, %p176
      %p178 = scmp.ne.s32.totalorder %s166, %s167
      %p179 = scmp.eq.s32.totalorder %s31, 3
      %p180 = por %p178, %p179
      %p182 = scmp.ne.s32.totalorder %s167, %s181
      %p183 = scmp.eq.s32.totalorder %s31, 0
      %p184 = por %p182, %p183
      %s186 = sadd.s32 %s185, 1
      %p189 = scmp.eq.s32.totalorder %s25, 3
      %p190 = scmp.ne.s32.totalorder %s185, %s187
      %p191 = scmp.eq.s32.totalorder %s25, 0
      %p192 = por %p190, %p191
      %p193 = scmp.ne.s32.totalorder %s185, %s187
      %p194 = scmp.eq.s32.totalorder %s30, 3
      %p195 = por %p193, %p194
      %p196 = scmp.ne.s32.totalorder %s187, %s188
      %p197 = scmp.eq.s32.totalorder %s30, 0
      %p198 = por %p196, %p197
      %p199 = scmp.ne.s32.totalorder %s187, %s188
      %p200 = scmp.eq.s32.totalorder %s31, 3
      %p201 = por %p199, %p200
      %p203 = scmp.ne.s32.totalorder %s188, %s202
      %p204 = scmp.eq.s32.totalorder %s31, 0
      %p205 = por %p203, %p204
      %s207 = sadd.s32 %s206, 1
      %p210 = scmp.eq.s32.totalorder %s25, 3
      %p211 = scmp.ne.s32.totalorder %s206, %s208
      %p212 = scmp.eq.s32.totalorder %s25, 0
      %p213 = por %p211, %p212
      %p214 = scmp.ne.s32.totalorder %s206, %s208
      %p215 = scmp.eq.s32.totalorder %s30, 3
      %p216 = por %p214, %p215
      %p217 = scmp.ne.s32.totalorder %s208, %s209
      %p218 = scmp.eq.s32.totalorder %s30, 0
      %p219 = por %p217, %p218
      %p220 = scmp.ne.s32.totalorder %s208, %s209
      %p221 = scmp.eq.s32.totalorder %s31, 3
      %p222 = por %p220, %p221
      %p224 = scmp.ne.s32.totalorder %s209, %s223
      %p225 = scmp.eq.s32.totalorder %s31, 0
      %p226 = por %p224, %p225
      %s228 = sadd.s32 %s227, 1
      %p231 = scmp.eq.s32.totalorder %s25, 3
      %p232 = scmp.ne.s32.totalorder %s227, %s229
      %p233 = scmp.eq.s32.totalorder %s25, 0
      %p234 = por %p232, %p233
      %p235 = scmp.ne.s32.totalorder %s227, %s229
      %p236 = scmp.eq.s32.totalorder %s30, 3
      %p237 = por %p235, %p236
      %p238 = scmp.ne.s32.totalorder %s229, %s230
      %p239 = scmp.eq.s32.totalorder %s30, 0
      %p240 = por %p238, %p239
      %p241 = scmp.ne.s32.totalorder %s229, %s230
      %p242 = scmp.eq.s32.totalorder %s31, 3
      %p243 = por %p241, %p242
      %p245 = scmp.ne.s32.totalorder %s230, %s244
      %p246 = scmp.eq.s32.totalorder %s31, 0
      %p247 = por %p245, %p246
      %s249 = sadd.s32 %s248, 1
      %p252 = scmp.eq.s32.totalorder %s25, 3
      %p253 = scmp.ne.s32.totalorder %s248, %s250
      %p254 = scmp.eq.s32.totalorder %s25, 0
      %p255 = por %p253, %p254
      %p256 = scmp.ne.s32.totalorder %s248, %s250
      %p257 = scmp.eq.s32.totalorder %s30, 3
      %p258 = por %p256, %p257
      %p259 = scmp.ne.s32.totalorder %s250, %s251
      %p260 = scmp.eq.s32.totalorder %s30, 0
      %p261 = por %p259, %p260
      %p262 = scmp.ne.s32.totalorder %s250, %s251
      %p263 = scmp.eq.s32.totalorder %s31, 3
      %p264 = por %p262, %p263
      %p266 = scmp.ne.s32.totalorder %s251, %s265
      %p267 = scmp.eq.s32.totalorder %s31, 0
      %p268 = por %p266, %p267
      %s270 = sadd.s32 %s269, 1
      %p273 = scmp.eq.s32.totalorder %s25, 3
      %p274 = scmp.ne.s32.totalorder %s269, %s271
      %p275 = scmp.eq.s32.totalorder %s25, 0
      %p276 = por %p274, %p275
      %p277 = scmp.ne.s32.totalorder %s269, %s271
      %p278 = scmp.eq.s32.totalorder %s30, 3
      %p279 = por %p277, %p278
      %p280 = scmp.ne.s32.totalorder %s271, %s272
      %p281 = scmp.eq.s32.totalorder %s30, 0
      %p282 = por %p280, %p281
      %p283 = scmp.ne.s32.totalorder %s271, %s272
      %p284 = scmp.eq.s32.totalorder %s31, 3
      %p285 = por %p283, %p284
      %p287 = scmp.ne.s32.totalorder %s272, %s286
      %p288 = scmp.eq.s32.totalorder %s31, 0
      %p289 = por %p287, %p288
      %s291 = sadd.s32 %s290, 1
      %p294 = scmp.eq.s32.totalorder %s25, 3
      %p295 = scmp.ne.s32.totalorder %s290, %s292
      %p296 = scmp.eq.s32.totalorder %s25, 0
      %p297 = por %p295, %p296
      %p298 = scmp.ne.s32.totalorder %s290, %s292
      %p299 = scmp.eq.s32.totalorder %s30, 3
      %p300 = por %p298, %p299
      %p301 = scmp.ne.s32.totalorder %s292, %s293
      %p302 = scmp.eq.s32.totalorder %s30, 0
      %p303 = por %p301, %p302
      %p304 = scmp.ne.s32.totalorder %s292, %s293
      %p305 = scmp.eq.s32.totalorder %s31, 3
      %p306 = por %p304, %p305
      %p308 = scmp.ne.s32.totalorder %s293, %s307
      %p309 = scmp.eq.s32.totalorder %s31, 0
      %p310 = por %p308, %p309
      %s312 = sadd.s32 %s311, 1
      %p315 = scmp.eq.s32.totalorder %s25, 3
      %p316 = scmp.ne.s32.totalorder %s311, %s313
      %p317 = scmp.eq.s32.totalorder %s25, 0
      %p318 = por %p316, %p317
      %p319 = scmp.ne.s32.totalorder %s311, %s313
      %p320 = scmp.eq.s32.totalorder %s30, 3
      %p321 = por %p319, %p320
      %p322 = scmp.ne.s32.totalorder %s313, %s314
      %p323 = scmp.eq.s32.totalorder %s30, 0
      %p324 = por %p322, %p323
      %p325 = scmp.ne.s32.totalorder %s313, %s314
      %p326 = scmp.eq.s32.totalorder %s31, 3
      %p327 = por %p325, %p326
      %p329 = scmp.ne.s32.totalorder %s314, %s328
      %p330 = scmp.eq.s32.totalorder %s31, 0
      %p331 = por %p329, %p330
      %s333 = sadd.s32 %s332, 1
      %p336 = scmp.eq.s32.totalorder %s25, 3
      %p337 = scmp.ne.s32.totalorder %s332, %s334
      %p338 = scmp.eq.s32.totalorder %s25, 0
      %p339 = por %p337, %p338
      %p340 = scmp.ne.s32.totalorder %s332, %s334
      %p341 = scmp.eq.s32.totalorder %s30, 3
      %p342 = por %p340, %p341
      %p343 = scmp.ne.s32.totalorder %s334, %s335
      %p344 = scmp.eq.s32.totalorder %s30, 0
      %p345 = por %p343, %p344
      %p346 = scmp.ne.s32.totalorder %s334, %s335
      %p347 = scmp.eq.s32.totalorder %s31, 3
      %p348 = por %p346, %p347
      %p350 = scmp.ne.s32.totalorder %s335, %s349
      %p351 = scmp.eq.s32.totalorder %s31, 0
      %p352 = por %p350, %p351
      %s354 = sadd.s32 %s353, 1
      %p357 = scmp.eq.s32.totalorder %s25, 3
      %p358 = scmp.ne.s32.totalorder %s353, %s355
      %p359 = scmp.eq.s32.totalorder %s25, 0
      %p360 = por %p358, %p359
      %p361 = scmp.ne.s32.totalorder %s353, %s355
      %p362 = scmp.eq.s32.totalorder %s30, 3
      %p363 = por %p361, %p362
      %p364 = scmp.ne.s32.totalorder %s355, %s356
      %p365 = scmp.eq.s32.totalorder %s30, 0
      %p366 = por %p364, %p365
      %p367 = scmp.ne.s32.totalorder %s355, %s356
      %p368 = scmp.eq.s32.totalorder %s31, 3
      %p369 = por %p367, %p368
      %p371 = scmp.ne.s32.totalorder %s356, %s370
      %p372 = scmp.eq.s32.totalorder %s31, 0
      %p373 = por %p371, %p372
      %s374 = ssub.s32 %s25, %s32
      %p375 = scmp.eq.s32.totalorder %s374, 0
      %s377 = sadd.s32 %s376, 1
      %s378 = scalar_select %p375, %s376, %s377
      %p381 = pneg %p375
      %p382 = scmp.eq.s32.totalorder %s25, 3
      %p383 = por %p381, %p382
      %p384 = scmp.ne.s32.totalorder %s376, %s379
      %p385 = scmp.eq.s32.totalorder %s25, 0
      %p386 = por %p384, %p385
      %p387 = scmp.ne.s32.totalorder %s376, %s379
      %p388 = scmp.eq.s32.totalorder %s30, 3
      %p389 = por %p387, %p388
      %p390 = scmp.ne.s32.totalorder %s379, %s380
      %p391 = scmp.eq.s32.totalorder %s30, 0
      %p392 = por %p390, %p391
      %p393 = scmp.ne.s32.totalorder %s379, %s380
      %p394 = scmp.eq.s32.totalorder %s31, 3
      %p395 = por %p393, %p394
      %p397 = scmp.ne.s32.totalorder %s380, %s396
      %p398 = scmp.eq.s32.totalorder %s31, 0
      %p399 = por %p397, %p398
      %p400 = scmp.le.s32.totalorder 1, %s25
      %p401 = scmp.lt.s32.totalorder %s25, 5
      %p402 = pnand %p400, %p401
      %p403 = pneg %p402
      // Predicated region
      $region9: #{tpu_custom_call.1} parent=5 // pred_check
        _
      $region10: #{tpu_custom_call.1} parent=5 // pred_check_branch
        %405 = sbr.rel (%p402) target = $region12
      $region11: #{tpu_custom_call.1} parent=5 // pred_region
        %s406 = ssub.s32 %s25, 1
        // Predicated region
        $region13: #{tpu_custom_call.1} parent=11 // pred_check
          %p407 = pneg %p72
        $region14: #{tpu_custom_call.1} parent=11 // pred_check_branch
          %409 = sbr.rel (%p407) target = $region16
        $region15: #{tpu_custom_call.1} parent=11 // pred_region
          _
        $region16: #{tpu_custom_call.1} parent=11 // pred_fallthru
          _
        // Predicated region
        $region17: #{tpu_custom_call.1} parent=11 // pred_check
          %p410 = pneg %p93
        $region18: #{tpu_custom_call.1} parent=11 // pred_check_branch
          %412 = sbr.rel (%p410) target = $region20
        $region19: #{tpu_custom_call.1} parent=11 // pred_region
          _
        $region20: #{tpu_custom_call.1} parent=11 // pred_fallthru
          _
        // Predicated region
        $region21: #{tpu_custom_call.1} parent=11 // pred_check
          %p413 = pneg %p114
        $region22: #{tpu_custom_call.1} parent=11 // pred_check_branch
          %415 = sbr.rel (%p413) target = $region24
        $region23: #{tpu_custom_call.1} parent=11 // pred_region
          _
        $region24: #{tpu_custom_call.1} parent=11 // pred_fallthru
          _
        // Predicated region
        $region25: #{tpu_custom_call.1} parent=11 // pred_check
          %p416 = pneg %p135
        $region26: #{tpu_custom_call.1} parent=11 // pred_check_branch
          %418 = sbr.rel (%p416) target = $region28
        $region27: #{tpu_custom_call.1} parent=11 // pred_region
          _
        $region28: #{tpu_custom_call.1} parent=11 // pred_fallthru
          _
        // Predicated region
        $region29: #{tpu_custom_call.1} parent=11 // pred_check
          %p419 = pneg %p156
        $region30: #{tpu_custom_call.1} parent=11 // pred_check_branch
          %421 = sbr.rel (%p419) target = $region32
        $region31: #{tpu_custom_call.1} parent=11 // pred_region
          _
        $region32: #{tpu_custom_call.1} parent=11 // pred_fallthru
          _
        // Predicated region
        $region33: #{tpu_custom_call.1} parent=11 // pred_check
          %p422 = pneg %p177
        $region34: #{tpu_custom_call.1} parent=11 // pred_check_branch
          %424 = sbr.rel (%p422) target = $region36
        $region35: #{tpu_custom_call.1} parent=11 // pred_region
          _
        $region36: #{tpu_custom_call.1} parent=11 // pred_fallthru
          _
        // Predicated region
        $region37: #{tpu_custom_call.1} parent=11 // pred_check
          %p425 = pneg %p198
        $region38: #{tpu_custom_call.1} parent=11 // pred_check_branch
          %427 = sbr.rel (%p425) target = $region40
        $region39: #{tpu_custom_call.1} parent=11 // pred_region
          _
        $region40: #{tpu_custom_call.1} parent=11 // pred_fallthru
          _
        // Predicated region
        $region41: #{tpu_custom_call.1} parent=11 // pred_check
          %p428 = pneg %p219
        $region42: #{tpu_custom_call.1} parent=11 // pred_check_branch
          %430 = sbr.rel (%p428) target = $region44
        $region43: #{tpu_custom_call.1} parent=11 // pred_region
          _
        $region44: #{tpu_custom_call.1} parent=11 // pred_fallthru
          _
        // Predicated region
        $region45: #{tpu_custom_call.1} parent=11 // pred_check
          %p431 = pneg %p240
        $region46: #{tpu_custom_call.1} parent=11 // pred_check_branch
          %433 = sbr.rel (%p431) target = $region48
        $region47: #{tpu_custom_call.1} parent=11 // pred_region
          _
        $region48: #{tpu_custom_call.1} parent=11 // pred_fallthru
          _
        // Predicated region
        $region49: #{tpu_custom_call.1} parent=11 // pred_check
          %p434 = pneg %p261
        $region50: #{tpu_custom_call.1} parent=11 // pred_check_branch
          %436 = sbr.rel (%p434) target = $region52
        $region51: #{tpu_custom_call.1} parent=11 // pred_region
          _
        $region52: #{tpu_custom_call.1} parent=11 // pred_fallthru
          _
        // Predicated region
        $region53: #{tpu_custom_call.1} parent=11 // pred_check
          %p437 = pneg %p282
        $region54: #{tpu_custom_call.1} parent=11 // pred_check_branch
          %439 = sbr.rel (%p437) target = $region56
        $region55: #{tpu_custom_call.1} parent=11 // pred_region
          _
        $region56: #{tpu_custom_call.1} parent=11 // pred_fallthru
          _
        // Predicated region
        $region57: #{tpu_custom_call.1} parent=11 // pred_check
          %p440 = pneg %p303
        $region58: #{tpu_custom_call.1} parent=11 // pred_check_branch
          %442 = sbr.rel (%p440) target = $region60
        $region59: #{tpu_custom_call.1} parent=11 // pred_region
          _
        $region60: #{tpu_custom_call.1} parent=11 // pred_fallthru
          _
        // Predicated region
        $region61: #{tpu_custom_call.1} parent=11 // pred_check
          %p443 = pneg %p324
        $region62: #{tpu_custom_call.1} parent=11 // pred_check_branch
          %445 = sbr.rel (%p443) target = $region64
        $region63: #{tpu_custom_call.1} parent=11 // pred_region
          _
        $region64: #{tpu_custom_call.1} parent=11 // pred_fallthru
          _
        // Predicated region
        $region65: #{tpu_custom_call.1} parent=11 // pred_check
          %p446 = pneg %p345
        $region66: #{tpu_custom_call.1} parent=11 // pred_check_branch
          %448 = sbr.rel (%p446) target = $region68
        $region67: #{tpu_custom_call.1} parent=11 // pred_region
          _
        $region68: #{tpu_custom_call.1} parent=11 // pred_fallthru
          _
        // Predicated region
        $region69: #{tpu_custom_call.1} parent=11 // pred_check
          %p449 = pneg %p366
        $region70: #{tpu_custom_call.1} parent=11 // pred_check_branch
          %451 = sbr.rel (%p449) target = $region72
        $region71: #{tpu_custom_call.1} parent=11 // pred_region
          _
        $region72: #{tpu_custom_call.1} parent=11 // pred_fallthru
          _
      $region12: #{tpu_custom_call.1} parent=5 // pred_fallthru
        _
      %p452 = scmp.lt.s32.totalorder %s25, 4
      // Predicated region
      $region73: #{tpu_custom_call.1} parent=5 // pred_check
        %p453 = pneg %p452
      $region74: #{tpu_custom_call.1} parent=5 // pred_check_branch
        %455 = sbr.rel (%p453) target = $region76
      $region75: #{tpu_custom_call.1} parent=5 // pred_region
        // Predicated region
        $region77: #{tpu_custom_call.1} parent=75 // pred_check
          %p456 = pneg %p45
        $region78: #{tpu_custom_call.1} parent=75 // pred_check_branch
          %458 = sbr.rel (%p456) target = $region80
        $region79: #{tpu_custom_call.1} parent=75 // pred_region
          %s459 = smul.u32 4, %s25
          %p460 = scmp.lt.s32.totalorder %s459, 15
          %s461 = scalar_select %p460, %s459, 15
          %s462 = smul.addr %s461, 8
          %s463 = scalar_lea.vmem %s0, %s462
          %s464 = smul.u32 4, %s25
        $region80: #{tpu_custom_call.1} parent=75 // pred_fallthru
          _
      $region76: #{tpu_custom_call.1} parent=5 // pred_fallthru
        _
      %p465 = scmp.le.s32.totalorder 1, %s25
      %p466 = scmp.lt.s32.totalorder %s25, 5
      %p467 = pnand %p465, %p466
      %p468 = pneg %p467
      // Predicated region
      $region81: #{tpu_custom_call.1} parent=5 // pred_check
        _
      $region82: #{tpu_custom_call.1} parent=5 // pred_check_branch
        %470 = sbr.rel (%p467) target = $region84
      $region83: #{tpu_custom_call.1} parent=5 // pred_region
        %s471 = ssub.s32 %s25, 1
        %s472 = smul.u32 4, %s30
        %p473 = scmp.lt.s32.totalorder %s472, 15
        %s474 = scalar_select %p473, %s472, 15
        %s475 = smul.addr %s474, 8
        %s476 = scalar_lea.vmem %s0, %s475
        %p477 = pneg %p51
        %p478 = pneg %p48
        %p479 = pneg %p72
        %p480 = pneg %p69
        %p481 = pneg %p93
        %p482 = pneg %p90
        %p483 = pneg %p114
        %p484 = pneg %p111
        %p485 = pneg %p135
        %p486 = pneg %p132
        %p487 = pneg %p156
        %p488 = pneg %p153
        %p489 = pneg %p177
        %p490 = pneg %p174
        %p491 = pneg %p198
        %p492 = pneg %p195
        %p493 = pneg %p219
        %p494 = pneg %p216
        %p495 = pneg %p240
        %p496 = pneg %p237
        %p497 = pneg %p261
        %p498 = pneg %p258
        %p499 = pneg %p282
        %p500 = pneg %p279
        %p501 = pneg %p303
        %p502 = pneg %p300
        %p503 = pneg %p324
        %p504 = pneg %p321
        %p505 = pneg %p345
        %p506 = pneg %p342
        %p507 = pneg %p366
        %p508 = pneg %p363
        %p509 = pneg %p392
        %p510 = pneg %p389
        %s511 = sand.u32 %s379, 1
        %s512 = scalar_lea.sflag [#allocation3], %s511
        %s513 = sand.u32 %s379, 1
        %s514 = smul.addr %s513, 32
        %s515 = scalar_lea.vmem [#allocation2], %s514
        %s516 = smul.u32 4, %s30
        %p517 = scmp.lt.s32.totalorder %s516, 15
        %s518 = scalar_select %p517, %s516, 15
        %s519 = smul.addr %s518, 8
        %s520 = scalar_lea.vmem %s0, %s519
        %s521 = smul.u32 4, %s30
        %s522 = smul.u32 4, %s30
        %v524 = vld [vmem:[%s520] sm:$0xff]
        %v525 = vld [vmem:[%s520 + $0x8] sm:$0xff]
        %v526 = vld [vmem:[%s520 + $0x10] sm:$0xff]
        %v527 = vld [vmem:[%s520 + $0x18] sm:$0xff]
        %v528 = vlaneseq
        %v529 = vshrl.u32 %v528, 7
        %v530 = vadd.s32 %v529, 8
        %v531 = vadd.s32 %v529, 16
        %v532 = vadd.s32 %v529, 24
        %v533 = vlaneseq
        %v534 = vand.u32 %v533, 127
        %vm535 = vcmp.le.s32.totalorder %v534, %v529
        %vm536 = vcmp.le.s32.totalorder %v534, %v530
        %vm537 = vcmp.le.s32.totalorder %v534, %v531
        %vm538 = vcmp.le.s32.totalorder %v534, %v532
        %vm539 = vcmp.lt.s32.totalorder %v534, 96
        %v540 = vsel %vm539, 1, 0
        %v541 = vcvt.s32.f32 %v540
        %v542 = vld [vmem:[%s1] sm:$0x1]
        %v543 = vld [vmem:[%s2] sm:$0x1]
        %v544 = vmul.f32 %v524, %v541
        %v545 = vmul.f32 %v525, %v541
        %v546 = vmul.f32 %v526, %v541
        %v547 = vmul.f32 %v527, %v541
        %548 = vadd.xlane.f32.xlu0 %v544
        %v549 = vpop.xlane.xlu0 %548
        %550 = vadd.xlane.f32.xlu0 %v545
        %v551 = vpop.xlane.xlu0 %550
        %552 = vadd.xlane.f32.xlu0 %v546
        %v553 = vpop.xlane.xlu0 %552
        %554 = vadd.xlane.f32.xlu0 %v547
        %v555 = vpop.xlane.xlu0 %554
        %v556 = vmul.f32 %v549, 0.010416667
        %v557 = vmul.f32 %v551, 0.010416667
        %v558 = vmul.f32 %v553, 0.010416667
        %v559 = vmul.f32 %v555, 0.010416667
        %v560 = vsub.f32 %v524, %v556
        %v561 = vsub.f32 %v525, %v557
        %v562 = vsub.f32 %v526, %v558
        %v563 = vsub.f32 %v527, %v559
        %v564 = vmul.f32 %v560, %v541
        %v565 = vmul.f32 %v561, %v541
        %v566 = vmul.f32 %v562, %v541
        %v567 = vmul.f32 %v563, %v541
        %v568 = vmul.f32 %v564, %v564
        %v569 = vmul.f32 %v565, %v565
        %v570 = vmul.f32 %v566, %v566
        %v571 = vmul.f32 %v567, %v567
        %572 = vadd.xlane.f32.xlu0 %v568
        %v573 = vpop.xlane.xlu0 %572
        %574 = vadd.xlane.f32.xlu0 %v569
        %v575 = vpop.xlane.xlu0 %574
        %576 = vadd.xlane.f32.xlu0 %v570
        %v577 = vpop.xlane.xlu0 %576
        %578 = vadd.xlane.f32.xlu0 %v571
        %v579 = vpop.xlane.xlu0 %578
        %v580 = vmul.f32 %v573, 0.010416667
        %v581 = vmul.f32 %v575, 0.010416667
        %v582 = vmul.f32 %v577, 0.010416667
        %v583 = vmul.f32 %v579, 0.010416667
        %v584 = vadd.f32 %v580, 1e-05
        %v585 = vadd.f32 %v581, 1e-05
        %v586 = vadd.f32 %v582, 1e-05
        %v587 = vadd.f32 %v583, 1e-05
        %v588 = vrsqrt.pop %v584
        %v589 = vrsqrt.pop %v585
        %v590 = vrsqrt.pop %v586
        %v591 = vrsqrt.pop %v587
        %v592 = vmul.f32 %v564, %v588
        %v593 = vmul.f32 %v565, %v589
        %v594 = vmul.f32 %v566, %v590
        %v595 = vmul.f32 %v567, %v591
        %v597 = vlaneseq
        %v598 = vshrl.u32 %v597, 7
        %v599 = vsub.s32 0, %v598
        %v600 = vrot.slane %v542, %v599
        %v602 = vmul.f32 %v592, %v600
        %v603 = vmul.f32 %v593, %v600
        %v604 = vmul.f32 %v594, %v600
        %v605 = vmul.f32 %v595, %v600
        %v607 = vlaneseq
        %v608 = vshrl.u32 %v607, 7
        %v609 = vsub.s32 0, %v608
        %v610 = vrot.slane %v543, %v609
        %v612 = vadd.f32 %v602, %v610
        %v613 = vadd.f32 %v603, %v610
        %v614 = vadd.f32 %v604, %v610
        %v615 = vadd.f32 %v605, %v610
        %v616 = vpack.c.bf16 %v613, %v612
        %v617 = vpack.c.bf16 %v615, %v614
        %v618 = vld [vmem:[%s3] sm:$0xf]
        %v619 = vld [vmem:[%s3 + $0x4] sm:$0xf]
        %v620 = vld [vmem:[%s3 + $0x8] sm:$0xf]
        %v621 = vld [vmem:[%s3 + $0xc] sm:$0xf]
        %v622 = vld [vmem:[%s3 + $0x10] sm:$0xf]
        %v623 = vld [vmem:[%s3 + $0x14] sm:$0xf]
        %v624 = vld [vmem:[%s3 + $0x18] sm:$0xf]
        %v625 = vld [vmem:[%s3 + $0x1c] sm:$0xf]
        %v626 = vld [vmem:[%s3 + $0x20] sm:$0xf]
        %v627 = vld [vmem:[%s3 + $0x24] sm:$0xf]
        %v628 = vld [vmem:[%s3 + $0x28] sm:$0xf]
        %v629 = vld [vmem:[%s3 + $0x2c] sm:$0xf]
        %v630 = vld [vmem:[%s3 + $0x30] sm:$0xf]
        %v631 = vld [vmem:[%s3 + $0x34] sm:$0xf]
        %v632 = vld [vmem:[%s3 + $0x38] sm:$0xf]
        %v633 = vld [vmem:[%s3 + $0x3c] sm:$0xf]
        %v634 = vld [vmem:[%s3 + $0x40] sm:$0xf]
        %v635 = vld [vmem:[%s3 + $0x44] sm:$0xf]
        %v636 = vld [vmem:[%s3 + $0x48] sm:$0xf]
        %v637 = vld [vmem:[%s3 + $0x4c] sm:$0xf]
        %v638 = vld [vmem:[%s3 + $0x50] sm:$0xf]
        %v639 = vld [vmem:[%s3 + $0x54] sm:$0xf]
        %v640 = vld [vmem:[%s3 + $0x58] sm:$0xf]
        %v641 = vld [vmem:[%s3 + $0x5c] sm:$0xf]
        %v642 = vld [vmem:[%s3 + $0x60] sm:$0xf]
        %v643 = vld [vmem:[%s3 + $0x64] sm:$0xf]
        %v644 = vld [vmem:[%s3 + $0x68] sm:$0xf]
        %v645 = vld [vmem:[%s3 + $0x6c] sm:$0xf]
        %v646 = vld [vmem:[%s3 + $0x70] sm:$0xf]
        %v647 = vld [vmem:[%s3 + $0x74] sm:$0xf]
        %v648 = vld [vmem:[%s3 + $0x78] sm:$0xf]
        %v649 = vld [vmem:[%s3 + $0x7c] sm:$0xf]
        %v650 = vld [vmem:[%s3 + $0x80] sm:$0xf]
        %v651 = vld [vmem:[%s3 + $0x84] sm:$0xf]
        %v652 = vld [vmem:[%s3 + $0x88] sm:$0xf]
        %v653 = vld [vmem:[%s3 + $0x8c] sm:$0xf]
        %v654 = vld [vmem:[%s3 + $0x90] sm:$0xf]
        %v655 = vld [vmem:[%s3 + $0x94] sm:$0xf]
        %v656 = vld [vmem:[%s3 + $0x98] sm:$0xf]
        %v657 = vld [vmem:[%s3 + $0x9c] sm:$0xf]
        %v658 = vld [vmem:[%s3 + $0xa0] sm:$0xf]
        %v659 = vld [vmem:[%s3 + $0xa4] sm:$0xf]
        %v660 = vld [vmem:[%s3 + $0xa8] sm:$0xf]
        %v661 = vld [vmem:[%s3 + $0xac] sm:$0xf]
        %v662 = vld [vmem:[%s3 + $0xb0] sm:$0xf]
        %v663 = vld [vmem:[%s3 + $0xb4] sm:$0xf]
        %v664 = vld [vmem:[%s3 + $0xb8] sm:$0xf]
        %v665 = vld [vmem:[%s3 + $0xbc] sm:$0xf]
        %v666 = vld [vmem:[%s3 + $0xc0] sm:$0xf]
        %v667 = vld [vmem:[%s3 + $0xc4] sm:$0xf]
        %v668 = vld [vmem:[%s3 + $0xc8] sm:$0xf]
        %v669 = vld [vmem:[%s3 + $0xcc] sm:$0xf]
        %v670 = vld [vmem:[%s3 + $0xd0] sm:$0xf]
        %v671 = vld [vmem:[%s3 + $0xd4] sm:$0xf]
        %v672 = vld [vmem:[%s3 + $0xd8] sm:$0xf]
        %v673 = vld [vmem:[%s3 + $0xdc] sm:$0xf]
        %v674 = vld [vmem:[%s3 + $0xe0] sm:$0xf]
        %v675 = vld [vmem:[%s3 + $0xe4] sm:$0xf]
        %v676 = vld [vmem:[%s3 + $0xe8] sm:$0xf]
        %v677 = vld [vmem:[%s3 + $0xec] sm:$0xf]
        %v678 = vld [vmem:[%s3 + $0xf0] sm:$0xf]
        %v679 = vld [vmem:[%s3 + $0xf4] sm:$0xf]
        %v680 = vld [vmem:[%s3 + $0xf8] sm:$0xf]
        %v681 = vld [vmem:[%s3 + $0xfc] sm:$0xf]
        %v682 = vld [vmem:[%s3 + $0x100] sm:$0xf]
        %v683 = vld [vmem:[%s3 + $0x104] sm:$0xf]
        %v684 = vld [vmem:[%s3 + $0x108] sm:$0xf]
        %v685 = vld [vmem:[%s3 + $0x10c] sm:$0xf]
        %v686 = vld [vmem:[%s3 + $0x110] sm:$0xf]
        %v687 = vld [vmem:[%s3 + $0x114] sm:$0xf]
        %v688 = vld [vmem:[%s3 + $0x118] sm:$0xf]
        %v689 = vld [vmem:[%s3 + $0x11c] sm:$0xf]
        %v690 = vld [vmem:[%s3 + $0x120] sm:$0xf]
        %v691 = vld [vmem:[%s3 + $0x124] sm:$0xf]
        %v692 = vld [vmem:[%s3 + $0x128] sm:$0xf]
        %v693 = vld [vmem:[%s3 + $0x12c] sm:$0xf]
        %v694 = vld [vmem:[%s3 + $0x130] sm:$0xf]
        %v695 = vld [vmem:[%s3 + $0x134] sm:$0xf]
        %v696 = vld [vmem:[%s3 + $0x138] sm:$0xf]
        %v697 = vld [vmem:[%s3 + $0x13c] sm:$0xf]
        %v698 = vld [vmem:[%s3 + $0x140] sm:$0xf]
        %v699 = vld [vmem:[%s3 + $0x144] sm:$0xf]
        %v700 = vld [vmem:[%s3 + $0x148] sm:$0xf]
        %v701 = vld [vmem:[%s3 + $0x14c] sm:$0xf]
        %v702 = vld [vmem:[%s3 + $0x150] sm:$0xf]
        %v703 = vld [vmem:[%s3 + $0x154] sm:$0xf]
        %v704 = vld [vmem:[%s3 + $0x158] sm:$0xf]
        %v705 = vld [vmem:[%s3 + $0x15c] sm:$0xf]
        %v706 = vld [vmem:[%s3 + $0x160] sm:$0xf]
        %v707 = vld [vmem:[%s3 + $0x164] sm:$0xf]
        %v708 = vld [vmem:[%s3 + $0x168] sm:$0xf]
        %v709 = vld [vmem:[%s3 + $0x16c] sm:$0xf]
        %v710 = vld [vmem:[%s3 + $0x170] sm:$0xf]
        %v711 = vld [vmem:[%s3 + $0x174] sm:$0xf]
        %v712 = vld [vmem:[%s3 + $0x178] sm:$0xf]
        %v713 = vld [vmem:[%s3 + $0x17c] sm:$0xf]
        %v730 = vunpack.c.l.b16 %v618
        %v731 = vunpack.c.l.b16 %v619
        %v732 = vunpack.c.l.b16 %v620
        %v733 = vunpack.c.l.b16 %v621
        %v734 = vunpack.c.l.b16 %v622
        %v735 = vunpack.c.l.b16 %v623
        %v736 = vunpack.c.l.b16 %v624
        %v737 = vunpack.c.l.b16 %v625
        %v738 = vunpack.c.l.b16 %v626
        %v739 = vunpack.c.l.b16 %v627
        %v740 = vunpack.c.l.b16 %v628
        %v741 = vunpack.c.l.b16 %v629
        %v742 = vunpack.c.l.b16 %v630
        %v743 = vunpack.c.l.b16 %v631
        %v744 = vunpack.c.l.b16 %v632
        %v745 = vunpack.c.l.b16 %v633
        %v746 = vpack.c.b16 %v731, %v730
        %v747 = vpack.c.b16 %v733, %v732
        %v748 = vpack.c.b16 %v735, %v734
        %v749 = vpack.c.b16 %v737, %v736
        %v750 = vpack.c.b16 %v739, %v738
        %v751 = vpack.c.b16 %v741, %v740
        %v752 = vpack.c.b16 %v743, %v742
        %v753 = vpack.c.b16 %v745, %v744
        %762 = vmatprep.subr.bf16.mxu0 0
        %763 = vmatpush1.bf16.msra.mxu0 %v753
        %764 = vmatprep.subr.bf16.mxu0 0
        %765 = vmatpush1.bf16.msra.mxu0 %v752
        %766 = vmatprep.subr.bf16.mxu0 0
        %767 = vmatpush1.bf16.msra.mxu0 %v751
        %768 = vmatprep.subr.bf16.mxu0 0
        %769 = vmatpush1.bf16.msra.mxu0 %v750
        %770 = vmatprep.subr.bf16.mxu0 0
        %771 = vmatpush1.bf16.msra.mxu0 %v749
        %772 = vmatprep.subr.bf16.mxu0 0
        %773 = vmatpush1.bf16.msra.mxu0 %v748
        %774 = vmatprep.subr.bf16.mxu0 0
        %775 = vmatpush1.bf16.msra.mxu0 %v747
        %776 = vmatprep.subr.bf16.mxu0 0
        %777 = vmatpush1.bf16.msra.mxu0 %v746
        %778 = vmatprep.subr.bf16.mxu0 0
        %779 = vmatpush2.bf16.msra.mxu0 0
        %780 = vmatprep.subr.bf16.mxu0 0
        %781 = vmatpush2.bf16.msra.mxu0 0
        %782 = vmatprep.subr.bf16.mxu0 0
        %783 = vmatpush2.bf16.msra.mxu0 0
        %784 = vmatprep.subr.bf16.mxu0 0
        %785 = vmatpush2.bf16.msra.mxu0 0
        %786 = vmatprep.subr.bf16.mxu0 0
        %787 = vmatpush2.bf16.msra.mxu0 0
        %788 = vmatprep.subr.bf16.mxu0 0
        %789 = vmatpush2.bf16.msra.mxu0 0
        %790 = vmatprep.subr.bf16.mxu0 0
        %791 = vmatpush2.bf16.msra.mxu0 0
        %792 = vmatprep.subr.bf16.mxu0 0
        %793 = vmatpush2.bf16.msra.mxu0 0
        %794 = vmatprep.mubr.bf16.mxu0 0
        %795 = vmatmul.mubr.bf16.gmra.mxu0 %v616
        %v796 = vpop.f32.mrf.mxu0
        %v797 = vadd.f32 0.0, %v796
        %v798 = vpop.f32.mrf.mxu0
        %v799 = vpop.f32.mrf.mxu0
        %v800 = vadd.f32 0.0, %v799
        %v801 = vpop.f32.mrf.mxu0
        %802 = vmatprep.mubr.bf16.mxu0 0
        %803 = vmatmul.mubr.bf16.gmra.mxu0 %v617
        %v804 = vpop.f32.mrf.mxu0
        %v805 = vadd.f32 0.0, %v804
        %v806 = vpop.f32.mrf.mxu0
        %v807 = vpop.f32.mrf.mxu0
        %v808 = vadd.f32 0.0, %v807
        %v809 = vpop.f32.mrf.mxu0
        %810 = vdwg.mxu0
        %v827 = vunpack.c.l.b16 %v634
        %v828 = vunpack.c.l.b16 %v635
        %v829 = vunpack.c.l.b16 %v636
        %v830 = vunpack.c.l.b16 %v637
        %v831 = vunpack.c.l.b16 %v638
        %v832 = vunpack.c.l.b16 %v639
        %v833 = vunpack.c.l.b16 %v640
        %v834 = vunpack.c.l.b16 %v641
        %v835 = vunpack.c.l.b16 %v642
        %v836 = vunpack.c.l.b16 %v643
        %v837 = vunpack.c.l.b16 %v644
        %v838 = vunpack.c.l.b16 %v645
        %v839 = vunpack.c.l.b16 %v646
        %v840 = vunpack.c.l.b16 %v647
        %v841 = vunpack.c.l.b16 %v648
        %v842 = vunpack.c.l.b16 %v649
        %v843 = vpack.c.b16 %v828, %v827
        %v844 = vpack.c.b16 %v830, %v829
        %v845 = vpack.c.b16 %v832, %v831
        %v846 = vpack.c.b16 %v834, %v833
        %v847 = vpack.c.b16 %v836, %v835
        %v848 = vpack.c.b16 %v838, %v837
        %v849 = vpack.c.b16 %v840, %v839
        %v850 = vpack.c.b16 %v842, %v841
        %859 = vmatprep.subr.bf16.mxu0 0
        %860 = vmatpush1.bf16.msra.mxu0 %v850
        %861 = vmatprep.subr.bf16.mxu0 0
        %862 = vmatpush1.bf16.msra.mxu0 %v849
        %863 = vmatprep.subr.bf16.mxu0 0
        %864 = vmatpush1.bf16.msra.mxu0 %v848
        %865 = vmatprep.subr.bf16.mxu0 0
        %866 = vmatpush1.bf16.msra.mxu0 %v847
        %867 = vmatprep.subr.bf16.mxu0 0
        %868 = vmatpush1.bf16.msra.mxu0 %v846
        %869 = vmatprep.subr.bf16.mxu0 0
        %870 = vmatpush1.bf16.msra.mxu0 %v845
        %871 = vmatprep.subr.bf16.mxu0 0
        %872 = vmatpush1.bf16.msra.mxu0 %v844
        %873 = vmatprep.subr.bf16.mxu0 0
        %874 = vmatpush1.bf16.msra.mxu0 %v843
        %875 = vmatprep.subr.bf16.mxu0 0
        %876 = vmatpush2.bf16.msra.mxu0 0
        %877 = vmatprep.subr.bf16.mxu0 0
        %878 = vmatpush2.bf16.msra.mxu0 0
        %879 = vmatprep.subr.bf16.mxu0 0
        %880 = vmatpush2.bf16.msra.mxu0 0
        %881 = vmatprep.subr.bf16.mxu0 0
        %882 = vmatpush2.bf16.msra.mxu0 0
        %883 = vmatprep.subr.bf16.mxu0 0
        %884 = vmatpush2.bf16.msra.mxu0 0
        %885 = vmatprep.subr.bf16.mxu0 0
        %886 = vmatpush2.bf16.msra.mxu0 0
        %887 = vmatprep.subr.bf16.mxu0 0
        %888 = vmatpush2.bf16.msra.mxu0 0
        %889 = vmatprep.subr.bf16.mxu0 0
        %890 = vmatpush2.bf16.msra.mxu0 0
        %891 = vmatprep.mubr.bf16.mxu0 0
        %892 = vmatmul.mubr.bf16.gmra.mxu0 %v616
        %v893 = vpop.f32.mrf.mxu0
        %v894 = vadd.f32 0.0, %v893
        %v895 = vpop.f32.mrf.mxu0
        %v896 = vpop.f32.mrf.mxu0
        %v897 = vadd.f32 0.0, %v896
        %v898 = vpop.f32.mrf.mxu0
        %899 = vmatprep.mubr.bf16.mxu0 0
        %900 = vmatmul.mubr.bf16.gmra.mxu0 %v617
        %v901 = vpop.f32.mrf.mxu0
        %v902 = vadd.f32 0.0, %v901
        %v903 = vpop.f32.mrf.mxu0
        %v904 = vpop.f32.mrf.mxu0
        %v905 = vadd.f32 0.0, %v904
        %v906 = vpop.f32.mrf.mxu0
        %907 = vdwg.mxu0
        %v924 = vunpack.c.l.b16 %v650
        %v925 = vunpack.c.l.b16 %v651
        %v926 = vunpack.c.l.b16 %v652
        %v927 = vunpack.c.l.b16 %v653
        %v928 = vunpack.c.l.b16 %v654
        %v929 = vunpack.c.l.b16 %v655
        %v930 = vunpack.c.l.b16 %v656
        %v931 = vunpack.c.l.b16 %v657
        %v932 = vunpack.c.l.b16 %v658
        %v933 = vunpack.c.l.b16 %v659
        %v934 = vunpack.c.l.b16 %v660
        %v935 = vunpack.c.l.b16 %v661
        %v936 = vunpack.c.l.b16 %v662
        %v937 = vunpack.c.l.b16 %v663
        %v938 = vunpack.c.l.b16 %v664
        %v939 = vunpack.c.l.b16 %v665
        %v940 = vpack.c.b16 %v925, %v924
        %v941 = vpack.c.b16 %v927, %v926
        %v942 = vpack.c.b16 %v929, %v928
        %v943 = vpack.c.b16 %v931, %v930
        %v944 = vpack.c.b16 %v933, %v932
        %v945 = vpack.c.b16 %v935, %v934
        %v946 = vpack.c.b16 %v937, %v936
        %v947 = vpack.c.b16 %v939, %v938
        %956 = vmatprep.subr.bf16.mxu0 0
        %957 = vmatpush1.bf16.msra.mxu0 %v947
        %958 = vmatprep.subr.bf16.mxu0 0
        %959 = vmatpush1.bf16.msra.mxu0 %v946
        %960 = vmatprep.subr.bf16.mxu0 0
        %961 = vmatpush1.bf16.msra.mxu0 %v945
        %962 = vmatprep.subr.bf16.mxu0 0
        %963 = vmatpush1.bf16.msra.mxu0 %v944
        %964 = vmatprep.subr.bf16.mxu0 0
        %965 = vmatpush1.bf16.msra.mxu0 %v943
        %966 = vmatprep.subr.bf16.mxu0 0
        %967 = vmatpush1.bf16.msra.mxu0 %v942
        %968 = vmatprep.subr.bf16.mxu0 0
        %969 = vmatpush1.bf16.msra.mxu0 %v941
        %970 = vmatprep.subr.bf16.mxu0 0
        %971 = vmatpush1.bf16.msra.mxu0 %v940
        %972 = vmatprep.subr.bf16.mxu0 0
        %973 = vmatpush2.bf16.msra.mxu0 0
        %974 = vmatprep.subr.bf16.mxu0 0
        %975 = vmatpush2.bf16.msra.mxu0 0
        %976 = vmatprep.subr.bf16.mxu0 0
        %977 = vmatpush2.bf16.msra.mxu0 0
        %978 = vmatprep.subr.bf16.mxu0 0
        %979 = vmatpush2.bf16.msra.mxu0 0
        %980 = vmatprep.subr.bf16.mxu0 0
        %981 = vmatpush2.bf16.msra.mxu0 0
        %982 = vmatprep.subr.bf16.mxu0 0
        %983 = vmatpush2.bf16.msra.mxu0 0
        %984 = vmatprep.subr.bf16.mxu0 0
        %985 = vmatpush2.bf16.msra.mxu0 0
        %986 = vmatprep.subr.bf16.mxu0 0
        %987 = vmatpush2.bf16.msra.mxu0 0
        %988 = vmatprep.mubr.bf16.mxu0 0
        %989 = vmatmul.mubr.bf16.gmra.mxu0 %v616
        %v990 = vpop.f32.mrf.mxu0
        %v991 = vadd.f32 0.0, %v990
        %v992 = vpop.f32.mrf.mxu0
        %v993 = vpop.f32.mrf.mxu0
        %v994 = vadd.f32 0.0, %v993
        %v995 = vpop.f32.mrf.mxu0
        %996 = vmatprep.mubr.bf16.mxu0 0
        %997 = vmatmul.mubr.bf16.gmra.mxu0 %v617
        %v998 = vpop.f32.mrf.mxu0
        %v999 = vadd.f32 0.0, %v998
        %v1000 = vpop.f32.mrf.mxu0
        %v1001 = vpop.f32.mrf.mxu0
        %v1002 = vadd.f32 0.0, %v1001
        %v1003 = vpop.f32.mrf.mxu0
        %1004 = vdwg.mxu0
        %v1021 = vunpack.c.l.b16 %v666
        %v1022 = vunpack.c.l.b16 %v667
        %v1023 = vunpack.c.l.b16 %v668
        %v1024 = vunpack.c.l.b16 %v669
        %v1025 = vunpack.c.l.b16 %v670
        %v1026 = vunpack.c.l.b16 %v671
        %v1027 = vunpack.c.l.b16 %v672
        %v1028 = vunpack.c.l.b16 %v673
        %v1029 = vunpack.c.l.b16 %v674
        %v1030 = vunpack.c.l.b16 %v675
        %v1031 = vunpack.c.l.b16 %v676
        %v1032 = vunpack.c.l.b16 %v677
        %v1033 = vunpack.c.l.b16 %v678
        %v1034 = vunpack.c.l.b16 %v679
        %v1035 = vunpack.c.l.b16 %v680
        %v1036 = vunpack.c.l.b16 %v681
        %v1037 = vpack.c.b16 %v1022, %v1021
        %v1038 = vpack.c.b16 %v1024, %v1023
        %v1039 = vpack.c.b16 %v1026, %v1025
        %v1040 = vpack.c.b16 %v1028, %v1027
        %v1041 = vpack.c.b16 %v1030, %v1029
        %v1042 = vpack.c.b16 %v1032, %v1031
        %v1043 = vpack.c.b16 %v1034, %v1033
        %v1044 = vpack.c.b16 %v1036, %v1035
        %1053 = vmatprep.subr.bf16.mxu0 0
        %1054 = vmatpush1.bf16.msra.mxu0 %v1044
        %1055 = vmatprep.subr.bf16.mxu0 0
        %1056 = vmatpush1.bf16.msra.mxu0 %v1043
        %1057 = vmatprep.subr.bf16.mxu0 0
        %1058 = vmatpush1.bf16.msra.mxu0 %v1042
        %1059 = vmatprep.subr.bf16.mxu0 0
        %1060 = vmatpush1.bf16.msra.mxu0 %v1041
        %1061 = vmatprep.subr.bf16.mxu0 0
        %1062 = vmatpush1.bf16.msra.mxu0 %v1040
        %1063 = vmatprep.subr.bf16.mxu0 0
        %1064 = vmatpush1.bf16.msra.mxu0 %v1039
        %1065 = vmatprep.subr.bf16.mxu0 0
        %1066 = vmatpush1.bf16.msra.mxu0 %v1038
        %1067 = vmatprep.subr.bf16.mxu0 0
        %1068 = vmatpush1.bf16.msra.mxu0 %v1037
        %1069 = vmatprep.subr.bf16.mxu0 0
        %1070 = vmatpush2.bf16.msra.mxu0 0
        %1071 = vmatprep.subr.bf16.mxu0 0
        %1072 = vmatpush2.bf16.msra.mxu0 0
        %1073 = vmatprep.subr.bf16.mxu0 0
        %1074 = vmatpush2.bf16.msra.mxu0 0
        %1075 = vmatprep.subr.bf16.mxu0 0
        %1076 = vmatpush2.bf16.msra.mxu0 0
        %1077 = vmatprep.subr.bf16.mxu0 0
        %1078 = vmatpush2.bf16.msra.mxu0 0
        %1079 = vmatprep.subr.bf16.mxu0 0
        %1080 = vmatpush2.bf16.msra.mxu0 0
        %1081 = vmatprep.subr.bf16.mxu0 0
        %1082 = vmatpush2.bf16.msra.mxu0 0
        %1083 = vmatprep.subr.bf16.mxu0 0
        %1084 = vmatpush2.bf16.msra.mxu0 0
        %1085 = vmatprep.mubr.bf16.mxu0 0
        %1086 = vmatmul.mubr.bf16.gmra.mxu0 %v616
        %v1087 = vpop.f32.mrf.mxu0
        %v1088 = vadd.f32 0.0, %v1087
        %v1089 = vpop.f32.mrf.mxu0
        %v1090 = vpop.f32.mrf.mxu0
        %v1091 = vadd.f32 0.0, %v1090
        %v1092 = vpop.f32.mrf.mxu0
        %1093 = vmatprep.mubr.bf16.mxu0 0
        %1094 = vmatmul.mubr.bf16.gmra.mxu0 %v617
        %v1095 = vpop.f32.mrf.mxu0
        %v1096 = vadd.f32 0.0, %v1095
        %v1097 = vpop.f32.mrf.mxu0
        %v1098 = vpop.f32.mrf.mxu0
        %v1099 = vadd.f32 0.0, %v1098
        %v1100 = vpop.f32.mrf.mxu0
        %1101 = vdwg.mxu0
        %v1118 = vunpack.c.l.b16 %v682
        %v1119 = vunpack.c.l.b16 %v683
        %v1120 = vunpack.c.l.b16 %v684
        %v1121 = vunpack.c.l.b16 %v685
        %v1122 = vunpack.c.l.b16 %v686
        %v1123 = vunpack.c.l.b16 %v687
        %v1124 = vunpack.c.l.b16 %v688
        %v1125 = vunpack.c.l.b16 %v689
        %v1126 = vunpack.c.l.b16 %v690
        %v1127 = vunpack.c.l.b16 %v691
        %v1128 = vunpack.c.l.b16 %v692
        %v1129 = vunpack.c.l.b16 %v693
        %v1130 = vunpack.c.l.b16 %v694
        %v1131 = vunpack.c.l.b16 %v695
        %v1132 = vunpack.c.l.b16 %v696
        %v1133 = vunpack.c.l.b16 %v697
        %v1134 = vpack.c.b16 %v1119, %v1118
        %v1135 = vpack.c.b16 %v1121, %v1120
        %v1136 = vpack.c.b16 %v1123, %v1122
        %v1137 = vpack.c.b16 %v1125, %v1124
        %v1138 = vpack.c.b16 %v1127, %v1126
        %v1139 = vpack.c.b16 %v1129, %v1128
        %v1140 = vpack.c.b16 %v1131, %v1130
        %v1141 = vpack.c.b16 %v1133, %v1132
        %1150 = vmatprep.subr.bf16.mxu0 0
        %1151 = vmatpush1.bf16.msra.mxu0 %v1141
        %1152 = vmatprep.subr.bf16.mxu0 0
        %1153 = vmatpush1.bf16.msra.mxu0 %v1140
        %1154 = vmatprep.subr.bf16.mxu0 0
        %1155 = vmatpush1.bf16.msra.mxu0 %v1139
        %1156 = vmatprep.subr.bf16.mxu0 0
        %1157 = vmatpush1.bf16.msra.mxu0 %v1138
        %1158 = vmatprep.subr.bf16.mxu0 0
        %1159 = vmatpush1.bf16.msra.mxu0 %v1137
        %1160 = vmatprep.subr.bf16.mxu0 0
        %1161 = vmatpush1.bf16.msra.mxu0 %v1136
        %1162 = vmatprep.subr.bf16.mxu0 0
        %1163 = vmatpush1.bf16.msra.mxu0 %v1135
        %1164 = vmatprep.subr.bf16.mxu0 0
        %1165 = vmatpush1.bf16.msra.mxu0 %v1134
        %1166 = vmatprep.subr.bf16.mxu0 0
        %1167 = vmatpush2.bf16.msra.mxu0 0
        %1168 = vmatprep.subr.bf16.mxu0 0
        %1169 = vmatpush2.bf16.msra.mxu0 0
        %1170 = vmatprep.subr.bf16.mxu0 0
        %1171 = vmatpush2.bf16.msra.mxu0 0
        %1172 = vmatprep.subr.bf16.mxu0 0
        %1173 = vmatpush2.bf16.msra.mxu0 0
        %1174 = vmatprep.subr.bf16.mxu0 0
        %1175 = vmatpush2.bf16.msra.mxu0 0
        %1176 = vmatprep.subr.bf16.mxu0 0
        %1177 = vmatpush2.bf16.msra.mxu0 0
        %1178 = vmatprep.subr.bf16.mxu0 0
        %1179 = vmatpush2.bf16.msra.mxu0 0
        %1180 = vmatprep.subr.bf16.mxu0 0
        %1181 = vmatpush2.bf16.msra.mxu0 0
        %1182 = vmatprep.mubr.bf16.mxu0 0
        %1183 = vmatmul.mubr.bf16.gmra.mxu0 %v616
        %v1184 = vpop.f32.mrf.mxu0
        %v1185 = vadd.f32 0.0, %v1184
        %v1186 = vpop.f32.mrf.mxu0
        %v1187 = vpop.f32.mrf.mxu0
        %v1188 = vadd.f32 0.0, %v1187
        %v1189 = vpop.f32.mrf.mxu0
        %1190 = vmatprep.mubr.bf16.mxu0 0
        %1191 = vmatmul.mubr.bf16.gmra.mxu0 %v617
        %v1192 = vpop.f32.mrf.mxu0
        %v1193 = vadd.f32 0.0, %v1192
        %v1194 = vpop.f32.mrf.mxu0
        %v1195 = vpop.f32.mrf.mxu0
        %v1196 = vadd.f32 0.0, %v1195
        %v1197 = vpop.f32.mrf.mxu0
        %1198 = vdwg.mxu0
        %v1215 = vunpack.c.l.b16 %v698
        %v1216 = vunpack.c.l.b16 %v699
        %v1217 = vunpack.c.l.b16 %v700
        %v1218 = vunpack.c.l.b16 %v701
        %v1219 = vunpack.c.l.b16 %v702
        %v1220 = vunpack.c.l.b16 %v703
        %v1221 = vunpack.c.l.b16 %v704
        %v1222 = vunpack.c.l.b16 %v705
        %v1223 = vunpack.c.l.b16 %v706
        %v1224 = vunpack.c.l.b16 %v707
        %v1225 = vunpack.c.l.b16 %v708
        %v1226 = vunpack.c.l.b16 %v709
        %v1227 = vunpack.c.l.b16 %v710
        %v1228 = vunpack.c.l.b16 %v711
        %v1229 = vunpack.c.l.b16 %v712
        %v1230 = vunpack.c.l.b16 %v713
        %v1231 = vpack.c.b16 %v1216, %v1215
        %v1232 = vpack.c.b16 %v1218, %v1217
        %v1233 = vpack.c.b16 %v1220, %v1219
        %v1234 = vpack.c.b16 %v1222, %v1221
        %v1235 = vpack.c.b16 %v1224, %v1223
        %v1236 = vpack.c.b16 %v1226, %v1225
        %v1237 = vpack.c.b16 %v1228, %v1227
        %v1238 = vpack.c.b16 %v1230, %v1229
        %1247 = vmatprep.subr.bf16.mxu0 0
        %1248 = vmatpush1.bf16.msra.mxu0 %v1238
        %1249 = vmatprep.subr.bf16.mxu0 0
        %1250 = vmatpush1.bf16.msra.mxu0 %v1237
        %1251 = vmatprep.subr.bf16.mxu0 0
        %1252 = vmatpush1.bf16.msra.mxu0 %v1236
        %1253 = vmatprep.subr.bf16.mxu0 0
        %1254 = vmatpush1.bf16.msra.mxu0 %v1235
        %1255 = vmatprep.subr.bf16.mxu0 0
        %1256 = vmatpush1.bf16.msra.mxu0 %v1234
        %1257 = vmatprep.subr.bf16.mxu0 0
        %1258 = vmatpush1.bf16.msra.mxu0 %v1233
        %1259 = vmatprep.subr.bf16.mxu0 0
        %1260 = vmatpush1.bf16.msra.mxu0 %v1232
        %1261 = vmatprep.subr.bf16.mxu0 0
        %1262 = vmatpush1.bf16.msra.mxu0 %v1231
        %1263 = vmatprep.subr.bf16.mxu0 0
        %1264 = vmatpush2.bf16.msra.mxu0 0
        %1265 = vmatprep.subr.bf16.mxu0 0
        %1266 = vmatpush2.bf16.msra.mxu0 0
        %1267 = vmatprep.subr.bf16.mxu0 0
        %1268 = vmatpush2.bf16.msra.mxu0 0
        %1269 = vmatprep.subr.bf16.mxu0 0
        %1270 = vmatpush2.bf16.msra.mxu0 0
        %1271 = vmatprep.subr.bf16.mxu0 0
        %1272 = vmatpush2.bf16.msra.mxu0 0
        %1273 = vmatprep.subr.bf16.mxu0 0
        %1274 = vmatpush2.bf16.msra.mxu0 0
        %1275 = vmatprep.subr.bf16.mxu0 0
        %1276 = vmatpush2.bf16.msra.mxu0 0
        %1277 = vmatprep.subr.bf16.mxu0 0
        %1278 = vmatpush2.bf16.msra.mxu0 0
        %1279 = vmatprep.mubr.bf16.mxu0 0
        %1280 = vmatmul.mubr.bf16.gmra.mxu0 %v616
        %v1281 = vpop.f32.mrf.mxu0
        %v1282 = vadd.f32 0.0, %v1281
        %v1283 = vpop.f32.mrf.mxu0
        %v1284 = vpop.f32.mrf.mxu0
        %v1285 = vadd.f32 0.0, %v1284
        %v1286 = vpop.f32.mrf.mxu0
        %1287 = vmatprep.mubr.bf16.mxu0 0
        %1288 = vmatmul.mubr.bf16.gmra.mxu0 %v617
        %v1289 = vpop.f32.mrf.mxu0
        %v1290 = vadd.f32 0.0, %v1289
        %v1291 = vpop.f32.mrf.mxu0
        %v1292 = vpop.f32.mrf.mxu0
        %v1293 = vadd.f32 0.0, %v1292
        %v1294 = vpop.f32.mrf.mxu0
        %1295 = vdwg.mxu0
        %v1296 = vld [vmem:[%s4] sm:$0xf]
        %v1297 = vld [vmem:[%s4 + $0x4] sm:$0xf]
        %v1298 = vld [vmem:[%s4 + $0x8] sm:$0xf]
        %v1299 = vld [vmem:[%s4 + $0xc] sm:$0xf]
        %v1300 = vld [vmem:[%s4 + $0x10] sm:$0xf]
        %v1301 = vld [vmem:[%s4 + $0x14] sm:$0xf]
        %v1302 = vld [vmem:[%s4 + $0x18] sm:$0xf]
        %v1303 = vld [vmem:[%s4 + $0x1c] sm:$0xf]
        %v1304 = vld [vmem:[%s4 + $0x20] sm:$0xf]
        %v1305 = vld [vmem:[%s4 + $0x24] sm:$0xf]
        %v1306 = vld [vmem:[%s4 + $0x28] sm:$0xf]
        %v1307 = vld [vmem:[%s4 + $0x2c] sm:$0xf]
        %v1308 = vld [vmem:[%s4 + $0x30] sm:$0xf]
        %v1309 = vld [vmem:[%s4 + $0x34] sm:$0xf]
        %v1310 = vld [vmem:[%s4 + $0x38] sm:$0xf]
        %v1311 = vld [vmem:[%s4 + $0x3c] sm:$0xf]
        %v1312 = vld [vmem:[%s4 + $0x40] sm:$0xf]
        %v1313 = vld [vmem:[%s4 + $0x44] sm:$0xf]
        %v1314 = vld [vmem:[%s4 + $0x48] sm:$0xf]
        %v1315 = vld [vmem:[%s4 + $0x4c] sm:$0xf]
        %v1316 = vld [vmem:[%s4 + $0x50] sm:$0xf]
        %v1317 = vld [vmem:[%s4 + $0x54] sm:$0xf]
        %v1318 = vld [vmem:[%s4 + $0x58] sm:$0xf]
        %v1319 = vld [vmem:[%s4 + $0x5c] sm:$0xf]
        %v1320 = vld [vmem:[%s4 + $0x60] sm:$0xf]
        %v1321 = vld [vmem:[%s4 + $0x64] sm:$0xf]
        %v1322 = vld [vmem:[%s4 + $0x68] sm:$0xf]
        %v1323 = vld [vmem:[%s4 + $0x6c] sm:$0xf]
        %v1324 = vld [vmem:[%s4 + $0x70] sm:$0xf]
        %v1325 = vld [vmem:[%s4 + $0x74] sm:$0xf]
        %v1326 = vld [vmem:[%s4 + $0x78] sm:$0xf]
        %v1327 = vld [vmem:[%s4 + $0x7c] sm:$0xf]
        %v1328 = vld [vmem:[%s4 + $0x80] sm:$0xf]
        %v1329 = vld [vmem:[%s4 + $0x84] sm:$0xf]
        %v1330 = vld [vmem:[%s4 + $0x88] sm:$0xf]
        %v1331 = vld [vmem:[%s4 + $0x8c] sm:$0xf]
        %v1332 = vld [vmem:[%s4 + $0x90] sm:$0xf]
        %v1333 = vld [vmem:[%s4 + $0x94] sm:$0xf]
        %v1334 = vld [vmem:[%s4 + $0x98] sm:$0xf]
        %v1335 = vld [vmem:[%s4 + $0x9c] sm:$0xf]
        %v1336 = vld [vmem:[%s4 + $0xa0] sm:$0xf]
        %v1337 = vld [vmem:[%s4 + $0xa4] sm:$0xf]
        %v1338 = vld [vmem:[%s4 + $0xa8] sm:$0xf]
        %v1339 = vld [vmem:[%s4 + $0xac] sm:$0xf]
        %v1340 = vld [vmem:[%s4 + $0xb0] sm:$0xf]
        %v1341 = vld [vmem:[%s4 + $0xb4] sm:$0xf]
        %v1342 = vld [vmem:[%s4 + $0xb8] sm:$0xf]
        %v1343 = vld [vmem:[%s4 + $0xbc] sm:$0xf]
        %v1344 = vld [vmem:[%s4 + $0xc0] sm:$0xf]
        %v1345 = vld [vmem:[%s4 + $0xc4] sm:$0xf]
        %v1346 = vld [vmem:[%s4 + $0xc8] sm:$0xf]
        %v1347 = vld [vmem:[%s4 + $0xcc] sm:$0xf]
        %v1348 = vld [vmem:[%s4 + $0xd0] sm:$0xf]
        %v1349 = vld [vmem:[%s4 + $0xd4] sm:$0xf]
        %v1350 = vld [vmem:[%s4 + $0xd8] sm:$0xf]
        %v1351 = vld [vmem:[%s4 + $0xdc] sm:$0xf]
        %v1352 = vld [vmem:[%s4 + $0xe0] sm:$0xf]
        %v1353 = vld [vmem:[%s4 + $0xe4] sm:$0xf]
        %v1354 = vld [vmem:[%s4 + $0xe8] sm:$0xf]
        %v1355 = vld [vmem:[%s4 + $0xec] sm:$0xf]
        %v1356 = vld [vmem:[%s4 + $0xf0] sm:$0xf]
        %v1357 = vld [vmem:[%s4 + $0xf4] sm:$0xf]
        %v1358 = vld [vmem:[%s4 + $0xf8] sm:$0xf]
        %v1359 = vld [vmem:[%s4 + $0xfc] sm:$0xf]
        %v1360 = vld [vmem:[%s4 + $0x100] sm:$0xf]
        %v1361 = vld [vmem:[%s4 + $0x104] sm:$0xf]
        %v1362 = vld [vmem:[%s4 + $0x108] sm:$0xf]
        %v1363 = vld [vmem:[%s4 + $0x10c] sm:$0xf]
        %v1364 = vld [vmem:[%s4 + $0x110] sm:$0xf]
        %v1365 = vld [vmem:[%s4 + $0x114] sm:$0xf]
        %v1366 = vld [vmem:[%s4 + $0x118] sm:$0xf]
        %v1367 = vld [vmem:[%s4 + $0x11c] sm:$0xf]
        %v1368 = vld [vmem:[%s4 + $0x120] sm:$0xf]
        %v1369 = vld [vmem:[%s4 + $0x124] sm:$0xf]
        %v1370 = vld [vmem:[%s4 + $0x128] sm:$0xf]
        %v1371 = vld [vmem:[%s4 + $0x12c] sm:$0xf]
        %v1372 = vld [vmem:[%s4 + $0x130] sm:$0xf]
        %v1373 = vld [vmem:[%s4 + $0x134] sm:$0xf]
        %v1374 = vld [vmem:[%s4 + $0x138] sm:$0xf]
        %v1375 = vld [vmem:[%s4 + $0x13c] sm:$0xf]
        %v1376 = vld [vmem:[%s4 + $0x140] sm:$0xf]
        %v1377 = vld [vmem:[%s4 + $0x144] sm:$0xf]
        %v1378 = vld [vmem:[%s4 + $0x148] sm:$0xf]
        %v1379 = vld [vmem:[%s4 + $0x14c] sm:$0xf]
        %v1380 = vld [vmem:[%s4 + $0x150] sm:$0xf]
        %v1381 = vld [vmem:[%s4 + $0x154] sm:$0xf]
        %v1382 = vld [vmem:[%s4 + $0x158] sm:$0xf]
        %v1383 = vld [vmem:[%s4 + $0x15c] sm:$0xf]
        %v1384 = vld [vmem:[%s4 + $0x160] sm:$0xf]
        %v1385 = vld [vmem:[%s4 + $0x164] sm:$0xf]
        %v1386 = vld [vmem:[%s4 + $0x168] sm:$0xf]
        %v1387 = vld [vmem:[%s4 + $0x16c] sm:$0xf]
        %v1388 = vld [vmem:[%s4 + $0x170] sm:$0xf]
        %v1389 = vld [vmem:[%s4 + $0x174] sm:$0xf]
        %v1390 = vld [vmem:[%s4 + $0x178] sm:$0xf]
        %v1391 = vld [vmem:[%s4 + $0x17c] sm:$0xf]
        %v1408 = vunpack.c.l.b16 %v1296
        %v1409 = vunpack.c.l.b16 %v1297
        %v1410 = vunpack.c.l.b16 %v1298
        %v1411 = vunpack.c.l.b16 %v1299
        %v1412 = vunpack.c.l.b16 %v1300
        %v1413 = vunpack.c.l.b16 %v1301
        %v1414 = vunpack.c.l.b16 %v1302
        %v1415 = vunpack.c.l.b16 %v1303
        %v1416 = vunpack.c.l.b16 %v1304
        %v1417 = vunpack.c.l.b16 %v1305
        %v1418 = vunpack.c.l.b16 %v1306
        %v1419 = vunpack.c.l.b16 %v1307
        %v1420 = vunpack.c.l.b16 %v1308
        %v1421 = vunpack.c.l.b16 %v1309
        %v1422 = vunpack.c.l.b16 %v1310
        %v1423 = vunpack.c.l.b16 %v1311
        %v1424 = vpack.c.b16 %v1409, %v1408
        %v1425 = vpack.c.b16 %v1411, %v1410
        %v1426 = vpack.c.b16 %v1413, %v1412
        %v1427 = vpack.c.b16 %v1415, %v1414
        %v1428 = vpack.c.b16 %v1417, %v1416
        %v1429 = vpack.c.b16 %v1419, %v1418
        %v1430 = vpack.c.b16 %v1421, %v1420
        %v1431 = vpack.c.b16 %v1423, %v1422
        %1440 = vmatprep.subr.bf16.mxu0 0
        %1441 = vmatpush1.bf16.msra.mxu0 %v1431
        %1442 = vmatprep.subr.bf16.mxu0 0
        %1443 = vmatpush1.bf16.msra.mxu0 %v1430
        %1444 = vmatprep.subr.bf16.mxu0 0
        %1445 = vmatpush1.bf16.msra.mxu0 %v1429
        %1446 = vmatprep.subr.bf16.mxu0 0
        %1447 = vmatpush1.bf16.msra.mxu0 %v1428
        %1448 = vmatprep.subr.bf16.mxu0 0
        %1449 = vmatpush1.bf16.msra.mxu0 %v1427
        %1450 = vmatprep.subr.bf16.mxu0 0
        %1451 = vmatpush1.bf16.msra.mxu0 %v1426
        %1452 = vmatprep.subr.bf16.mxu0 0
        %1453 = vmatpush1.bf16.msra.mxu0 %v1425
        %1454 = vmatprep.subr.bf16.mxu0 0
        %1455 = vmatpush1.bf16.msra.mxu0 %v1424
        %1456 = vmatprep.subr.bf16.mxu0 0
        %1457 = vmatpush2.bf16.msra.mxu0 0
        %1458 = vmatprep.subr.bf16.mxu0 0
        %1459 = vmatpush2.bf16.msra.mxu0 0
        %1460 = vmatprep.subr.bf16.mxu0 0
        %1461 = vmatpush2.bf16.msra.mxu0 0
        %1462 = vmatprep.subr.bf16.mxu0 0
        %1463 = vmatpush2.bf16.msra.mxu0 0
        %1464 = vmatprep.subr.bf16.mxu0 0
        %1465 = vmatpush2.bf16.msra.mxu0 0
        %1466 = vmatprep.subr.bf16.mxu0 0
        %1467 = vmatpush2.bf16.msra.mxu0 0
        %1468 = vmatprep.subr.bf16.mxu0 0
        %1469 = vmatpush2.bf16.msra.mxu0 0
        %1470 = vmatprep.subr.bf16.mxu0 0
        %1471 = vmatpush2.bf16.msra.mxu0 0
        %1472 = vmatprep.mubr.bf16.mxu0 0
        %1473 = vmatmul.mubr.bf16.gmra.mxu0 %v616
        %v1474 = vpop.f32.mrf.mxu0
        %v1475 = vadd.f32 0.0, %v1474
        %v1476 = vpop.f32.mrf.mxu0
        %v1477 = vpop.f32.mrf.mxu0
        %v1478 = vadd.f32 0.0, %v1477
        %v1479 = vpop.f32.mrf.mxu0
        %1480 = vmatprep.mubr.bf16.mxu0 0
        %1481 = vmatmul.mubr.bf16.gmra.mxu0 %v617
        %v1482 = vpop.f32.mrf.mxu0
        %v1483 = vadd.f32 0.0, %v1482
        %v1484 = vpop.f32.mrf.mxu0
        %v1485 = vpop.f32.mrf.mxu0
        %v1486 = vadd.f32 0.0, %v1485
        %v1487 = vpop.f32.mrf.mxu0
        %1488 = vdwg.mxu0
        %v1505 = vunpack.c.l.b16 %v1312
        %v1506 = vunpack.c.l.b16 %v1313
        %v1507 = vunpack.c.l.b16 %v1314
        %v1508 = vunpack.c.l.b16 %v1315
        %v1509 = vunpack.c.l.b16 %v1316
        %v1510 = vunpack.c.l.b16 %v1317
        %v1511 = vunpack.c.l.b16 %v1318
        %v1512 = vunpack.c.l.b16 %v1319
        %v1513 = vunpack.c.l.b16 %v1320
        %v1514 = vunpack.c.l.b16 %v1321
        %v1515 = vunpack.c.l.b16 %v1322
        %v1516 = vunpack.c.l.b16 %v1323
        %v1517 = vunpack.c.l.b16 %v1324
        %v1518 = vunpack.c.l.b16 %v1325
        %v1519 = vunpack.c.l.b16 %v1326
        %v1520 = vunpack.c.l.b16 %v1327
        %v1521 = vpack.c.b16 %v1506, %v1505
        %v1522 = vpack.c.b16 %v1508, %v1507
        %v1523 = vpack.c.b16 %v1510, %v1509
        %v1524 = vpack.c.b16 %v1512, %v1511
        %v1525 = vpack.c.b16 %v1514, %v1513
        %v1526 = vpack.c.b16 %v1516, %v1515
        %v1527 = vpack.c.b16 %v1518, %v1517
        %v1528 = vpack.c.b16 %v1520, %v1519
        %1537 = vmatprep.subr.bf16.mxu0 0
        %1538 = vmatpush1.bf16.msra.mxu0 %v1528
        %1539 = vmatprep.subr.bf16.mxu0 0
        %1540 = vmatpush1.bf16.msra.mxu0 %v1527
        %1541 = vmatprep.subr.bf16.mxu0 0
        %1542 = vmatpush1.bf16.msra.mxu0 %v1526
        %1543 = vmatprep.subr.bf16.mxu0 0
        %1544 = vmatpush1.bf16.msra.mxu0 %v1525
        %1545 = vmatprep.subr.bf16.mxu0 0
        %1546 = vmatpush1.bf16.msra.mxu0 %v1524
        %1547 = vmatprep.subr.bf16.mxu0 0
        %1548 = vmatpush1.bf16.msra.mxu0 %v1523
        %1549 = vmatprep.subr.bf16.mxu0 0
        %1550 = vmatpush1.bf16.msra.mxu0 %v1522
        %1551 = vmatprep.subr.bf16.mxu0 0
        %1552 = vmatpush1.bf16.msra.mxu0 %v1521
        %1553 = vmatprep.subr.bf16.mxu0 0
        %1554 = vmatpush2.bf16.msra.mxu0 0
        %1555 = vmatprep.subr.bf16.mxu0 0
        %1556 = vmatpush2.bf16.msra.mxu0 0
        %1557 = vmatprep.subr.bf16.mxu0 0
        %1558 = vmatpush2.bf16.msra.mxu0 0
        %1559 = vmatprep.subr.bf16.mxu0 0
        %1560 = vmatpush2.bf16.msra.mxu0 0
        %1561 = vmatprep.subr.bf16.mxu0 0
        %1562 = vmatpush2.bf16.msra.mxu0 0
        %1563 = vmatprep.subr.bf16.mxu0 0
        %1564 = vmatpush2.bf16.msra.mxu0 0
        %1565 = vmatprep.subr.bf16.mxu0 0
        %1566 = vmatpush2.bf16.msra.mxu0 0
        %1567 = vmatprep.subr.bf16.mxu0 0
        %1568 = vmatpush2.bf16.msra.mxu0 0
        %1569 = vmatprep.mubr.bf16.mxu0 0
        %1570 = vmatmul.mubr.bf16.gmra.mxu0 %v616
        %v1571 = vpop.f32.mrf.mxu0
        %v1572 = vadd.f32 0.0, %v1571
        %v1573 = vpop.f32.mrf.mxu0
        %v1574 = vpop.f32.mrf.mxu0
        %v1575 = vadd.f32 0.0, %v1574
        %v1576 = vpop.f32.mrf.mxu0
        %1577 = vmatprep.mubr.bf16.mxu0 0
        %1578 = vmatmul.mubr.bf16.gmra.mxu0 %v617
        %v1579 = vpop.f32.mrf.mxu0
        %v1580 = vadd.f32 0.0, %v1579
        %v1581 = vpop.f32.mrf.mxu0
        %v1582 = vpop.f32.mrf.mxu0
        %v1583 = vadd.f32 0.0, %v1582
        %v1584 = vpop.f32.mrf.mxu0
        %1585 = vdwg.mxu0
        %v1602 = vunpack.c.l.b16 %v1328
        %v1603 = vunpack.c.l.b16 %v1329
        %v1604 = vunpack.c.l.b16 %v1330
        %v1605 = vunpack.c.l.b16 %v1331
        %v1606 = vunpack.c.l.b16 %v1332
        %v1607 = vunpack.c.l.b16 %v1333
        %v1608 = vunpack.c.l.b16 %v1334
        %v1609 = vunpack.c.l.b16 %v1335
        %v1610 = vunpack.c.l.b16 %v1336
        %v1611 = vunpack.c.l.b16 %v1337
        %v1612 = vunpack.c.l.b16 %v1338
        %v1613 = vunpack.c.l.b16 %v1339
        %v1614 = vunpack.c.l.b16 %v1340
        %v1615 = vunpack.c.l.b16 %v1341
        %v1616 = vunpack.c.l.b16 %v1342
        %v1617 = vunpack.c.l.b16 %v1343
        %v1618 = vpack.c.b16 %v1603, %v1602
        %v1619 = vpack.c.b16 %v1605, %v1604
        %v1620 = vpack.c.b16 %v1607, %v1606
        %v1621 = vpack.c.b16 %v1609, %v1608
        %v1622 = vpack.c.b16 %v1611, %v1610
        %v1623 = vpack.c.b16 %v1613, %v1612
        %v1624 = vpack.c.b16 %v1615, %v1614
        %v1625 = vpack.c.b16 %v1617, %v1616
        %1634 = vmatprep.subr.bf16.mxu0 0
        %1635 = vmatpush1.bf16.msra.mxu0 %v1625
        %1636 = vmatprep.subr.bf16.mxu0 0
        %1637 = vmatpush1.bf16.msra.mxu0 %v1624
        %1638 = vmatprep.subr.bf16.mxu0 0
        %1639 = vmatpush1.bf16.msra.mxu0 %v1623
        %1640 = vmatprep.subr.bf16.mxu0 0
        %1641 = vmatpush1.bf16.msra.mxu0 %v1622
        %1642 = vmatprep.subr.bf16.mxu0 0
        %1643 = vmatpush1.bf16.msra.mxu0 %v1621
        %1644 = vmatprep.subr.bf16.mxu0 0
        %1645 = vmatpush1.bf16.msra.mxu0 %v1620
        %1646 = vmatprep.subr.bf16.mxu0 0
        %1647 = vmatpush1.bf16.msra.mxu0 %v1619
        %1648 = vmatprep.subr.bf16.mxu0 0
        %1649 = vmatpush1.bf16.msra.mxu0 %v1618
        %1650 = vmatprep.subr.bf16.mxu0 0
        %1651 = vmatpush2.bf16.msra.mxu0 0
        %1652 = vmatprep.subr.bf16.mxu0 0
        %1653 = vmatpush2.bf16.msra.mxu0 0
        %1654 = vmatprep.subr.bf16.mxu0 0
        %1655 = vmatpush2.bf16.msra.mxu0 0
        %1656 = vmatprep.subr.bf16.mxu0 0
        %1657 = vmatpush2.bf16.msra.mxu0 0
        %1658 = vmatprep.subr.bf16.mxu0 0
        %1659 = vmatpush2.bf16.msra.mxu0 0
        %1660 = vmatprep.subr.bf16.mxu0 0
        %1661 = vmatpush2.bf16.msra.mxu0 0
        %1662 = vmatprep.subr.bf16.mxu0 0
        %1663 = vmatpush2.bf16.msra.mxu0 0
        %1664 = vmatprep.subr.bf16.mxu0 0
        %1665 = vmatpush2.bf16.msra.mxu0 0
        %1666 = vmatprep.mubr.bf16.mxu0 0
        %1667 = vmatmul.mubr.bf16.gmra.mxu0 %v616
        %v1668 = vpop.f32.mrf.mxu0
        %v1669 = vadd.f32 0.0, %v1668
        %v1670 = vpop.f32.mrf.mxu0
        %v1671 = vpop.f32.mrf.mxu0
        %v1672 = vadd.f32 0.0, %v1671
        %v1673 = vpop.f32.mrf.mxu0
        %1674 = vmatprep.mubr.bf16.mxu0 0
        %1675 = vmatmul.mubr.bf16.gmra.mxu0 %v617
        %v1676 = vpop.f32.mrf.mxu0
        %v1677 = vadd.f32 0.0, %v1676
        %v1678 = vpop.f32.mrf.mxu0
        %v1679 = vpop.f32.mrf.mxu0
        %v1680 = vadd.f32 0.0, %v1679
        %v1681 = vpop.f32.mrf.mxu0
        %1682 = vdwg.mxu0
        %v1699 = vunpack.c.l.b16 %v1344
        %v1700 = vunpack.c.l.b16 %v1345
        %v1701 = vunpack.c.l.b16 %v1346
        %v1702 = vunpack.c.l.b16 %v1347
        %v1703 = vunpack.c.l.b16 %v1348
        %v1704 = vunpack.c.l.b16 %v1349
        %v1705 = vunpack.c.l.b16 %v1350
        %v1706 = vunpack.c.l.b16 %v1351
        %v1707 = vunpack.c.l.b16 %v1352
        %v1708 = vunpack.c.l.b16 %v1353
        %v1709 = vunpack.c.l.b16 %v1354
        %v1710 = vunpack.c.l.b16 %v1355
        %v1711 = vunpack.c.l.b16 %v1356
        %v1712 = vunpack.c.l.b16 %v1357
        %v1713 = vunpack.c.l.b16 %v1358
        %v1714 = vunpack.c.l.b16 %v1359
        %v1715 = vpack.c.b16 %v1700, %v1699
        %v1716 = vpack.c.b16 %v1702, %v1701
        %v1717 = vpack.c.b16 %v1704, %v1703
        %v1718 = vpack.c.b16 %v1706, %v1705
        %v1719 = vpack.c.b16 %v1708, %v1707
        %v1720 = vpack.c.b16 %v1710, %v1709
        %v1721 = vpack.c.b16 %v1712, %v1711
        %v1722 = vpack.c.b16 %v1714, %v1713
        %1731 = vmatprep.subr.bf16.mxu0 0
        %1732 = vmatpush1.bf16.msra.mxu0 %v1722
        %1733 = vmatprep.subr.bf16.mxu0 0
        %1734 = vmatpush1.bf16.msra.mxu0 %v1721
        %1735 = vmatprep.subr.bf16.mxu0 0
        %1736 = vmatpush1.bf16.msra.mxu0 %v1720
        %1737 = vmatprep.subr.bf16.mxu0 0
        %1738 = vmatpush1.bf16.msra.mxu0 %v1719
        %1739 = vmatprep.subr.bf16.mxu0 0
        %1740 = vmatpush1.bf16.msra.mxu0 %v1718
        %1741 = vmatprep.subr.bf16.mxu0 0
        %1742 = vmatpush1.bf16.msra.mxu0 %v1717
        %1743 = vmatprep.subr.bf16.mxu0 0
        %1744 = vmatpush1.bf16.msra.mxu0 %v1716
        %1745 = vmatprep.subr.bf16.mxu0 0
        %1746 = vmatpush1.bf16.msra.mxu0 %v1715
        %1747 = vmatprep.subr.bf16.mxu0 0
        %1748 = vmatpush2.bf16.msra.mxu0 0
        %1749 = vmatprep.subr.bf16.mxu0 0
        %1750 = vmatpush2.bf16.msra.mxu0 0
        %1751 = vmatprep.subr.bf16.mxu0 0
        %1752 = vmatpush2.bf16.msra.mxu0 0
        %1753 = vmatprep.subr.bf16.mxu0 0
        %1754 = vmatpush2.bf16.msra.mxu0 0
        %1755 = vmatprep.subr.bf16.mxu0 0
        %1756 = vmatpush2.bf16.msra.mxu0 0
        %1757 = vmatprep.subr.bf16.mxu0 0
        %1758 = vmatpush2.bf16.msra.mxu0 0
        %1759 = vmatprep.subr.bf16.mxu0 0
        %1760 = vmatpush2.bf16.msra.mxu0 0
        %1761 = vmatprep.subr.bf16.mxu0 0
        %1762 = vmatpush2.bf16.msra.mxu0 0
        %1763 = vmatprep.mubr.bf16.mxu0 0
        %1764 = vmatmul.mubr.bf16.gmra.mxu0 %v616
        %v1765 = vpop.f32.mrf.mxu0
        %v1766 = vadd.f32 0.0, %v1765
        %v1767 = vpop.f32.mrf.mxu0
        %v1768 = vpop.f32.mrf.mxu0
        %v1769 = vadd.f32 0.0, %v1768
        %v1770 = vpop.f32.mrf.mxu0
        %1771 = vmatprep.mubr.bf16.mxu0 0
        %1772 = vmatmul.mubr.bf16.gmra.mxu0 %v617
        %v1773 = vpop.f32.mrf.mxu0
        %v1774 = vadd.f32 0.0, %v1773
        %v1775 = vpop.f32.mrf.mxu0
        %v1776 = vpop.f32.mrf.mxu0
        %v1777 = vadd.f32 0.0, %v1776
        %v1778 = vpop.f32.mrf.mxu0
        %1779 = vdwg.mxu0
        %v1796 = vunpack.c.l.b16 %v1360
        %v1797 = vunpack.c.l.b16 %v1361
        %v1798 = vunpack.c.l.b16 %v1362
        %v1799 = vunpack.c.l.b16 %v1363
        %v1800 = vunpack.c.l.b16 %v1364
        %v1801 = vunpack.c.l.b16 %v1365
        %v1802 = vunpack.c.l.b16 %v1366
        %v1803 = vunpack.c.l.b16 %v1367
        %v1804 = vunpack.c.l.b16 %v1368
        %v1805 = vunpack.c.l.b16 %v1369
        %v1806 = vunpack.c.l.b16 %v1370
        %v1807 = vunpack.c.l.b16 %v1371
        %v1808 = vunpack.c.l.b16 %v1372
        %v1809 = vunpack.c.l.b16 %v1373
        %v1810 = vunpack.c.l.b16 %v1374
        %v1811 = vunpack.c.l.b16 %v1375
        %v1812 = vpack.c.b16 %v1797, %v1796
        %v1813 = vpack.c.b16 %v1799, %v1798
        %v1814 = vpack.c.b16 %v1801, %v1800
        %v1815 = vpack.c.b16 %v1803, %v1802
        %v1816 = vpack.c.b16 %v1805, %v1804
        %v1817 = vpack.c.b16 %v1807, %v1806
        %v1818 = vpack.c.b16 %v1809, %v1808
        %v1819 = vpack.c.b16 %v1811, %v1810
        %1828 = vmatprep.subr.bf16.mxu0 0
        %1829 = vmatpush1.bf16.msra.mxu0 %v1819
        %1830 = vmatprep.subr.bf16.mxu0 0
        %1831 = vmatpush1.bf16.msra.mxu0 %v1818
        %1832 = vmatprep.subr.bf16.mxu0 0
        %1833 = vmatpush1.bf16.msra.mxu0 %v1817
        %1834 = vmatprep.subr.bf16.mxu0 0
        %1835 = vmatpush1.bf16.msra.mxu0 %v1816
        %1836 = vmatprep.subr.bf16.mxu0 0
        %1837 = vmatpush1.bf16.msra.mxu0 %v1815
        %1838 = vmatprep.subr.bf16.mxu0 0
        %1839 = vmatpush1.bf16.msra.mxu0 %v1814
        %1840 = vmatprep.subr.bf16.mxu0 0
        %1841 = vmatpush1.bf16.msra.mxu0 %v1813
        %1842 = vmatprep.subr.bf16.mxu0 0
        %1843 = vmatpush1.bf16.msra.mxu0 %v1812
        %1844 = vmatprep.subr.bf16.mxu0 0
        %1845 = vmatpush2.bf16.msra.mxu0 0
        %1846 = vmatprep.subr.bf16.mxu0 0
        %1847 = vmatpush2.bf16.msra.mxu0 0
        %1848 = vmatprep.subr.bf16.mxu0 0
        %1849 = vmatpush2.bf16.msra.mxu0 0
        %1850 = vmatprep.subr.bf16.mxu0 0
        %1851 = vmatpush2.bf16.msra.mxu0 0
        %1852 = vmatprep.subr.bf16.mxu0 0
        %1853 = vmatpush2.bf16.msra.mxu0 0
        %1854 = vmatprep.subr.bf16.mxu0 0
        %1855 = vmatpush2.bf16.msra.mxu0 0
        %1856 = vmatprep.subr.bf16.mxu0 0
        %1857 = vmatpush2.bf16.msra.mxu0 0
        %1858 = vmatprep.subr.bf16.mxu0 0
        %1859 = vmatpush2.bf16.msra.mxu0 0
        %1860 = vmatprep.mubr.bf16.mxu0 0
        %1861 = vmatmul.mubr.bf16.gmra.mxu0 %v616
        %v1862 = vpop.f32.mrf.mxu0
        %v1863 = vadd.f32 0.0, %v1862
        %v1864 = vpop.f32.mrf.mxu0
        %v1865 = vpop.f32.mrf.mxu0
        %v1866 = vadd.f32 0.0, %v1865
        %v1867 = vpop.f32.mrf.mxu0
        %1868 = vmatprep.mubr.bf16.mxu0 0
        %1869 = vmatmul.mubr.bf16.gmra.mxu0 %v617
        %v1870 = vpop.f32.mrf.mxu0
        %v1871 = vadd.f32 0.0, %v1870
        %v1872 = vpop.f32.mrf.mxu0
        %v1873 = vpop.f32.mrf.mxu0
        %v1874 = vadd.f32 0.0, %v1873
        %v1875 = vpop.f32.mrf.mxu0
        %1876 = vdwg.mxu0
        %v1893 = vunpack.c.l.b16 %v1376
        %v1894 = vunpack.c.l.b16 %v1377
        %v1895 = vunpack.c.l.b16 %v1378
        %v1896 = vunpack.c.l.b16 %v1379
        %v1897 = vunpack.c.l.b16 %v1380
        %v1898 = vunpack.c.l.b16 %v1381
        %v1899 = vunpack.c.l.b16 %v1382
        %v1900 = vunpack.c.l.b16 %v1383
        %v1901 = vunpack.c.l.b16 %v1384
        %v1902 = vunpack.c.l.b16 %v1385
        %v1903 = vunpack.c.l.b16 %v1386
        %v1904 = vunpack.c.l.b16 %v1387
        %v1905 = vunpack.c.l.b16 %v1388
        %v1906 = vunpack.c.l.b16 %v1389
        %v1907 = vunpack.c.l.b16 %v1390
        %v1908 = vunpack.c.l.b16 %v1391
        %v1909 = vpack.c.b16 %v1894, %v1893
        %v1910 = vpack.c.b16 %v1896, %v1895
        %v1911 = vpack.c.b16 %v1898, %v1897
        %v1912 = vpack.c.b16 %v1900, %v1899
        %v1913 = vpack.c.b16 %v1902, %v1901
        %v1914 = vpack.c.b16 %v1904, %v1903
        %v1915 = vpack.c.b16 %v1906, %v1905
        %v1916 = vpack.c.b16 %v1908, %v1907
        %1925 = vmatprep.subr.bf16.mxu0 0
        %1926 = vmatpush1.bf16.msra.mxu0 %v1916
        %1927 = vmatprep.subr.bf16.mxu0 0
        %1928 = vmatpush1.bf16.msra.mxu0 %v1915
        %1929 = vmatprep.subr.bf16.mxu0 0
        %1930 = vmatpush1.bf16.msra.mxu0 %v1914
        %1931 = vmatprep.subr.bf16.mxu0 0
        %1932 = vmatpush1.bf16.msra.mxu0 %v1913
        %1933 = vmatprep.subr.bf16.mxu0 0
        %1934 = vmatpush1.bf16.msra.mxu0 %v1912
        %1935 = vmatprep.subr.bf16.mxu0 0
        %1936 = vmatpush1.bf16.msra.mxu0 %v1911
        %1937 = vmatprep.subr.bf16.mxu0 0
        %1938 = vmatpush1.bf16.msra.mxu0 %v1910
        %1939 = vmatprep.subr.bf16.mxu0 0
        %1940 = vmatpush1.bf16.msra.mxu0 %v1909
        %1941 = vmatprep.subr.bf16.mxu0 0
        %1942 = vmatpush2.bf16.msra.mxu0 0
        %1943 = vmatprep.subr.bf16.mxu0 0
        %1944 = vmatpush2.bf16.msra.mxu0 0
        %1945 = vmatprep.subr.bf16.mxu0 0
        %1946 = vmatpush2.bf16.msra.mxu0 0
        %1947 = vmatprep.subr.bf16.mxu0 0
        %1948 = vmatpush2.bf16.msra.mxu0 0
        %1949 = vmatprep.subr.bf16.mxu0 0
        %1950 = vmatpush2.bf16.msra.mxu0 0
        %1951 = vmatprep.subr.bf16.mxu0 0
        %1952 = vmatpush2.bf16.msra.mxu0 0
        %1953 = vmatprep.subr.bf16.mxu0 0
        %1954 = vmatpush2.bf16.msra.mxu0 0
        %1955 = vmatprep.subr.bf16.mxu0 0
        %1956 = vmatpush2.bf16.msra.mxu0 0
        %1957 = vmatprep.mubr.bf16.mxu0 0
        %1958 = vmatmul.mubr.bf16.gmra.mxu0 %v616
        %v1959 = vpop.f32.mrf.mxu0
        %v1960 = vadd.f32 0.0, %v1959
        %v1961 = vpop.f32.mrf.mxu0
        %v1962 = vpop.f32.mrf.mxu0
        %v1963 = vadd.f32 0.0, %v1962
        %v1964 = vpop.f32.mrf.mxu0
        %1965 = vmatprep.mubr.bf16.mxu0 0
        %1966 = vmatmul.mubr.bf16.gmra.mxu0 %v617
        %v1967 = vpop.f32.mrf.mxu0
        %v1968 = vadd.f32 0.0, %v1967
        %v1969 = vpop.f32.mrf.mxu0
        %v1970 = vpop.f32.mrf.mxu0
        %v1971 = vadd.f32 0.0, %v1970
        %v1972 = vpop.f32.mrf.mxu0
        %1973 = vdwg.mxu0
        %v1974 = vld [vmem:[%s5] sm:$0xf]
        %v1975 = vld [vmem:[%s5 + $0x4] sm:$0xf]
        %v1976 = vld [vmem:[%s5 + $0x8] sm:$0xf]
        %v1977 = vld [vmem:[%s5 + $0xc] sm:$0xf]
        %v1978 = vld [vmem:[%s5 + $0x10] sm:$0xf]
        %v1979 = vld [vmem:[%s5 + $0x14] sm:$0xf]
        %v1980 = vld [vmem:[%s5 + $0x18] sm:$0xf]
        %v1981 = vld [vmem:[%s5 + $0x1c] sm:$0xf]
        %v1982 = vld [vmem:[%s5 + $0x20] sm:$0xf]
        %v1983 = vld [vmem:[%s5 + $0x24] sm:$0xf]
        %v1984 = vld [vmem:[%s5 + $0x28] sm:$0xf]
        %v1985 = vld [vmem:[%s5 + $0x2c] sm:$0xf]
        %v1986 = vld [vmem:[%s5 + $0x30] sm:$0xf]
        %v1987 = vld [vmem:[%s5 + $0x34] sm:$0xf]
        %v1988 = vld [vmem:[%s5 + $0x38] sm:$0xf]
        %v1989 = vld [vmem:[%s5 + $0x3c] sm:$0xf]
        %v1990 = vld [vmem:[%s5 + $0x40] sm:$0xf]
        %v1991 = vld [vmem:[%s5 + $0x44] sm:$0xf]
        %v1992 = vld [vmem:[%s5 + $0x48] sm:$0xf]
        %v1993 = vld [vmem:[%s5 + $0x4c] sm:$0xf]
        %v1994 = vld [vmem:[%s5 + $0x50] sm:$0xf]
        %v1995 = vld [vmem:[%s5 + $0x54] sm:$0xf]
        %v1996 = vld [vmem:[%s5 + $0x58] sm:$0xf]
        %v1997 = vld [vmem:[%s5 + $0x5c] sm:$0xf]
        %v1998 = vld [vmem:[%s5 + $0x60] sm:$0xf]
        %v1999 = vld [vmem:[%s5 + $0x64] sm:$0xf]
        %v2000 = vld [vmem:[%s5 + $0x68] sm:$0xf]
        %v2001 = vld [vmem:[%s5 + $0x6c] sm:$0xf]
        %v2002 = vld [vmem:[%s5 + $0x70] sm:$0xf]
        %v2003 = vld [vmem:[%s5 + $0x74] sm:$0xf]
        %v2004 = vld [vmem:[%s5 + $0x78] sm:$0xf]
        %v2005 = vld [vmem:[%s5 + $0x7c] sm:$0xf]
        %v2006 = vld [vmem:[%s5 + $0x80] sm:$0xf]
        %v2007 = vld [vmem:[%s5 + $0x84] sm:$0xf]
        %v2008 = vld [vmem:[%s5 + $0x88] sm:$0xf]
        %v2009 = vld [vmem:[%s5 + $0x8c] sm:$0xf]
        %v2010 = vld [vmem:[%s5 + $0x90] sm:$0xf]
        %v2011 = vld [vmem:[%s5 + $0x94] sm:$0xf]
        %v2012 = vld [vmem:[%s5 + $0x98] sm:$0xf]
        %v2013 = vld [vmem:[%s5 + $0x9c] sm:$0xf]
        %v2014 = vld [vmem:[%s5 + $0xa0] sm:$0xf]
        %v2015 = vld [vmem:[%s5 + $0xa4] sm:$0xf]
        %v2016 = vld [vmem:[%s5 + $0xa8] sm:$0xf]
        %v2017 = vld [vmem:[%s5 + $0xac] sm:$0xf]
        %v2018 = vld [vmem:[%s5 + $0xb0] sm:$0xf]
        %v2019 = vld [vmem:[%s5 + $0xb4] sm:$0xf]
        %v2020 = vld [vmem:[%s5 + $0xb8] sm:$0xf]
        %v2021 = vld [vmem:[%s5 + $0xbc] sm:$0xf]
        %v2022 = vld [vmem:[%s5 + $0xc0] sm:$0xf]
        %v2023 = vld [vmem:[%s5 + $0xc4] sm:$0xf]
        %v2024 = vld [vmem:[%s5 + $0xc8] sm:$0xf]
        %v2025 = vld [vmem:[%s5 + $0xcc] sm:$0xf]
        %v2026 = vld [vmem:[%s5 + $0xd0] sm:$0xf]
        %v2027 = vld [vmem:[%s5 + $0xd4] sm:$0xf]
        %v2028 = vld [vmem:[%s5 + $0xd8] sm:$0xf]
        %v2029 = vld [vmem:[%s5 + $0xdc] sm:$0xf]
        %v2030 = vld [vmem:[%s5 + $0xe0] sm:$0xf]
        %v2031 = vld [vmem:[%s5 + $0xe4] sm:$0xf]
        %v2032 = vld [vmem:[%s5 + $0xe8] sm:$0xf]
        %v2033 = vld [vmem:[%s5 + $0xec] sm:$0xf]
        %v2034 = vld [vmem:[%s5 + $0xf0] sm:$0xf]
        %v2035 = vld [vmem:[%s5 + $0xf4] sm:$0xf]
        %v2036 = vld [vmem:[%s5 + $0xf8] sm:$0xf]
        %v2037 = vld [vmem:[%s5 + $0xfc] sm:$0xf]
        %v2038 = vld [vmem:[%s5 + $0x100] sm:$0xf]
        %v2039 = vld [vmem:[%s5 + $0x104] sm:$0xf]
        %v2040 = vld [vmem:[%s5 + $0x108] sm:$0xf]
        %v2041 = vld [vmem:[%s5 + $0x10c] sm:$0xf]
        %v2042 = vld [vmem:[%s5 + $0x110] sm:$0xf]
        %v2043 = vld [vmem:[%s5 + $0x114] sm:$0xf]
        %v2044 = vld [vmem:[%s5 + $0x118] sm:$0xf]
        %v2045 = vld [vmem:[%s5 + $0x11c] sm:$0xf]
        %v2046 = vld [vmem:[%s5 + $0x120] sm:$0xf]
        %v2047 = vld [vmem:[%s5 + $0x124] sm:$0xf]
        %v2048 = vld [vmem:[%s5 + $0x128] sm:$0xf]
        %v2049 = vld [vmem:[%s5 + $0x12c] sm:$0xf]
        %v2050 = vld [vmem:[%s5 + $0x130] sm:$0xf]
        %v2051 = vld [vmem:[%s5 + $0x134] sm:$0xf]
        %v2052 = vld [vmem:[%s5 + $0x138] sm:$0xf]
        %v2053 = vld [vmem:[%s5 + $0x13c] sm:$0xf]
        %v2054 = vld [vmem:[%s5 + $0x140] sm:$0xf]
        %v2055 = vld [vmem:[%s5 + $0x144] sm:$0xf]
        %v2056 = vld [vmem:[%s5 + $0x148] sm:$0xf]
        %v2057 = vld [vmem:[%s5 + $0x14c] sm:$0xf]
        %v2058 = vld [vmem:[%s5 + $0x150] sm:$0xf]
        %v2059 = vld [vmem:[%s5 + $0x154] sm:$0xf]
        %v2060 = vld [vmem:[%s5 + $0x158] sm:$0xf]
        %v2061 = vld [vmem:[%s5 + $0x15c] sm:$0xf]
        %v2062 = vld [vmem:[%s5 + $0x160] sm:$0xf]
        %v2063 = vld [vmem:[%s5 + $0x164] sm:$0xf]
        %v2064 = vld [vmem:[%s5 + $0x168] sm:$0xf]
        %v2065 = vld [vmem:[%s5 + $0x16c] sm:$0xf]
        %v2066 = vld [vmem:[%s5 + $0x170] sm:$0xf]
        %v2067 = vld [vmem:[%s5 + $0x174] sm:$0xf]
        %v2068 = vld [vmem:[%s5 + $0x178] sm:$0xf]
        %v2069 = vld [vmem:[%s5 + $0x17c] sm:$0xf]
        %v2086 = vunpack.c.l.b16 %v1974
        %v2087 = vunpack.c.l.b16 %v1975
        %v2088 = vunpack.c.l.b16 %v1976
        %v2089 = vunpack.c.l.b16 %v1977
        %v2090 = vunpack.c.l.b16 %v1978
        %v2091 = vunpack.c.l.b16 %v1979
        %v2092 = vunpack.c.l.b16 %v1980
        %v2093 = vunpack.c.l.b16 %v1981
        %v2094 = vunpack.c.l.b16 %v1982
        %v2095 = vunpack.c.l.b16 %v1983
        %v2096 = vunpack.c.l.b16 %v1984
        %v2097 = vunpack.c.l.b16 %v1985
        %v2098 = vunpack.c.l.b16 %v1986
        %v2099 = vunpack.c.l.b16 %v1987
        %v2100 = vunpack.c.l.b16 %v1988
        %v2101 = vunpack.c.l.b16 %v1989
        %v2102 = vpack.c.b16 %v2087, %v2086
        %v2103 = vpack.c.b16 %v2089, %v2088
        %v2104 = vpack.c.b16 %v2091, %v2090
        %v2105 = vpack.c.b16 %v2093, %v2092
        %v2106 = vpack.c.b16 %v2095, %v2094
        %v2107 = vpack.c.b16 %v2097, %v2096
        %v2108 = vpack.c.b16 %v2099, %v2098
        %v2109 = vpack.c.b16 %v2101, %v2100
        %2118 = vmatprep.subr.bf16.mxu0 0
        %2119 = vmatpush1.bf16.msra.mxu0 %v2109
        %2120 = vmatprep.subr.bf16.mxu0 0
        %2121 = vmatpush1.bf16.msra.mxu0 %v2108
        %2122 = vmatprep.subr.bf16.mxu0 0
        %2123 = vmatpush1.bf16.msra.mxu0 %v2107
        %2124 = vmatprep.subr.bf16.mxu0 0
        %2125 = vmatpush1.bf16.msra.mxu0 %v2106
        %2126 = vmatprep.subr.bf16.mxu0 0
        %2127 = vmatpush1.bf16.msra.mxu0 %v2105
        %2128 = vmatprep.subr.bf16.mxu0 0
        %2129 = vmatpush1.bf16.msra.mxu0 %v2104
        %2130 = vmatprep.subr.bf16.mxu0 0
        %2131 = vmatpush1.bf16.msra.mxu0 %v2103
        %2132 = vmatprep.subr.bf16.mxu0 0
        %2133 = vmatpush1.bf16.msra.mxu0 %v2102
        %2134 = vmatprep.subr.bf16.mxu0 0
        %2135 = vmatpush2.bf16.msra.mxu0 0
        %2136 = vmatprep.subr.bf16.mxu0 0
        %2137 = vmatpush2.bf16.msra.mxu0 0
        %2138 = vmatprep.subr.bf16.mxu0 0
        %2139 = vmatpush2.bf16.msra.mxu0 0
        %2140 = vmatprep.subr.bf16.mxu0 0
        %2141 = vmatpush2.bf16.msra.mxu0 0
        %2142 = vmatprep.subr.bf16.mxu0 0
        %2143 = vmatpush2.bf16.msra.mxu0 0
        %2144 = vmatprep.subr.bf16.mxu0 0
        %2145 = vmatpush2.bf16.msra.mxu0 0
        %2146 = vmatprep.subr.bf16.mxu0 0
        %2147 = vmatpush2.bf16.msra.mxu0 0
        %2148 = vmatprep.subr.bf16.mxu0 0
        %2149 = vmatpush2.bf16.msra.mxu0 0
        %2150 = vmatprep.mubr.bf16.mxu0 0
        %2151 = vmatmul.mubr.bf16.gmra.mxu0 %v616
        %v2152 = vpop.f32.mrf.mxu0
        %v2153 = vadd.f32 0.0, %v2152
        %v2154 = vpop.f32.mrf.mxu0
        %v2155 = vpop.f32.mrf.mxu0
        %v2156 = vadd.f32 0.0, %v2155
        %v2157 = vpop.f32.mrf.mxu0
        %2158 = vmatprep.mubr.bf16.mxu0 0
        %2159 = vmatmul.mubr.bf16.gmra.mxu0 %v617
        %v2160 = vpop.f32.mrf.mxu0
        %v2161 = vadd.f32 0.0, %v2160
        %v2162 = vpop.f32.mrf.mxu0
        %v2163 = vpop.f32.mrf.mxu0
        %v2164 = vadd.f32 0.0, %v2163
        %v2165 = vpop.f32.mrf.mxu0
        %2166 = vdwg.mxu0
        %v2183 = vunpack.c.l.b16 %v1990
        %v2184 = vunpack.c.l.b16 %v1991
        %v2185 = vunpack.c.l.b16 %v1992
        %v2186 = vunpack.c.l.b16 %v1993
        %v2187 = vunpack.c.l.b16 %v1994
        %v2188 = vunpack.c.l.b16 %v1995
        %v2189 = vunpack.c.l.b16 %v1996
        %v2190 = vunpack.c.l.b16 %v1997
        %v2191 = vunpack.c.l.b16 %v1998
        %v2192 = vunpack.c.l.b16 %v1999
        %v2193 = vunpack.c.l.b16 %v2000
        %v2194 = vunpack.c.l.b16 %v2001
        %v2195 = vunpack.c.l.b16 %v2002
        %v2196 = vunpack.c.l.b16 %v2003
        %v2197 = vunpack.c.l.b16 %v2004
        %v2198 = vunpack.c.l.b16 %v2005
        %v2199 = vpack.c.b16 %v2184, %v2183
        %v2200 = vpack.c.b16 %v2186, %v2185
        %v2201 = vpack.c.b16 %v2188, %v2187
        %v2202 = vpack.c.b16 %v2190, %v2189
        %v2203 = vpack.c.b16 %v2192, %v2191
        %v2204 = vpack.c.b16 %v2194, %v2193
        %v2205 = vpack.c.b16 %v2196, %v2195
        %v2206 = vpack.c.b16 %v2198, %v2197
        %2215 = vmatprep.subr.bf16.mxu0 0
        %2216 = vmatpush1.bf16.msra.mxu0 %v2206
        %2217 = vmatprep.subr.bf16.mxu0 0
        %2218 = vmatpush1.bf16.msra.mxu0 %v2205
        %2219 = vmatprep.subr.bf16.mxu0 0
        %2220 = vmatpush1.bf16.msra.mxu0 %v2204
        %2221 = vmatprep.subr.bf16.mxu0 0
        %2222 = vmatpush1.bf16.msra.mxu0 %v2203
        %2223 = vmatprep.subr.bf16.mxu0 0
        %2224 = vmatpush1.bf16.msra.mxu0 %v2202
        %2225 = vmatprep.subr.bf16.mxu0 0
        %2226 = vmatpush1.bf16.msra.mxu0 %v2201
        %2227 = vmatprep.subr.bf16.mxu0 0
        %2228 = vmatpush1.bf16.msra.mxu0 %v2200
        %2229 = vmatprep.subr.bf16.mxu0 0
        %2230 = vmatpush1.bf16.msra.mxu0 %v2199
        %2231 = vmatprep.subr.bf16.mxu0 0
        %2232 = vmatpush2.bf16.msra.mxu0 0
        %2233 = vmatprep.subr.bf16.mxu0 0
        %2234 = vmatpush2.bf16.msra.mxu0 0
        %2235 = vmatprep.subr.bf16.mxu0 0
        %2236 = vmatpush2.bf16.msra.mxu0 0
        %2237 = vmatprep.subr.bf16.mxu0 0
        %2238 = vmatpush2.bf16.msra.mxu0 0
        %2239 = vmatprep.subr.bf16.mxu0 0
        %2240 = vmatpush2.bf16.msra.mxu0 0
        %2241 = vmatprep.subr.bf16.mxu0 0
        %2242 = vmatpush2.bf16.msra.mxu0 0
        %2243 = vmatprep.subr.bf16.mxu0 0
        %2244 = vmatpush2.bf16.msra.mxu0 0
        %2245 = vmatprep.subr.bf16.mxu0 0
        %2246 = vmatpush2.bf16.msra.mxu0 0
        %2247 = vmatprep.mubr.bf16.mxu0 0
        %2248 = vmatmul.mubr.bf16.gmra.mxu0 %v616
        %v2249 = vpop.f32.mrf.mxu0
        %v2250 = vadd.f32 0.0, %v2249
        %v2251 = vpop.f32.mrf.mxu0
        %v2252 = vpop.f32.mrf.mxu0
        %v2253 = vadd.f32 0.0, %v2252
        %v2254 = vpop.f32.mrf.mxu0
        %2255 = vmatprep.mubr.bf16.mxu0 0
        %2256 = vmatmul.mubr.bf16.gmra.mxu0 %v617
        %v2257 = vpop.f32.mrf.mxu0
        %v2258 = vadd.f32 0.0, %v2257
        %v2259 = vpop.f32.mrf.mxu0
        %v2260 = vpop.f32.mrf.mxu0
        %v2261 = vadd.f32 0.0, %v2260
        %v2262 = vpop.f32.mrf.mxu0
        %2263 = vdwg.mxu0
        %v2280 = vunpack.c.l.b16 %v2006
        %v2281 = vunpack.c.l.b16 %v2007
        %v2282 = vunpack.c.l.b16 %v2008
        %v2283 = vunpack.c.l.b16 %v2009
        %v2284 = vunpack.c.l.b16 %v2010
        %v2285 = vunpack.c.l.b16 %v2011
        %v2286 = vunpack.c.l.b16 %v2012
        %v2287 = vunpack.c.l.b16 %v2013
        %v2288 = vunpack.c.l.b16 %v2014
        %v2289 = vunpack.c.l.b16 %v2015
        %v2290 = vunpack.c.l.b16 %v2016
        %v2291 = vunpack.c.l.b16 %v2017
        %v2292 = vunpack.c.l.b16 %v2018
        %v2293 = vunpack.c.l.b16 %v2019
        %v2294 = vunpack.c.l.b16 %v2020
        %v2295 = vunpack.c.l.b16 %v2021
        %v2296 = vpack.c.b16 %v2281, %v2280
        %v2297 = vpack.c.b16 %v2283, %v2282
        %v2298 = vpack.c.b16 %v2285, %v2284
        %v2299 = vpack.c.b16 %v2287, %v2286
        %v2300 = vpack.c.b16 %v2289, %v2288
        %v2301 = vpack.c.b16 %v2291, %v2290
        %v2302 = vpack.c.b16 %v2293, %v2292
        %v2303 = vpack.c.b16 %v2295, %v2294
        %2312 = vmatprep.subr.bf16.mxu0 0
        %2313 = vmatpush1.bf16.msra.mxu0 %v2303
        %2314 = vmatprep.subr.bf16.mxu0 0
        %2315 = vmatpush1.bf16.msra.mxu0 %v2302
        %2316 = vmatprep.subr.bf16.mxu0 0
        %2317 = vmatpush1.bf16.msra.mxu0 %v2301
        %2318 = vmatprep.subr.bf16.mxu0 0
        %2319 = vmatpush1.bf16.msra.mxu0 %v2300
        %2320 = vmatprep.subr.bf16.mxu0 0
        %2321 = vmatpush1.bf16.msra.mxu0 %v2299
        %2322 = vmatprep.subr.bf16.mxu0 0
        %2323 = vmatpush1.bf16.msra.mxu0 %v2298
        %2324 = vmatprep.subr.bf16.mxu0 0
        %2325 = vmatpush1.bf16.msra.mxu0 %v2297
        %2326 = vmatprep.subr.bf16.mxu0 0
        %2327 = vmatpush1.bf16.msra.mxu0 %v2296
        %2328 = vmatprep.subr.bf16.mxu0 0
        %2329 = vmatpush2.bf16.msra.mxu0 0
        %2330 = vmatprep.subr.bf16.mxu0 0
        %2331 = vmatpush2.bf16.msra.mxu0 0
        %2332 = vmatprep.subr.bf16.mxu0 0
        %2333 = vmatpush2.bf16.msra.mxu0 0
        %2334 = vmatprep.subr.bf16.mxu0 0
        %2335 = vmatpush2.bf16.msra.mxu0 0
        %2336 = vmatprep.subr.bf16.mxu0 0
        %2337 = vmatpush2.bf16.msra.mxu0 0
        %2338 = vmatprep.subr.bf16.mxu0 0
        %2339 = vmatpush2.bf16.msra.mxu0 0
        %2340 = vmatprep.subr.bf16.mxu0 0
        %2341 = vmatpush2.bf16.msra.mxu0 0
        %2342 = vmatprep.subr.bf16.mxu0 0
        %2343 = vmatpush2.bf16.msra.mxu0 0
        %2344 = vmatprep.mubr.bf16.mxu0 0
        %2345 = vmatmul.mubr.bf16.gmra.mxu0 %v616
        %v2346 = vpop.f32.mrf.mxu0
        %v2347 = vadd.f32 0.0, %v2346
        %v2348 = vpop.f32.mrf.mxu0
        %v2349 = vpop.f32.mrf.mxu0
        %v2350 = vadd.f32 0.0, %v2349
        %v2351 = vpop.f32.mrf.mxu0
        %2352 = vmatprep.mubr.bf16.mxu0 0
        %2353 = vmatmul.mubr.bf16.gmra.mxu0 %v617
        %v2354 = vpop.f32.mrf.mxu0
        %v2355 = vadd.f32 0.0, %v2354
        %v2356 = vpop.f32.mrf.mxu0
        %v2357 = vpop.f32.mrf.mxu0
        %v2358 = vadd.f32 0.0, %v2357
        %v2359 = vpop.f32.mrf.mxu0
        %2360 = vdwg.mxu0
        %v2377 = vunpack.c.l.b16 %v2022
        %v2378 = vunpack.c.l.b16 %v2023
        %v2379 = vunpack.c.l.b16 %v2024
        %v2380 = vunpack.c.l.b16 %v2025
        %v2381 = vunpack.c.l.b16 %v2026
        %v2382 = vunpack.c.l.b16 %v2027
        %v2383 = vunpack.c.l.b16 %v2028
        %v2384 = vunpack.c.l.b16 %v2029
        %v2385 = vunpack.c.l.b16 %v2030
        %v2386 = vunpack.c.l.b16 %v2031
        %v2387 = vunpack.c.l.b16 %v2032
        %v2388 = vunpack.c.l.b16 %v2033
        %v2389 = vunpack.c.l.b16 %v2034
        %v2390 = vunpack.c.l.b16 %v2035
        %v2391 = vunpack.c.l.b16 %v2036
        %v2392 = vunpack.c.l.b16 %v2037
        %v2393 = vpack.c.b16 %v2378, %v2377
        %v2394 = vpack.c.b16 %v2380, %v2379
        %v2395 = vpack.c.b16 %v2382, %v2381
        %v2396 = vpack.c.b16 %v2384, %v2383
        %v2397 = vpack.c.b16 %v2386, %v2385
        %v2398 = vpack.c.b16 %v2388, %v2387
        %v2399 = vpack.c.b16 %v2390, %v2389
        %v2400 = vpack.c.b16 %v2392, %v2391
        %2409 = vmatprep.subr.bf16.mxu0 0
        %2410 = vmatpush1.bf16.msra.mxu0 %v2400
        %2411 = vmatprep.subr.bf16.mxu0 0
        %2412 = vmatpush1.bf16.msra.mxu0 %v2399
        %2413 = vmatprep.subr.bf16.mxu0 0
        %2414 = vmatpush1.bf16.msra.mxu0 %v2398
        %2415 = vmatprep.subr.bf16.mxu0 0
        %2416 = vmatpush1.bf16.msra.mxu0 %v2397
        %2417 = vmatprep.subr.bf16.mxu0 0
        %2418 = vmatpush1.bf16.msra.mxu0 %v2396
        %2419 = vmatprep.subr.bf16.mxu0 0
        %2420 = vmatpush1.bf16.msra.mxu0 %v2395
        %2421 = vmatprep.subr.bf16.mxu0 0
        %2422 = vmatpush1.bf16.msra.mxu0 %v2394
        %2423 = vmatprep.subr.bf16.mxu0 0
        %2424 = vmatpush1.bf16.msra.mxu0 %v2393
        %2425 = vmatprep.subr.bf16.mxu0 0
        %2426 = vmatpush2.bf16.msra.mxu0 0
        %2427 = vmatprep.subr.bf16.mxu0 0
        %2428 = vmatpush2.bf16.msra.mxu0 0
        %2429 = vmatprep.subr.bf16.mxu0 0
        %2430 = vmatpush2.bf16.msra.mxu0 0
        %2431 = vmatprep.subr.bf16.mxu0 0
        %2432 = vmatpush2.bf16.msra.mxu0 0
        %2433 = vmatprep.subr.bf16.mxu0 0
        %2434 = vmatpush2.bf16.msra.mxu0 0
        %2435 = vmatprep.subr.bf16.mxu0 0
        %2436 = vmatpush2.bf16.msra.mxu0 0
        %2437 = vmatprep.subr.bf16.mxu0 0
        %2438 = vmatpush2.bf16.msra.mxu0 0
        %2439 = vmatprep.subr.bf16.mxu0 0
        %2440 = vmatpush2.bf16.msra.mxu0 0
        %2441 = vmatprep.mubr.bf16.mxu0 0
        %2442 = vmatmul.mubr.bf16.gmra.mxu0 %v616
        %v2443 = vpop.f32.mrf.mxu0
        %v2444 = vadd.f32 0.0, %v2443
        %v2445 = vpop.f32.mrf.mxu0
        %v2446 = vpop.f32.mrf.mxu0
        %v2447 = vadd.f32 0.0, %v2446
        %v2448 = vpop.f32.mrf.mxu0
        %2449 = vmatprep.mubr.bf16.mxu0 0
        %2450 = vmatmul.mubr.bf16.gmra.mxu0 %v617
        %v2451 = vpop.f32.mrf.mxu0
        %v2452 = vadd.f32 0.0, %v2451
        %v2453 = vpop.f32.mrf.mxu0
        %v2454 = vpop.f32.mrf.mxu0
        %v2455 = vadd.f32 0.0, %v2454
        %v2456 = vpop.f32.mrf.mxu0
        %2457 = vdwg.mxu0
        %v2474 = vunpack.c.l.b16 %v2038
        %v2475 = vunpack.c.l.b16 %v2039
        %v2476 = vunpack.c.l.b16 %v2040
        %v2477 = vunpack.c.l.b16 %v2041
        %v2478 = vunpack.c.l.b16 %v2042
        %v2479 = vunpack.c.l.b16 %v2043
        %v2480 = vunpack.c.l.b16 %v2044
        %v2481 = vunpack.c.l.b16 %v2045
        %v2482 = vunpack.c.l.b16 %v2046
        %v2483 = vunpack.c.l.b16 %v2047
        %v2484 = vunpack.c.l.b16 %v2048
        %v2485 = vunpack.c.l.b16 %v2049
        %v2486 = vunpack.c.l.b16 %v2050
        %v2487 = vunpack.c.l.b16 %v2051
        %v2488 = vunpack.c.l.b16 %v2052
        %v2489 = vunpack.c.l.b16 %v2053
        %v2490 = vpack.c.b16 %v2475, %v2474
        %v2491 = vpack.c.b16 %v2477, %v2476
        %v2492 = vpack.c.b16 %v2479, %v2478
        %v2493 = vpack.c.b16 %v2481, %v2480
        %v2494 = vpack.c.b16 %v2483, %v2482
        %v2495 = vpack.c.b16 %v2485, %v2484
        %v2496 = vpack.c.b16 %v2487, %v2486
        %v2497 = vpack.c.b16 %v2489, %v2488
        %2506 = vmatprep.subr.bf16.mxu0 0
        %2507 = vmatpush1.bf16.msra.mxu0 %v2497
        %2508 = vmatprep.subr.bf16.mxu0 0
        %2509 = vmatpush1.bf16.msra.mxu0 %v2496
        %2510 = vmatprep.subr.bf16.mxu0 0
        %2511 = vmatpush1.bf16.msra.mxu0 %v2495
        %2512 = vmatprep.subr.bf16.mxu0 0
        %2513 = vmatpush1.bf16.msra.mxu0 %v2494
        %2514 = vmatprep.subr.bf16.mxu0 0
        %2515 = vmatpush1.bf16.msra.mxu0 %v2493
        %2516 = vmatprep.subr.bf16.mxu0 0
        %2517 = vmatpush1.bf16.msra.mxu0 %v2492
        %2518 = vmatprep.subr.bf16.mxu0 0
        %2519 = vmatpush1.bf16.msra.mxu0 %v2491
        %2520 = vmatprep.subr.bf16.mxu0 0
        %2521 = vmatpush1.bf16.msra.mxu0 %v2490
        %2522 = vmatprep.subr.bf16.mxu0 0
        %2523 = vmatpush2.bf16.msra.mxu0 0
        %2524 = vmatprep.subr.bf16.mxu0 0
        %2525 = vmatpush2.bf16.msra.mxu0 0
        %2526 = vmatprep.subr.bf16.mxu0 0
        %2527 = vmatpush2.bf16.msra.mxu0 0
        %2528 = vmatprep.subr.bf16.mxu0 0
        %2529 = vmatpush2.bf16.msra.mxu0 0
        %2530 = vmatprep.subr.bf16.mxu0 0
        %2531 = vmatpush2.bf16.msra.mxu0 0
        %2532 = vmatprep.subr.bf16.mxu0 0
        %2533 = vmatpush2.bf16.msra.mxu0 0
        %2534 = vmatprep.subr.bf16.mxu0 0
        %2535 = vmatpush2.bf16.msra.mxu0 0
        %2536 = vmatprep.subr.bf16.mxu0 0
        %2537 = vmatpush2.bf16.msra.mxu0 0
        %2538 = vmatprep.mubr.bf16.mxu0 0
        %2539 = vmatmul.mubr.bf16.gmra.mxu0 %v616
        %v2540 = vpop.f32.mrf.mxu0
        %v2541 = vadd.f32 0.0, %v2540
        %v2542 = vpop.f32.mrf.mxu0
        %v2543 = vpop.f32.mrf.mxu0
        %v2544 = vadd.f32 0.0, %v2543
        %v2545 = vpop.f32.mrf.mxu0
        %2546 = vmatprep.mubr.bf16.mxu0 0
        %2547 = vmatmul.mubr.bf16.gmra.mxu0 %v617
        %v2548 = vpop.f32.mrf.mxu0
        %v2549 = vadd.f32 0.0, %v2548
        %v2550 = vpop.f32.mrf.mxu0
        %v2551 = vpop.f32.mrf.mxu0
        %v2552 = vadd.f32 0.0, %v2551
        %v2553 = vpop.f32.mrf.mxu0
        %2554 = vdwg.mxu0
        %v2571 = vunpack.c.l.b16 %v2054
        %v2572 = vunpack.c.l.b16 %v2055
        %v2573 = vunpack.c.l.b16 %v2056
        %v2574 = vunpack.c.l.b16 %v2057
        %v2575 = vunpack.c.l.b16 %v2058
        %v2576 = vunpack.c.l.b16 %v2059
        %v2577 = vunpack.c.l.b16 %v2060
        %v2578 = vunpack.c.l.b16 %v2061
        %v2579 = vunpack.c.l.b16 %v2062
        %v2580 = vunpack.c.l.b16 %v2063
        %v2581 = vunpack.c.l.b16 %v2064
        %v2582 = vunpack.c.l.b16 %v2065
        %v2583 = vunpack.c.l.b16 %v2066
        %v2584 = vunpack.c.l.b16 %v2067
        %v2585 = vunpack.c.l.b16 %v2068
        %v2586 = vunpack.c.l.b16 %v2069
        %v2587 = vpack.c.b16 %v2572, %v2571
        %v2588 = vpack.c.b16 %v2574, %v2573
        %v2589 = vpack.c.b16 %v2576, %v2575
        %v2590 = vpack.c.b16 %v2578, %v2577
        %v2591 = vpack.c.b16 %v2580, %v2579
        %v2592 = vpack.c.b16 %v2582, %v2581
        %v2593 = vpack.c.b16 %v2584, %v2583
        %v2594 = vpack.c.b16 %v2586, %v2585
        %2603 = vmatprep.subr.bf16.mxu0 0
        %2604 = vmatpush1.bf16.msra.mxu0 %v2594
        %2605 = vmatprep.subr.bf16.mxu0 0
        %2606 = vmatpush1.bf16.msra.mxu0 %v2593
        %2607 = vmatprep.subr.bf16.mxu0 0
        %2608 = vmatpush1.bf16.msra.mxu0 %v2592
        %2609 = vmatprep.subr.bf16.mxu0 0
        %2610 = vmatpush1.bf16.msra.mxu0 %v2591
        %2611 = vmatprep.subr.bf16.mxu0 0
        %2612 = vmatpush1.bf16.msra.mxu0 %v2590
        %2613 = vmatprep.subr.bf16.mxu0 0
        %2614 = vmatpush1.bf16.msra.mxu0 %v2589
        %2615 = vmatprep.subr.bf16.mxu0 0
        %2616 = vmatpush1.bf16.msra.mxu0 %v2588
        %2617 = vmatprep.subr.bf16.mxu0 0
        %2618 = vmatpush1.bf16.msra.mxu0 %v2587
        %2619 = vmatprep.subr.bf16.mxu0 0
        %2620 = vmatpush2.bf16.msra.mxu0 0
        %2621 = vmatprep.subr.bf16.mxu0 0
        %2622 = vmatpush2.bf16.msra.mxu0 0
        %2623 = vmatprep.subr.bf16.mxu0 0
        %2624 = vmatpush2.bf16.msra.mxu0 0
        %2625 = vmatprep.subr.bf16.mxu0 0
        %2626 = vmatpush2.bf16.msra.mxu0 0
        %2627 = vmatprep.subr.bf16.mxu0 0
        %2628 = vmatpush2.bf16.msra.mxu0 0
        %2629 = vmatprep.subr.bf16.mxu0 0
        %2630 = vmatpush2.bf16.msra.mxu0 0
        %2631 = vmatprep.subr.bf16.mxu0 0
        %2632 = vmatpush2.bf16.msra.mxu0 0
        %2633 = vmatprep.subr.bf16.mxu0 0
        %2634 = vmatpush2.bf16.msra.mxu0 0
        %2635 = vmatprep.mubr.bf16.mxu0 0
        %2636 = vmatmul.mubr.bf16.gmra.mxu0 %v616
        %v2637 = vpop.f32.mrf.mxu0
        %v2638 = vadd.f32 0.0, %v2637
        %v2639 = vpop.f32.mrf.mxu0
        %v2640 = vpop.f32.mrf.mxu0
        %v2641 = vadd.f32 0.0, %v2640
        %v2642 = vpop.f32.mrf.mxu0
        %2643 = vmatprep.mubr.bf16.mxu0 0
        %2644 = vmatmul.mubr.bf16.gmra.mxu0 %v617
        %v2645 = vpop.f32.mrf.mxu0
        %v2646 = vadd.f32 0.0, %v2645
        %v2647 = vpop.f32.mrf.mxu0
        %v2648 = vpop.f32.mrf.mxu0
        %v2649 = vadd.f32 0.0, %v2648
        %v2650 = vpop.f32.mrf.mxu0
        %2651 = vdwg.mxu0
        %v2652 = vpack.c.bf16 %v800, %v797
        %v2653 = vpack.c.bf16 %v808, %v805
        %v2654 = vpack.c.bf16 %v897, %v894
        %v2655 = vpack.c.bf16 %v905, %v902
        %v2656 = vpack.c.bf16 %v994, %v991
        %v2657 = vpack.c.bf16 %v1002, %v999
        %v2658 = vpack.c.bf16 %v1091, %v1088
        %v2659 = vpack.c.bf16 %v1099, %v1096
        %v2660 = vpack.c.bf16 %v1188, %v1185
        %v2661 = vpack.c.bf16 %v1196, %v1193
        %v2662 = vpack.c.bf16 %v1285, %v1282
        %v2663 = vpack.c.bf16 %v1293, %v1290
        %v2664 = vpack.c.bf16 %v1478, %v1475
        %v2665 = vpack.c.bf16 %v1486, %v1483
        %v2666 = vpack.c.bf16 %v1575, %v1572
        %v2667 = vpack.c.bf16 %v1583, %v1580
        %v2668 = vpack.c.bf16 %v1672, %v1669
        %v2669 = vpack.c.bf16 %v1680, %v1677
        %v2670 = vpack.c.bf16 %v1769, %v1766
        %v2671 = vpack.c.bf16 %v1777, %v1774
        %v2672 = vpack.c.bf16 %v1866, %v1863
        %v2673 = vpack.c.bf16 %v1874, %v1871
        %v2674 = vpack.c.bf16 %v1963, %v1960
        %v2675 = vpack.c.bf16 %v1971, %v1968
        %vm2676 = vcmask 130048
        %v2678 = vsel %vm2676, %v2652, 0
        %v2681 = vsel %vm2676, %v2653, 0
        %v2684 = vsel %vm2676, %v2664, 0
        %v2687 = vsel %vm2676, %v2665, 0
        %2689 = vmatprep.subr.bf16.mxu0 0
        %2690 = vmatpush1.bf16.xpose.msra.mxu0 0
        %2691 = vmatprep.subr.bf16.mxu0 0
        %2692 = vmatpush1.bf16.xpose.msra.mxu0 0
        %2693 = vmatprep.subr.bf16.mxu0 0
        %2694 = vmatpush1.bf16.xpose.msra.mxu0 0
        %2695 = vmatprep.subr.bf16.mxu0 0
        %2696 = vmatpush1.bf16.xpose.msra.mxu0 0
        %2697 = vmatprep.subr.bf16.mxu0 0
        %2698 = vmatpush1.bf16.xpose.msra.mxu0 0
        %2699 = vmatprep.subr.bf16.mxu0 0
        %2700 = vmatpush1.bf16.xpose.msra.mxu0 0
        %2701 = vmatprep.subr.bf16.mxu0 0
        %2702 = vmatpush1.bf16.xpose.msra.mxu0 %v2687
        %2703 = vmatprep.subr.bf16.mxu0 0
        %2704 = vmatpush1.bf16.xpose.msra.mxu0 %v2684
        %2705 = vmatprep.subr.bf16.mxu0 0
        %2706 = vmatpush2.bf16.xpose.msra.mxu0 0
        %2707 = vmatprep.subr.bf16.mxu0 0
        %2708 = vmatpush2.bf16.xpose.msra.mxu0 0
        %2709 = vmatprep.subr.bf16.mxu0 0
        %2710 = vmatpush2.bf16.xpose.msra.mxu0 0
        %2711 = vmatprep.subr.bf16.mxu0 0
        %2712 = vmatpush2.bf16.xpose.msra.mxu0 0
        %2713 = vmatprep.subr.bf16.mxu0 0
        %2714 = vmatpush2.bf16.xpose.msra.mxu0 0
        %2715 = vmatprep.subr.bf16.mxu0 0
        %2716 = vmatpush2.bf16.xpose.msra.mxu0 0
        %2717 = vmatprep.subr.bf16.mxu0 0
        %2718 = vmatpush2.bf16.xpose.msra.mxu0 0
        %2719 = vmatprep.subr.bf16.mxu0 0
        %2720 = vmatpush2.bf16.xpose.msra.mxu0 0
        %2721 = vmatprep.mubr.bf16.mxu0 0
        %2722 = vmatmul.mubr.bf16.gmra.mxu0 %v2678
        %v2723 = vpop.f32.mrf.mxu0
        %v2724 = vadd.f32 0.0, %v2723
        %v2725 = vpop.f32.mrf.mxu0
        %v2726 = vpop.f32.mrf.mxu0
        %v2727 = vadd.f32 0.0, %v2726
        %v2728 = vpop.f32.mrf.mxu0
        %2729 = vmatprep.mubr.bf16.mxu0 0
        %2730 = vmatmul.mubr.bf16.gmra.mxu0 %v2681
        %v2731 = vpop.f32.mrf.mxu0
        %v2732 = vadd.f32 0.0, %v2731
        %v2733 = vpop.f32.mrf.mxu0
        %v2734 = vpop.f32.mrf.mxu0
        %v2735 = vadd.f32 0.0, %v2734
        %v2736 = vpop.f32.mrf.mxu0
        %2737 = vdwg.mxu0
        %v2739 = vsel %vm2676, %v2654, 0
        %v2742 = vsel %vm2676, %v2655, 0
        %v2745 = vsel %vm2676, %v2666, 0
        %v2748 = vsel %vm2676, %v2667, 0
        %2750 = vmatprep.subr.bf16.mxu0 0
        %2751 = vmatpush1.bf16.xpose.msra.mxu0 0
        %2752 = vmatprep.subr.bf16.mxu0 0
        %2753 = vmatpush1.bf16.xpose.msra.mxu0 0
        %2754 = vmatprep.subr.bf16.mxu0 0
        %2755 = vmatpush1.bf16.xpose.msra.mxu0 0
        %2756 = vmatprep.subr.bf16.mxu0 0
        %2757 = vmatpush1.bf16.xpose.msra.mxu0 0
        %2758 = vmatprep.subr.bf16.mxu0 0
        %2759 = vmatpush1.bf16.xpose.msra.mxu0 0
        %2760 = vmatprep.subr.bf16.mxu0 0
        %2761 = vmatpush1.bf16.xpose.msra.mxu0 0
        %2762 = vmatprep.subr.bf16.mxu0 0
        %2763 = vmatpush1.bf16.xpose.msra.mxu0 %v2748
        %2764 = vmatprep.subr.bf16.mxu0 0
        %2765 = vmatpush1.bf16.xpose.msra.mxu0 %v2745
        %2766 = vmatprep.subr.bf16.mxu0 0
        %2767 = vmatpush2.bf16.xpose.msra.mxu0 0
        %2768 = vmatprep.subr.bf16.mxu0 0
        %2769 = vmatpush2.bf16.xpose.msra.mxu0 0
        %2770 = vmatprep.subr.bf16.mxu0 0
        %2771 = vmatpush2.bf16.xpose.msra.mxu0 0
        %2772 = vmatprep.subr.bf16.mxu0 0
        %2773 = vmatpush2.bf16.xpose.msra.mxu0 0
        %2774 = vmatprep.subr.bf16.mxu0 0
        %2775 = vmatpush2.bf16.xpose.msra.mxu0 0
        %2776 = vmatprep.subr.bf16.mxu0 0
        %2777 = vmatpush2.bf16.xpose.msra.mxu0 0
        %2778 = vmatprep.subr.bf16.mxu0 0
        %2779 = vmatpush2.bf16.xpose.msra.mxu0 0
        %2780 = vmatprep.subr.bf16.mxu0 0
        %2781 = vmatpush2.bf16.xpose.msra.mxu0 0
        %2782 = vmatprep.mubr.bf16.mxu0 0
        %2783 = vmatmul.mubr.bf16.gmra.mxu0 %v2739
        %v2784 = vpop.f32.mrf.mxu0
        %v2785 = vadd.f32 0.0, %v2784
        %v2786 = vpop.f32.mrf.mxu0
        %v2787 = vpop.f32.mrf.mxu0
        %v2788 = vadd.f32 0.0, %v2787
        %v2789 = vpop.f32.mrf.mxu0
        %2790 = vmatprep.mubr.bf16.mxu0 0
        %2791 = vmatmul.mubr.bf16.gmra.mxu0 %v2742
        %v2792 = vpop.f32.mrf.mxu0
        %v2793 = vadd.f32 0.0, %v2792
        %v2794 = vpop.f32.mrf.mxu0
        %v2795 = vpop.f32.mrf.mxu0
        %v2796 = vadd.f32 0.0, %v2795
        %v2797 = vpop.f32.mrf.mxu0
        %2798 = vdwg.mxu0
        %v2800 = vsel %vm2676, %v2656, 0
        %v2803 = vsel %vm2676, %v2657, 0
        %v2806 = vsel %vm2676, %v2668, 0
        %v2809 = vsel %vm2676, %v2669, 0
        %2811 = vmatprep.subr.bf16.mxu0 0
        %2812 = vmatpush1.bf16.xpose.msra.mxu0 0
        %2813 = vmatprep.subr.bf16.mxu0 0
        %2814 = vmatpush1.bf16.xpose.msra.mxu0 0
        %2815 = vmatprep.subr.bf16.mxu0 0
        %2816 = vmatpush1.bf16.xpose.msra.mxu0 0
        %2817 = vmatprep.subr.bf16.mxu0 0
        %2818 = vmatpush1.bf16.xpose.msra.mxu0 0
        %2819 = vmatprep.subr.bf16.mxu0 0
        %2820 = vmatpush1.bf16.xpose.msra.mxu0 0
        %2821 = vmatprep.subr.bf16.mxu0 0
        %2822 = vmatpush1.bf16.xpose.msra.mxu0 0
        %2823 = vmatprep.subr.bf16.mxu0 0
        %2824 = vmatpush1.bf16.xpose.msra.mxu0 %v2809
        %2825 = vmatprep.subr.bf16.mxu0 0
        %2826 = vmatpush1.bf16.xpose.msra.mxu0 %v2806
        %2827 = vmatprep.subr.bf16.mxu0 0
        %2828 = vmatpush2.bf16.xpose.msra.mxu0 0
        %2829 = vmatprep.subr.bf16.mxu0 0
        %2830 = vmatpush2.bf16.xpose.msra.mxu0 0
        %2831 = vmatprep.subr.bf16.mxu0 0
        %2832 = vmatpush2.bf16.xpose.msra.mxu0 0
        %2833 = vmatprep.subr.bf16.mxu0 0
        %2834 = vmatpush2.bf16.xpose.msra.mxu0 0
        %2835 = vmatprep.subr.bf16.mxu0 0
        %2836 = vmatpush2.bf16.xpose.msra.mxu0 0
        %2837 = vmatprep.subr.bf16.mxu0 0
        %2838 = vmatpush2.bf16.xpose.msra.mxu0 0
        %2839 = vmatprep.subr.bf16.mxu0 0
        %2840 = vmatpush2.bf16.xpose.msra.mxu0 0
        %2841 = vmatprep.subr.bf16.mxu0 0
        %2842 = vmatpush2.bf16.xpose.msra.mxu0 0
        %2843 = vmatprep.mubr.bf16.mxu0 0
        %2844 = vmatmul.mubr.bf16.gmra.mxu0 %v2800
        %v2845 = vpop.f32.mrf.mxu0
        %v2846 = vadd.f32 0.0, %v2845
        %v2847 = vpop.f32.mrf.mxu0
        %v2848 = vpop.f32.mrf.mxu0
        %v2849 = vadd.f32 0.0, %v2848
        %v2850 = vpop.f32.mrf.mxu0
        %2851 = vmatprep.mubr.bf16.mxu0 0
        %2852 = vmatmul.mubr.bf16.gmra.mxu0 %v2803
        %v2853 = vpop.f32.mrf.mxu0
        %v2854 = vadd.f32 0.0, %v2853
        %v2855 = vpop.f32.mrf.mxu0
        %v2856 = vpop.f32.mrf.mxu0
        %v2857 = vadd.f32 0.0, %v2856
        %v2858 = vpop.f32.mrf.mxu0
        %2859 = vdwg.mxu0
        %v2861 = vsel %vm2676, %v2658, 0
        %v2864 = vsel %vm2676, %v2659, 0
        %v2867 = vsel %vm2676, %v2670, 0
        %v2870 = vsel %vm2676, %v2671, 0
        %2872 = vmatprep.subr.bf16.mxu0 0
        %2873 = vmatpush1.bf16.xpose.msra.mxu0 0
        %2874 = vmatprep.subr.bf16.mxu0 0
        %2875 = vmatpush1.bf16.xpose.msra.mxu0 0
        %2876 = vmatprep.subr.bf16.mxu0 0
        %2877 = vmatpush1.bf16.xpose.msra.mxu0 0
        %2878 = vmatprep.subr.bf16.mxu0 0
        %2879 = vmatpush1.bf16.xpose.msra.mxu0 0
        %2880 = vmatprep.subr.bf16.mxu0 0
        %2881 = vmatpush1.bf16.xpose.msra.mxu0 0
        %2882 = vmatprep.subr.bf16.mxu0 0
        %2883 = vmatpush1.bf16.xpose.msra.mxu0 0
        %2884 = vmatprep.subr.bf16.mxu0 0
        %2885 = vmatpush1.bf16.xpose.msra.mxu0 %v2870
        %2886 = vmatprep.subr.bf16.mxu0 0
        %2887 = vmatpush1.bf16.xpose.msra.mxu0 %v2867
        %2888 = vmatprep.subr.bf16.mxu0 0
        %2889 = vmatpush2.bf16.xpose.msra.mxu0 0
        %2890 = vmatprep.subr.bf16.mxu0 0
        %2891 = vmatpush2.bf16.xpose.msra.mxu0 0
        %2892 = vmatprep.subr.bf16.mxu0 0
        %2893 = vmatpush2.bf16.xpose.msra.mxu0 0
        %2894 = vmatprep.subr.bf16.mxu0 0
        %2895 = vmatpush2.bf16.xpose.msra.mxu0 0
        %2896 = vmatprep.subr.bf16.mxu0 0
        %2897 = vmatpush2.bf16.xpose.msra.mxu0 0
        %2898 = vmatprep.subr.bf16.mxu0 0
        %2899 = vmatpush2.bf16.xpose.msra.mxu0 0
        %2900 = vmatprep.subr.bf16.mxu0 0
        %2901 = vmatpush2.bf16.xpose.msra.mxu0 0
        %2902 = vmatprep.subr.bf16.mxu0 0
        %2903 = vmatpush2.bf16.xpose.msra.mxu0 0
        %2904 = vmatprep.mubr.bf16.mxu0 0
        %2905 = vmatmul.mubr.bf16.gmra.mxu0 %v2861
        %v2906 = vpop.f32.mrf.mxu0
        %v2907 = vadd.f32 0.0, %v2906
        %v2908 = vpop.f32.mrf.mxu0
        %v2909 = vpop.f32.mrf.mxu0
        %v2910 = vadd.f32 0.0, %v2909
        %v2911 = vpop.f32.mrf.mxu0
        %2912 = vmatprep.mubr.bf16.mxu0 0
        %2913 = vmatmul.mubr.bf16.gmra.mxu0 %v2864
        %v2914 = vpop.f32.mrf.mxu0
        %v2915 = vadd.f32 0.0, %v2914
        %v2916 = vpop.f32.mrf.mxu0
        %v2917 = vpop.f32.mrf.mxu0
        %v2918 = vadd.f32 0.0, %v2917
        %v2919 = vpop.f32.mrf.mxu0
        %2920 = vdwg.mxu0
        %v2922 = vsel %vm2676, %v2660, 0
        %v2925 = vsel %vm2676, %v2661, 0
        %v2928 = vsel %vm2676, %v2672, 0
        %v2931 = vsel %vm2676, %v2673, 0
        %2933 = vmatprep.subr.bf16.mxu0 0
        %2934 = vmatpush1.bf16.xpose.msra.mxu0 0
        %2935 = vmatprep.subr.bf16.mxu0 0
        %2936 = vmatpush1.bf16.xpose.msra.mxu0 0
        %2937 = vmatprep.subr.bf16.mxu0 0
        %2938 = vmatpush1.bf16.xpose.msra.mxu0 0
        %2939 = vmatprep.subr.bf16.mxu0 0
        %2940 = vmatpush1.bf16.xpose.msra.mxu0 0
        %2941 = vmatprep.subr.bf16.mxu0 0
        %2942 = vmatpush1.bf16.xpose.msra.mxu0 0
        %2943 = vmatprep.subr.bf16.mxu0 0
        %2944 = vmatpush1.bf16.xpose.msra.mxu0 0
        %2945 = vmatprep.subr.bf16.mxu0 0
        %2946 = vmatpush1.bf16.xpose.msra.mxu0 %v2931
        %2947 = vmatprep.subr.bf16.mxu0 0
        %2948 = vmatpush1.bf16.xpose.msra.mxu0 %v2928
        %2949 = vmatprep.subr.bf16.mxu0 0
        %2950 = vmatpush2.bf16.xpose.msra.mxu0 0
        %2951 = vmatprep.subr.bf16.mxu0 0
        %2952 = vmatpush2.bf16.xpose.msra.mxu0 0
        %2953 = vmatprep.subr.bf16.mxu0 0
        %2954 = vmatpush2.bf16.xpose.msra.mxu0 0
        %2955 = vmatprep.subr.bf16.mxu0 0
        %2956 = vmatpush2.bf16.xpose.msra.mxu0 0
        %2957 = vmatprep.subr.bf16.mxu0 0
        %2958 = vmatpush2.bf16.xpose.msra.mxu0 0
        %2959 = vmatprep.subr.bf16.mxu0 0
        %2960 = vmatpush2.bf16.xpose.msra.mxu0 0
        %2961 = vmatprep.subr.bf16.mxu0 0
        %2962 = vmatpush2.bf16.xpose.msra.mxu0 0
        %2963 = vmatprep.subr.bf16.mxu0 0
        %2964 = vmatpush2.bf16.xpose.msra.mxu0 0
        %2965 = vmatprep.mubr.bf16.mxu0 0
        %2966 = vmatmul.mubr.bf16.gmra.mxu0 %v2922
        %v2967 = vpop.f32.mrf.mxu0
        %v2968 = vadd.f32 0.0, %v2967
        %v2969 = vpop.f32.mrf.mxu0
        %v2970 = vpop.f32.mrf.mxu0
        %v2971 = vadd.f32 0.0, %v2970
        %v2972 = vpop.f32.mrf.mxu0
        %2973 = vmatprep.mubr.bf16.mxu0 0
        %2974 = vmatmul.mubr.bf16.gmra.mxu0 %v2925
        %v2975 = vpop.f32.mrf.mxu0
        %v2976 = vadd.f32 0.0, %v2975
        %v2977 = vpop.f32.mrf.mxu0
        %v2978 = vpop.f32.mrf.mxu0
        %v2979 = vadd.f32 0.0, %v2978
        %v2980 = vpop.f32.mrf.mxu0
        %2981 = vdwg.mxu0
        %v2983 = vsel %vm2676, %v2662, 0
        %v2986 = vsel %vm2676, %v2663, 0
        %v2989 = vsel %vm2676, %v2674, 0
        %v2992 = vsel %vm2676, %v2675, 0
        %2994 = vmatprep.subr.bf16.mxu0 0
        %2995 = vmatpush1.bf16.xpose.msra.mxu0 0
        %2996 = vmatprep.subr.bf16.mxu0 0
        %2997 = vmatpush1.bf16.xpose.msra.mxu0 0
        %2998 = vmatprep.subr.bf16.mxu0 0
        %2999 = vmatpush1.bf16.xpose.msra.mxu0 0
        %3000 = vmatprep.subr.bf16.mxu0 0
        %3001 = vmatpush1.bf16.xpose.msra.mxu0 0
        %3002 = vmatprep.subr.bf16.mxu0 0
        %3003 = vmatpush1.bf16.xpose.msra.mxu0 0
        %3004 = vmatprep.subr.bf16.mxu0 0
        %3005 = vmatpush1.bf16.xpose.msra.mxu0 0
        %3006 = vmatprep.subr.bf16.mxu0 0
        %3007 = vmatpush1.bf16.xpose.msra.mxu0 %v2992
        %3008 = vmatprep.subr.bf16.mxu0 0
        %3009 = vmatpush1.bf16.xpose.msra.mxu0 %v2989
        %3010 = vmatprep.subr.bf16.mxu0 0
        %3011 = vmatpush2.bf16.xpose.msra.mxu0 0
        %3012 = vmatprep.subr.bf16.mxu0 0
        %3013 = vmatpush2.bf16.xpose.msra.mxu0 0
        %3014 = vmatprep.subr.bf16.mxu0 0
        %3015 = vmatpush2.bf16.xpose.msra.mxu0 0
        %3016 = vmatprep.subr.bf16.mxu0 0
        %3017 = vmatpush2.bf16.xpose.msra.mxu0 0
        %3018 = vmatprep.subr.bf16.mxu0 0
        %3019 = vmatpush2.bf16.xpose.msra.mxu0 0
        %3020 = vmatprep.subr.bf16.mxu0 0
        %3021 = vmatpush2.bf16.xpose.msra.mxu0 0
        %3022 = vmatprep.subr.bf16.mxu0 0
        %3023 = vmatpush2.bf16.xpose.msra.mxu0 0
        %3024 = vmatprep.subr.bf16.mxu0 0
        %3025 = vmatpush2.bf16.xpose.msra.mxu0 0
        %3026 = vmatprep.mubr.bf16.mxu0 0
        %3027 = vmatmul.mubr.bf16.gmra.mxu0 %v2983
        %v3028 = vpop.f32.mrf.mxu0
        %v3029 = vadd.f32 0.0, %v3028
        %v3030 = vpop.f32.mrf.mxu0
        %v3031 = vpop.f32.mrf.mxu0
        %v3032 = vadd.f32 0.0, %v3031
        %v3033 = vpop.f32.mrf.mxu0
        %3034 = vmatprep.mubr.bf16.mxu0 0
        %3035 = vmatmul.mubr.bf16.gmra.mxu0 %v2986
        %v3036 = vpop.f32.mrf.mxu0
        %v3037 = vadd.f32 0.0, %v3036
        %v3038 = vpop.f32.mrf.mxu0
        %v3039 = vpop.f32.mrf.mxu0
        %v3040 = vadd.f32 0.0, %v3039
        %v3041 = vpop.f32.mrf.mxu0
        %3042 = vdwg.mxu0
        %v3043 = vsel %vm535, 1, 0
        %v3044 = vsel %vm536, 1, 0
        %v3045 = vsel %vm537, 1, 0
        %v3046 = vsel %vm538, 1, 0
        %vm3047 = vcmp.eq.s32.totalorder %v3043, 1
        %vm3048 = vcmp.eq.s32.totalorder %v3044, 1
        %vm3049 = vcmp.eq.s32.totalorder %v3045, 1
        %vm3050 = vcmp.eq.s32.totalorder %v3046, 1
        %v3051 = vsel %vm3047, %v2724, -1e+30
        %v3052 = vsel %vm3048, %v2727, -1e+30
        %v3053 = vsel %vm3049, %v2732, -1e+30
        %v3054 = vsel %vm3050, %v2735, -1e+30
        %v3055 = vsel %vm3047, %v2785, -1e+30
        %v3056 = vsel %vm3048, %v2788, -1e+30
        %v3057 = vsel %vm3049, %v2793, -1e+30
        %v3058 = vsel %vm3050, %v2796, -1e+30
        %v3059 = vsel %vm3047, %v2846, -1e+30
        %v3060 = vsel %vm3048, %v2849, -1e+30
        %v3061 = vsel %vm3049, %v2854, -1e+30
        %v3062 = vsel %vm3050, %v2857, -1e+30
        %v3063 = vsel %vm3047, %v2907, -1e+30
        %v3064 = vsel %vm3048, %v2910, -1e+30
        %v3065 = vsel %vm3049, %v2915, -1e+30
        %v3066 = vsel %vm3050, %v2918, -1e+30
        %v3067 = vsel %vm3047, %v2968, -1e+30
        %v3068 = vsel %vm3048, %v2971, -1e+30
        %v3069 = vsel %vm3049, %v2976, -1e+30
        %v3070 = vsel %vm3050, %v2979, -1e+30
        %v3071 = vsel %vm3047, %v3029, -1e+30
        %v3072 = vsel %vm3048, %v3032, -1e+30
        %v3073 = vsel %vm3049, %v3037, -1e+30
        %v3074 = vsel %vm3050, %v3040, -1e+30
        %vm3075 = vcmask 261120
        %v3076 = vsel %vm3075, %v3051, -inf
        %3077 = vmax.xlane.f32.xlu0 %v3076
        %v3078 = vpop.xlane.xlu0 %3077
        %v3079 = vsel %vm3075, %v3052, -inf
        %3080 = vmax.xlane.f32.xlu0 %v3079
        %v3081 = vpop.xlane.xlu0 %3080
        %v3082 = vsel %vm3075, %v3053, -inf
        %3083 = vmax.xlane.f32.xlu0 %v3082
        %v3084 = vpop.xlane.xlu0 %3083
        %v3085 = vsel %vm3075, %v3054, -inf
        %3086 = vmax.xlane.f32.xlu0 %v3085
        %v3087 = vpop.xlane.xlu0 %3086
        %v3088 = vsel %vm3075, %v3055, -inf
        %3089 = vmax.xlane.f32.xlu0 %v3088
        %v3090 = vpop.xlane.xlu0 %3089
        %v3091 = vsel %vm3075, %v3056, -inf
        %3092 = vmax.xlane.f32.xlu0 %v3091
        %v3093 = vpop.xlane.xlu0 %3092
        %v3094 = vsel %vm3075, %v3057, -inf
        %3095 = vmax.xlane.f32.xlu0 %v3094
        %v3096 = vpop.xlane.xlu0 %3095
        %v3097 = vsel %vm3075, %v3058, -inf
        %3098 = vmax.xlane.f32.xlu0 %v3097
        %v3099 = vpop.xlane.xlu0 %3098
        %v3100 = vsel %vm3075, %v3059, -inf
        %3101 = vmax.xlane.f32.xlu0 %v3100
        %v3102 = vpop.xlane.xlu0 %3101
        %v3103 = vsel %vm3075, %v3060, -inf
        %3104 = vmax.xlane.f32.xlu0 %v3103
        %v3105 = vpop.xlane.xlu0 %3104
        %v3106 = vsel %vm3075, %v3061, -inf
        %3107 = vmax.xlane.f32.xlu0 %v3106
        %v3108 = vpop.xlane.xlu0 %3107
        %v3109 = vsel %vm3075, %v3062, -inf
        %3110 = vmax.xlane.f32.xlu0 %v3109
        %v3111 = vpop.xlane.xlu0 %3110
        %v3112 = vsel %vm3075, %v3063, -inf
        %3113 = vmax.xlane.f32.xlu0 %v3112
        %v3114 = vpop.xlane.xlu0 %3113
        %v3115 = vsel %vm3075, %v3064, -inf
        %3116 = vmax.xlane.f32.xlu0 %v3115
        %v3117 = vpop.xlane.xlu0 %3116
        %v3118 = vsel %vm3075, %v3065, -inf
        %3119 = vmax.xlane.f32.xlu0 %v3118
        %v3120 = vpop.xlane.xlu0 %3119
        %v3121 = vsel %vm3075, %v3066, -inf
        %3122 = vmax.xlane.f32.xlu0 %v3121
        %v3123 = vpop.xlane.xlu0 %3122
        %v3124 = vsel %vm3075, %v3067, -inf
        %3125 = vmax.xlane.f32.xlu0 %v3124
        %v3126 = vpop.xlane.xlu0 %3125
        %v3127 = vsel %vm3075, %v3068, -inf
        %3128 = vmax.xlane.f32.xlu0 %v3127
        %v3129 = vpop.xlane.xlu0 %3128
        %v3130 = vsel %vm3075, %v3069, -inf
        %3131 = vmax.xlane.f32.xlu0 %v3130
        %v3132 = vpop.xlane.xlu0 %3131
        %v3133 = vsel %vm3075, %v3070, -inf
        %3134 = vmax.xlane.f32.xlu0 %v3133
        %v3135 = vpop.xlane.xlu0 %3134
        %v3136 = vsel %vm3075, %v3071, -inf
        %3137 = vmax.xlane.f32.xlu0 %v3136
        %v3138 = vpop.xlane.xlu0 %3137
        %v3139 = vsel %vm3075, %v3072, -inf
        %3140 = vmax.xlane.f32.xlu0 %v3139
        %v3141 = vpop.xlane.xlu0 %3140
        %v3142 = vsel %vm3075, %v3073, -inf
        %3143 = vmax.xlane.f32.xlu0 %v3142
        %v3144 = vpop.xlane.xlu0 %3143
        %v3145 = vsel %vm3075, %v3074, -inf
        %3146 = vmax.xlane.f32.xlu0 %v3145
        %v3147 = vpop.xlane.xlu0 %3146
        %v3148 = vsub.f32 %v3051, %v3078
        %v3149 = vsub.f32 %v3052, %v3081
        %v3150 = vsub.f32 %v3053, %v3084
        %v3151 = vsub.f32 %v3054, %v3087
        %v3152 = vsub.f32 %v3055, %v3090
        %v3153 = vsub.f32 %v3056, %v3093
        %v3154 = vsub.f32 %v3057, %v3096
        %v3155 = vsub.f32 %v3058, %v3099
        %v3156 = vsub.f32 %v3059, %v3102
        %v3157 = vsub.f32 %v3060, %v3105
        %v3158 = vsub.f32 %v3061, %v3108
        %v3159 = vsub.f32 %v3062, %v3111
        %v3160 = vsub.f32 %v3063, %v3114
        %v3161 = vsub.f32 %v3064, %v3117
        %v3162 = vsub.f32 %v3065, %v3120
        %v3163 = vsub.f32 %v3066, %v3123
        %v3164 = vsub.f32 %v3067, %v3126
        %v3165 = vsub.f32 %v3068, %v3129
        %v3166 = vsub.f32 %v3069, %v3132
        %v3167 = vsub.f32 %v3070, %v3135
        %v3168 = vsub.f32 %v3071, %v3138
        %v3169 = vsub.f32 %v3072, %v3141
        %v3170 = vsub.f32 %v3073, %v3144
        %v3171 = vsub.f32 %v3074, %v3147
        %v3172 = vmul.f32 %v3148, 1.442695
        %v3173 = vpow.pop %v3172
        %v3174 = vmul.f32 %v3149, 1.442695
        %v3175 = vpow.pop %v3174
        %v3176 = vmul.f32 %v3150, 1.442695
        %v3177 = vpow.pop %v3176
        %v3178 = vmul.f32 %v3151, 1.442695
        %v3179 = vpow.pop %v3178
        %v3180 = vmul.f32 %v3152, 1.442695
        %v3181 = vpow.pop %v3180
        %v3182 = vmul.f32 %v3153, 1.442695
        %v3183 = vpow.pop %v3182
        %v3184 = vmul.f32 %v3154, 1.442695
        %v3185 = vpow.pop %v3184
        %v3186 = vmul.f32 %v3155, 1.442695
        %v3187 = vpow.pop %v3186
        %v3188 = vmul.f32 %v3156, 1.442695
        %v3189 = vpow.pop %v3188
        %v3190 = vmul.f32 %v3157, 1.442695
        %v3191 = vpow.pop %v3190
        %v3192 = vmul.f32 %v3158, 1.442695
        %v3193 = vpow.pop %v3192
        %v3194 = vmul.f32 %v3159, 1.442695
        %v3195 = vpow.pop %v3194
        %v3196 = vmul.f32 %v3160, 1.442695
        %v3197 = vpow.pop %v3196
        %v3198 = vmul.f32 %v3161, 1.442695
        %v3199 = vpow.pop %v3198
        %v3200 = vmul.f32 %v3162, 1.442695
        %v3201 = vpow.pop %v3200
        %v3202 = vmul.f32 %v3163, 1.442695
        %v3203 = vpow.pop %v3202
        %v3204 = vmul.f32 %v3164, 1.442695
        %v3205 = vpow.pop %v3204
        %v3206 = vmul.f32 %v3165, 1.442695
        %v3207 = vpow.pop %v3206
        %v3208 = vmul.f32 %v3166, 1.442695
        %v3209 = vpow.pop %v3208
        %v3210 = vmul.f32 %v3167, 1.442695
        %v3211 = vpow.pop %v3210
        %v3212 = vmul.f32 %v3168, 1.442695
        %v3213 = vpow.pop %v3212
        %v3214 = vmul.f32 %v3169, 1.442695
        %v3215 = vpow.pop %v3214
        %v3216 = vmul.f32 %v3170, 1.442695
        %v3217 = vpow.pop %v3216
        %v3218 = vmul.f32 %v3171, 1.442695
        %v3219 = vpow.pop %v3218
        %v3220 = vsel %vm3075, %v3173, 0.0
        %3221 = vadd.xlane.f32.xlu0 %v3220
        %v3222 = vpop.xlane.xlu0 %3221
        %v3223 = vsel %vm3075, %v3175, 0.0
        %3224 = vadd.xlane.f32.xlu0 %v3223
        %v3225 = vpop.xlane.xlu0 %3224
        %v3226 = vsel %vm3075, %v3177, 0.0
        %3227 = vadd.xlane.f32.xlu0 %v3226
        %v3228 = vpop.xlane.xlu0 %3227
        %v3229 = vsel %vm3075, %v3179, 0.0
        %3230 = vadd.xlane.f32.xlu0 %v3229
        %v3231 = vpop.xlane.xlu0 %3230
        %v3232 = vsel %vm3075, %v3181, 0.0
        %3233 = vadd.xlane.f32.xlu0 %v3232
        %v3234 = vpop.xlane.xlu0 %3233
        %v3235 = vsel %vm3075, %v3183, 0.0
        %3236 = vadd.xlane.f32.xlu0 %v3235
        %v3237 = vpop.xlane.xlu0 %3236
        %v3238 = vsel %vm3075, %v3185, 0.0
        %3239 = vadd.xlane.f32.xlu0 %v3238
        %v3240 = vpop.xlane.xlu0 %3239
        %v3241 = vsel %vm3075, %v3187, 0.0
        %3242 = vadd.xlane.f32.xlu0 %v3241
        %v3243 = vpop.xlane.xlu0 %3242
        %v3244 = vsel %vm3075, %v3189, 0.0
        %3245 = vadd.xlane.f32.xlu0 %v3244
        %v3246 = vpop.xlane.xlu0 %3245
        %v3247 = vsel %vm3075, %v3191, 0.0
        %3248 = vadd.xlane.f32.xlu0 %v3247
        %v3249 = vpop.xlane.xlu0 %3248
        %v3250 = vsel %vm3075, %v3193, 0.0
        %3251 = vadd.xlane.f32.xlu0 %v3250
        %v3252 = vpop.xlane.xlu0 %3251
        %v3253 = vsel %vm3075, %v3195, 0.0
        %3254 = vadd.xlane.f32.xlu0 %v3253
        %v3255 = vpop.xlane.xlu0 %3254
        %v3256 = vsel %vm3075, %v3197, 0.0
        %3257 = vadd.xlane.f32.xlu0 %v3256
        %v3258 = vpop.xlane.xlu0 %3257
        %v3259 = vsel %vm3075, %v3199, 0.0
        %3260 = vadd.xlane.f32.xlu0 %v3259
        %v3261 = vpop.xlane.xlu0 %3260
        %v3262 = vsel %vm3075, %v3201, 0.0
        %3263 = vadd.xlane.f32.xlu0 %v3262
        %v3264 = vpop.xlane.xlu0 %3263
        %v3265 = vsel %vm3075, %v3203, 0.0
        %3266 = vadd.xlane.f32.xlu0 %v3265
        %v3267 = vpop.xlane.xlu0 %3266
        %v3268 = vsel %vm3075, %v3205, 0.0
        %3269 = vadd.xlane.f32.xlu0 %v3268
        %v3270 = vpop.xlane.xlu0 %3269
        %v3271 = vsel %vm3075, %v3207, 0.0
        %3272 = vadd.xlane.f32.xlu0 %v3271
        %v3273 = vpop.xlane.xlu0 %3272
        %v3274 = vsel %vm3075, %v3209, 0.0
        %3275 = vadd.xlane.f32.xlu0 %v3274
        %v3276 = vpop.xlane.xlu0 %3275
        %v3277 = vsel %vm3075, %v3211, 0.0
        %3278 = vadd.xlane.f32.xlu0 %v3277
        %v3279 = vpop.xlane.xlu0 %3278
        %v3280 = vsel %vm3075, %v3213, 0.0
        %3281 = vadd.xlane.f32.xlu0 %v3280
        %v3282 = vpop.xlane.xlu0 %3281
        %v3283 = vsel %vm3075, %v3215, 0.0
        %3284 = vadd.xlane.f32.xlu0 %v3283
        %v3285 = vpop.xlane.xlu0 %3284
        %v3286 = vsel %vm3075, %v3217, 0.0
        %3287 = vadd.xlane.f32.xlu0 %v3286
        %v3288 = vpop.xlane.xlu0 %3287
        %v3289 = vsel %vm3075, %v3219, 0.0
        %3290 = vadd.xlane.f32.xlu0 %v3289
        %v3291 = vpop.xlane.xlu0 %3290
        %v3292 = vrcp.pop %v3222
        %v3293 = vrcp.pop %v3225
        %v3294 = vrcp.pop %v3228
        %v3295 = vrcp.pop %v3231
        %v3296 = vrcp.pop %v3234
        %v3297 = vrcp.pop %v3237
        %v3298 = vrcp.pop %v3240
        %v3299 = vrcp.pop %v3243
        %v3300 = vrcp.pop %v3246
        %v3301 = vrcp.pop %v3249
        %v3302 = vrcp.pop %v3252
        %v3303 = vrcp.pop %v3255
        %v3304 = vrcp.pop %v3258
        %v3305 = vrcp.pop %v3261
        %v3306 = vrcp.pop %v3264
        %v3307 = vrcp.pop %v3267
        %v3308 = vrcp.pop %v3270
        %v3309 = vrcp.pop %v3273
        %v3310 = vrcp.pop %v3276
        %v3311 = vrcp.pop %v3279
        %v3312 = vrcp.pop %v3282
        %v3313 = vrcp.pop %v3285
        %v3314 = vrcp.pop %v3288
        %v3315 = vrcp.pop %v3291
        %v3316 = vpack.c.bf16 %v3175, %v3173
        %v3317 = vpack.c.bf16 %v3179, %v3177
        %v3318 = vpack.c.bf16 %v3183, %v3181
        %v3319 = vpack.c.bf16 %v3187, %v3185
        %v3320 = vpack.c.bf16 %v3191, %v3189
        %v3321 = vpack.c.bf16 %v3195, %v3193
        %v3322 = vpack.c.bf16 %v3199, %v3197
        %v3323 = vpack.c.bf16 %v3203, %v3201
        %v3324 = vpack.c.bf16 %v3207, %v3205
        %v3325 = vpack.c.bf16 %v3211, %v3209
        %v3326 = vpack.c.bf16 %v3215, %v3213
        %v3327 = vpack.c.bf16 %v3219, %v3217
        %v3328 = vpack.c.bf16 %v2156, %v2153
        %v3329 = vpack.c.bf16 %v2164, %v2161
        %v3330 = vpack.c.bf16 %v2253, %v2250
        %v3331 = vpack.c.bf16 %v2261, %v2258
        %v3332 = vpack.c.bf16 %v2350, %v2347
        %v3333 = vpack.c.bf16 %v2358, %v2355
        %v3334 = vpack.c.bf16 %v2447, %v2444
        %v3335 = vpack.c.bf16 %v2455, %v2452
        %v3336 = vpack.c.bf16 %v2544, %v2541
        %v3337 = vpack.c.bf16 %v2552, %v2549
        %v3338 = vpack.c.bf16 %v2641, %v2638
        %v3339 = vpack.c.bf16 %v2649, %v2646
        %v3341 = vsel %vm3075, %v3316, 0
        %v3344 = vsel %vm3075, %v3317, 0
        %3346 = vmatprep.subr.bf16.mxu0 0
        %3347 = vmatpush1.bf16.msra.mxu0 0
        %3348 = vmatprep.subr.bf16.mxu0 0
        %3349 = vmatpush1.bf16.msra.mxu0 0
        %3350 = vmatprep.subr.bf16.mxu0 0
        %3351 = vmatpush1.bf16.msra.mxu0 0
        %3352 = vmatprep.subr.bf16.mxu0 0
        %3353 = vmatpush1.bf16.msra.mxu0 0
        %3354 = vmatprep.subr.bf16.mxu0 0
        %3355 = vmatpush1.bf16.msra.mxu0 0
        %3356 = vmatprep.subr.bf16.mxu0 0
        %3357 = vmatpush1.bf16.msra.mxu0 0
        %3358 = vmatprep.subr.bf16.mxu0 0
        %3359 = vmatpush1.bf16.msra.mxu0 %v3329
        %3360 = vmatprep.subr.bf16.mxu0 0
        %3361 = vmatpush1.bf16.msra.mxu0 %v3328
        %3362 = vmatprep.subr.bf16.mxu0 0
        %3363 = vmatpush2.bf16.msra.mxu0 0
        %3364 = vmatprep.subr.bf16.mxu0 0
        %3365 = vmatpush2.bf16.msra.mxu0 0
        %3366 = vmatprep.subr.bf16.mxu0 0
        %3367 = vmatpush2.bf16.msra.mxu0 0
        %3368 = vmatprep.subr.bf16.mxu0 0
        %3369 = vmatpush2.bf16.msra.mxu0 0
        %3370 = vmatprep.subr.bf16.mxu0 0
        %3371 = vmatpush2.bf16.msra.mxu0 0
        %3372 = vmatprep.subr.bf16.mxu0 0
        %3373 = vmatpush2.bf16.msra.mxu0 0
        %3374 = vmatprep.subr.bf16.mxu0 0
        %3375 = vmatpush2.bf16.msra.mxu0 0
        %3376 = vmatprep.subr.bf16.mxu0 0
        %3377 = vmatpush2.bf16.msra.mxu0 0
        %3378 = vmatprep.mubr.bf16.mxu0 0
        %3379 = vmatmul.mubr.bf16.gmra.mxu0 %v3341
        %v3380 = vpop.f32.mrf.mxu0
        %v3381 = vadd.f32 0.0, %v3380
        %v3382 = vpop.f32.mrf.mxu0
        %v3383 = vpop.f32.mrf.mxu0
        %v3384 = vadd.f32 0.0, %v3383
        %v3385 = vpop.f32.mrf.mxu0
        %3386 = vmatprep.mubr.bf16.mxu0 0
        %3387 = vmatmul.mubr.bf16.gmra.mxu0 %v3344
        %v3388 = vpop.f32.mrf.mxu0
        %v3389 = vadd.f32 0.0, %v3388
        %v3390 = vpop.f32.mrf.mxu0
        %v3391 = vpop.f32.mrf.mxu0
        %v3392 = vadd.f32 0.0, %v3391
        %v3393 = vpop.f32.mrf.mxu0
        %3394 = vdwg.mxu0
        %v3396 = vsel %vm3075, %v3318, 0
        %v3399 = vsel %vm3075, %v3319, 0
        %3401 = vmatprep.subr.bf16.mxu0 0
        %3402 = vmatpush1.bf16.msra.mxu0 0
        %3403 = vmatprep.subr.bf16.mxu0 0
        %3404 = vmatpush1.bf16.msra.mxu0 0
        %3405 = vmatprep.subr.bf16.mxu0 0
        %3406 = vmatpush1.bf16.msra.mxu0 0
        %3407 = vmatprep.subr.bf16.mxu0 0
        %3408 = vmatpush1.bf16.msra.mxu0 0
        %3409 = vmatprep.subr.bf16.mxu0 0
        %3410 = vmatpush1.bf16.msra.mxu0 0
        %3411 = vmatprep.subr.bf16.mxu0 0
        %3412 = vmatpush1.bf16.msra.mxu0 0
        %3413 = vmatprep.subr.bf16.mxu0 0
        %3414 = vmatpush1.bf16.msra.mxu0 %v3331
        %3415 = vmatprep.subr.bf16.mxu0 0
        %3416 = vmatpush1.bf16.msra.mxu0 %v3330
        %3417 = vmatprep.subr.bf16.mxu0 0
        %3418 = vmatpush2.bf16.msra.mxu0 0
        %3419 = vmatprep.subr.bf16.mxu0 0
        %3420 = vmatpush2.bf16.msra.mxu0 0
        %3421 = vmatprep.subr.bf16.mxu0 0
        %3422 = vmatpush2.bf16.msra.mxu0 0
        %3423 = vmatprep.subr.bf16.mxu0 0
        %3424 = vmatpush2.bf16.msra.mxu0 0
        %3425 = vmatprep.subr.bf16.mxu0 0
        %3426 = vmatpush2.bf16.msra.mxu0 0
        %3427 = vmatprep.subr.bf16.mxu0 0
        %3428 = vmatpush2.bf16.msra.mxu0 0
        %3429 = vmatprep.subr.bf16.mxu0 0
        %3430 = vmatpush2.bf16.msra.mxu0 0
        %3431 = vmatprep.subr.bf16.mxu0 0
        %3432 = vmatpush2.bf16.msra.mxu0 0
        %3433 = vmatprep.mubr.bf16.mxu0 0
        %3434 = vmatmul.mubr.bf16.gmra.mxu0 %v3396
        %v3435 = vpop.f32.mrf.mxu0
        %v3436 = vadd.f32 0.0, %v3435
        %v3437 = vpop.f32.mrf.mxu0
        %v3438 = vpop.f32.mrf.mxu0
        %v3439 = vadd.f32 0.0, %v3438
        %v3440 = vpop.f32.mrf.mxu0
        %3441 = vmatprep.mubr.bf16.mxu0 0
        %3442 = vmatmul.mubr.bf16.gmra.mxu0 %v3399
        %v3443 = vpop.f32.mrf.mxu0
        %v3444 = vadd.f32 0.0, %v3443
        %v3445 = vpop.f32.mrf.mxu0
        %v3446 = vpop.f32.mrf.mxu0
        %v3447 = vadd.f32 0.0, %v3446
        %v3448 = vpop.f32.mrf.mxu0
        %3449 = vdwg.mxu0
        %v3451 = vsel %vm3075, %v3320, 0
        %v3454 = vsel %vm3075, %v3321, 0
        %3456 = vmatprep.subr.bf16.mxu0 0
        %3457 = vmatpush1.bf16.msra.mxu0 0
        %3458 = vmatprep.subr.bf16.mxu0 0
        %3459 = vmatpush1.bf16.msra.mxu0 0
        %3460 = vmatprep.subr.bf16.mxu0 0
        %3461 = vmatpush1.bf16.msra.mxu0 0
        %3462 = vmatprep.subr.bf16.mxu0 0
        %3463 = vmatpush1.bf16.msra.mxu0 0
        %3464 = vmatprep.subr.bf16.mxu0 0
        %3465 = vmatpush1.bf16.msra.mxu0 0
        %3466 = vmatprep.subr.bf16.mxu0 0
        %3467 = vmatpush1.bf16.msra.mxu0 0
        %3468 = vmatprep.subr.bf16.mxu0 0
        %3469 = vmatpush1.bf16.msra.mxu0 %v3333
        %3470 = vmatprep.subr.bf16.mxu0 0
        %3471 = vmatpush1.bf16.msra.mxu0 %v3332
        %3472 = vmatprep.subr.bf16.mxu0 0
        %3473 = vmatpush2.bf16.msra.mxu0 0
        %3474 = vmatprep.subr.bf16.mxu0 0
        %3475 = vmatpush2.bf16.msra.mxu0 0
        %3476 = vmatprep.subr.bf16.mxu0 0
        %3477 = vmatpush2.bf16.msra.mxu0 0
        %3478 = vmatprep.subr.bf16.mxu0 0
        %3479 = vmatpush2.bf16.msra.mxu0 0
        %3480 = vmatprep.subr.bf16.mxu0 0
        %3481 = vmatpush2.bf16.msra.mxu0 0
        %3482 = vmatprep.subr.bf16.mxu0 0
        %3483 = vmatpush2.bf16.msra.mxu0 0
        %3484 = vmatprep.subr.bf16.mxu0 0
        %3485 = vmatpush2.bf16.msra.mxu0 0
        %3486 = vmatprep.subr.bf16.mxu0 0
        %3487 = vmatpush2.bf16.msra.mxu0 0
        %3488 = vmatprep.mubr.bf16.mxu0 0
        %3489 = vmatmul.mubr.bf16.gmra.mxu0 %v3451
        %v3490 = vpop.f32.mrf.mxu0
        %v3491 = vadd.f32 0.0, %v3490
        %v3492 = vpop.f32.mrf.mxu0
        %v3493 = vpop.f32.mrf.mxu0
        %v3494 = vadd.f32 0.0, %v3493
        %v3495 = vpop.f32.mrf.mxu0
        %3496 = vmatprep.mubr.bf16.mxu0 0
        %3497 = vmatmul.mubr.bf16.gmra.mxu0 %v3454
        %v3498 = vpop.f32.mrf.mxu0
        %v3499 = vadd.f32 0.0, %v3498
        %v3500 = vpop.f32.mrf.mxu0
        %v3501 = vpop.f32.mrf.mxu0
        %v3502 = vadd.f32 0.0, %v3501
        %v3503 = vpop.f32.mrf.mxu0
        %3504 = vdwg.mxu0
        %v3506 = vsel %vm3075, %v3322, 0
        %v3509 = vsel %vm3075, %v3323, 0
        %3511 = vmatprep.subr.bf16.mxu0 0
        %3512 = vmatpush1.bf16.msra.mxu0 0
        %3513 = vmatprep.subr.bf16.mxu0 0
        %3514 = vmatpush1.bf16.msra.mxu0 0
        %3515 = vmatprep.subr.bf16.mxu0 0
        %3516 = vmatpush1.bf16.msra.mxu0 0
        %3517 = vmatprep.subr.bf16.mxu0 0
        %3518 = vmatpush1.bf16.msra.mxu0 0
        %3519 = vmatprep.subr.bf16.mxu0 0
        %3520 = vmatpush1.bf16.msra.mxu0 0
        %3521 = vmatprep.subr.bf16.mxu0 0
        %3522 = vmatpush1.bf16.msra.mxu0 0
        %3523 = vmatprep.subr.bf16.mxu0 0
        %3524 = vmatpush1.bf16.msra.mxu0 %v3335
        %3525 = vmatprep.subr.bf16.mxu0 0
        %3526 = vmatpush1.bf16.msra.mxu0 %v3334
        %3527 = vmatprep.subr.bf16.mxu0 0
        %3528 = vmatpush2.bf16.msra.mxu0 0
        %3529 = vmatprep.subr.bf16.mxu0 0
        %3530 = vmatpush2.bf16.msra.mxu0 0
        %3531 = vmatprep.subr.bf16.mxu0 0
        %3532 = vmatpush2.bf16.msra.mxu0 0
        %3533 = vmatprep.subr.bf16.mxu0 0
        %3534 = vmatpush2.bf16.msra.mxu0 0
        %3535 = vmatprep.subr.bf16.mxu0 0
        %3536 = vmatpush2.bf16.msra.mxu0 0
        %3537 = vmatprep.subr.bf16.mxu0 0
        %3538 = vmatpush2.bf16.msra.mxu0 0
        %3539 = vmatprep.subr.bf16.mxu0 0
        %3540 = vmatpush2.bf16.msra.mxu0 0
        %3541 = vmatprep.subr.bf16.mxu0 0
        %3542 = vmatpush2.bf16.msra.mxu0 0
        %3543 = vmatprep.mubr.bf16.mxu0 0
        %3544 = vmatmul.mubr.bf16.gmra.mxu0 %v3506
        %v3545 = vpop.f32.mrf.mxu0
        %v3546 = vadd.f32 0.0, %v3545
        %v3547 = vpop.f32.mrf.mxu0
        %v3548 = vpop.f32.mrf.mxu0
        %v3549 = vadd.f32 0.0, %v3548
        %v3550 = vpop.f32.mrf.mxu0
        %3551 = vmatprep.mubr.bf16.mxu0 0
        %3552 = vmatmul.mubr.bf16.gmra.mxu0 %v3509
        %v3553 = vpop.f32.mrf.mxu0
        %v3554 = vadd.f32 0.0, %v3553
        %v3555 = vpop.f32.mrf.mxu0
        %v3556 = vpop.f32.mrf.mxu0
        %v3557 = vadd.f32 0.0, %v3556
        %v3558 = vpop.f32.mrf.mxu0
        %3559 = vdwg.mxu0
        %v3561 = vsel %vm3075, %v3324, 0
        %v3564 = vsel %vm3075, %v3325, 0
        %3566 = vmatprep.subr.bf16.mxu0 0
        %3567 = vmatpush1.bf16.msra.mxu0 0
        %3568 = vmatprep.subr.bf16.mxu0 0
        %3569 = vmatpush1.bf16.msra.mxu0 0
        %3570 = vmatprep.subr.bf16.mxu0 0
        %3571 = vmatpush1.bf16.msra.mxu0 0
        %3572 = vmatprep.subr.bf16.mxu0 0
        %3573 = vmatpush1.bf16.msra.mxu0 0
        %3574 = vmatprep.subr.bf16.mxu0 0
        %3575 = vmatpush1.bf16.msra.mxu0 0
        %3576 = vmatprep.subr.bf16.mxu0 0
        %3577 = vmatpush1.bf16.msra.mxu0 0
        %3578 = vmatprep.subr.bf16.mxu0 0
        %3579 = vmatpush1.bf16.msra.mxu0 %v3337
        %3580 = vmatprep.subr.bf16.mxu0 0
        %3581 = vmatpush1.bf16.msra.mxu0 %v3336
        %3582 = vmatprep.subr.bf16.mxu0 0
        %3583 = vmatpush2.bf16.msra.mxu0 0
        %3584 = vmatprep.subr.bf16.mxu0 0
        %3585 = vmatpush2.bf16.msra.mxu0 0
        %3586 = vmatprep.subr.bf16.mxu0 0
        %3587 = vmatpush2.bf16.msra.mxu0 0
        %3588 = vmatprep.subr.bf16.mxu0 0
        %3589 = vmatpush2.bf16.msra.mxu0 0
        %3590 = vmatprep.subr.bf16.mxu0 0
        %3591 = vmatpush2.bf16.msra.mxu0 0
        %3592 = vmatprep.subr.bf16.mxu0 0
        %3593 = vmatpush2.bf16.msra.mxu0 0
        %3594 = vmatprep.subr.bf16.mxu0 0
        %3595 = vmatpush2.bf16.msra.mxu0 0
        %3596 = vmatprep.subr.bf16.mxu0 0
        %3597 = vmatpush2.bf16.msra.mxu0 0
        %3598 = vmatprep.mubr.bf16.mxu0 0
        %3599 = vmatmul.mubr.bf16.gmra.mxu0 %v3561
        %v3600 = vpop.f32.mrf.mxu0
        %v3601 = vadd.f32 0.0, %v3600
        %v3602 = vpop.f32.mrf.mxu0
        %v3603 = vpop.f32.mrf.mxu0
        %v3604 = vadd.f32 0.0, %v3603
        %v3605 = vpop.f32.mrf.mxu0
        %3606 = vmatprep.mubr.bf16.mxu0 0
        %3607 = vmatmul.mubr.bf16.gmra.mxu0 %v3564
        %v3608 = vpop.f32.mrf.mxu0
        %v3609 = vadd.f32 0.0, %v3608
        %v3610 = vpop.f32.mrf.mxu0
        %v3611 = vpop.f32.mrf.mxu0
        %v3612 = vadd.f32 0.0, %v3611
        %v3613 = vpop.f32.mrf.mxu0
        %3614 = vdwg.mxu0
        %v3616 = vsel %vm3075, %v3326, 0
        %v3619 = vsel %vm3075, %v3327, 0
        %3621 = vmatprep.subr.bf16.mxu0 0
        %3622 = vmatpush1.bf16.msra.mxu0 0
        %3623 = vmatprep.subr.bf16.mxu0 0
        %3624 = vmatpush1.bf16.msra.mxu0 0
        %3625 = vmatprep.subr.bf16.mxu0 0
        %3626 = vmatpush1.bf16.msra.mxu0 0
        %3627 = vmatprep.subr.bf16.mxu0 0
        %3628 = vmatpush1.bf16.msra.mxu0 0
        %3629 = vmatprep.subr.bf16.mxu0 0
        %3630 = vmatpush1.bf16.msra.mxu0 0
        %3631 = vmatprep.subr.bf16.mxu0 0
        %3632 = vmatpush1.bf16.msra.mxu0 0
        %3633 = vmatprep.subr.bf16.mxu0 0
        %3634 = vmatpush1.bf16.msra.mxu0 %v3339
        %3635 = vmatprep.subr.bf16.mxu0 0
        %3636 = vmatpush1.bf16.msra.mxu0 %v3338
        %3637 = vmatprep.subr.bf16.mxu0 0
        %3638 = vmatpush2.bf16.msra.mxu0 0
        %3639 = vmatprep.subr.bf16.mxu0 0
        %3640 = vmatpush2.bf16.msra.mxu0 0
        %3641 = vmatprep.subr.bf16.mxu0 0
        %3642 = vmatpush2.bf16.msra.mxu0 0
        %3643 = vmatprep.subr.bf16.mxu0 0
        %3644 = vmatpush2.bf16.msra.mxu0 0
        %3645 = vmatprep.subr.bf16.mxu0 0
        %3646 = vmatpush2.bf16.msra.mxu0 0
        %3647 = vmatprep.subr.bf16.mxu0 0
        %3648 = vmatpush2.bf16.msra.mxu0 0
        %3649 = vmatprep.subr.bf16.mxu0 0
        %3650 = vmatpush2.bf16.msra.mxu0 0
        %3651 = vmatprep.subr.bf16.mxu0 0
        %3652 = vmatpush2.bf16.msra.mxu0 0
        %3653 = vmatprep.mubr.bf16.mxu0 0
        %3654 = vmatmul.mubr.bf16.gmra.mxu0 %v3616
        %v3655 = vpop.f32.mrf.mxu0
        %v3656 = vadd.f32 0.0, %v3655
        %v3657 = vpop.f32.mrf.mxu0
        %v3658 = vpop.f32.mrf.mxu0
        %v3659 = vadd.f32 0.0, %v3658
        %v3660 = vpop.f32.mrf.mxu0
        %3661 = vmatprep.mubr.bf16.mxu0 0
        %3662 = vmatmul.mubr.bf16.gmra.mxu0 %v3619
        %v3663 = vpop.f32.mrf.mxu0
        %v3664 = vadd.f32 0.0, %v3663
        %v3665 = vpop.f32.mrf.mxu0
        %v3666 = vpop.f32.mrf.mxu0
        %v3667 = vadd.f32 0.0, %v3666
        %v3668 = vpop.f32.mrf.mxu0
        %3669 = vdwg.mxu0
        %v3670 = vmul.f32 %v3381, %v3292
        %v3671 = vmul.f32 %v3384, %v3293
        %v3672 = vmul.f32 %v3389, %v3294
        %v3673 = vmul.f32 %v3392, %v3295
        %v3674 = vmul.f32 %v3436, %v3296
        %v3675 = vmul.f32 %v3439, %v3297
        %v3676 = vmul.f32 %v3444, %v3298
        %v3677 = vmul.f32 %v3447, %v3299
        %v3678 = vmul.f32 %v3491, %v3300
        %v3679 = vmul.f32 %v3494, %v3301
        %v3680 = vmul.f32 %v3499, %v3302
        %v3681 = vmul.f32 %v3502, %v3303
        %v3682 = vmul.f32 %v3546, %v3304
        %v3683 = vmul.f32 %v3549, %v3305
        %v3684 = vmul.f32 %v3554, %v3306
        %v3685 = vmul.f32 %v3557, %v3307
        %v3686 = vmul.f32 %v3601, %v3308
        %v3687 = vmul.f32 %v3604, %v3309
        %v3688 = vmul.f32 %v3609, %v3310
        %v3689 = vmul.f32 %v3612, %v3311
        %v3690 = vmul.f32 %v3656, %v3312
        %v3691 = vmul.f32 %v3659, %v3313
        %v3692 = vmul.f32 %v3664, %v3314
        %v3693 = vmul.f32 %v3667, %v3315
        %v3694 = vpack.c.bf16 %v3671, %v3670
        %v3695 = vpack.c.bf16 %v3673, %v3672
        %v3696 = vpack.c.bf16 %v3675, %v3674
        %v3697 = vpack.c.bf16 %v3677, %v3676
        %v3698 = vpack.c.bf16 %v3679, %v3678
        %v3699 = vpack.c.bf16 %v3681, %v3680
        %v3700 = vpack.c.bf16 %v3683, %v3682
        %v3701 = vpack.c.bf16 %v3685, %v3684
        %v3702 = vpack.c.bf16 %v3687, %v3686
        %v3703 = vpack.c.bf16 %v3689, %v3688
        %v3704 = vpack.c.bf16 %v3691, %v3690
        %v3705 = vpack.c.bf16 %v3693, %v3692
        %v3706 = vld [vmem:[%s6] sm:$0xf]
        %v3707 = vld [vmem:[%s6 + $0x4] sm:$0xf]
        %v3708 = vld [vmem:[%s6 + $0x8] sm:$0xf]
        %v3709 = vld [vmem:[%s6 + $0xc] sm:$0xf]
        %v3710 = vld [vmem:[%s6 + $0x10] sm:$0xf]
        %v3711 = vld [vmem:[%s6 + $0x14] sm:$0xf]
        %v3712 = vld [vmem:[%s6 + $0x18] sm:$0xf]
        %v3713 = vld [vmem:[%s6 + $0x1c] sm:$0xf]
        %v3714 = vld [vmem:[%s6 + $0x20] sm:$0xf]
        %v3715 = vld [vmem:[%s6 + $0x24] sm:$0xf]
        %v3716 = vld [vmem:[%s6 + $0x28] sm:$0xf]
        %v3717 = vld [vmem:[%s6 + $0x2c] sm:$0xf]
        %v3720 = vunpack.c.l.b16 %v3706
        %v3721 = vunpack.c.l.b16 %v3707
        %v3722 = vpack.c.b16 %v3721, %v3720
        %v3725 = vsel %vm2676, %v3694, 0
        %v3728 = vsel %vm2676, %v3695, 0
        %3730 = vmatprep.subr.bf16.mxu0 0
        %3731 = vmatpush1.bf16.msra.mxu0 0
        %3732 = vmatprep.subr.bf16.mxu0 0
        %3733 = vmatpush1.bf16.msra.mxu0 0
        %3734 = vmatprep.subr.bf16.mxu0 0
        %3735 = vmatpush1.bf16.msra.mxu0 0
        %3736 = vmatprep.subr.bf16.mxu0 0
        %3737 = vmatpush1.bf16.msra.mxu0 0
        %3738 = vmatprep.subr.bf16.mxu0 0
        %3739 = vmatpush1.bf16.msra.mxu0 0
        %3740 = vmatprep.subr.bf16.mxu0 0
        %3741 = vmatpush1.bf16.msra.mxu0 0
        %3742 = vmatprep.subr.bf16.mxu0 0
        %3743 = vmatpush1.bf16.msra.mxu0 0
        %3744 = vmatprep.subr.bf16.mxu0 0
        %3745 = vmatpush1.bf16.msra.mxu0 %v3722
        %3746 = vmatprep.subr.bf16.mxu0 0
        %3747 = vmatpush2.bf16.msra.mxu0 0
        %3748 = vmatprep.subr.bf16.mxu0 0
        %3749 = vmatpush2.bf16.msra.mxu0 0
        %3750 = vmatprep.subr.bf16.mxu0 0
        %3751 = vmatpush2.bf16.msra.mxu0 0
        %3752 = vmatprep.subr.bf16.mxu0 0
        %3753 = vmatpush2.bf16.msra.mxu0 0
        %3754 = vmatprep.subr.bf16.mxu0 0
        %3755 = vmatpush2.bf16.msra.mxu0 0
        %3756 = vmatprep.subr.bf16.mxu0 0
        %3757 = vmatpush2.bf16.msra.mxu0 0
        %3758 = vmatprep.subr.bf16.mxu0 0
        %3759 = vmatpush2.bf16.msra.mxu0 0
        %3760 = vmatprep.subr.bf16.mxu0 0
        %3761 = vmatpush2.bf16.msra.mxu0 0
        %3762 = vmatprep.mubr.bf16.mxu0 0
        %3763 = vmatmul.mubr.bf16.gmra.mxu0 %v3725
        %v3764 = vpop.f32.mrf.mxu0
        %v3765 = vadd.f32 0.0, %v3764
        %v3766 = vpop.f32.mrf.mxu0
        %v3767 = vpop.f32.mrf.mxu0
        %v3768 = vadd.f32 0.0, %v3767
        %v3769 = vpop.f32.mrf.mxu0
        %3770 = vmatprep.mubr.bf16.mxu0 0
        %3771 = vmatmul.mubr.bf16.gmra.mxu0 %v3728
        %v3772 = vpop.f32.mrf.mxu0
        %v3773 = vadd.f32 0.0, %v3772
        %v3774 = vpop.f32.mrf.mxu0
        %v3775 = vpop.f32.mrf.mxu0
        %v3776 = vadd.f32 0.0, %v3775
        %v3777 = vpop.f32.mrf.mxu0
        %3778 = vdwg.mxu0
        %v3781 = vunpack.c.l.b16 %v3708
        %v3782 = vunpack.c.l.b16 %v3709
        %v3783 = vpack.c.b16 %v3782, %v3781
        %v3786 = vsel %vm2676, %v3696, 0
        %v3789 = vsel %vm2676, %v3697, 0
        %3791 = vmatprep.subr.bf16.mxu0 0
        %3792 = vmatpush1.bf16.msra.mxu0 0
        %3793 = vmatprep.subr.bf16.mxu0 0
        %3794 = vmatpush1.bf16.msra.mxu0 0
        %3795 = vmatprep.subr.bf16.mxu0 0
        %3796 = vmatpush1.bf16.msra.mxu0 0
        %3797 = vmatprep.subr.bf16.mxu0 0
        %3798 = vmatpush1.bf16.msra.mxu0 0
        %3799 = vmatprep.subr.bf16.mxu0 0
        %3800 = vmatpush1.bf16.msra.mxu0 0
        %3801 = vmatprep.subr.bf16.mxu0 0
        %3802 = vmatpush1.bf16.msra.mxu0 0
        %3803 = vmatprep.subr.bf16.mxu0 0
        %3804 = vmatpush1.bf16.msra.mxu0 0
        %3805 = vmatprep.subr.bf16.mxu0 0
        %3806 = vmatpush1.bf16.msra.mxu0 %v3783
        %3807 = vmatprep.subr.bf16.mxu0 0
        %3808 = vmatpush2.bf16.msra.mxu0 0
        %3809 = vmatprep.subr.bf16.mxu0 0
        %3810 = vmatpush2.bf16.msra.mxu0 0
        %3811 = vmatprep.subr.bf16.mxu0 0
        %3812 = vmatpush2.bf16.msra.mxu0 0
        %3813 = vmatprep.subr.bf16.mxu0 0
        %3814 = vmatpush2.bf16.msra.mxu0 0
        %3815 = vmatprep.subr.bf16.mxu0 0
        %3816 = vmatpush2.bf16.msra.mxu0 0
        %3817 = vmatprep.subr.bf16.mxu0 0
        %3818 = vmatpush2.bf16.msra.mxu0 0
        %3819 = vmatprep.subr.bf16.mxu0 0
        %3820 = vmatpush2.bf16.msra.mxu0 0
        %3821 = vmatprep.subr.bf16.mxu0 0
        %3822 = vmatpush2.bf16.msra.mxu0 0
        %3823 = vmatprep.mubr.bf16.mxu0 0
        %3824 = vmatmul.mubr.bf16.gmra.mxu0 %v3786
        %v3825 = vpop.f32.mrf.mxu0
        %v3826 = vadd.f32 0.0, %v3825
        %v3827 = vpop.f32.mrf.mxu0
        %v3828 = vpop.f32.mrf.mxu0
        %v3829 = vadd.f32 0.0, %v3828
        %v3830 = vpop.f32.mrf.mxu0
        %3831 = vmatprep.mubr.bf16.mxu0 0
        %3832 = vmatmul.mubr.bf16.gmra.mxu0 %v3789
        %v3833 = vpop.f32.mrf.mxu0
        %v3834 = vadd.f32 0.0, %v3833
        %v3835 = vpop.f32.mrf.mxu0
        %v3836 = vpop.f32.mrf.mxu0
        %v3837 = vadd.f32 0.0, %v3836
        %v3838 = vpop.f32.mrf.mxu0
        %3839 = vdwg.mxu0
        %v3842 = vunpack.c.l.b16 %v3710
        %v3843 = vunpack.c.l.b16 %v3711
        %v3844 = vpack.c.b16 %v3843, %v3842
        %v3847 = vsel %vm2676, %v3698, 0
        %v3850 = vsel %vm2676, %v3699, 0
        %3852 = vmatprep.subr.bf16.mxu0 0
        %3853 = vmatpush1.bf16.msra.mxu0 0
        %3854 = vmatprep.subr.bf16.mxu0 0
        %3855 = vmatpush1.bf16.msra.mxu0 0
        %3856 = vmatprep.subr.bf16.mxu0 0
        %3857 = vmatpush1.bf16.msra.mxu0 0
        %3858 = vmatprep.subr.bf16.mxu0 0
        %3859 = vmatpush1.bf16.msra.mxu0 0
        %3860 = vmatprep.subr.bf16.mxu0 0
        %3861 = vmatpush1.bf16.msra.mxu0 0
        %3862 = vmatprep.subr.bf16.mxu0 0
        %3863 = vmatpush1.bf16.msra.mxu0 0
        %3864 = vmatprep.subr.bf16.mxu0 0
        %3865 = vmatpush1.bf16.msra.mxu0 0
        %3866 = vmatprep.subr.bf16.mxu0 0
        %3867 = vmatpush1.bf16.msra.mxu0 %v3844
        %3868 = vmatprep.subr.bf16.mxu0 0
        %3869 = vmatpush2.bf16.msra.mxu0 0
        %3870 = vmatprep.subr.bf16.mxu0 0
        %3871 = vmatpush2.bf16.msra.mxu0 0
        %3872 = vmatprep.subr.bf16.mxu0 0
        %3873 = vmatpush2.bf16.msra.mxu0 0
        %3874 = vmatprep.subr.bf16.mxu0 0
        %3875 = vmatpush2.bf16.msra.mxu0 0
        %3876 = vmatprep.subr.bf16.mxu0 0
        %3877 = vmatpush2.bf16.msra.mxu0 0
        %3878 = vmatprep.subr.bf16.mxu0 0
        %3879 = vmatpush2.bf16.msra.mxu0 0
        %3880 = vmatprep.subr.bf16.mxu0 0
        %3881 = vmatpush2.bf16.msra.mxu0 0
        %3882 = vmatprep.subr.bf16.mxu0 0
        %3883 = vmatpush2.bf16.msra.mxu0 0
        %3884 = vmatprep.mubr.bf16.mxu0 0
        %3885 = vmatmul.mubr.bf16.gmra.mxu0 %v3847
        %v3886 = vpop.f32.mrf.mxu0
        %v3887 = vadd.f32 0.0, %v3886
        %v3888 = vpop.f32.mrf.mxu0
        %v3889 = vpop.f32.mrf.mxu0
        %v3890 = vadd.f32 0.0, %v3889
        %v3891 = vpop.f32.mrf.mxu0
        %3892 = vmatprep.mubr.bf16.mxu0 0
        %3893 = vmatmul.mubr.bf16.gmra.mxu0 %v3850
        %v3894 = vpop.f32.mrf.mxu0
        %v3895 = vadd.f32 0.0, %v3894
        %v3896 = vpop.f32.mrf.mxu0
        %v3897 = vpop.f32.mrf.mxu0
        %v3898 = vadd.f32 0.0, %v3897
        %v3899 = vpop.f32.mrf.mxu0
        %3900 = vdwg.mxu0
        %v3903 = vunpack.c.l.b16 %v3712
        %v3904 = vunpack.c.l.b16 %v3713
        %v3905 = vpack.c.b16 %v3904, %v3903
        %v3908 = vsel %vm2676, %v3700, 0
        %v3911 = vsel %vm2676, %v3701, 0
        %3913 = vmatprep.subr.bf16.mxu0 0
        %3914 = vmatpush1.bf16.msra.mxu0 0
        %3915 = vmatprep.subr.bf16.mxu0 0
        %3916 = vmatpush1.bf16.msra.mxu0 0
        %3917 = vmatprep.subr.bf16.mxu0 0
        %3918 = vmatpush1.bf16.msra.mxu0 0
        %3919 = vmatprep.subr.bf16.mxu0 0
        %3920 = vmatpush1.bf16.msra.mxu0 0
        %3921 = vmatprep.subr.bf16.mxu0 0
        %3922 = vmatpush1.bf16.msra.mxu0 0
        %3923 = vmatprep.subr.bf16.mxu0 0
        %3924 = vmatpush1.bf16.msra.mxu0 0
        %3925 = vmatprep.subr.bf16.mxu0 0
        %3926 = vmatpush1.bf16.msra.mxu0 0
        %3927 = vmatprep.subr.bf16.mxu0 0
        %3928 = vmatpush1.bf16.msra.mxu0 %v3905
        %3929 = vmatprep.subr.bf16.mxu0 0
        %3930 = vmatpush2.bf16.msra.mxu0 0
        %3931 = vmatprep.subr.bf16.mxu0 0
        %3932 = vmatpush2.bf16.msra.mxu0 0
        %3933 = vmatprep.subr.bf16.mxu0 0
        %3934 = vmatpush2.bf16.msra.mxu0 0
        %3935 = vmatprep.subr.bf16.mxu0 0
        %3936 = vmatpush2.bf16.msra.mxu0 0
        %3937 = vmatprep.subr.bf16.mxu0 0
        %3938 = vmatpush2.bf16.msra.mxu0 0
        %3939 = vmatprep.subr.bf16.mxu0 0
        %3940 = vmatpush2.bf16.msra.mxu0 0
        %3941 = vmatprep.subr.bf16.mxu0 0
        %3942 = vmatpush2.bf16.msra.mxu0 0
        %3943 = vmatprep.subr.bf16.mxu0 0
        %3944 = vmatpush2.bf16.msra.mxu0 0
        %3945 = vmatprep.mubr.bf16.mxu0 0
        %3946 = vmatmul.mubr.bf16.gmra.mxu0 %v3908
        %v3947 = vpop.f32.mrf.mxu0
        %v3948 = vadd.f32 0.0, %v3947
        %v3949 = vpop.f32.mrf.mxu0
        %v3950 = vpop.f32.mrf.mxu0
        %v3951 = vadd.f32 0.0, %v3950
        %v3952 = vpop.f32.mrf.mxu0
        %3953 = vmatprep.mubr.bf16.mxu0 0
        %3954 = vmatmul.mubr.bf16.gmra.mxu0 %v3911
        %v3955 = vpop.f32.mrf.mxu0
        %v3956 = vadd.f32 0.0, %v3955
        %v3957 = vpop.f32.mrf.mxu0
        %v3958 = vpop.f32.mrf.mxu0
        %v3959 = vadd.f32 0.0, %v3958
        %v3960 = vpop.f32.mrf.mxu0
        %3961 = vdwg.mxu0
        %v3964 = vunpack.c.l.b16 %v3714
        %v3965 = vunpack.c.l.b16 %v3715
        %v3966 = vpack.c.b16 %v3965, %v3964
        %v3969 = vsel %vm2676, %v3702, 0
        %v3972 = vsel %vm2676, %v3703, 0
        %3974 = vmatprep.subr.bf16.mxu0 0
        %3975 = vmatpush1.bf16.msra.mxu0 0
        %3976 = vmatprep.subr.bf16.mxu0 0
        %3977 = vmatpush1.bf16.msra.mxu0 0
        %3978 = vmatprep.subr.bf16.mxu0 0
        %3979 = vmatpush1.bf16.msra.mxu0 0
        %3980 = vmatprep.subr.bf16.mxu0 0
        %3981 = vmatpush1.bf16.msra.mxu0 0
        %3982 = vmatprep.subr.bf16.mxu0 0
        %3983 = vmatpush1.bf16.msra.mxu0 0
        %3984 = vmatprep.subr.bf16.mxu0 0
        %3985 = vmatpush1.bf16.msra.mxu0 0
        %3986 = vmatprep.subr.bf16.mxu0 0
        %3987 = vmatpush1.bf16.msra.mxu0 0
        %3988 = vmatprep.subr.bf16.mxu0 0
        %3989 = vmatpush1.bf16.msra.mxu0 %v3966
        %3990 = vmatprep.subr.bf16.mxu0 0
        %3991 = vmatpush2.bf16.msra.mxu0 0
        %3992 = vmatprep.subr.bf16.mxu0 0
        %3993 = vmatpush2.bf16.msra.mxu0 0
        %3994 = vmatprep.subr.bf16.mxu0 0
        %3995 = vmatpush2.bf16.msra.mxu0 0
        %3996 = vmatprep.subr.bf16.mxu0 0
        %3997 = vmatpush2.bf16.msra.mxu0 0
        %3998 = vmatprep.subr.bf16.mxu0 0
        %3999 = vmatpush2.bf16.msra.mxu0 0
        %4000 = vmatprep.subr.bf16.mxu0 0
        %4001 = vmatpush2.bf16.msra.mxu0 0
        %4002 = vmatprep.subr.bf16.mxu0 0
        %4003 = vmatpush2.bf16.msra.mxu0 0
        %4004 = vmatprep.subr.bf16.mxu0 0
        %4005 = vmatpush2.bf16.msra.mxu0 0
        %4006 = vmatprep.mubr.bf16.mxu0 0
        %4007 = vmatmul.mubr.bf16.gmra.mxu0 %v3969
        %v4008 = vpop.f32.mrf.mxu0
        %v4009 = vadd.f32 0.0, %v4008
        %v4010 = vpop.f32.mrf.mxu0
        %v4011 = vpop.f32.mrf.mxu0
        %v4012 = vadd.f32 0.0, %v4011
        %v4013 = vpop.f32.mrf.mxu0
        %4014 = vmatprep.mubr.bf16.mxu0 0
        %4015 = vmatmul.mubr.bf16.gmra.mxu0 %v3972
        %v4016 = vpop.f32.mrf.mxu0
        %v4017 = vadd.f32 0.0, %v4016
        %v4018 = vpop.f32.mrf.mxu0
        %v4019 = vpop.f32.mrf.mxu0
        %v4020 = vadd.f32 0.0, %v4019
        %v4021 = vpop.f32.mrf.mxu0
        %4022 = vdwg.mxu0
        %v4025 = vunpack.c.l.b16 %v3716
        %v4026 = vunpack.c.l.b16 %v3717
        %v4027 = vpack.c.b16 %v4026, %v4025
        %v4030 = vsel %vm2676, %v3704, 0
        %v4033 = vsel %vm2676, %v3705, 0
        %4035 = vmatprep.subr.bf16.mxu0 0
        %4036 = vmatpush1.bf16.msra.mxu0 0
        %4037 = vmatprep.subr.bf16.mxu0 0
        %4038 = vmatpush1.bf16.msra.mxu0 0
        %4039 = vmatprep.subr.bf16.mxu0 0
        %4040 = vmatpush1.bf16.msra.mxu0 0
        %4041 = vmatprep.subr.bf16.mxu0 0
        %4042 = vmatpush1.bf16.msra.mxu0 0
        %4043 = vmatprep.subr.bf16.mxu0 0
        %4044 = vmatpush1.bf16.msra.mxu0 0
        %4045 = vmatprep.subr.bf16.mxu0 0
        %4046 = vmatpush1.bf16.msra.mxu0 0
        %4047 = vmatprep.subr.bf16.mxu0 0
        %4048 = vmatpush1.bf16.msra.mxu0 0
        %4049 = vmatprep.subr.bf16.mxu0 0
        %4050 = vmatpush1.bf16.msra.mxu0 %v4027
        %4051 = vmatprep.subr.bf16.mxu0 0
        %4052 = vmatpush2.bf16.msra.mxu0 0
        %4053 = vmatprep.subr.bf16.mxu0 0
        %4054 = vmatpush2.bf16.msra.mxu0 0
        %4055 = vmatprep.subr.bf16.mxu0 0
        %4056 = vmatpush2.bf16.msra.mxu0 0
        %4057 = vmatprep.subr.bf16.mxu0 0
        %4058 = vmatpush2.bf16.msra.mxu0 0
        %4059 = vmatprep.subr.bf16.mxu0 0
        %4060 = vmatpush2.bf16.msra.mxu0 0
        %4061 = vmatprep.subr.bf16.mxu0 0
        %4062 = vmatpush2.bf16.msra.mxu0 0
        %4063 = vmatprep.subr.bf16.mxu0 0
        %4064 = vmatpush2.bf16.msra.mxu0 0
        %4065 = vmatprep.subr.bf16.mxu0 0
        %4066 = vmatpush2.bf16.msra.mxu0 0
        %4067 = vmatprep.mubr.bf16.mxu0 0
        %4068 = vmatmul.mubr.bf16.gmra.mxu0 %v4030
        %v4069 = vpop.f32.mrf.mxu0
        %v4070 = vadd.f32 0.0, %v4069
        %v4071 = vpop.f32.mrf.mxu0
        %v4072 = vpop.f32.mrf.mxu0
        %v4073 = vadd.f32 0.0, %v4072
        %v4074 = vpop.f32.mrf.mxu0
        %4075 = vmatprep.mubr.bf16.mxu0 0
        %4076 = vmatmul.mubr.bf16.gmra.mxu0 %v4033
        %v4077 = vpop.f32.mrf.mxu0
        %v4078 = vadd.f32 0.0, %v4077
        %v4079 = vpop.f32.mrf.mxu0
        %v4080 = vpop.f32.mrf.mxu0
        %v4081 = vadd.f32 0.0, %v4080
        %v4082 = vpop.f32.mrf.mxu0
        %4083 = vdwg.mxu0
        %v4084 = vadd.f32 %v3765, %v3826
        %v4085 = vadd.f32 %v4084, %v3887
        %v4086 = vadd.f32 %v4085, %v3948
        %v4087 = vadd.f32 %v4086, %v4009
        %v4088 = vadd.f32 %v4087, %v4070
        %v4089 = vadd.f32 %v3768, %v3829
        %v4090 = vadd.f32 %v4089, %v3890
        %v4091 = vadd.f32 %v4090, %v3951
        %v4092 = vadd.f32 %v4091, %v4012
        %v4093 = vadd.f32 %v4092, %v4073
        %v4094 = vadd.f32 %v3773, %v3834
        %v4095 = vadd.f32 %v4094, %v3895
        %v4096 = vadd.f32 %v4095, %v3956
        %v4097 = vadd.f32 %v4096, %v4017
        %v4098 = vadd.f32 %v4097, %v4078
        %v4099 = vadd.f32 %v3776, %v3837
        %v4100 = vadd.f32 %v4099, %v3898
        %v4101 = vadd.f32 %v4100, %v3959
        %v4102 = vadd.f32 %v4101, %v4020
        %v4103 = vadd.f32 %v4102, %v4081
        %v4104 = vadd.f32 %v524, %v4088
        %v4105 = vadd.f32 %v525, %v4093
        %v4106 = vadd.f32 %v526, %v4098
        %v4107 = vadd.f32 %v527, %v4103
        %v4108 = vld [vmem:[%s7] sm:$0x1]
        %v4110 = vlaneseq
        %v4111 = vshrl.u32 %v4110, 7
        %v4112 = vsub.s32 0, %v4111
        %v4113 = vrot.slane %v4108, %v4112
        %v4115 = vadd.f32 %v4104, %v4113
        %v4116 = vadd.f32 %v4105, %v4113
        %v4117 = vadd.f32 %v4106, %v4113
        %v4118 = vadd.f32 %v4107, %v4113
        %v4119 = vld [vmem:[%s8] sm:$0x1]
        %v4120 = vld [vmem:[%s9] sm:$0x1]
        %v4121 = vmul.f32 %v4115, %v541
        %v4122 = vmul.f32 %v4116, %v541
        %v4123 = vmul.f32 %v4117, %v541
        %v4124 = vmul.f32 %v4118, %v541
        %4125 = vadd.xlane.f32.xlu0 %v4121
        %v4126 = vpop.xlane.xlu0 %4125
        %4127 = vadd.xlane.f32.xlu0 %v4122
        %v4128 = vpop.xlane.xlu0 %4127
        %4129 = vadd.xlane.f32.xlu0 %v4123
        %v4130 = vpop.xlane.xlu0 %4129
        %4131 = vadd.xlane.f32.xlu0 %v4124
        %v4132 = vpop.xlane.xlu0 %4131
        %v4133 = vmul.f32 %v4126, 0.010416667
        %v4134 = vmul.f32 %v4128, 0.010416667
        %v4135 = vmul.f32 %v4130, 0.010416667
        %v4136 = vmul.f32 %v4132, 0.010416667
        %v4137 = vsub.f32 %v4115, %v4133
        %v4138 = vsub.f32 %v4116, %v4134
        %v4139 = vsub.f32 %v4117, %v4135
        %v4140 = vsub.f32 %v4118, %v4136
        %v4141 = vmul.f32 %v4137, %v541
        %v4142 = vmul.f32 %v4138, %v541
        %v4143 = vmul.f32 %v4139, %v541
        %v4144 = vmul.f32 %v4140, %v541
        %v4145 = vmul.f32 %v4141, %v4141
        %v4146 = vmul.f32 %v4142, %v4142
        %v4147 = vmul.f32 %v4143, %v4143
        %v4148 = vmul.f32 %v4144, %v4144
        %4149 = vadd.xlane.f32.xlu0 %v4145
        %v4150 = vpop.xlane.xlu0 %4149
        %4151 = vadd.xlane.f32.xlu0 %v4146
        %v4152 = vpop.xlane.xlu0 %4151
        %4153 = vadd.xlane.f32.xlu0 %v4147
        %v4154 = vpop.xlane.xlu0 %4153
        %4155 = vadd.xlane.f32.xlu0 %v4148
        %v4156 = vpop.xlane.xlu0 %4155
        %v4157 = vmul.f32 %v4150, 0.010416667
        %v4158 = vmul.f32 %v4152, 0.010416667
        %v4159 = vmul.f32 %v4154, 0.010416667
        %v4160 = vmul.f32 %v4156, 0.010416667
        %v4161 = vadd.f32 %v4157, 1e-05
        %v4162 = vadd.f32 %v4158, 1e-05
        %v4163 = vadd.f32 %v4159, 1e-05
        %v4164 = vadd.f32 %v4160, 1e-05
        %v4165 = vrsqrt.pop %v4161
        %v4166 = vrsqrt.pop %v4162
        %v4167 = vrsqrt.pop %v4163
        %v4168 = vrsqrt.pop %v4164
        %v4169 = vmul.f32 %v4141, %v4165
        %v4170 = vmul.f32 %v4142, %v4166
        %v4171 = vmul.f32 %v4143, %v4167
        %v4172 = vmul.f32 %v4144, %v4168
        %v4174 = vlaneseq
        %v4175 = vshrl.u32 %v4174, 7
        %v4176 = vsub.s32 0, %v4175
        %v4177 = vrot.slane %v4119, %v4176
        %v4179 = vmul.f32 %v4169, %v4177
        %v4180 = vmul.f32 %v4170, %v4177
        %v4181 = vmul.f32 %v4171, %v4177
        %v4182 = vmul.f32 %v4172, %v4177
        %v4184 = vlaneseq
        %v4185 = vshrl.u32 %v4184, 7
        %v4186 = vsub.s32 0, %v4185
        %v4187 = vrot.slane %v4120, %v4186
        %v4189 = vadd.f32 %v4179, %v4187
        %v4190 = vadd.f32 %v4180, %v4187
        %v4191 = vadd.f32 %v4181, %v4187
        %v4192 = vadd.f32 %v4182, %v4187
        %v4193 = vpack.c.bf16 %v4190, %v4189
        %v4194 = vpack.c.bf16 %v4192, %v4191
        %v4195 = vld [vmem:[%s10] sm:$0xff]
        %v4196 = vld [vmem:[%s10 + $0x8] sm:$0xf]
        %v4197 = vld [vmem:[%s10 + $0xc] sm:$0xff]
        %v4198 = vld [vmem:[%s10 + $0x14] sm:$0xf]
        %v4199 = vld [vmem:[%s10 + $0x18] sm:$0xff]
        %v4200 = vld [vmem:[%s10 + $0x20] sm:$0xf]
        %v4201 = vld [vmem:[%s10 + $0x24] sm:$0xff]
        %v4202 = vld [vmem:[%s10 + $0x2c] sm:$0xf]
        %v4203 = vld [vmem:[%s10 + $0x30] sm:$0xff]
        %v4204 = vld [vmem:[%s10 + $0x38] sm:$0xf]
        %v4205 = vld [vmem:[%s10 + $0x3c] sm:$0xff]
        %v4206 = vld [vmem:[%s10 + $0x44] sm:$0xf]
        %v4207 = vld [vmem:[%s10 + $0x48] sm:$0xff]
        %v4208 = vld [vmem:[%s10 + $0x50] sm:$0xf]
        %v4209 = vld [vmem:[%s10 + $0x54] sm:$0xff]
        %v4210 = vld [vmem:[%s10 + $0x5c] sm:$0xf]
        %v4211 = vld [vmem:[%s10 + $0x60] sm:$0xff]
        %v4212 = vld [vmem:[%s10 + $0x68] sm:$0xf]
        %v4213 = vld [vmem:[%s10 + $0x6c] sm:$0xff]
        %v4214 = vld [vmem:[%s10 + $0x74] sm:$0xf]
        %v4215 = vld [vmem:[%s10 + $0x78] sm:$0xff]
        %v4216 = vld [vmem:[%s10 + $0x80] sm:$0xf]
        %v4217 = vld [vmem:[%s10 + $0x84] sm:$0xff]
        %v4218 = vld [vmem:[%s10 + $0x8c] sm:$0xf]
        %v4219 = vld [vmem:[%s10 + $0x90] sm:$0xff]
        %v4220 = vld [vmem:[%s10 + $0x98] sm:$0xf]
        %v4221 = vld [vmem:[%s10 + $0x9c] sm:$0xff]
        %v4222 = vld [vmem:[%s10 + $0xa4] sm:$0xf]
        %v4223 = vld [vmem:[%s10 + $0xa8] sm:$0xff]
        %v4224 = vld [vmem:[%s10 + $0xb0] sm:$0xf]
        %v4225 = vld [vmem:[%s10 + $0xb4] sm:$0xff]
        %v4226 = vld [vmem:[%s10 + $0xbc] sm:$0xf]
        %v4227 = vld [vmem:[%s11] sm:$0x7]
        %v4229 = vlaneseq
        %v4230 = vshrl.u32 %v4229, 7
        %v4231 = vsub.s32 0, %v4230
        %v4232 = vrot.slane %v4227, %v4231
        %v4233 = vlaneseq
        %v4234 = vshrl.u32 %v4233, 7
        %v4235 = vsub.s32 1, %v4234
        %v4236 = vrot.slane %v4227, %v4235
        %v4237 = vlaneseq
        %v4238 = vshrl.u32 %v4237, 7
        %v4239 = vsub.s32 2, %v4238
        %v4240 = vrot.slane %v4227, %v4239
        %v4276 = vunpack.c.l.b16 %v4195
        %v4277 = vunpack.c.h.b16 %v4195
        %v4278 = vunpack.c.l.b16 %v4196
        %v4279 = vunpack.c.l.b16 %v4197
        %v4280 = vunpack.c.h.b16 %v4197
        %v4281 = vunpack.c.l.b16 %v4198
        %v4282 = vunpack.c.l.b16 %v4199
        %v4283 = vunpack.c.h.b16 %v4199
        %v4284 = vunpack.c.l.b16 %v4200
        %v4285 = vunpack.c.l.b16 %v4201
        %v4286 = vunpack.c.h.b16 %v4201
        %v4287 = vunpack.c.l.b16 %v4202
        %v4288 = vunpack.c.l.b16 %v4203
        %v4289 = vunpack.c.h.b16 %v4203
        %v4290 = vunpack.c.l.b16 %v4204
        %v4291 = vunpack.c.l.b16 %v4205
        %v4292 = vunpack.c.h.b16 %v4205
        %v4293 = vunpack.c.l.b16 %v4206
        %v4294 = vunpack.c.l.b16 %v4207
        %v4295 = vunpack.c.h.b16 %v4207
        %v4296 = vunpack.c.l.b16 %v4208
        %v4297 = vunpack.c.l.b16 %v4209
        %v4298 = vunpack.c.h.b16 %v4209
        %v4299 = vunpack.c.l.b16 %v4210
        %v4300 = vunpack.c.l.b16 %v4211
        %v4301 = vunpack.c.h.b16 %v4211
        %v4302 = vunpack.c.l.b16 %v4212
        %v4303 = vunpack.c.l.b16 %v4213
        %v4304 = vunpack.c.h.b16 %v4213
        %v4305 = vunpack.c.l.b16 %v4214
        %v4306 = vunpack.c.l.b16 %v4215
        %v4307 = vunpack.c.h.b16 %v4215
        %v4308 = vunpack.c.l.b16 %v4216
        %v4309 = vunpack.c.l.b16 %v4217
        %v4310 = vunpack.c.h.b16 %v4217
        %v4311 = vunpack.c.l.b16 %v4218
        %v4312 = vunpack.c.l.b16 %v4219
        %v4313 = vunpack.c.h.b16 %v4219
        %v4314 = vunpack.c.l.b16 %v4220
        %v4315 = vunpack.c.l.b16 %v4221
        %v4316 = vunpack.c.h.b16 %v4221
        %v4317 = vunpack.c.l.b16 %v4222
        %v4318 = vunpack.c.l.b16 %v4223
        %v4319 = vunpack.c.h.b16 %v4223
        %v4320 = vunpack.c.l.b16 %v4224
        %v4321 = vunpack.c.l.b16 %v4225
        %v4322 = vunpack.c.h.b16 %v4225
        %v4323 = vunpack.c.l.b16 %v4226
        %v4324 = vpack.c.b16 %v4279, %v4276
        %v4325 = vpack.c.b16 %v4280, %v4277
        %v4326 = vpack.c.b16 %v4281, %v4278
        %v4327 = vpack.c.b16 %v4285, %v4282
        %v4328 = vpack.c.b16 %v4286, %v4283
        %v4329 = vpack.c.b16 %v4287, %v4284
        %v4330 = vpack.c.b16 %v4291, %v4288
        %v4331 = vpack.c.b16 %v4292, %v4289
        %v4332 = vpack.c.b16 %v4293, %v4290
        %v4333 = vpack.c.b16 %v4297, %v4294
        %v4334 = vpack.c.b16 %v4298, %v4295
        %v4335 = vpack.c.b16 %v4299, %v4296
        %v4336 = vpack.c.b16 %v4303, %v4300
        %v4337 = vpack.c.b16 %v4304, %v4301
        %v4338 = vpack.c.b16 %v4305, %v4302
        %v4339 = vpack.c.b16 %v4309, %v4306
        %v4340 = vpack.c.b16 %v4310, %v4307
        %v4341 = vpack.c.b16 %v4311, %v4308
        %v4342 = vpack.c.b16 %v4315, %v4312
        %v4343 = vpack.c.b16 %v4316, %v4313
        %v4344 = vpack.c.b16 %v4317, %v4314
        %v4345 = vpack.c.b16 %v4321, %v4318
        %v4346 = vpack.c.b16 %v4322, %v4319
        %v4347 = vpack.c.b16 %v4323, %v4320
        %4372 = vmatprep.subr.bf16.mxu0 %v4346
        %4373 = vmatpush1.bf16.msra.mxu0 %v4345
        %4374 = vmatprep.subr.bf16.mxu0 %v4343
        %4375 = vmatpush1.bf16.msra.mxu0 %v4342
        %4376 = vmatprep.subr.bf16.mxu0 %v4340
        %4377 = vmatpush1.bf16.msra.mxu0 %v4339
        %4378 = vmatprep.subr.bf16.mxu0 %v4337
        %4379 = vmatpush1.bf16.msra.mxu0 %v4336
        %4380 = vmatprep.subr.bf16.mxu0 %v4334
        %4381 = vmatpush1.bf16.msra.mxu0 %v4333
        %4382 = vmatprep.subr.bf16.mxu0 %v4331
        %4383 = vmatpush1.bf16.msra.mxu0 %v4330
        %4384 = vmatprep.subr.bf16.mxu0 %v4328
        %4385 = vmatpush1.bf16.msra.mxu0 %v4327
        %4386 = vmatprep.subr.bf16.mxu0 %v4325
        %4387 = vmatpush1.bf16.msra.mxu0 %v4324
        %4388 = vmatprep.subr.bf16.mxu0 0
        %4389 = vmatpush2.bf16.msra.mxu0 0
        %4390 = vmatprep.subr.bf16.mxu0 0
        %4391 = vmatpush2.bf16.msra.mxu0 0
        %4392 = vmatprep.subr.bf16.mxu0 0
        %4393 = vmatpush2.bf16.msra.mxu0 0
        %4394 = vmatprep.subr.bf16.mxu0 0
        %4395 = vmatpush2.bf16.msra.mxu0 0
        %4396 = vmatprep.subr.bf16.mxu0 0
        %4397 = vmatpush2.bf16.msra.mxu0 0
        %4398 = vmatprep.subr.bf16.mxu0 0
        %4399 = vmatpush2.bf16.msra.mxu0 0
        %4400 = vmatprep.subr.bf16.mxu0 0
        %4401 = vmatpush2.bf16.msra.mxu0 0
        %4402 = vmatprep.subr.bf16.mxu0 0
        %4403 = vmatpush2.bf16.msra.mxu0 0
        %4404 = vmatprep.mubr.bf16.mxu0 0
        %4405 = vmatmul.mubr.bf16.gmra.mxu0 %v4193
        %v4406 = vpop.f32.mrf.mxu0
        %v4407 = vadd.f32 %v4232, %v4406
        %v4408 = vpop.f32.mrf.mxu0
        %v4409 = vadd.f32 %v4236, %v4408
        %v4410 = vpop.f32.mrf.mxu0
        %v4411 = vadd.f32 %v4232, %v4410
        %v4412 = vpop.f32.mrf.mxu0
        %v4413 = vadd.f32 %v4236, %v4412
        %4414 = vmatprep.mubr.bf16.mxu0 0
        %4415 = vmatmul.mubr.bf16.gmra.mxu0 %v4194
        %v4416 = vpop.f32.mrf.mxu0
        %v4417 = vadd.f32 %v4232, %v4416
        %v4418 = vpop.f32.mrf.mxu0
        %v4419 = vadd.f32 %v4236, %v4418
        %v4420 = vpop.f32.mrf.mxu0
        %v4421 = vadd.f32 %v4232, %v4420
        %v4422 = vpop.f32.mrf.mxu0
        %v4423 = vadd.f32 %v4236, %v4422
        %4424 = vdwg.mxu0
        %4425 = vmatprep.subr.bf16.mxu0 0
        %4426 = vmatpush1.bf16.msra.mxu0 %v4347
        %4427 = vmatprep.subr.bf16.mxu0 0
        %4428 = vmatpush1.bf16.msra.mxu0 %v4344
        %4429 = vmatprep.subr.bf16.mxu0 0
        %4430 = vmatpush1.bf16.msra.mxu0 %v4341
        %4431 = vmatprep.subr.bf16.mxu0 0
        %4432 = vmatpush1.bf16.msra.mxu0 %v4338
        %4433 = vmatprep.subr.bf16.mxu0 0
        %4434 = vmatpush1.bf16.msra.mxu0 %v4335
        %4435 = vmatprep.subr.bf16.mxu0 0
        %4436 = vmatpush1.bf16.msra.mxu0 %v4332
        %4437 = vmatprep.subr.bf16.mxu0 0
        %4438 = vmatpush1.bf16.msra.mxu0 %v4329
        %4439 = vmatprep.subr.bf16.mxu0 0
        %4440 = vmatpush1.bf16.msra.mxu0 %v4326
        %4441 = vmatprep.subr.bf16.mxu0 0
        %4442 = vmatpush2.bf16.msra.mxu0 0
        %4443 = vmatprep.subr.bf16.mxu0 0
        %4444 = vmatpush2.bf16.msra.mxu0 0
        %4445 = vmatprep.subr.bf16.mxu0 0
        %4446 = vmatpush2.bf16.msra.mxu0 0
        %4447 = vmatprep.subr.bf16.mxu0 0
        %4448 = vmatpush2.bf16.msra.mxu0 0
        %4449 = vmatprep.subr.bf16.mxu0 0
        %4450 = vmatpush2.bf16.msra.mxu0 0
        %4451 = vmatprep.subr.bf16.mxu0 0
        %4452 = vmatpush2.bf16.msra.mxu0 0
        %4453 = vmatprep.subr.bf16.mxu0 0
        %4454 = vmatpush2.bf16.msra.mxu0 0
        %4455 = vmatprep.subr.bf16.mxu0 0
        %4456 = vmatpush2.bf16.msra.mxu0 0
        %4457 = vmatprep.mubr.bf16.mxu0 0
        %4458 = vmatmul.mubr.bf16.gmra.mxu0 %v4193
        %v4459 = vpop.f32.mrf.mxu0
        %v4460 = vadd.f32 %v4240, %v4459
        %v4461 = vpop.f32.mrf.mxu0
        %v4462 = vpop.f32.mrf.mxu0
        %v4463 = vadd.f32 %v4240, %v4462
        %v4464 = vpop.f32.mrf.mxu0
        %4465 = vmatprep.mubr.bf16.mxu0 0
        %4466 = vmatmul.mubr.bf16.gmra.mxu0 %v4194
        %v4467 = vpop.f32.mrf.mxu0
        %v4468 = vadd.f32 %v4240, %v4467
        %v4469 = vpop.f32.mrf.mxu0
        %v4470 = vpop.f32.mrf.mxu0
        %v4471 = vadd.f32 %v4240, %v4470
        %v4472 = vpop.f32.mrf.mxu0
        %4473 = vdwg.mxu0
        %v4474 = vmax.f32 %v4407, 0.0
        %v4475 = vmax.f32 %v4409, 0.0
        %v4476 = vmax.f32 %v4460, 0.0
        %v4477 = vmax.f32 %v4411, 0.0
        %v4478 = vmax.f32 %v4413, 0.0
        %v4479 = vmax.f32 %v4463, 0.0
        %v4480 = vmax.f32 %v4417, 0.0
        %v4481 = vmax.f32 %v4419, 0.0
        %v4482 = vmax.f32 %v4468, 0.0
        %v4483 = vmax.f32 %v4421, 0.0
        %v4484 = vmax.f32 %v4423, 0.0
        %v4485 = vmax.f32 %v4471, 0.0
        %v4486 = vpack.c.bf16 %v4477, %v4474
        %v4487 = vpack.c.bf16 %v4478, %v4475
        %v4488 = vpack.c.bf16 %v4479, %v4476
        %v4489 = vpack.c.bf16 %v4483, %v4480
        %v4490 = vpack.c.bf16 %v4484, %v4481
        %v4491 = vpack.c.bf16 %v4485, %v4482
        %v4492 = vld [vmem:[%s12] sm:$0xf]
        %v4493 = vld [vmem:[%s12 + $0x4] sm:$0xf]
        %v4494 = vld [vmem:[%s12 + $0x8] sm:$0xf]
        %v4495 = vld [vmem:[%s12 + $0xc] sm:$0xf]
        %v4496 = vld [vmem:[%s12 + $0x10] sm:$0xf]
        %v4497 = vld [vmem:[%s12 + $0x14] sm:$0xf]
        %v4498 = vld [vmem:[%s12 + $0x18] sm:$0xf]
        %v4499 = vld [vmem:[%s12 + $0x1c] sm:$0xf]
        %v4500 = vld [vmem:[%s12 + $0x20] sm:$0xf]
        %v4501 = vld [vmem:[%s12 + $0x24] sm:$0xf]
        %v4502 = vld [vmem:[%s12 + $0x28] sm:$0xf]
        %v4503 = vld [vmem:[%s12 + $0x2c] sm:$0xf]
        %v4504 = vld [vmem:[%s12 + $0x30] sm:$0xf]
        %v4505 = vld [vmem:[%s12 + $0x34] sm:$0xf]
        %v4506 = vld [vmem:[%s12 + $0x38] sm:$0xf]
        %v4507 = vld [vmem:[%s12 + $0x3c] sm:$0xf]
        %v4508 = vld [vmem:[%s12 + $0x40] sm:$0xf]
        %v4509 = vld [vmem:[%s12 + $0x44] sm:$0xf]
        %v4510 = vld [vmem:[%s12 + $0x48] sm:$0xf]
        %v4511 = vld [vmem:[%s12 + $0x4c] sm:$0xf]
        %v4512 = vld [vmem:[%s12 + $0x50] sm:$0xf]
        %v4513 = vld [vmem:[%s12 + $0x54] sm:$0xf]
        %v4514 = vld [vmem:[%s12 + $0x58] sm:$0xf]
        %v4515 = vld [vmem:[%s12 + $0x5c] sm:$0xf]
        %v4516 = vld [vmem:[%s12 + $0x60] sm:$0xf]
        %v4517 = vld [vmem:[%s12 + $0x64] sm:$0xf]
        %v4518 = vld [vmem:[%s12 + $0x68] sm:$0xf]
        %v4519 = vld [vmem:[%s12 + $0x6c] sm:$0xf]
        %v4520 = vld [vmem:[%s12 + $0x70] sm:$0xf]
        %v4521 = vld [vmem:[%s12 + $0x74] sm:$0xf]
        %v4522 = vld [vmem:[%s12 + $0x78] sm:$0xf]
        %v4523 = vld [vmem:[%s12 + $0x7c] sm:$0xf]
        %v4524 = vld [vmem:[%s12 + $0x80] sm:$0xf]
        %v4525 = vld [vmem:[%s12 + $0x84] sm:$0xf]
        %v4526 = vld [vmem:[%s12 + $0x88] sm:$0xf]
        %v4527 = vld [vmem:[%s12 + $0x8c] sm:$0xf]
        %v4528 = vld [vmem:[%s12 + $0x90] sm:$0xf]
        %v4529 = vld [vmem:[%s12 + $0x94] sm:$0xf]
        %v4530 = vld [vmem:[%s12 + $0x98] sm:$0xf]
        %v4531 = vld [vmem:[%s12 + $0x9c] sm:$0xf]
        %v4532 = vld [vmem:[%s12 + $0xa0] sm:$0xf]
        %v4533 = vld [vmem:[%s12 + $0xa4] sm:$0xf]
        %v4534 = vld [vmem:[%s12 + $0xa8] sm:$0xf]
        %v4535 = vld [vmem:[%s12 + $0xac] sm:$0xf]
        %v4536 = vld [vmem:[%s12 + $0xb0] sm:$0xf]
        %v4537 = vld [vmem:[%s12 + $0xb4] sm:$0xf]
        %v4538 = vld [vmem:[%s12 + $0xb8] sm:$0xf]
        %v4539 = vld [vmem:[%s12 + $0xbc] sm:$0xf]
        %v4540 = vld [vmem:[%s13] sm:$0x1]
        %v4542 = vlaneseq
        %v4543 = vshrl.u32 %v4542, 7
        %v4544 = vsub.s32 0, %v4543
        %v4545 = vrot.slane %v4540, %v4544
        %v4595 = vunpack.c.l.b16 %v4492
        %v4596 = vunpack.c.l.b16 %v4493
        %v4597 = vunpack.c.l.b16 %v4494
        %v4598 = vunpack.c.l.b16 %v4495
        %v4599 = vunpack.c.l.b16 %v4496
        %v4600 = vunpack.c.l.b16 %v4497
        %v4601 = vunpack.c.l.b16 %v4498
        %v4602 = vunpack.c.l.b16 %v4499
        %v4603 = vunpack.c.l.b16 %v4500
        %v4604 = vunpack.c.l.b16 %v4501
        %v4605 = vunpack.c.l.b16 %v4502
        %v4606 = vunpack.c.l.b16 %v4503
        %v4607 = vunpack.c.l.b16 %v4504
        %v4608 = vunpack.c.l.b16 %v4505
        %v4609 = vunpack.c.l.b16 %v4506
        %v4610 = vunpack.c.l.b16 %v4507
        %v4611 = vunpack.c.l.b16 %v4508
        %v4612 = vunpack.c.l.b16 %v4509
        %v4613 = vunpack.c.l.b16 %v4510
        %v4614 = vunpack.c.l.b16 %v4511
        %v4615 = vunpack.c.l.b16 %v4512
        %v4616 = vunpack.c.l.b16 %v4513
        %v4617 = vunpack.c.l.b16 %v4514
        %v4618 = vunpack.c.l.b16 %v4515
        %v4619 = vunpack.c.l.b16 %v4516
        %v4620 = vunpack.c.l.b16 %v4517
        %v4621 = vunpack.c.l.b16 %v4518
        %v4622 = vunpack.c.l.b16 %v4519
        %v4623 = vunpack.c.l.b16 %v4520
        %v4624 = vunpack.c.l.b16 %v4521
        %v4625 = vunpack.c.l.b16 %v4522
        %v4626 = vunpack.c.l.b16 %v4523
        %v4627 = vunpack.c.l.b16 %v4524
        %v4628 = vunpack.c.l.b16 %v4525
        %v4629 = vunpack.c.l.b16 %v4526
        %v4630 = vunpack.c.l.b16 %v4527
        %v4631 = vunpack.c.l.b16 %v4528
        %v4632 = vunpack.c.l.b16 %v4529
        %v4633 = vunpack.c.l.b16 %v4530
        %v4634 = vunpack.c.l.b16 %v4531
        %v4635 = vunpack.c.l.b16 %v4532
        %v4636 = vunpack.c.l.b16 %v4533
        %v4637 = vunpack.c.l.b16 %v4534
        %v4638 = vunpack.c.l.b16 %v4535
        %v4639 = vunpack.c.l.b16 %v4536
        %v4640 = vunpack.c.l.b16 %v4537
        %v4641 = vunpack.c.l.b16 %v4538
        %v4642 = vunpack.c.l.b16 %v4539
        %v4643 = vpack.c.b16 %v4596, %v4595
        %v4644 = vpack.c.b16 %v4598, %v4597
        %v4645 = vpack.c.b16 %v4600, %v4599
        %v4646 = vpack.c.b16 %v4602, %v4601
        %v4647 = vpack.c.b16 %v4604, %v4603
        %v4648 = vpack.c.b16 %v4606, %v4605
        %v4649 = vpack.c.b16 %v4608, %v4607
        %v4650 = vpack.c.b16 %v4610, %v4609
        %v4651 = vpack.c.b16 %v4612, %v4611
        %v4652 = vpack.c.b16 %v4614, %v4613
        %v4653 = vpack.c.b16 %v4616, %v4615
        %v4654 = vpack.c.b16 %v4618, %v4617
        %v4655 = vpack.c.b16 %v4620, %v4619
        %v4656 = vpack.c.b16 %v4622, %v4621
        %v4657 = vpack.c.b16 %v4624, %v4623
        %v4658 = vpack.c.b16 %v4626, %v4625
        %v4659 = vpack.c.b16 %v4628, %v4627
        %v4660 = vpack.c.b16 %v4630, %v4629
        %v4661 = vpack.c.b16 %v4632, %v4631
        %v4662 = vpack.c.b16 %v4634, %v4633
        %v4663 = vpack.c.b16 %v4636, %v4635
        %v4664 = vpack.c.b16 %v4638, %v4637
        %v4665 = vpack.c.b16 %v4640, %v4639
        %v4666 = vpack.c.b16 %v4642, %v4641
        %4691 = vmatprep.subr.bf16.mxu0 0
        %4692 = vmatpush1.bf16.msra.mxu0 %v4650
        %4693 = vmatprep.subr.bf16.mxu0 0
        %4694 = vmatpush1.bf16.msra.mxu0 %v4649
        %4695 = vmatprep.subr.bf16.mxu0 0
        %4696 = vmatpush1.bf16.msra.mxu0 %v4648
        %4697 = vmatprep.subr.bf16.mxu0 0
        %4698 = vmatpush1.bf16.msra.mxu0 %v4647
        %4699 = vmatprep.subr.bf16.mxu0 0
        %4700 = vmatpush1.bf16.msra.mxu0 %v4646
        %4701 = vmatprep.subr.bf16.mxu0 0
        %4702 = vmatpush1.bf16.msra.mxu0 %v4645
        %4703 = vmatprep.subr.bf16.mxu0 0
        %4704 = vmatpush1.bf16.msra.mxu0 %v4644
        %4705 = vmatprep.subr.bf16.mxu0 0
        %4706 = vmatpush1.bf16.msra.mxu0 %v4643
        %4707 = vmatprep.subr.bf16.mxu0 0
        %4708 = vmatpush2.bf16.msra.mxu0 %v4658
        %4709 = vmatprep.subr.bf16.mxu0 0
        %4710 = vmatpush2.bf16.msra.mxu0 %v4657
        %4711 = vmatprep.subr.bf16.mxu0 0
        %4712 = vmatpush2.bf16.msra.mxu0 %v4656
        %4713 = vmatprep.subr.bf16.mxu0 0
        %4714 = vmatpush2.bf16.msra.mxu0 %v4655
        %4715 = vmatprep.subr.bf16.mxu0 0
        %4716 = vmatpush2.bf16.msra.mxu0 %v4654
        %4717 = vmatprep.subr.bf16.mxu0 0
        %4718 = vmatpush2.bf16.msra.mxu0 %v4653
        %4719 = vmatprep.subr.bf16.mxu0 0
        %4720 = vmatpush2.bf16.msra.mxu0 %v4652
        %4721 = vmatprep.subr.bf16.mxu0 0
        %4722 = vmatpush2.bf16.msra.mxu0 %v4651
        %4723 = vmatprep.mubr.bf16.mxu0 %v4487
        %4724 = vmatmul.mubr.bf16.gmra.mxu0 %v4486
        %v4725 = vpop.f32.mrf.mxu0
        %v4726 = vadd.f32 %v4545, %v4725
        %v4727 = vpop.f32.mrf.mxu0
        %v4728 = vpop.f32.mrf.mxu0
        %v4729 = vadd.f32 %v4545, %v4728
        %v4730 = vpop.f32.mrf.mxu0
        %4731 = vmatprep.mubr.bf16.mxu0 %v4490
        %4732 = vmatmul.mubr.bf16.gmra.mxu0 %v4489
        %v4733 = vpop.f32.mrf.mxu0
        %v4734 = vadd.f32 %v4545, %v4733
        %v4735 = vpop.f32.mrf.mxu0
        %v4736 = vpop.f32.mrf.mxu0
        %v4737 = vadd.f32 %v4545, %v4736
        %v4738 = vpop.f32.mrf.mxu0
        %4739 = vdwg.mxu0
        %4740 = vmatprep.subr.bf16.mxu0 0
        %4741 = vmatpush1.bf16.msra.mxu0 %v4666
        %4742 = vmatprep.subr.bf16.mxu0 0
        %4743 = vmatpush1.bf16.msra.mxu0 %v4665
        %4744 = vmatprep.subr.bf16.mxu0 0
        %4745 = vmatpush1.bf16.msra.mxu0 %v4664
        %4746 = vmatprep.subr.bf16.mxu0 0
        %4747 = vmatpush1.bf16.msra.mxu0 %v4663
        %4748 = vmatprep.subr.bf16.mxu0 0
        %4749 = vmatpush1.bf16.msra.mxu0 %v4662
        %4750 = vmatprep.subr.bf16.mxu0 0
        %4751 = vmatpush1.bf16.msra.mxu0 %v4661
        %4752 = vmatprep.subr.bf16.mxu0 0
        %4753 = vmatpush1.bf16.msra.mxu0 %v4660
        %4754 = vmatprep.subr.bf16.mxu0 0
        %4755 = vmatpush1.bf16.msra.mxu0 %v4659
        %4756 = vmatprep.subr.bf16.mxu0 0
        %4757 = vmatpush2.bf16.msra.mxu0 0
        %4758 = vmatprep.subr.bf16.mxu0 0
        %4759 = vmatpush2.bf16.msra.mxu0 0
        %4760 = vmatprep.subr.bf16.mxu0 0
        %4761 = vmatpush2.bf16.msra.mxu0 0
        %4762 = vmatprep.subr.bf16.mxu0 0
        %4763 = vmatpush2.bf16.msra.mxu0 0
        %4764 = vmatprep.subr.bf16.mxu0 0
        %4765 = vmatpush2.bf16.msra.mxu0 0
        %4766 = vmatprep.subr.bf16.mxu0 0
        %4767 = vmatpush2.bf16.msra.mxu0 0
        %4768 = vmatprep.subr.bf16.mxu0 0
        %4769 = vmatpush2.bf16.msra.mxu0 0
        %4770 = vmatprep.subr.bf16.mxu0 0
        %4771 = vmatpush2.bf16.msra.mxu0 0
        %4772 = vmatprep.mubr.bf16.mxu0 0
        %4773 = vmatmul.mubr.bf16.gmra.mxu0 %v4488
        %v4774 = vpop.f32.mrf.mxu0
        %v4775 = vadd.f32 %v4726, %v4774
        %v4776 = vpop.f32.mrf.mxu0
        %v4777 = vpop.f32.mrf.mxu0
        %v4778 = vadd.f32 %v4729, %v4777
        %v4779 = vpop.f32.mrf.mxu0
        %4780 = vmatprep.mubr.bf16.mxu0 0
        %4781 = vmatmul.mubr.bf16.gmra.mxu0 %v4491
        %v4782 = vpop.f32.mrf.mxu0
        %v4783 = vadd.f32 %v4734, %v4782
        %v4784 = vpop.f32.mrf.mxu0
        %v4785 = vpop.f32.mrf.mxu0
        %v4786 = vadd.f32 %v4737, %v4785
        %v4787 = vpop.f32.mrf.mxu0
        %4788 = vdwg.mxu0
        %v4789 = vadd.f32 %v4115, %v4775
        %v4790 = vadd.f32 %v4116, %v4778
        %v4791 = vadd.f32 %v4117, %v4783
        %v4792 = vadd.f32 %v4118, %v4786
        %s4793 = scalar_lea.vmem %s1, 1
        %v4794 = vld [vmem:[%s4793] sm:$0x1]
        %s4795 = scalar_lea.vmem %s2, 1
        %v4796 = vld [vmem:[%s4795] sm:$0x1]
        %v4797 = vmul.f32 %v4789, %v541
        %v4798 = vmul.f32 %v4790, %v541
        %v4799 = vmul.f32 %v4791, %v541
        %v4800 = vmul.f32 %v4792, %v541
        %4801 = vadd.xlane.f32.xlu0 %v4797
        %v4802 = vpop.xlane.xlu0 %4801
        %4803 = vadd.xlane.f32.xlu0 %v4798
        %v4804 = vpop.xlane.xlu0 %4803
        %4805 = vadd.xlane.f32.xlu0 %v4799
        %v4806 = vpop.xlane.xlu0 %4805
        %4807 = vadd.xlane.f32.xlu0 %v4800
        %v4808 = vpop.xlane.xlu0 %4807
        %v4809 = vmul.f32 %v4802, 0.010416667
        %v4810 = vmul.f32 %v4804, 0.010416667
        %v4811 = vmul.f32 %v4806, 0.010416667
        %v4812 = vmul.f32 %v4808, 0.010416667
        %v4813 = vsub.f32 %v4789, %v4809
        %v4814 = vsub.f32 %v4790, %v4810
        %v4815 = vsub.f32 %v4791, %v4811
        %v4816 = vsub.f32 %v4792, %v4812
        %v4817 = vmul.f32 %v4813, %v541
        %v4818 = vmul.f32 %v4814, %v541
        %v4819 = vmul.f32 %v4815, %v541
        %v4820 = vmul.f32 %v4816, %v541
        %v4821 = vmul.f32 %v4817, %v4817
        %v4822 = vmul.f32 %v4818, %v4818
        %v4823 = vmul.f32 %v4819, %v4819
        %v4824 = vmul.f32 %v4820, %v4820
        %4825 = vadd.xlane.f32.xlu0 %v4821
        %v4826 = vpop.xlane.xlu0 %4825
        %4827 = vadd.xlane.f32.xlu0 %v4822
        %v4828 = vpop.xlane.xlu0 %4827
        %4829 = vadd.xlane.f32.xlu0 %v4823
        %v4830 = vpop.xlane.xlu0 %4829
        %4831 = vadd.xlane.f32.xlu0 %v4824
        %v4832 = vpop.xlane.xlu0 %4831
        %v4833 = vmul.f32 %v4826, 0.010416667
        %v4834 = vmul.f32 %v4828, 0.010416667
        %v4835 = vmul.f32 %v4830, 0.010416667
        %v4836 = vmul.f32 %v4832, 0.010416667
        %v4837 = vadd.f32 %v4833, 1e-05
        %v4838 = vadd.f32 %v4834, 1e-05
        %v4839 = vadd.f32 %v4835, 1e-05
        %v4840 = vadd.f32 %v4836, 1e-05
        %v4841 = vrsqrt.pop %v4837
        %v4842 = vrsqrt.pop %v4838
        %v4843 = vrsqrt.pop %v4839
        %v4844 = vrsqrt.pop %v4840
        %v4845 = vmul.f32 %v4817, %v4841
        %v4846 = vmul.f32 %v4818, %v4842
        %v4847 = vmul.f32 %v4819, %v4843
        %v4848 = vmul.f32 %v4820, %v4844
        %v4850 = vlaneseq
        %v4851 = vshrl.u32 %v4850, 7
        %v4852 = vsub.s32 0, %v4851
        %v4853 = vrot.slane %v4794, %v4852
        %v4855 = vmul.f32 %v4845, %v4853
        %v4856 = vmul.f32 %v4846, %v4853
        %v4857 = vmul.f32 %v4847, %v4853
        %v4858 = vmul.f32 %v4848, %v4853
        %v4860 = vlaneseq
        %v4861 = vshrl.u32 %v4860, 7
        %v4862 = vsub.s32 0, %v4861
        %v4863 = vrot.slane %v4796, %v4862
        %v4865 = vadd.f32 %v4855, %v4863
        %v4866 = vadd.f32 %v4856, %v4863
        %v4867 = vadd.f32 %v4857, %v4863
        %v4868 = vadd.f32 %v4858, %v4863
        %v4869 = vpack.c.bf16 %v4866, %v4865
        %v4870 = vpack.c.bf16 %v4868, %v4867
        %s4871 = scalar_lea.vmem %s3, 384
        %v4872 = vld [vmem:[%s4871] sm:$0xf]
        %v4873 = vld [vmem:[%s4871 + $0x4] sm:$0xf]
        %v4874 = vld [vmem:[%s4871 + $0x8] sm:$0xf]
        %v4875 = vld [vmem:[%s4871 + $0xc] sm:$0xf]
        %v4876 = vld [vmem:[%s4871 + $0x10] sm:$0xf]
        %v4877 = vld [vmem:[%s4871 + $0x14] sm:$0xf]
        %v4878 = vld [vmem:[%s4871 + $0x18] sm:$0xf]
        %v4879 = vld [vmem:[%s4871 + $0x1c] sm:$0xf]
        %v4880 = vld [vmem:[%s4871 + $0x20] sm:$0xf]
        %v4881 = vld [vmem:[%s4871 + $0x24] sm:$0xf]
        %v4882 = vld [vmem:[%s4871 + $0x28] sm:$0xf]
        %v4883 = vld [vmem:[%s4871 + $0x2c] sm:$0xf]
        %v4884 = vld [vmem:[%s4871 + $0x30] sm:$0xf]
        %v4885 = vld [vmem:[%s4871 + $0x34] sm:$0xf]
        %v4886 = vld [vmem:[%s4871 + $0x38] sm:$0xf]
        %v4887 = vld [vmem:[%s4871 + $0x3c] sm:$0xf]
        %v4888 = vld [vmem:[%s4871 + $0x40] sm:$0xf]
        %v4889 = vld [vmem:[%s4871 + $0x44] sm:$0xf]
        %v4890 = vld [vmem:[%s4871 + $0x48] sm:$0xf]
        %v4891 = vld [vmem:[%s4871 + $0x4c] sm:$0xf]
        %v4892 = vld [vmem:[%s4871 + $0x50] sm:$0xf]
        %v4893 = vld [vmem:[%s4871 + $0x54] sm:$0xf]
        %v4894 = vld [vmem:[%s4871 + $0x58] sm:$0xf]
        %v4895 = vld [vmem:[%s4871 + $0x5c] sm:$0xf]
        %v4896 = vld [vmem:[%s4871 + $0x60] sm:$0xf]
        %v4897 = vld [vmem:[%s4871 + $0x64] sm:$0xf]
        %v4898 = vld [vmem:[%s4871 + $0x68] sm:$0xf]
        %v4899 = vld [vmem:[%s4871 + $0x6c] sm:$0xf]
        %v4900 = vld [vmem:[%s4871 + $0x70] sm:$0xf]
        %v4901 = vld [vmem:[%s4871 + $0x74] sm:$0xf]
        %v4902 = vld [vmem:[%s4871 + $0x78] sm:$0xf]
        %v4903 = vld [vmem:[%s4871 + $0x7c] sm:$0xf]
        %v4904 = vld [vmem:[%s4871 + $0x80] sm:$0xf]
        %v4905 = vld [vmem:[%s4871 + $0x84] sm:$0xf]
        %v4906 = vld [vmem:[%s4871 + $0x88] sm:$0xf]
        %v4907 = vld [vmem:[%s4871 + $0x8c] sm:$0xf]
        %v4908 = vld [vmem:[%s4871 + $0x90] sm:$0xf]
        %v4909 = vld [vmem:[%s4871 + $0x94] sm:$0xf]
        %v4910 = vld [vmem:[%s4871 + $0x98] sm:$0xf]
        %v4911 = vld [vmem:[%s4871 + $0x9c] sm:$0xf]
        %v4912 = vld [vmem:[%s4871 + $0xa0] sm:$0xf]
        %v4913 = vld [vmem:[%s4871 + $0xa4] sm:$0xf]
        %v4914 = vld [vmem:[%s4871 + $0xa8] sm:$0xf]
        %v4915 = vld [vmem:[%s4871 + $0xac] sm:$0xf]
        %v4916 = vld [vmem:[%s4871 + $0xb0] sm:$0xf]
        %v4917 = vld [vmem:[%s4871 + $0xb4] sm:$0xf]
        %v4918 = vld [vmem:[%s4871 + $0xb8] sm:$0xf]
        %v4919 = vld [vmem:[%s4871 + $0xbc] sm:$0xf]
        %v4920 = vld [vmem:[%s4871 + $0xc0] sm:$0xf]
        %v4921 = vld [vmem:[%s4871 + $0xc4] sm:$0xf]
        %v4922 = vld [vmem:[%s4871 + $0xc8] sm:$0xf]
        %v4923 = vld [vmem:[%s4871 + $0xcc] sm:$0xf]
        %v4924 = vld [vmem:[%s4871 + $0xd0] sm:$0xf]
        %v4925 = vld [vmem:[%s4871 + $0xd4] sm:$0xf]
        %v4926 = vld [vmem:[%s4871 + $0xd8] sm:$0xf]
        %v4927 = vld [vmem:[%s4871 + $0xdc] sm:$0xf]
        %v4928 = vld [vmem:[%s4871 + $0xe0] sm:$0xf]
        %v4929 = vld [vmem:[%s4871 + $0xe4] sm:$0xf]
        %v4930 = vld [vmem:[%s4871 + $0xe8] sm:$0xf]
        %v4931 = vld [vmem:[%s4871 + $0xec] sm:$0xf]
        %v4932 = vld [vmem:[%s4871 + $0xf0] sm:$0xf]
        %v4933 = vld [vmem:[%s4871 + $0xf4] sm:$0xf]
        %v4934 = vld [vmem:[%s4871 + $0xf8] sm:$0xf]
        %v4935 = vld [vmem:[%s4871 + $0xfc] sm:$0xf]
        %v4936 = vld [vmem:[%s4871 + $0x100] sm:$0xf]
        %v4937 = vld [vmem:[%s4871 + $0x104] sm:$0xf]
        %v4938 = vld [vmem:[%s4871 + $0x108] sm:$0xf]
        %v4939 = vld [vmem:[%s4871 + $0x10c] sm:$0xf]
        %v4940 = vld [vmem:[%s4871 + $0x110] sm:$0xf]
        %v4941 = vld [vmem:[%s4871 + $0x114] sm:$0xf]
        %v4942 = vld [vmem:[%s4871 + $0x118] sm:$0xf]
        %v4943 = vld [vmem:[%s4871 + $0x11c] sm:$0xf]
        %v4944 = vld [vmem:[%s4871 + $0x120] sm:$0xf]
        %v4945 = vld [vmem:[%s4871 + $0x124] sm:$0xf]
        %v4946 = vld [vmem:[%s4871 + $0x128] sm:$0xf]
        %v4947 = vld [vmem:[%s4871 + $0x12c] sm:$0xf]
        %v4948 = vld [vmem:[%s4871 + $0x130] sm:$0xf]
        %v4949 = vld [vmem:[%s4871 + $0x134] sm:$0xf]
        %v4950 = vld [vmem:[%s4871 + $0x138] sm:$0xf]
        %v4951 = vld [vmem:[%s4871 + $0x13c] sm:$0xf]
        %v4952 = vld [vmem:[%s4871 + $0x140] sm:$0xf]
        %v4953 = vld [vmem:[%s4871 + $0x144] sm:$0xf]
        %v4954 = vld [vmem:[%s4871 + $0x148] sm:$0xf]
        %v4955 = vld [vmem:[%s4871 + $0x14c] sm:$0xf]
        %v4956 = vld [vmem:[%s4871 + $0x150] sm:$0xf]
        %v4957 = vld [vmem:[%s4871 + $0x154] sm:$0xf]
        %v4958 = vld [vmem:[%s4871 + $0x158] sm:$0xf]
        %v4959 = vld [vmem:[%s4871 + $0x15c] sm:$0xf]
        %v4960 = vld [vmem:[%s4871 + $0x160] sm:$0xf]
        %v4961 = vld [vmem:[%s4871 + $0x164] sm:$0xf]
        %v4962 = vld [vmem:[%s4871 + $0x168] sm:$0xf]
        %v4963 = vld [vmem:[%s4871 + $0x16c] sm:$0xf]
        %v4964 = vld [vmem:[%s4871 + $0x170] sm:$0xf]
        %v4965 = vld [vmem:[%s4871 + $0x174] sm:$0xf]
        %v4966 = vld [vmem:[%s4871 + $0x178] sm:$0xf]
        %v4967 = vld [vmem:[%s4871 + $0x17c] sm:$0xf]
        %v4984 = vunpack.c.l.b16 %v4872
        %v4985 = vunpack.c.l.b16 %v4873
        %v4986 = vunpack.c.l.b16 %v4874
        %v4987 = vunpack.c.l.b16 %v4875
        %v4988 = vunpack.c.l.b16 %v4876
        %v4989 = vunpack.c.l.b16 %v4877
        %v4990 = vunpack.c.l.b16 %v4878
        %v4991 = vunpack.c.l.b16 %v4879
        %v4992 = vunpack.c.l.b16 %v4880
        %v4993 = vunpack.c.l.b16 %v4881
        %v4994 = vunpack.c.l.b16 %v4882
        %v4995 = vunpack.c.l.b16 %v4883
        %v4996 = vunpack.c.l.b16 %v4884
        %v4997 = vunpack.c.l.b16 %v4885
        %v4998 = vunpack.c.l.b16 %v4886
        %v4999 = vunpack.c.l.b16 %v4887
        %v5000 = vpack.c.b16 %v4985, %v4984
        %v5001 = vpack.c.b16 %v4987, %v4986
        %v5002 = vpack.c.b16 %v4989, %v4988
        %v5003 = vpack.c.b16 %v4991, %v4990
        %v5004 = vpack.c.b16 %v4993, %v4992
        %v5005 = vpack.c.b16 %v4995, %v4994
        %v5006 = vpack.c.b16 %v4997, %v4996
        %v5007 = vpack.c.b16 %v4999, %v4998
        %5016 = vmatprep.subr.bf16.mxu0 0
        %5017 = vmatpush1.bf16.msra.mxu0 %v5007
        %5018 = vmatprep.subr.bf16.mxu0 0
        %5019 = vmatpush1.bf16.msra.mxu0 %v5006
        %5020 = vmatprep.subr.bf16.mxu0 0
        %5021 = vmatpush1.bf16.msra.mxu0 %v5005
        %5022 = vmatprep.subr.bf16.mxu0 0
        %5023 = vmatpush1.bf16.msra.mxu0 %v5004
        %5024 = vmatprep.subr.bf16.mxu0 0
        %5025 = vmatpush1.bf16.msra.mxu0 %v5003
        %5026 = vmatprep.subr.bf16.mxu0 0
        %5027 = vmatpush1.bf16.msra.mxu0 %v5002
        %5028 = vmatprep.subr.bf16.mxu0 0
        %5029 = vmatpush1.bf16.msra.mxu0 %v5001
        %5030 = vmatprep.subr.bf16.mxu0 0
        %5031 = vmatpush1.bf16.msra.mxu0 %v5000
        %5032 = vmatprep.subr.bf16.mxu0 0
        %5033 = vmatpush2.bf16.msra.mxu0 0
        %5034 = vmatprep.subr.bf16.mxu0 0
        %5035 = vmatpush2.bf16.msra.mxu0 0
        %5036 = vmatprep.subr.bf16.mxu0 0
        %5037 = vmatpush2.bf16.msra.mxu0 0
        %5038 = vmatprep.subr.bf16.mxu0 0
        %5039 = vmatpush2.bf16.msra.mxu0 0
        %5040 = vmatprep.subr.bf16.mxu0 0
        %5041 = vmatpush2.bf16.msra.mxu0 0
        %5042 = vmatprep.subr.bf16.mxu0 0
        %5043 = vmatpush2.bf16.msra.mxu0 0
        %5044 = vmatprep.subr.bf16.mxu0 0
        %5045 = vmatpush2.bf16.msra.mxu0 0
        %5046 = vmatprep.subr.bf16.mxu0 0
        %5047 = vmatpush2.bf16.msra.mxu0 0
        %5048 = vmatprep.mubr.bf16.mxu0 0
        %5049 = vmatmul.mubr.bf16.gmra.mxu0 %v4869
        %v5050 = vpop.f32.mrf.mxu0
        %v5051 = vadd.f32 0.0, %v5050
        %v5052 = vpop.f32.mrf.mxu0
        %v5053 = vpop.f32.mrf.mxu0
        %v5054 = vadd.f32 0.0, %v5053
        %v5055 = vpop.f32.mrf.mxu0
        %5056 = vmatprep.mubr.bf16.mxu0 0
        %5057 = vmatmul.mubr.bf16.gmra.mxu0 %v4870
        %v5058 = vpop.f32.mrf.mxu0
        %v5059 = vadd.f32 0.0, %v5058
        %v5060 = vpop.f32.mrf.mxu0
        %v5061 = vpop.f32.mrf.mxu0
        %v5062 = vadd.f32 0.0, %v5061
        %v5063 = vpop.f32.mrf.mxu0
        %5064 = vdwg.mxu0
        %v5081 = vunpack.c.l.b16 %v4888
        %v5082 = vunpack.c.l.b16 %v4889
        %v5083 = vunpack.c.l.b16 %v4890
        %v5084 = vunpack.c.l.b16 %v4891
        %v5085 = vunpack.c.l.b16 %v4892
        %v5086 = vunpack.c.l.b16 %v4893
        %v5087 = vunpack.c.l.b16 %v4894
        %v5088 = vunpack.c.l.b16 %v4895
        %v5089 = vunpack.c.l.b16 %v4896
        %v5090 = vunpack.c.l.b16 %v4897
        %v5091 = vunpack.c.l.b16 %v4898
        %v5092 = vunpack.c.l.b16 %v4899
        %v5093 = vunpack.c.l.b16 %v4900
        %v5094 = vunpack.c.l.b16 %v4901
        %v5095 = vunpack.c.l.b16 %v4902
        %v5096 = vunpack.c.l.b16 %v4903
        %v5097 = vpack.c.b16 %v5082, %v5081
        %v5098 = vpack.c.b16 %v5084, %v5083
        %v5099 = vpack.c.b16 %v5086, %v5085
        %v5100 = vpack.c.b16 %v5088, %v5087
        %v5101 = vpack.c.b16 %v5090, %v5089
        %v5102 = vpack.c.b16 %v5092, %v5091
        %v5103 = vpack.c.b16 %v5094, %v5093
        %v5104 = vpack.c.b16 %v5096, %v5095
        %5113 = vmatprep.subr.bf16.mxu0 0
        %5114 = vmatpush1.bf16.msra.mxu0 %v5104
        %5115 = vmatprep.subr.bf16.mxu0 0
        %5116 = vmatpush1.bf16.msra.mxu0 %v5103
        %5117 = vmatprep.subr.bf16.mxu0 0
        %5118 = vmatpush1.bf16.msra.mxu0 %v5102
        %5119 = vmatprep.subr.bf16.mxu0 0
        %5120 = vmatpush1.bf16.msra.mxu0 %v5101
        %5121 = vmatprep.subr.bf16.mxu0 0
        %5122 = vmatpush1.bf16.msra.mxu0 %v5100
        %5123 = vmatprep.subr.bf16.mxu0 0
        %5124 = vmatpush1.bf16.msra.mxu0 %v5099
        %5125 = vmatprep.subr.bf16.mxu0 0
        %5126 = vmatpush1.bf16.msra.mxu0 %v5098
        %5127 = vmatprep.subr.bf16.mxu0 0
        %5128 = vmatpush1.bf16.msra.mxu0 %v5097
        %5129 = vmatprep.subr.bf16.mxu0 0
        %5130 = vmatpush2.bf16.msra.mxu0 0
        %5131 = vmatprep.subr.bf16.mxu0 0
        %5132 = vmatpush2.bf16.msra.mxu0 0
        %5133 = vmatprep.subr.bf16.mxu0 0
        %5134 = vmatpush2.bf16.msra.mxu0 0
        %5135 = vmatprep.subr.bf16.mxu0 0
        %5136 = vmatpush2.bf16.msra.mxu0 0
        %5137 = vmatprep.subr.bf16.mxu0 0
        %5138 = vmatpush2.bf16.msra.mxu0 0
        %5139 = vmatprep.subr.bf16.mxu0 0
        %5140 = vmatpush2.bf16.msra.mxu0 0
        %5141 = vmatprep.subr.bf16.mxu0 0
        %5142 = vmatpush2.bf16.msra.mxu0 0
        %5143 = vmatprep.subr.bf16.mxu0 0
        %5144 = vmatpush2.bf16.msra.mxu0 0
        %5145 = vmatprep.mubr.bf16.mxu0 0
        %5146 = vmatmul.mubr.bf16.gmra.mxu0 %v4869
        %v5147 = vpop.f32.mrf.mxu0
        %v5148 = vadd.f32 0.0, %v5147
        %v5149 = vpop.f32.mrf.mxu0
        %v5150 = vpop.f32.mrf.mxu0
        %v5151 = vadd.f32 0.0, %v5150
        %v5152 = vpop.f32.mrf.mxu0
        %5153 = vmatprep.mubr.bf16.mxu0 0
        %5154 = vmatmul.mubr.bf16.gmra.mxu0 %v4870
        %v5155 = vpop.f32.mrf.mxu0
        %v5156 = vadd.f32 0.0, %v5155
        %v5157 = vpop.f32.mrf.mxu0
        %v5158 = vpop.f32.mrf.mxu0
        %v5159 = vadd.f32 0.0, %v5158
        %v5160 = vpop.f32.mrf.mxu0
        %5161 = vdwg.mxu0
        %v5178 = vunpack.c.l.b16 %v4904
        %v5179 = vunpack.c.l.b16 %v4905
        %v5180 = vunpack.c.l.b16 %v4906
        %v5181 = vunpack.c.l.b16 %v4907
        %v5182 = vunpack.c.l.b16 %v4908
        %v5183 = vunpack.c.l.b16 %v4909
        %v5184 = vunpack.c.l.b16 %v4910
        %v5185 = vunpack.c.l.b16 %v4911
        %v5186 = vunpack.c.l.b16 %v4912
        %v5187 = vunpack.c.l.b16 %v4913
        %v5188 = vunpack.c.l.b16 %v4914
        %v5189 = vunpack.c.l.b16 %v4915
        %v5190 = vunpack.c.l.b16 %v4916
        %v5191 = vunpack.c.l.b16 %v4917
        %v5192 = vunpack.c.l.b16 %v4918
        %v5193 = vunpack.c.l.b16 %v4919
        %v5194 = vpack.c.b16 %v5179, %v5178
        %v5195 = vpack.c.b16 %v5181, %v5180
        %v5196 = vpack.c.b16 %v5183, %v5182
        %v5197 = vpack.c.b16 %v5185, %v5184
        %v5198 = vpack.c.b16 %v5187, %v5186
        %v5199 = vpack.c.b16 %v5189, %v5188
        %v5200 = vpack.c.b16 %v5191, %v5190
        %v5201 = vpack.c.b16 %v5193, %v5192
        %5210 = vmatprep.subr.bf16.mxu0 0
        %5211 = vmatpush1.bf16.msra.mxu0 %v5201
        %5212 = vmatprep.subr.bf16.mxu0 0
        %5213 = vmatpush1.bf16.msra.mxu0 %v5200
        %5214 = vmatprep.subr.bf16.mxu0 0
        %5215 = vmatpush1.bf16.msra.mxu0 %v5199
        %5216 = vmatprep.subr.bf16.mxu0 0
        %5217 = vmatpush1.bf16.msra.mxu0 %v5198
        %5218 = vmatprep.subr.bf16.mxu0 0
        %5219 = vmatpush1.bf16.msra.mxu0 %v5197
        %5220 = vmatprep.subr.bf16.mxu0 0
        %5221 = vmatpush1.bf16.msra.mxu0 %v5196
        %5222 = vmatprep.subr.bf16.mxu0 0
        %5223 = vmatpush1.bf16.msra.mxu0 %v5195
        %5224 = vmatprep.subr.bf16.mxu0 0
        %5225 = vmatpush1.bf16.msra.mxu0 %v5194
        %5226 = vmatprep.subr.bf16.mxu0 0
        %5227 = vmatpush2.bf16.msra.mxu0 0
        %5228 = vmatprep.subr.bf16.mxu0 0
        %5229 = vmatpush2.bf16.msra.mxu0 0
        %5230 = vmatprep.subr.bf16.mxu0 0
        %5231 = vmatpush2.bf16.msra.mxu0 0
        %5232 = vmatprep.subr.bf16.mxu0 0
        %5233 = vmatpush2.bf16.msra.mxu0 0
        %5234 = vmatprep.subr.bf16.mxu0 0
        %5235 = vmatpush2.bf16.msra.mxu0 0
        %5236 = vmatprep.subr.bf16.mxu0 0
        %5237 = vmatpush2.bf16.msra.mxu0 0
        %5238 = vmatprep.subr.bf16.mxu0 0
        %5239 = vmatpush2.bf16.msra.mxu0 0
        %5240 = vmatprep.subr.bf16.mxu0 0
        %5241 = vmatpush2.bf16.msra.mxu0 0
        %5242 = vmatprep.mubr.bf16.mxu0 0
        %5243 = vmatmul.mubr.bf16.gmra.mxu0 %v4869
        %v5244 = vpop.f32.mrf.mxu0
        %v5245 = vadd.f32 0.0, %v5244
        %v5246 = vpop.f32.mrf.mxu0
        %v5247 = vpop.f32.mrf.mxu0
        %v5248 = vadd.f32 0.0, %v5247
        %v5249 = vpop.f32.mrf.mxu0
        %5250 = vmatprep.mubr.bf16.mxu0 0
        %5251 = vmatmul.mubr.bf16.gmra.mxu0 %v4870
        %v5252 = vpop.f32.mrf.mxu0
        %v5253 = vadd.f32 0.0, %v5252
        %v5254 = vpop.f32.mrf.mxu0
        %v5255 = vpop.f32.mrf.mxu0
        %v5256 = vadd.f32 0.0, %v5255
        %v5257 = vpop.f32.mrf.mxu0
        %5258 = vdwg.mxu0
        %v5275 = vunpack.c.l.b16 %v4920
        %v5276 = vunpack.c.l.b16 %v4921
        %v5277 = vunpack.c.l.b16 %v4922
        %v5278 = vunpack.c.l.b16 %v4923
        %v5279 = vunpack.c.l.b16 %v4924
        %v5280 = vunpack.c.l.b16 %v4925
        %v5281 = vunpack.c.l.b16 %v4926
        %v5282 = vunpack.c.l.b16 %v4927
        %v5283 = vunpack.c.l.b16 %v4928
        %v5284 = vunpack.c.l.b16 %v4929
        %v5285 = vunpack.c.l.b16 %v4930
        %v5286 = vunpack.c.l.b16 %v4931
        %v5287 = vunpack.c.l.b16 %v4932
        %v5288 = vunpack.c.l.b16 %v4933
        %v5289 = vunpack.c.l.b16 %v4934
        %v5290 = vunpack.c.l.b16 %v4935
        %v5291 = vpack.c.b16 %v5276, %v5275
        %v5292 = vpack.c.b16 %v5278, %v5277
        %v5293 = vpack.c.b16 %v5280, %v5279
        %v5294 = vpack.c.b16 %v5282, %v5281
        %v5295 = vpack.c.b16 %v5284, %v5283
        %v5296 = vpack.c.b16 %v5286, %v5285
        %v5297 = vpack.c.b16 %v5288, %v5287
        %v5298 = vpack.c.b16 %v5290, %v5289
        %5307 = vmatprep.subr.bf16.mxu0 0
        %5308 = vmatpush1.bf16.msra.mxu0 %v5298
        %5309 = vmatprep.subr.bf16.mxu0 0
        %5310 = vmatpush1.bf16.msra.mxu0 %v5297
        %5311 = vmatprep.subr.bf16.mxu0 0
        %5312 = vmatpush1.bf16.msra.mxu0 %v5296
        %5313 = vmatprep.subr.bf16.mxu0 0
        %5314 = vmatpush1.bf16.msra.mxu0 %v5295
        %5315 = vmatprep.subr.bf16.mxu0 0
        %5316 = vmatpush1.bf16.msra.mxu0 %v5294
        %5317 = vmatprep.subr.bf16.mxu0 0
        %5318 = vmatpush1.bf16.msra.mxu0 %v5293
        %5319 = vmatprep.subr.bf16.mxu0 0
        %5320 = vmatpush1.bf16.msra.mxu0 %v5292
        %5321 = vmatprep.subr.bf16.mxu0 0
        %5322 = vmatpush1.bf16.msra.mxu0 %v5291
        %5323 = vmatprep.subr.bf16.mxu0 0
        %5324 = vmatpush2.bf16.msra.mxu0 0
        %5325 = vmatprep.subr.bf16.mxu0 0
        %5326 = vmatpush2.bf16.msra.mxu0 0
        %5327 = vmatprep.subr.bf16.mxu0 0
        %5328 = vmatpush2.bf16.msra.mxu0 0
        %5329 = vmatprep.subr.bf16.mxu0 0
        %5330 = vmatpush2.bf16.msra.mxu0 0
        %5331 = vmatprep.subr.bf16.mxu0 0
        %5332 = vmatpush2.bf16.msra.mxu0 0
        %5333 = vmatprep.subr.bf16.mxu0 0
        %5334 = vmatpush2.bf16.msra.mxu0 0
        %5335 = vmatprep.subr.bf16.mxu0 0
        %5336 = vmatpush2.bf16.msra.mxu0 0
        %5337 = vmatprep.subr.bf16.mxu0 0
        %5338 = vmatpush2.bf16.msra.mxu0 0
        %5339 = vmatprep.mubr.bf16.mxu0 0
        %5340 = vmatmul.mubr.bf16.gmra.mxu0 %v4869
        %v5341 = vpop.f32.mrf.mxu0
        %v5342 = vadd.f32 0.0, %v5341
        %v5343 = vpop.f32.mrf.mxu0
        %v5344 = vpop.f32.mrf.mxu0
        %v5345 = vadd.f32 0.0, %v5344
        %v5346 = vpop.f32.mrf.mxu0
        %5347 = vmatprep.mubr.bf16.mxu0 0
        %5348 = vmatmul.mubr.bf16.gmra.mxu0 %v4870
        %v5349 = vpop.f32.mrf.mxu0
        %v5350 = vadd.f32 0.0, %v5349
        %v5351 = vpop.f32.mrf.mxu0
        %v5352 = vpop.f32.mrf.mxu0
        %v5353 = vadd.f32 0.0, %v5352
        %v5354 = vpop.f32.mrf.mxu0
        %5355 = vdwg.mxu0
        %v5372 = vunpack.c.l.b16 %v4936
        %v5373 = vunpack.c.l.b16 %v4937
        %v5374 = vunpack.c.l.b16 %v4938
        %v5375 = vunpack.c.l.b16 %v4939
        %v5376 = vunpack.c.l.b16 %v4940
        %v5377 = vunpack.c.l.b16 %v4941
        %v5378 = vunpack.c.l.b16 %v4942
        %v5379 = vunpack.c.l.b16 %v4943
        %v5380 = vunpack.c.l.b16 %v4944
        %v5381 = vunpack.c.l.b16 %v4945
        %v5382 = vunpack.c.l.b16 %v4946
        %v5383 = vunpack.c.l.b16 %v4947
        %v5384 = vunpack.c.l.b16 %v4948
        %v5385 = vunpack.c.l.b16 %v4949
        %v5386 = vunpack.c.l.b16 %v4950
        %v5387 = vunpack.c.l.b16 %v4951
        %v5388 = vpack.c.b16 %v5373, %v5372
        %v5389 = vpack.c.b16 %v5375, %v5374
        %v5390 = vpack.c.b16 %v5377, %v5376
        %v5391 = vpack.c.b16 %v5379, %v5378
        %v5392 = vpack.c.b16 %v5381, %v5380
        %v5393 = vpack.c.b16 %v5383, %v5382
        %v5394 = vpack.c.b16 %v5385, %v5384
        %v5395 = vpack.c.b16 %v5387, %v5386
        %5404 = vmatprep.subr.bf16.mxu0 0
        %5405 = vmatpush1.bf16.msra.mxu0 %v5395
        %5406 = vmatprep.subr.bf16.mxu0 0
        %5407 = vmatpush1.bf16.msra.mxu0 %v5394
        %5408 = vmatprep.subr.bf16.mxu0 0
        %5409 = vmatpush1.bf16.msra.mxu0 %v5393
        %5410 = vmatprep.subr.bf16.mxu0 0
        %5411 = vmatpush1.bf16.msra.mxu0 %v5392
        %5412 = vmatprep.subr.bf16.mxu0 0
        %5413 = vmatpush1.bf16.msra.mxu0 %v5391
        %5414 = vmatprep.subr.bf16.mxu0 0
        %5415 = vmatpush1.bf16.msra.mxu0 %v5390
        %5416 = vmatprep.subr.bf16.mxu0 0
        %5417 = vmatpush1.bf16.msra.mxu0 %v5389
        %5418 = vmatprep.subr.bf16.mxu0 0
        %5419 = vmatpush1.bf16.msra.mxu0 %v5388
        %5420 = vmatprep.subr.bf16.mxu0 0
        %5421 = vmatpush2.bf16.msra.mxu0 0
        %5422 = vmatprep.subr.bf16.mxu0 0
        %5423 = vmatpush2.bf16.msra.mxu0 0
        %5424 = vmatprep.subr.bf16.mxu0 0
        %5425 = vmatpush2.bf16.msra.mxu0 0
        %5426 = vmatprep.subr.bf16.mxu0 0
        %5427 = vmatpush2.bf16.msra.mxu0 0
        %5428 = vmatprep.subr.bf16.mxu0 0
        %5429 = vmatpush2.bf16.msra.mxu0 0
        %5430 = vmatprep.subr.bf16.mxu0 0
        %5431 = vmatpush2.bf16.msra.mxu0 0
        %5432 = vmatprep.subr.bf16.mxu0 0
        %5433 = vmatpush2.bf16.msra.mxu0 0
        %5434 = vmatprep.subr.bf16.mxu0 0
        %5435 = vmatpush2.bf16.msra.mxu0 0
        %5436 = vmatprep.mubr.bf16.mxu0 0
        %5437 = vmatmul.mubr.bf16.gmra.mxu0 %v4869
        %v5438 = vpop.f32.mrf.mxu0
        %v5439 = vadd.f32 0.0, %v5438
        %v5440 = vpop.f32.mrf.mxu0
        %v5441 = vpop.f32.mrf.mxu0
        %v5442 = vadd.f32 0.0, %v5441
        %v5443 = vpop.f32.mrf.mxu0
        %5444 = vmatprep.mubr.bf16.mxu0 0
        %5445 = vmatmul.mubr.bf16.gmra.mxu0 %v4870
        %v5446 = vpop.f32.mrf.mxu0
        %v5447 = vadd.f32 0.0, %v5446
        %v5448 = vpop.f32.mrf.mxu0
        %v5449 = vpop.f32.mrf.mxu0
        %v5450 = vadd.f32 0.0, %v5449
        %v5451 = vpop.f32.mrf.mxu0
        %5452 = vdwg.mxu0
        %v5469 = vunpack.c.l.b16 %v4952
        %v5470 = vunpack.c.l.b16 %v4953
        %v5471 = vunpack.c.l.b16 %v4954
        %v5472 = vunpack.c.l.b16 %v4955
        %v5473 = vunpack.c.l.b16 %v4956
        %v5474 = vunpack.c.l.b16 %v4957
        %v5475 = vunpack.c.l.b16 %v4958
        %v5476 = vunpack.c.l.b16 %v4959
        %v5477 = vunpack.c.l.b16 %v4960
        %v5478 = vunpack.c.l.b16 %v4961
        %v5479 = vunpack.c.l.b16 %v4962
        %v5480 = vunpack.c.l.b16 %v4963
        %v5481 = vunpack.c.l.b16 %v4964
        %v5482 = vunpack.c.l.b16 %v4965
        %v5483 = vunpack.c.l.b16 %v4966
        %v5484 = vunpack.c.l.b16 %v4967
        %v5485 = vpack.c.b16 %v5470, %v5469
        %v5486 = vpack.c.b16 %v5472, %v5471
        %v5487 = vpack.c.b16 %v5474, %v5473
        %v5488 = vpack.c.b16 %v5476, %v5475
        %v5489 = vpack.c.b16 %v5478, %v5477
        %v5490 = vpack.c.b16 %v5480, %v5479
        %v5491 = vpack.c.b16 %v5482, %v5481
        %v5492 = vpack.c.b16 %v5484, %v5483
        %5501 = vmatprep.subr.bf16.mxu0 0
        %5502 = vmatpush1.bf16.msra.mxu0 %v5492
        %5503 = vmatprep.subr.bf16.mxu0 0
        %5504 = vmatpush1.bf16.msra.mxu0 %v5491
        %5505 = vmatprep.subr.bf16.mxu0 0
        %5506 = vmatpush1.bf16.msra.mxu0 %v5490
        %5507 = vmatprep.subr.bf16.mxu0 0
        %5508 = vmatpush1.bf16.msra.mxu0 %v5489
        %5509 = vmatprep.subr.bf16.mxu0 0
        %5510 = vmatpush1.bf16.msra.mxu0 %v5488
        %5511 = vmatprep.subr.bf16.mxu0 0
        %5512 = vmatpush1.bf16.msra.mxu0 %v5487
        %5513 = vmatprep.subr.bf16.mxu0 0
        %5514 = vmatpush1.bf16.msra.mxu0 %v5486
        %5515 = vmatprep.subr.bf16.mxu0 0
        %5516 = vmatpush1.bf16.msra.mxu0 %v5485
        %5517 = vmatprep.subr.bf16.mxu0 0
        %5518 = vmatpush2.bf16.msra.mxu0 0
        %5519 = vmatprep.subr.bf16.mxu0 0
        %5520 = vmatpush2.bf16.msra.mxu0 0
        %5521 = vmatprep.subr.bf16.mxu0 0
        %5522 = vmatpush2.bf16.msra.mxu0 0
        %5523 = vmatprep.subr.bf16.mxu0 0
        %5524 = vmatpush2.bf16.msra.mxu0 0
        %5525 = vmatprep.subr.bf16.mxu0 0
        %5526 = vmatpush2.bf16.msra.mxu0 0
        %5527 = vmatprep.subr.bf16.mxu0 0
        %5528 = vmatpush2.bf16.msra.mxu0 0
        %5529 = vmatprep.subr.bf16.mxu0 0
        %5530 = vmatpush2.bf16.msra.mxu0 0
        %5531 = vmatprep.subr.bf16.mxu0 0
        %5532 = vmatpush2.bf16.msra.mxu0 0
        %5533 = vmatprep.mubr.bf16.mxu0 0
        %5534 = vmatmul.mubr.bf16.gmra.mxu0 %v4869
        %v5535 = vpop.f32.mrf.mxu0
        %v5536 = vadd.f32 0.0, %v5535
        %v5537 = vpop.f32.mrf.mxu0
        %v5538 = vpop.f32.mrf.mxu0
        %v5539 = vadd.f32 0.0, %v5538
        %v5540 = vpop.f32.mrf.mxu0
        %5541 = vmatprep.mubr.bf16.mxu0 0
        %5542 = vmatmul.mubr.bf16.gmra.mxu0 %v4870
        %v5543 = vpop.f32.mrf.mxu0
        %v5544 = vadd.f32 0.0, %v5543
        %v5545 = vpop.f32.mrf.mxu0
        %v5546 = vpop.f32.mrf.mxu0
        %v5547 = vadd.f32 0.0, %v5546
        %v5548 = vpop.f32.mrf.mxu0
        %5549 = vdwg.mxu0
        %s5550 = scalar_lea.vmem %s4, 384
        %v5551 = vld [vmem:[%s5550] sm:$0xf]
        %v5552 = vld [vmem:[%s5550 + $0x4] sm:$0xf]
        %v5553 = vld [vmem:[%s5550 + $0x8] sm:$0xf]
        %v5554 = vld [vmem:[%s5550 + $0xc] sm:$0xf]
        %v5555 = vld [vmem:[%s5550 + $0x10] sm:$0xf]
        %v5556 = vld [vmem:[%s5550 + $0x14] sm:$0xf]
        %v5557 = vld [vmem:[%s5550 + $0x18] sm:$0xf]
        %v5558 = vld [vmem:[%s5550 + $0x1c] sm:$0xf]
        %v5559 = vld [vmem:[%s5550 + $0x20] sm:$0xf]
        %v5560 = vld [vmem:[%s5550 + $0x24] sm:$0xf]
        %v5561 = vld [vmem:[%s5550 + $0x28] sm:$0xf]
        %v5562 = vld [vmem:[%s5550 + $0x2c] sm:$0xf]
        %v5563 = vld [vmem:[%s5550 + $0x30] sm:$0xf]
        %v5564 = vld [vmem:[%s5550 + $0x34] sm:$0xf]
        %v5565 = vld [vmem:[%s5550 + $0x38] sm:$0xf]
        %v5566 = vld [vmem:[%s5550 + $0x3c] sm:$0xf]
        %v5567 = vld [vmem:[%s5550 + $0x40] sm:$0xf]
        %v5568 = vld [vmem:[%s5550 + $0x44] sm:$0xf]
        %v5569 = vld [vmem:[%s5550 + $0x48] sm:$0xf]
        %v5570 = vld [vmem:[%s5550 + $0x4c] sm:$0xf]
        %v5571 = vld [vmem:[%s5550 + $0x50] sm:$0xf]
        %v5572 = vld [vmem:[%s5550 + $0x54] sm:$0xf]
        %v5573 = vld [vmem:[%s5550 + $0x58] sm:$0xf]
        %v5574 = vld [vmem:[%s5550 + $0x5c] sm:$0xf]
        %v5575 = vld [vmem:[%s5550 + $0x60] sm:$0xf]
        %v5576 = vld [vmem:[%s5550 + $0x64] sm:$0xf]
        %v5577 = vld [vmem:[%s5550 + $0x68] sm:$0xf]
        %v5578 = vld [vmem:[%s5550 + $0x6c] sm:$0xf]
        %v5579 = vld [vmem:[%s5550 + $0x70] sm:$0xf]
        %v5580 = vld [vmem:[%s5550 + $0x74] sm:$0xf]
        %v5581 = vld [vmem:[%s5550 + $0x78] sm:$0xf]
        %v5582 = vld [vmem:[%s5550 + $0x7c] sm:$0xf]
        %v5583 = vld [vmem:[%s5550 + $0x80] sm:$0xf]
        %v5584 = vld [vmem:[%s5550 + $0x84] sm:$0xf]
        %v5585 = vld [vmem:[%s5550 + $0x88] sm:$0xf]
        %v5586 = vld [vmem:[%s5550 + $0x8c] sm:$0xf]
        %v5587 = vld [vmem:[%s5550 + $0x90] sm:$0xf]
        %v5588 = vld [vmem:[%s5550 + $0x94] sm:$0xf]
        %v5589 = vld [vmem:[%s5550 + $0x98] sm:$0xf]
        %v5590 = vld [vmem:[%s5550 + $0x9c] sm:$0xf]
        %v5591 = vld [vmem:[%s5550 + $0xa0] sm:$0xf]
        %v5592 = vld [vmem:[%s5550 + $0xa4] sm:$0xf]
        %v5593 = vld [vmem:[%s5550 + $0xa8] sm:$0xf]
        %v5594 = vld [vmem:[%s5550 + $0xac] sm:$0xf]
        %v5595 = vld [vmem:[%s5550 + $0xb0] sm:$0xf]
        %v5596 = vld [vmem:[%s5550 + $0xb4] sm:$0xf]
        %v5597 = vld [vmem:[%s5550 + $0xb8] sm:$0xf]
        %v5598 = vld [vmem:[%s5550 + $0xbc] sm:$0xf]
        %v5599 = vld [vmem:[%s5550 + $0xc0] sm:$0xf]
        %v5600 = vld [vmem:[%s5550 + $0xc4] sm:$0xf]
        %v5601 = vld [vmem:[%s5550 + $0xc8] sm:$0xf]
        %v5602 = vld [vmem:[%s5550 + $0xcc] sm:$0xf]
        %v5603 = vld [vmem:[%s5550 + $0xd0] sm:$0xf]
        %v5604 = vld [vmem:[%s5550 + $0xd4] sm:$0xf]
        %v5605 = vld [vmem:[%s5550 + $0xd8] sm:$0xf]
        %v5606 = vld [vmem:[%s5550 + $0xdc] sm:$0xf]
        %v5607 = vld [vmem:[%s5550 + $0xe0] sm:$0xf]
        %v5608 = vld [vmem:[%s5550 + $0xe4] sm:$0xf]
        %v5609 = vld [vmem:[%s5550 + $0xe8] sm:$0xf]
        %v5610 = vld [vmem:[%s5550 + $0xec] sm:$0xf]
        %v5611 = vld [vmem:[%s5550 + $0xf0] sm:$0xf]
        %v5612 = vld [vmem:[%s5550 + $0xf4] sm:$0xf]
        %v5613 = vld [vmem:[%s5550 + $0xf8] sm:$0xf]
        %v5614 = vld [vmem:[%s5550 + $0xfc] sm:$0xf]
        %v5615 = vld [vmem:[%s5550 + $0x100] sm:$0xf]
        %v5616 = vld [vmem:[%s5550 + $0x104] sm:$0xf]
        %v5617 = vld [vmem:[%s5550 + $0x108] sm:$0xf]
        %v5618 = vld [vmem:[%s5550 + $0x10c] sm:$0xf]
        %v5619 = vld [vmem:[%s5550 + $0x110] sm:$0xf]
        %v5620 = vld [vmem:[%s5550 + $0x114] sm:$0xf]
        %v5621 = vld [vmem:[%s5550 + $0x118] sm:$0xf]
        %v5622 = vld [vmem:[%s5550 + $0x11c] sm:$0xf]
        %v5623 = vld [vmem:[%s5550 + $0x120] sm:$0xf]
        %v5624 = vld [vmem:[%s5550 + $0x124] sm:$0xf]
        %v5625 = vld [vmem:[%s5550 + $0x128] sm:$0xf]
        %v5626 = vld [vmem:[%s5550 + $0x12c] sm:$0xf]
        %v5627 = vld [vmem:[%s5550 + $0x130] sm:$0xf]
        %v5628 = vld [vmem:[%s5550 + $0x134] sm:$0xf]
        %v5629 = vld [vmem:[%s5550 + $0x138] sm:$0xf]
        %v5630 = vld [vmem:[%s5550 + $0x13c] sm:$0xf]
        %v5631 = vld [vmem:[%s5550 + $0x140] sm:$0xf]
        %v5632 = vld [vmem:[%s5550 + $0x144] sm:$0xf]
        %v5633 = vld [vmem:[%s5550 + $0x148] sm:$0xf]
        %v5634 = vld [vmem:[%s5550 + $0x14c] sm:$0xf]
        %v5635 = vld [vmem:[%s5550 + $0x150] sm:$0xf]
        %v5636 = vld [vmem:[%s5550 + $0x154] sm:$0xf]
        %v5637 = vld [vmem:[%s5550 + $0x158] sm:$0xf]
        %v5638 = vld [vmem:[%s5550 + $0x15c] sm:$0xf]
        %v5639 = vld [vmem:[%s5550 + $0x160] sm:$0xf]
        %v5640 = vld [vmem:[%s5550 + $0x164] sm:$0xf]
        %v5641 = vld [vmem:[%s5550 + $0x168] sm:$0xf]
        %v5642 = vld [vmem:[%s5550 + $0x16c] sm:$0xf]
        %v5643 = vld [vmem:[%s5550 + $0x170] sm:$0xf]
        %v5644 = vld [vmem:[%s5550 + $0x174] sm:$0xf]
        %v5645 = vld [vmem:[%s5550 + $0x178] sm:$0xf]
        %v5646 = vld [vmem:[%s5550 + $0x17c] sm:$0xf]
        %v5663 = vunpack.c.l.b16 %v5551
        %v5664 = vunpack.c.l.b16 %v5552
        %v5665 = vunpack.c.l.b16 %v5553
        %v5666 = vunpack.c.l.b16 %v5554
        %v5667 = vunpack.c.l.b16 %v5555
        %v5668 = vunpack.c.l.b16 %v5556
        %v5669 = vunpack.c.l.b16 %v5557
        %v5670 = vunpack.c.l.b16 %v5558
        %v5671 = vunpack.c.l.b16 %v5559
        %v5672 = vunpack.c.l.b16 %v5560
        %v5673 = vunpack.c.l.b16 %v5561
        %v5674 = vunpack.c.l.b16 %v5562
        %v5675 = vunpack.c.l.b16 %v5563
        %v5676 = vunpack.c.l.b16 %v5564
        %v5677 = vunpack.c.l.b16 %v5565
        %v5678 = vunpack.c.l.b16 %v5566
        %v5679 = vpack.c.b16 %v5664, %v5663
        %v5680 = vpack.c.b16 %v5666, %v5665
        %v5681 = vpack.c.b16 %v5668, %v5667
        %v5682 = vpack.c.b16 %v5670, %v5669
        %v5683 = vpack.c.b16 %v5672, %v5671
        %v5684 = vpack.c.b16 %v5674, %v5673
        %v5685 = vpack.c.b16 %v5676, %v5675
        %v5686 = vpack.c.b16 %v5678, %v5677
        %5695 = vmatprep.subr.bf16.mxu0 0
        %5696 = vmatpush1.bf16.msra.mxu0 %v5686
        %5697 = vmatprep.subr.bf16.mxu0 0
        %5698 = vmatpush1.bf16.msra.mxu0 %v5685
        %5699 = vmatprep.subr.bf16.mxu0 0
        %5700 = vmatpush1.bf16.msra.mxu0 %v5684
        %5701 = vmatprep.subr.bf16.mxu0 0
        %5702 = vmatpush1.bf16.msra.mxu0 %v5683
        %5703 = vmatprep.subr.bf16.mxu0 0
        %5704 = vmatpush1.bf16.msra.mxu0 %v5682
        %5705 = vmatprep.subr.bf16.mxu0 0
        %5706 = vmatpush1.bf16.msra.mxu0 %v5681
        %5707 = vmatprep.subr.bf16.mxu0 0
        %5708 = vmatpush1.bf16.msra.mxu0 %v5680
        %5709 = vmatprep.subr.bf16.mxu0 0
        %5710 = vmatpush1.bf16.msra.mxu0 %v5679
        %5711 = vmatprep.subr.bf16.mxu0 0
        %5712 = vmatpush2.bf16.msra.mxu0 0
        %5713 = vmatprep.subr.bf16.mxu0 0
        %5714 = vmatpush2.bf16.msra.mxu0 0
        %5715 = vmatprep.subr.bf16.mxu0 0
        %5716 = vmatpush2.bf16.msra.mxu0 0
        %5717 = vmatprep.subr.bf16.mxu0 0
        %5718 = vmatpush2.bf16.msra.mxu0 0
        %5719 = vmatprep.subr.bf16.mxu0 0
        %5720 = vmatpush2.bf16.msra.mxu0 0
        %5721 = vmatprep.subr.bf16.mxu0 0
        %5722 = vmatpush2.bf16.msra.mxu0 0
        %5723 = vmatprep.subr.bf16.mxu0 0
        %5724 = vmatpush2.bf16.msra.mxu0 0
        %5725 = vmatprep.subr.bf16.mxu0 0
        %5726 = vmatpush2.bf16.msra.mxu0 0
        %5727 = vmatprep.mubr.bf16.mxu0 0
        %5728 = vmatmul.mubr.bf16.gmra.mxu0 %v4869
        %v5729 = vpop.f32.mrf.mxu0
        %v5730 = vadd.f32 0.0, %v5729
        %v5731 = vpop.f32.mrf.mxu0
        %v5732 = vpop.f32.mrf.mxu0
        %v5733 = vadd.f32 0.0, %v5732
        %v5734 = vpop.f32.mrf.mxu0
        %5735 = vmatprep.mubr.bf16.mxu0 0
        %5736 = vmatmul.mubr.bf16.gmra.mxu0 %v4870
        %v5737 = vpop.f32.mrf.mxu0
        %v5738 = vadd.f32 0.0, %v5737
        %v5739 = vpop.f32.mrf.mxu0
        %v5740 = vpop.f32.mrf.mxu0
        %v5741 = vadd.f32 0.0, %v5740
        %v5742 = vpop.f32.mrf.mxu0
        %5743 = vdwg.mxu0
        %v5760 = vunpack.c.l.b16 %v5567
        %v5761 = vunpack.c.l.b16 %v5568
        %v5762 = vunpack.c.l.b16 %v5569
        %v5763 = vunpack.c.l.b16 %v5570
        %v5764 = vunpack.c.l.b16 %v5571
        %v5765 = vunpack.c.l.b16 %v5572
        %v5766 = vunpack.c.l.b16 %v5573
        %v5767 = vunpack.c.l.b16 %v5574
        %v5768 = vunpack.c.l.b16 %v5575
        %v5769 = vunpack.c.l.b16 %v5576
        %v5770 = vunpack.c.l.b16 %v5577
        %v5771 = vunpack.c.l.b16 %v5578
        %v5772 = vunpack.c.l.b16 %v5579
        %v5773 = vunpack.c.l.b16 %v5580
        %v5774 = vunpack.c.l.b16 %v5581
        %v5775 = vunpack.c.l.b16 %v5582
        %v5776 = vpack.c.b16 %v5761, %v5760
        %v5777 = vpack.c.b16 %v5763, %v5762
        %v5778 = vpack.c.b16 %v5765, %v5764
        %v5779 = vpack.c.b16 %v5767, %v5766
        %v5780 = vpack.c.b16 %v5769, %v5768
        %v5781 = vpack.c.b16 %v5771, %v5770
        %v5782 = vpack.c.b16 %v5773, %v5772
        %v5783 = vpack.c.b16 %v5775, %v5774
        %5792 = vmatprep.subr.bf16.mxu0 0
        %5793 = vmatpush1.bf16.msra.mxu0 %v5783
        %5794 = vmatprep.subr.bf16.mxu0 0
        %5795 = vmatpush1.bf16.msra.mxu0 %v5782
        %5796 = vmatprep.subr.bf16.mxu0 0
        %5797 = vmatpush1.bf16.msra.mxu0 %v5781
        %5798 = vmatprep.subr.bf16.mxu0 0
        %5799 = vmatpush1.bf16.msra.mxu0 %v5780
        %5800 = vmatprep.subr.bf16.mxu0 0
        %5801 = vmatpush1.bf16.msra.mxu0 %v5779
        %5802 = vmatprep.subr.bf16.mxu0 0
        %5803 = vmatpush1.bf16.msra.mxu0 %v5778
        %5804 = vmatprep.subr.bf16.mxu0 0
        %5805 = vmatpush1.bf16.msra.mxu0 %v5777
        %5806 = vmatprep.subr.bf16.mxu0 0
        %5807 = vmatpush1.bf16.msra.mxu0 %v5776
        %5808 = vmatprep.subr.bf16.mxu0 0
        %5809 = vmatpush2.bf16.msra.mxu0 0
        %5810 = vmatprep.subr.bf16.mxu0 0
        %5811 = vmatpush2.bf16.msra.mxu0 0
        %5812 = vmatprep.subr.bf16.mxu0 0
        %5813 = vmatpush2.bf16.msra.mxu0 0
        %5814 = vmatprep.subr.bf16.mxu0 0
        %5815 = vmatpush2.bf16.msra.mxu0 0
        %5816 = vmatprep.subr.bf16.mxu0 0
        %5817 = vmatpush2.bf16.msra.mxu0 0
        %5818 = vmatprep.subr.bf16.mxu0 0
        %5819 = vmatpush2.bf16.msra.mxu0 0
        %5820 = vmatprep.subr.bf16.mxu0 0
        %5821 = vmatpush2.bf16.msra.mxu0 0
        %5822 = vmatprep.subr.bf16.mxu0 0
        %5823 = vmatpush2.bf16.msra.mxu0 0
        %5824 = vmatprep.mubr.bf16.mxu0 0
        %5825 = vmatmul.mubr.bf16.gmra.mxu0 %v4869
        %v5826 = vpop.f32.mrf.mxu0
        %v5827 = vadd.f32 0.0, %v5826
        %v5828 = vpop.f32.mrf.mxu0
        %v5829 = vpop.f32.mrf.mxu0
        %v5830 = vadd.f32 0.0, %v5829
        %v5831 = vpop.f32.mrf.mxu0
        %5832 = vmatprep.mubr.bf16.mxu0 0
        %5833 = vmatmul.mubr.bf16.gmra.mxu0 %v4870
        %v5834 = vpop.f32.mrf.mxu0
        %v5835 = vadd.f32 0.0, %v5834
        %v5836 = vpop.f32.mrf.mxu0
        %v5837 = vpop.f32.mrf.mxu0
        %v5838 = vadd.f32 0.0, %v5837
        %v5839 = vpop.f32.mrf.mxu0
        %5840 = vdwg.mxu0
        %v5857 = vunpack.c.l.b16 %v5583
        %v5858 = vunpack.c.l.b16 %v5584
        %v5859 = vunpack.c.l.b16 %v5585
        %v5860 = vunpack.c.l.b16 %v5586
        %v5861 = vunpack.c.l.b16 %v5587
        %v5862 = vunpack.c.l.b16 %v5588
        %v5863 = vunpack.c.l.b16 %v5589
        %v5864 = vunpack.c.l.b16 %v5590
        %v5865 = vunpack.c.l.b16 %v5591
        %v5866 = vunpack.c.l.b16 %v5592
        %v5867 = vunpack.c.l.b16 %v5593
        %v5868 = vunpack.c.l.b16 %v5594
        %v5869 = vunpack.c.l.b16 %v5595
        %v5870 = vunpack.c.l.b16 %v5596
        %v5871 = vunpack.c.l.b16 %v5597
        %v5872 = vunpack.c.l.b16 %v5598
        %v5873 = vpack.c.b16 %v5858, %v5857
        %v5874 = vpack.c.b16 %v5860, %v5859
        %v5875 = vpack.c.b16 %v5862, %v5861
        %v5876 = vpack.c.b16 %v5864, %v5863
        %v5877 = vpack.c.b16 %v5866, %v5865
        %v5878 = vpack.c.b16 %v5868, %v5867
        %v5879 = vpack.c.b16 %v5870, %v5869
        %v5880 = vpack.c.b16 %v5872, %v5871
        %5889 = vmatprep.subr.bf16.mxu0 0
        %5890 = vmatpush1.bf16.msra.mxu0 %v5880
        %5891 = vmatprep.subr.bf16.mxu0 0
        %5892 = vmatpush1.bf16.msra.mxu0 %v5879
        %5893 = vmatprep.subr.bf16.mxu0 0
        %5894 = vmatpush1.bf16.msra.mxu0 %v5878
        %5895 = vmatprep.subr.bf16.mxu0 0
        %5896 = vmatpush1.bf16.msra.mxu0 %v5877
        %5897 = vmatprep.subr.bf16.mxu0 0
        %5898 = vmatpush1.bf16.msra.mxu0 %v5876
        %5899 = vmatprep.subr.bf16.mxu0 0
        %5900 = vmatpush1.bf16.msra.mxu0 %v5875
        %5901 = vmatprep.subr.bf16.mxu0 0
        %5902 = vmatpush1.bf16.msra.mxu0 %v5874
        %5903 = vmatprep.subr.bf16.mxu0 0
        %5904 = vmatpush1.bf16.msra.mxu0 %v5873
        %5905 = vmatprep.subr.bf16.mxu0 0
        %5906 = vmatpush2.bf16.msra.mxu0 0
        %5907 = vmatprep.subr.bf16.mxu0 0
        %5908 = vmatpush2.bf16.msra.mxu0 0
        %5909 = vmatprep.subr.bf16.mxu0 0
        %5910 = vmatpush2.bf16.msra.mxu0 0
        %5911 = vmatprep.subr.bf16.mxu0 0
        %5912 = vmatpush2.bf16.msra.mxu0 0
        %5913 = vmatprep.subr.bf16.mxu0 0
        %5914 = vmatpush2.bf16.msra.mxu0 0
        %5915 = vmatprep.subr.bf16.mxu0 0
        %5916 = vmatpush2.bf16.msra.mxu0 0
        %5917 = vmatprep.subr.bf16.mxu0 0
        %5918 = vmatpush2.bf16.msra.mxu0 0
        %5919 = vmatprep.subr.bf16.mxu0 0
        %5920 = vmatpush2.bf16.msra.mxu0 0
        %5921 = vmatprep.mubr.bf16.mxu0 0
        %5922 = vmatmul.mubr.bf16.gmra.mxu0 %v4869
        %v5923 = vpop.f32.mrf.mxu0
        %v5924 = vadd.f32 0.0, %v5923
        %v5925 = vpop.f32.mrf.mxu0
        %v5926 = vpop.f32.mrf.mxu0
        %v5927 = vadd.f32 0.0, %v5926
        %v5928 = vpop.f32.mrf.mxu0
        %5929 = vmatprep.mubr.bf16.mxu0 0
        %5930 = vmatmul.mubr.bf16.gmra.mxu0 %v4870
        %v5931 = vpop.f32.mrf.mxu0
        %v5932 = vadd.f32 0.0, %v5931
        %v5933 = vpop.f32.mrf.mxu0
        %v5934 = vpop.f32.mrf.mxu0
        %v5935 = vadd.f32 0.0, %v5934
        %v5936 = vpop.f32.mrf.mxu0
        %5937 = vdwg.mxu0
        %v5954 = vunpack.c.l.b16 %v5599
        %v5955 = vunpack.c.l.b16 %v5600
        %v5956 = vunpack.c.l.b16 %v5601
        %v5957 = vunpack.c.l.b16 %v5602
        %v5958 = vunpack.c.l.b16 %v5603
        %v5959 = vunpack.c.l.b16 %v5604
        %v5960 = vunpack.c.l.b16 %v5605
        %v5961 = vunpack.c.l.b16 %v5606
        %v5962 = vunpack.c.l.b16 %v5607
        %v5963 = vunpack.c.l.b16 %v5608
        %v5964 = vunpack.c.l.b16 %v5609
        %v5965 = vunpack.c.l.b16 %v5610
        %v5966 = vunpack.c.l.b16 %v5611
        %v5967 = vunpack.c.l.b16 %v5612
        %v5968 = vunpack.c.l.b16 %v5613
        %v5969 = vunpack.c.l.b16 %v5614
        %v5970 = vpack.c.b16 %v5955, %v5954
        %v5971 = vpack.c.b16 %v5957, %v5956
        %v5972 = vpack.c.b16 %v5959, %v5958
        %v5973 = vpack.c.b16 %v5961, %v5960
        %v5974 = vpack.c.b16 %v5963, %v5962
        %v5975 = vpack.c.b16 %v5965, %v5964
        %v5976 = vpack.c.b16 %v5967, %v5966
        %v5977 = vpack.c.b16 %v5969, %v5968
        %5986 = vmatprep.subr.bf16.mxu0 0
        %5987 = vmatpush1.bf16.msra.mxu0 %v5977
        %5988 = vmatprep.subr.bf16.mxu0 0
        %5989 = vmatpush1.bf16.msra.mxu0 %v5976
        %5990 = vmatprep.subr.bf16.mxu0 0
        %5991 = vmatpush1.bf16.msra.mxu0 %v5975
        %5992 = vmatprep.subr.bf16.mxu0 0
        %5993 = vmatpush1.bf16.msra.mxu0 %v5974
        %5994 = vmatprep.subr.bf16.mxu0 0
        %5995 = vmatpush1.bf16.msra.mxu0 %v5973
        %5996 = vmatprep.subr.bf16.mxu0 0
        %5997 = vmatpush1.bf16.msra.mxu0 %v5972
        %5998 = vmatprep.subr.bf16.mxu0 0
        %5999 = vmatpush1.bf16.msra.mxu0 %v5971
        %6000 = vmatprep.subr.bf16.mxu0 0
        %6001 = vmatpush1.bf16.msra.mxu0 %v5970
        %6002 = vmatprep.subr.bf16.mxu0 0
        %6003 = vmatpush2.bf16.msra.mxu0 0
        %6004 = vmatprep.subr.bf16.mxu0 0
        %6005 = vmatpush2.bf16.msra.mxu0 0
        %6006 = vmatprep.subr.bf16.mxu0 0
        %6007 = vmatpush2.bf16.msra.mxu0 0
        %6008 = vmatprep.subr.bf16.mxu0 0
        %6009 = vmatpush2.bf16.msra.mxu0 0
        %6010 = vmatprep.subr.bf16.mxu0 0
        %6011 = vmatpush2.bf16.msra.mxu0 0
        %6012 = vmatprep.subr.bf16.mxu0 0
        %6013 = vmatpush2.bf16.msra.mxu0 0
        %6014 = vmatprep.subr.bf16.mxu0 0
        %6015 = vmatpush2.bf16.msra.mxu0 0
        %6016 = vmatprep.subr.bf16.mxu0 0
        %6017 = vmatpush2.bf16.msra.mxu0 0
        %6018 = vmatprep.mubr.bf16.mxu0 0
        %6019 = vmatmul.mubr.bf16.gmra.mxu0 %v4869
        %v6020 = vpop.f32.mrf.mxu0
        %v6021 = vadd.f32 0.0, %v6020
        %v6022 = vpop.f32.mrf.mxu0
        %v6023 = vpop.f32.mrf.mxu0
        %v6024 = vadd.f32 0.0, %v6023
        %v6025 = vpop.f32.mrf.mxu0
        %6026 = vmatprep.mubr.bf16.mxu0 0
        %6027 = vmatmul.mubr.bf16.gmra.mxu0 %v4870
        %v6028 = vpop.f32.mrf.mxu0
        %v6029 = vadd.f32 0.0, %v6028
        %v6030 = vpop.f32.mrf.mxu0
        %v6031 = vpop.f32.mrf.mxu0
        %v6032 = vadd.f32 0.0, %v6031
        %v6033 = vpop.f32.mrf.mxu0
        %6034 = vdwg.mxu0
        %v6051 = vunpack.c.l.b16 %v5615
        %v6052 = vunpack.c.l.b16 %v5616
        %v6053 = vunpack.c.l.b16 %v5617
        %v6054 = vunpack.c.l.b16 %v5618
        %v6055 = vunpack.c.l.b16 %v5619
        %v6056 = vunpack.c.l.b16 %v5620
        %v6057 = vunpack.c.l.b16 %v5621
        %v6058 = vunpack.c.l.b16 %v5622
        %v6059 = vunpack.c.l.b16 %v5623
        %v6060 = vunpack.c.l.b16 %v5624
        %v6061 = vunpack.c.l.b16 %v5625
        %v6062 = vunpack.c.l.b16 %v5626
        %v6063 = vunpack.c.l.b16 %v5627
        %v6064 = vunpack.c.l.b16 %v5628
        %v6065 = vunpack.c.l.b16 %v5629
        %v6066 = vunpack.c.l.b16 %v5630
        %v6067 = vpack.c.b16 %v6052, %v6051
        %v6068 = vpack.c.b16 %v6054, %v6053
        %v6069 = vpack.c.b16 %v6056, %v6055
        %v6070 = vpack.c.b16 %v6058, %v6057
        %v6071 = vpack.c.b16 %v6060, %v6059
        %v6072 = vpack.c.b16 %v6062, %v6061
        %v6073 = vpack.c.b16 %v6064, %v6063
        %v6074 = vpack.c.b16 %v6066, %v6065
        %6083 = vmatprep.subr.bf16.mxu0 0
        %6084 = vmatpush1.bf16.msra.mxu0 %v6074
        %6085 = vmatprep.subr.bf16.mxu0 0
        %6086 = vmatpush1.bf16.msra.mxu0 %v6073
        %6087 = vmatprep.subr.bf16.mxu0 0
        %6088 = vmatpush1.bf16.msra.mxu0 %v6072
        %6089 = vmatprep.subr.bf16.mxu0 0
        %6090 = vmatpush1.bf16.msra.mxu0 %v6071
        %6091 = vmatprep.subr.bf16.mxu0 0
        %6092 = vmatpush1.bf16.msra.mxu0 %v6070
        %6093 = vmatprep.subr.bf16.mxu0 0
        %6094 = vmatpush1.bf16.msra.mxu0 %v6069
        %6095 = vmatprep.subr.bf16.mxu0 0
        %6096 = vmatpush1.bf16.msra.mxu0 %v6068
        %6097 = vmatprep.subr.bf16.mxu0 0
        %6098 = vmatpush1.bf16.msra.mxu0 %v6067
        %6099 = vmatprep.subr.bf16.mxu0 0
        %6100 = vmatpush2.bf16.msra.mxu0 0
        %6101 = vmatprep.subr.bf16.mxu0 0
        %6102 = vmatpush2.bf16.msra.mxu0 0
        %6103 = vmatprep.subr.bf16.mxu0 0
        %6104 = vmatpush2.bf16.msra.mxu0 0
        %6105 = vmatprep.subr.bf16.mxu0 0
        %6106 = vmatpush2.bf16.msra.mxu0 0
        %6107 = vmatprep.subr.bf16.mxu0 0
        %6108 = vmatpush2.bf16.msra.mxu0 0
        %6109 = vmatprep.subr.bf16.mxu0 0
        %6110 = vmatpush2.bf16.msra.mxu0 0
        %6111 = vmatprep.subr.bf16.mxu0 0
        %6112 = vmatpush2.bf16.msra.mxu0 0
        %6113 = vmatprep.subr.bf16.mxu0 0
        %6114 = vmatpush2.bf16.msra.mxu0 0
        %6115 = vmatprep.mubr.bf16.mxu0 0
        %6116 = vmatmul.mubr.bf16.gmra.mxu0 %v4869
        %v6117 = vpop.f32.mrf.mxu0
        %v6118 = vadd.f32 0.0, %v6117
        %v6119 = vpop.f32.mrf.mxu0
        %v6120 = vpop.f32.mrf.mxu0
        %v6121 = vadd.f32 0.0, %v6120
        %v6122 = vpop.f32.mrf.mxu0
        %6123 = vmatprep.mubr.bf16.mxu0 0
        %6124 = vmatmul.mubr.bf16.gmra.mxu0 %v4870
        %v6125 = vpop.f32.mrf.mxu0
        %v6126 = vadd.f32 0.0, %v6125
        %v6127 = vpop.f32.mrf.mxu0
        %v6128 = vpop.f32.mrf.mxu0
        %v6129 = vadd.f32 0.0, %v6128
        %v6130 = vpop.f32.mrf.mxu0
        %6131 = vdwg.mxu0
        %v6148 = vunpack.c.l.b16 %v5631
        %v6149 = vunpack.c.l.b16 %v5632
        %v6150 = vunpack.c.l.b16 %v5633
        %v6151 = vunpack.c.l.b16 %v5634
        %v6152 = vunpack.c.l.b16 %v5635
        %v6153 = vunpack.c.l.b16 %v5636
        %v6154 = vunpack.c.l.b16 %v5637
        %v6155 = vunpack.c.l.b16 %v5638
        %v6156 = vunpack.c.l.b16 %v5639
        %v6157 = vunpack.c.l.b16 %v5640
        %v6158 = vunpack.c.l.b16 %v5641
        %v6159 = vunpack.c.l.b16 %v5642
        %v6160 = vunpack.c.l.b16 %v5643
        %v6161 = vunpack.c.l.b16 %v5644
        %v6162 = vunpack.c.l.b16 %v5645
        %v6163 = vunpack.c.l.b16 %v5646
        %v6164 = vpack.c.b16 %v6149, %v6148
        %v6165 = vpack.c.b16 %v6151, %v6150
        %v6166 = vpack.c.b16 %v6153, %v6152
        %v6167 = vpack.c.b16 %v6155, %v6154
        %v6168 = vpack.c.b16 %v6157, %v6156
        %v6169 = vpack.c.b16 %v6159, %v6158
        %v6170 = vpack.c.b16 %v6161, %v6160
        %v6171 = vpack.c.b16 %v6163, %v6162
        %6180 = vmatprep.subr.bf16.mxu0 0
        %6181 = vmatpush1.bf16.msra.mxu0 %v6171
        %6182 = vmatprep.subr.bf16.mxu0 0
        %6183 = vmatpush1.bf16.msra.mxu0 %v6170
        %6184 = vmatprep.subr.bf16.mxu0 0
        %6185 = vmatpush1.bf16.msra.mxu0 %v6169
        %6186 = vmatprep.subr.bf16.mxu0 0
        %6187 = vmatpush1.bf16.msra.mxu0 %v6168
        %6188 = vmatprep.subr.bf16.mxu0 0
        %6189 = vmatpush1.bf16.msra.mxu0 %v6167
        %6190 = vmatprep.subr.bf16.mxu0 0
        %6191 = vmatpush1.bf16.msra.mxu0 %v6166
        %6192 = vmatprep.subr.bf16.mxu0 0
        %6193 = vmatpush1.bf16.msra.mxu0 %v6165
        %6194 = vmatprep.subr.bf16.mxu0 0
        %6195 = vmatpush1.bf16.msra.mxu0 %v6164
        %6196 = vmatprep.subr.bf16.mxu0 0
        %6197 = vmatpush2.bf16.msra.mxu0 0
        %6198 = vmatprep.subr.bf16.mxu0 0
        %6199 = vmatpush2.bf16.msra.mxu0 0
        %6200 = vmatprep.subr.bf16.mxu0 0
        %6201 = vmatpush2.bf16.msra.mxu0 0
        %6202 = vmatprep.subr.bf16.mxu0 0
        %6203 = vmatpush2.bf16.msra.mxu0 0
        %6204 = vmatprep.subr.bf16.mxu0 0
        %6205 = vmatpush2.bf16.msra.mxu0 0
        %6206 = vmatprep.subr.bf16.mxu0 0
        %6207 = vmatpush2.bf16.msra.mxu0 0
        %6208 = vmatprep.subr.bf16.mxu0 0
        %6209 = vmatpush2.bf16.msra.mxu0 0
        %6210 = vmatprep.subr.bf16.mxu0 0
        %6211 = vmatpush2.bf16.msra.mxu0 0
        %6212 = vmatprep.mubr.bf16.mxu0 0
        %6213 = vmatmul.mubr.bf16.gmra.mxu0 %v4869
        %v6214 = vpop.f32.mrf.mxu0
        %v6215 = vadd.f32 0.0, %v6214
        %v6216 = vpop.f32.mrf.mxu0
        %v6217 = vpop.f32.mrf.mxu0
        %v6218 = vadd.f32 0.0, %v6217
        %v6219 = vpop.f32.mrf.mxu0
        %6220 = vmatprep.mubr.bf16.mxu0 0
        %6221 = vmatmul.mubr.bf16.gmra.mxu0 %v4870
        %v6222 = vpop.f32.mrf.mxu0
        %v6223 = vadd.f32 0.0, %v6222
        %v6224 = vpop.f32.mrf.mxu0
        %v6225 = vpop.f32.mrf.mxu0
        %v6226 = vadd.f32 0.0, %v6225
        %v6227 = vpop.f32.mrf.mxu0
        %6228 = vdwg.mxu0
        %s6229 = scalar_lea.vmem %s5, 384
        %v6230 = vld [vmem:[%s6229] sm:$0xf]
        %v6231 = vld [vmem:[%s6229 + $0x4] sm:$0xf]
        %v6232 = vld [vmem:[%s6229 + $0x8] sm:$0xf]
        %v6233 = vld [vmem:[%s6229 + $0xc] sm:$0xf]
        %v6234 = vld [vmem:[%s6229 + $0x10] sm:$0xf]
        %v6235 = vld [vmem:[%s6229 + $0x14] sm:$0xf]
        %v6236 = vld [vmem:[%s6229 + $0x18] sm:$0xf]
        %v6237 = vld [vmem:[%s6229 + $0x1c] sm:$0xf]
        %v6238 = vld [vmem:[%s6229 + $0x20] sm:$0xf]
        %v6239 = vld [vmem:[%s6229 + $0x24] sm:$0xf]
        %v6240 = vld [vmem:[%s6229 + $0x28] sm:$0xf]
        %v6241 = vld [vmem:[%s6229 + $0x2c] sm:$0xf]
        %v6242 = vld [vmem:[%s6229 + $0x30] sm:$0xf]
        %v6243 = vld [vmem:[%s6229 + $0x34] sm:$0xf]
        %v6244 = vld [vmem:[%s6229 + $0x38] sm:$0xf]
        %v6245 = vld [vmem:[%s6229 + $0x3c] sm:$0xf]
        %v6246 = vld [vmem:[%s6229 + $0x40] sm:$0xf]
        %v6247 = vld [vmem:[%s6229 + $0x44] sm:$0xf]
        %v6248 = vld [vmem:[%s6229 + $0x48] sm:$0xf]
        %v6249 = vld [vmem:[%s6229 + $0x4c] sm:$0xf]
        %v6250 = vld [vmem:[%s6229 + $0x50] sm:$0xf]
        %v6251 = vld [vmem:[%s6229 + $0x54] sm:$0xf]
        %v6252 = vld [vmem:[%s6229 + $0x58] sm:$0xf]
        %v6253 = vld [vmem:[%s6229 + $0x5c] sm:$0xf]
        %v6254 = vld [vmem:[%s6229 + $0x60] sm:$0xf]
        %v6255 = vld [vmem:[%s6229 + $0x64] sm:$0xf]
        %v6256 = vld [vmem:[%s6229 + $0x68] sm:$0xf]
        %v6257 = vld [vmem:[%s6229 + $0x6c] sm:$0xf]
        %v6258 = vld [vmem:[%s6229 + $0x70] sm:$0xf]
        %v6259 = vld [vmem:[%s6229 + $0x74] sm:$0xf]
        %v6260 = vld [vmem:[%s6229 + $0x78] sm:$0xf]
        %v6261 = vld [vmem:[%s6229 + $0x7c] sm:$0xf]
        %v6262 = vld [vmem:[%s6229 + $0x80] sm:$0xf]
        %v6263 = vld [vmem:[%s6229 + $0x84] sm:$0xf]
        %v6264 = vld [vmem:[%s6229 + $0x88] sm:$0xf]
        %v6265 = vld [vmem:[%s6229 + $0x8c] sm:$0xf]
        %v6266 = vld [vmem:[%s6229 + $0x90] sm:$0xf]
        %v6267 = vld [vmem:[%s6229 + $0x94] sm:$0xf]
        %v6268 = vld [vmem:[%s6229 + $0x98] sm:$0xf]
        %v6269 = vld [vmem:[%s6229 + $0x9c] sm:$0xf]
        %v6270 = vld [vmem:[%s6229 + $0xa0] sm:$0xf]
        %v6271 = vld [vmem:[%s6229 + $0xa4] sm:$0xf]
        %v6272 = vld [vmem:[%s6229 + $0xa8] sm:$0xf]
        %v6273 = vld [vmem:[%s6229 + $0xac] sm:$0xf]
        %v6274 = vld [vmem:[%s6229 + $0xb0] sm:$0xf]
        %v6275 = vld [vmem:[%s6229 + $0xb4] sm:$0xf]
        %v6276 = vld [vmem:[%s6229 + $0xb8] sm:$0xf]
        %v6277 = vld [vmem:[%s6229 + $0xbc] sm:$0xf]
        %v6278 = vld [vmem:[%s6229 + $0xc0] sm:$0xf]
        %v6279 = vld [vmem:[%s6229 + $0xc4] sm:$0xf]
        %v6280 = vld [vmem:[%s6229 + $0xc8] sm:$0xf]
        %v6281 = vld [vmem:[%s6229 + $0xcc] sm:$0xf]
        %v6282 = vld [vmem:[%s6229 + $0xd0] sm:$0xf]
        %v6283 = vld [vmem:[%s6229 + $0xd4] sm:$0xf]
        %v6284 = vld [vmem:[%s6229 + $0xd8] sm:$0xf]
        %v6285 = vld [vmem:[%s6229 + $0xdc] sm:$0xf]
        %v6286 = vld [vmem:[%s6229 + $0xe0] sm:$0xf]
        %v6287 = vld [vmem:[%s6229 + $0xe4] sm:$0xf]
        %v6288 = vld [vmem:[%s6229 + $0xe8] sm:$0xf]
        %v6289 = vld [vmem:[%s6229 + $0xec] sm:$0xf]
        %v6290 = vld [vmem:[%s6229 + $0xf0] sm:$0xf]
        %v6291 = vld [vmem:[%s6229 + $0xf4] sm:$0xf]
        %v6292 = vld [vmem:[%s6229 + $0xf8] sm:$0xf]
        %v6293 = vld [vmem:[%s6229 + $0xfc] sm:$0xf]
        %v6294 = vld [vmem:[%s6229 + $0x100] sm:$0xf]
        %v6295 = vld [vmem:[%s6229 + $0x104] sm:$0xf]
        %v6296 = vld [vmem:[%s6229 + $0x108] sm:$0xf]
        %v6297 = vld [vmem:[%s6229 + $0x10c] sm:$0xf]
        %v6298 = vld [vmem:[%s6229 + $0x110] sm:$0xf]
        %v6299 = vld [vmem:[%s6229 + $0x114] sm:$0xf]
        %v6300 = vld [vmem:[%s6229 + $0x118] sm:$0xf]
        %v6301 = vld [vmem:[%s6229 + $0x11c] sm:$0xf]
        %v6302 = vld [vmem:[%s6229 + $0x120] sm:$0xf]
        %v6303 = vld [vmem:[%s6229 + $0x124] sm:$0xf]
        %v6304 = vld [vmem:[%s6229 + $0x128] sm:$0xf]
        %v6305 = vld [vmem:[%s6229 + $0x12c] sm:$0xf]
        %v6306 = vld [vmem:[%s6229 + $0x130] sm:$0xf]
        %v6307 = vld [vmem:[%s6229 + $0x134] sm:$0xf]
        %v6308 = vld [vmem:[%s6229 + $0x138] sm:$0xf]
        %v6309 = vld [vmem:[%s6229 + $0x13c] sm:$0xf]
        %v6310 = vld [vmem:[%s6229 + $0x140] sm:$0xf]
        %v6311 = vld [vmem:[%s6229 + $0x144] sm:$0xf]
        %v6312 = vld [vmem:[%s6229 + $0x148] sm:$0xf]
        %v6313 = vld [vmem:[%s6229 + $0x14c] sm:$0xf]
        %v6314 = vld [vmem:[%s6229 + $0x150] sm:$0xf]
        %v6315 = vld [vmem:[%s6229 + $0x154] sm:$0xf]
        %v6316 = vld [vmem:[%s6229 + $0x158] sm:$0xf]
        %v6317 = vld [vmem:[%s6229 + $0x15c] sm:$0xf]
        %v6318 = vld [vmem:[%s6229 + $0x160] sm:$0xf]
        %v6319 = vld [vmem:[%s6229 + $0x164] sm:$0xf]
        %v6320 = vld [vmem:[%s6229 + $0x168] sm:$0xf]
        %v6321 = vld [vmem:[%s6229 + $0x16c] sm:$0xf]
        %v6322 = vld [vmem:[%s6229 + $0x170] sm:$0xf]
        %v6323 = vld [vmem:[%s6229 + $0x174] sm:$0xf]
        %v6324 = vld [vmem:[%s6229 + $0x178] sm:$0xf]
        %v6325 = vld [vmem:[%s6229 + $0x17c] sm:$0xf]
        %v6342 = vunpack.c.l.b16 %v6230
        %v6343 = vunpack.c.l.b16 %v6231
        %v6344 = vunpack.c.l.b16 %v6232
        %v6345 = vunpack.c.l.b16 %v6233
        %v6346 = vunpack.c.l.b16 %v6234
        %v6347 = vunpack.c.l.b16 %v6235
        %v6348 = vunpack.c.l.b16 %v6236
        %v6349 = vunpack.c.l.b16 %v6237
        %v6350 = vunpack.c.l.b16 %v6238
        %v6351 = vunpack.c.l.b16 %v6239
        %v6352 = vunpack.c.l.b16 %v6240
        %v6353 = vunpack.c.l.b16 %v6241
        %v6354 = vunpack.c.l.b16 %v6242
        %v6355 = vunpack.c.l.b16 %v6243
        %v6356 = vunpack.c.l.b16 %v6244
        %v6357 = vunpack.c.l.b16 %v6245
        %v6358 = vpack.c.b16 %v6343, %v6342
        %v6359 = vpack.c.b16 %v6345, %v6344
        %v6360 = vpack.c.b16 %v6347, %v6346
        %v6361 = vpack.c.b16 %v6349, %v6348
        %v6362 = vpack.c.b16 %v6351, %v6350
        %v6363 = vpack.c.b16 %v6353, %v6352
        %v6364 = vpack.c.b16 %v6355, %v6354
        %v6365 = vpack.c.b16 %v6357, %v6356
        %6374 = vmatprep.subr.bf16.mxu0 0
        %6375 = vmatpush1.bf16.msra.mxu0 %v6365
        %6376 = vmatprep.subr.bf16.mxu0 0
        %6377 = vmatpush1.bf16.msra.mxu0 %v6364
        %6378 = vmatprep.subr.bf16.mxu0 0
        %6379 = vmatpush1.bf16.msra.mxu0 %v6363
        %6380 = vmatprep.subr.bf16.mxu0 0
        %6381 = vmatpush1.bf16.msra.mxu0 %v6362
        %6382 = vmatprep.subr.bf16.mxu0 0
        %6383 = vmatpush1.bf16.msra.mxu0 %v6361
        %6384 = vmatprep.subr.bf16.mxu0 0
        %6385 = vmatpush1.bf16.msra.mxu0 %v6360
        %6386 = vmatprep.subr.bf16.mxu0 0
        %6387 = vmatpush1.bf16.msra.mxu0 %v6359
        %6388 = vmatprep.subr.bf16.mxu0 0
        %6389 = vmatpush1.bf16.msra.mxu0 %v6358
        %6390 = vmatprep.subr.bf16.mxu0 0
        %6391 = vmatpush2.bf16.msra.mxu0 0
        %6392 = vmatprep.subr.bf16.mxu0 0
        %6393 = vmatpush2.bf16.msra.mxu0 0
        %6394 = vmatprep.subr.bf16.mxu0 0
        %6395 = vmatpush2.bf16.msra.mxu0 0
        %6396 = vmatprep.subr.bf16.mxu0 0
        %6397 = vmatpush2.bf16.msra.mxu0 0
        %6398 = vmatprep.subr.bf16.mxu0 0
        %6399 = vmatpush2.bf16.msra.mxu0 0
        %6400 = vmatprep.subr.bf16.mxu0 0
        %6401 = vmatpush2.bf16.msra.mxu0 0
        %6402 = vmatprep.subr.bf16.mxu0 0
        %6403 = vmatpush2.bf16.msra.mxu0 0
        %6404 = vmatprep.subr.bf16.mxu0 0
        %6405 = vmatpush2.bf16.msra.mxu0 0
        %6406 = vmatprep.mubr.bf16.mxu0 0
        %6407 = vmatmul.mubr.bf16.gmra.mxu0 %v4869
        %v6408 = vpop.f32.mrf.mxu0
        %v6409 = vadd.f32 0.0, %v6408
        %v6410 = vpop.f32.mrf.mxu0
        %v6411 = vpop.f32.mrf.mxu0
        %v6412 = vadd.f32 0.0, %v6411
        %v6413 = vpop.f32.mrf.mxu0
        %6414 = vmatprep.mubr.bf16.mxu0 0
        %6415 = vmatmul.mubr.bf16.gmra.mxu0 %v4870
        %v6416 = vpop.f32.mrf.mxu0
        %v6417 = vadd.f32 0.0, %v6416
        %v6418 = vpop.f32.mrf.mxu0
        %v6419 = vpop.f32.mrf.mxu0
        %v6420 = vadd.f32 0.0, %v6419
        %v6421 = vpop.f32.mrf.mxu0
        %6422 = vdwg.mxu0
        %v6439 = vunpack.c.l.b16 %v6246
        %v6440 = vunpack.c.l.b16 %v6247
        %v6441 = vunpack.c.l.b16 %v6248
        %v6442 = vunpack.c.l.b16 %v6249
        %v6443 = vunpack.c.l.b16 %v6250
        %v6444 = vunpack.c.l.b16 %v6251
        %v6445 = vunpack.c.l.b16 %v6252
        %v6446 = vunpack.c.l.b16 %v6253
        %v6447 = vunpack.c.l.b16 %v6254
        %v6448 = vunpack.c.l.b16 %v6255
        %v6449 = vunpack.c.l.b16 %v6256
        %v6450 = vunpack.c.l.b16 %v6257
        %v6451 = vunpack.c.l.b16 %v6258
        %v6452 = vunpack.c.l.b16 %v6259
        %v6453 = vunpack.c.l.b16 %v6260
        %v6454 = vunpack.c.l.b16 %v6261
        %v6455 = vpack.c.b16 %v6440, %v6439
        %v6456 = vpack.c.b16 %v6442, %v6441
        %v6457 = vpack.c.b16 %v6444, %v6443
        %v6458 = vpack.c.b16 %v6446, %v6445
        %v6459 = vpack.c.b16 %v6448, %v6447
        %v6460 = vpack.c.b16 %v6450, %v6449
        %v6461 = vpack.c.b16 %v6452, %v6451
        %v6462 = vpack.c.b16 %v6454, %v6453
        %6471 = vmatprep.subr.bf16.mxu0 0
        %6472 = vmatpush1.bf16.msra.mxu0 %v6462
        %6473 = vmatprep.subr.bf16.mxu0 0
        %6474 = vmatpush1.bf16.msra.mxu0 %v6461
        %6475 = vmatprep.subr.bf16.mxu0 0
        %6476 = vmatpush1.bf16.msra.mxu0 %v6460
        %6477 = vmatprep.subr.bf16.mxu0 0
        %6478 = vmatpush1.bf16.msra.mxu0 %v6459
        %6479 = vmatprep.subr.bf16.mxu0 0
        %6480 = vmatpush1.bf16.msra.mxu0 %v6458
        %6481 = vmatprep.subr.bf16.mxu0 0
        %6482 = vmatpush1.bf16.msra.mxu0 %v6457
        %6483 = vmatprep.subr.bf16.mxu0 0
        %6484 = vmatpush1.bf16.msra.mxu0 %v6456
        %6485 = vmatprep.subr.bf16.mxu0 0
        %6486 = vmatpush1.bf16.msra.mxu0 %v6455
        %6487 = vmatprep.subr.bf16.mxu0 0
        %6488 = vmatpush2.bf16.msra.mxu0 0
        %6489 = vmatprep.subr.bf16.mxu0 0
        %6490 = vmatpush2.bf16.msra.mxu0 0
        %6491 = vmatprep.subr.bf16.mxu0 0
        %6492 = vmatpush2.bf16.msra.mxu0 0
        %6493 = vmatprep.subr.bf16.mxu0 0
        %6494 = vmatpush2.bf16.msra.mxu0 0
        %6495 = vmatprep.subr.bf16.mxu0 0
        %6496 = vmatpush2.bf16.msra.mxu0 0
        %6497 = vmatprep.subr.bf16.mxu0 0
        %6498 = vmatpush2.bf16.msra.mxu0 0
        %6499 = vmatprep.subr.bf16.mxu0 0
        %6500 = vmatpush2.bf16.msra.mxu0 0
        %6501 = vmatprep.subr.bf16.mxu0 0
        %6502 = vmatpush2.bf16.msra.mxu0 0
        %6503 = vmatprep.mubr.bf16.mxu0 0
        %6504 = vmatmul.mubr.bf16.gmra.mxu0 %v4869
        %v6505 = vpop.f32.mrf.mxu0
        %v6506 = vadd.f32 0.0, %v6505
        %v6507 = vpop.f32.mrf.mxu0
        %v6508 = vpop.f32.mrf.mxu0
        %v6509 = vadd.f32 0.0, %v6508
        %v6510 = vpop.f32.mrf.mxu0
        %6511 = vmatprep.mubr.bf16.mxu0 0
        %6512 = vmatmul.mubr.bf16.gmra.mxu0 %v4870
        %v6513 = vpop.f32.mrf.mxu0
        %v6514 = vadd.f32 0.0, %v6513
        %v6515 = vpop.f32.mrf.mxu0
        %v6516 = vpop.f32.mrf.mxu0
        %v6517 = vadd.f32 0.0, %v6516
        %v6518 = vpop.f32.mrf.mxu0
        %6519 = vdwg.mxu0
        %v6536 = vunpack.c.l.b16 %v6262
        %v6537 = vunpack.c.l.b16 %v6263
        %v6538 = vunpack.c.l.b16 %v6264
        %v6539 = vunpack.c.l.b16 %v6265
        %v6540 = vunpack.c.l.b16 %v6266
        %v6541 = vunpack.c.l.b16 %v6267
        %v6542 = vunpack.c.l.b16 %v6268
        %v6543 = vunpack.c.l.b16 %v6269
        %v6544 = vunpack.c.l.b16 %v6270
        %v6545 = vunpack.c.l.b16 %v6271
        %v6546 = vunpack.c.l.b16 %v6272
        %v6547 = vunpack.c.l.b16 %v6273
        %v6548 = vunpack.c.l.b16 %v6274
        %v6549 = vunpack.c.l.b16 %v6275
        %v6550 = vunpack.c.l.b16 %v6276
        %v6551 = vunpack.c.l.b16 %v6277
        %v6552 = vpack.c.b16 %v6537, %v6536
        %v6553 = vpack.c.b16 %v6539, %v6538
        %v6554 = vpack.c.b16 %v6541, %v6540
        %v6555 = vpack.c.b16 %v6543, %v6542
        %v6556 = vpack.c.b16 %v6545, %v6544
        %v6557 = vpack.c.b16 %v6547, %v6546
        %v6558 = vpack.c.b16 %v6549, %v6548
        %v6559 = vpack.c.b16 %v6551, %v6550
        %6568 = vmatprep.subr.bf16.mxu0 0
        %6569 = vmatpush1.bf16.msra.mxu0 %v6559
        %6570 = vmatprep.subr.bf16.mxu0 0
        %6571 = vmatpush1.bf16.msra.mxu0 %v6558
        %6572 = vmatprep.subr.bf16.mxu0 0
        %6573 = vmatpush1.bf16.msra.mxu0 %v6557
        %6574 = vmatprep.subr.bf16.mxu0 0
        %6575 = vmatpush1.bf16.msra.mxu0 %v6556
        %6576 = vmatprep.subr.bf16.mxu0 0
        %6577 = vmatpush1.bf16.msra.mxu0 %v6555
        %6578 = vmatprep.subr.bf16.mxu0 0
        %6579 = vmatpush1.bf16.msra.mxu0 %v6554
        %6580 = vmatprep.subr.bf16.mxu0 0
        %6581 = vmatpush1.bf16.msra.mxu0 %v6553
        %6582 = vmatprep.subr.bf16.mxu0 0
        %6583 = vmatpush1.bf16.msra.mxu0 %v6552
        %6584 = vmatprep.subr.bf16.mxu0 0
        %6585 = vmatpush2.bf16.msra.mxu0 0
        %6586 = vmatprep.subr.bf16.mxu0 0
        %6587 = vmatpush2.bf16.msra.mxu0 0
        %6588 = vmatprep.subr.bf16.mxu0 0
        %6589 = vmatpush2.bf16.msra.mxu0 0
        %6590 = vmatprep.subr.bf16.mxu0 0
        %6591 = vmatpush2.bf16.msra.mxu0 0
        %6592 = vmatprep.subr.bf16.mxu0 0
        %6593 = vmatpush2.bf16.msra.mxu0 0
        %6594 = vmatprep.subr.bf16.mxu0 0
        %6595 = vmatpush2.bf16.msra.mxu0 0
        %6596 = vmatprep.subr.bf16.mxu0 0
        %6597 = vmatpush2.bf16.msra.mxu0 0
        %6598 = vmatprep.subr.bf16.mxu0 0
        %6599 = vmatpush2.bf16.msra.mxu0 0
        %6600 = vmatprep.mubr.bf16.mxu0 0
        %6601 = vmatmul.mubr.bf16.gmra.mxu0 %v4869
        %v6602 = vpop.f32.mrf.mxu0
        %v6603 = vadd.f32 0.0, %v6602
        %v6604 = vpop.f32.mrf.mxu0
        %v6605 = vpop.f32.mrf.mxu0
        %v6606 = vadd.f32 0.0, %v6605
        %v6607 = vpop.f32.mrf.mxu0
        %6608 = vmatprep.mubr.bf16.mxu0 0
        %6609 = vmatmul.mubr.bf16.gmra.mxu0 %v4870
        %v6610 = vpop.f32.mrf.mxu0
        %v6611 = vadd.f32 0.0, %v6610
        %v6612 = vpop.f32.mrf.mxu0
        %v6613 = vpop.f32.mrf.mxu0
        %v6614 = vadd.f32 0.0, %v6613
        %v6615 = vpop.f32.mrf.mxu0
        %6616 = vdwg.mxu0
        %v6633 = vunpack.c.l.b16 %v6278
        %v6634 = vunpack.c.l.b16 %v6279
        %v6635 = vunpack.c.l.b16 %v6280
        %v6636 = vunpack.c.l.b16 %v6281
        %v6637 = vunpack.c.l.b16 %v6282
        %v6638 = vunpack.c.l.b16 %v6283
        %v6639 = vunpack.c.l.b16 %v6284
        %v6640 = vunpack.c.l.b16 %v6285
        %v6641 = vunpack.c.l.b16 %v6286
        %v6642 = vunpack.c.l.b16 %v6287
        %v6643 = vunpack.c.l.b16 %v6288
        %v6644 = vunpack.c.l.b16 %v6289
        %v6645 = vunpack.c.l.b16 %v6290
        %v6646 = vunpack.c.l.b16 %v6291
        %v6647 = vunpack.c.l.b16 %v6292
        %v6648 = vunpack.c.l.b16 %v6293
        %v6649 = vpack.c.b16 %v6634, %v6633
        %v6650 = vpack.c.b16 %v6636, %v6635
        %v6651 = vpack.c.b16 %v6638, %v6637
        %v6652 = vpack.c.b16 %v6640, %v6639
        %v6653 = vpack.c.b16 %v6642, %v6641
        %v6654 = vpack.c.b16 %v6644, %v6643
        %v6655 = vpack.c.b16 %v6646, %v6645
        %v6656 = vpack.c.b16 %v6648, %v6647
        %6665 = vmatprep.subr.bf16.mxu0 0
        %6666 = vmatpush1.bf16.msra.mxu0 %v6656
        %6667 = vmatprep.subr.bf16.mxu0 0
        %6668 = vmatpush1.bf16.msra.mxu0 %v6655
        %6669 = vmatprep.subr.bf16.mxu0 0
        %6670 = vmatpush1.bf16.msra.mxu0 %v6654
        %6671 = vmatprep.subr.bf16.mxu0 0
        %6672 = vmatpush1.bf16.msra.mxu0 %v6653
        %6673 = vmatprep.subr.bf16.mxu0 0
        %6674 = vmatpush1.bf16.msra.mxu0 %v6652
        %6675 = vmatprep.subr.bf16.mxu0 0
        %6676 = vmatpush1.bf16.msra.mxu0 %v6651
        %6677 = vmatprep.subr.bf16.mxu0 0
        %6678 = vmatpush1.bf16.msra.mxu0 %v6650
        %6679 = vmatprep.subr.bf16.mxu0 0
        %6680 = vmatpush1.bf16.msra.mxu0 %v6649
        %6681 = vmatprep.subr.bf16.mxu0 0
        %6682 = vmatpush2.bf16.msra.mxu0 0
        %6683 = vmatprep.subr.bf16.mxu0 0
        %6684 = vmatpush2.bf16.msra.mxu0 0
        %6685 = vmatprep.subr.bf16.mxu0 0
        %6686 = vmatpush2.bf16.msra.mxu0 0
        %6687 = vmatprep.subr.bf16.mxu0 0
        %6688 = vmatpush2.bf16.msra.mxu0 0
        %6689 = vmatprep.subr.bf16.mxu0 0
        %6690 = vmatpush2.bf16.msra.mxu0 0
        %6691 = vmatprep.subr.bf16.mxu0 0
        %6692 = vmatpush2.bf16.msra.mxu0 0
        %6693 = vmatprep.subr.bf16.mxu0 0
        %6694 = vmatpush2.bf16.msra.mxu0 0
        %6695 = vmatprep.subr.bf16.mxu0 0
        %6696 = vmatpush2.bf16.msra.mxu0 0
        %6697 = vmatprep.mubr.bf16.mxu0 0
        %6698 = vmatmul.mubr.bf16.gmra.mxu0 %v4869
        %v6699 = vpop.f32.mrf.mxu0
        %v6700 = vadd.f32 0.0, %v6699
        %v6701 = vpop.f32.mrf.mxu0
        %v6702 = vpop.f32.mrf.mxu0
        %v6703 = vadd.f32 0.0, %v6702
        %v6704 = vpop.f32.mrf.mxu0
        %6705 = vmatprep.mubr.bf16.mxu0 0
        %6706 = vmatmul.mubr.bf16.gmra.mxu0 %v4870
        %v6707 = vpop.f32.mrf.mxu0
        %v6708 = vadd.f32 0.0, %v6707
        %v6709 = vpop.f32.mrf.mxu0
        %v6710 = vpop.f32.mrf.mxu0
        %v6711 = vadd.f32 0.0, %v6710
        %v6712 = vpop.f32.mrf.mxu0
        %6713 = vdwg.mxu0
        %v6730 = vunpack.c.l.b16 %v6294
        %v6731 = vunpack.c.l.b16 %v6295
        %v6732 = vunpack.c.l.b16 %v6296
        %v6733 = vunpack.c.l.b16 %v6297
        %v6734 = vunpack.c.l.b16 %v6298
        %v6735 = vunpack.c.l.b16 %v6299
        %v6736 = vunpack.c.l.b16 %v6300
        %v6737 = vunpack.c.l.b16 %v6301
        %v6738 = vunpack.c.l.b16 %v6302
        %v6739 = vunpack.c.l.b16 %v6303
        %v6740 = vunpack.c.l.b16 %v6304
        %v6741 = vunpack.c.l.b16 %v6305
        %v6742 = vunpack.c.l.b16 %v6306
        %v6743 = vunpack.c.l.b16 %v6307
        %v6744 = vunpack.c.l.b16 %v6308
        %v6745 = vunpack.c.l.b16 %v6309
        %v6746 = vpack.c.b16 %v6731, %v6730
        %v6747 = vpack.c.b16 %v6733, %v6732
        %v6748 = vpack.c.b16 %v6735, %v6734
        %v6749 = vpack.c.b16 %v6737, %v6736
        %v6750 = vpack.c.b16 %v6739, %v6738
        %v6751 = vpack.c.b16 %v6741, %v6740
        %v6752 = vpack.c.b16 %v6743, %v6742
        %v6753 = vpack.c.b16 %v6745, %v6744
        %6762 = vmatprep.subr.bf16.mxu0 0
        %6763 = vmatpush1.bf16.msra.mxu0 %v6753
        %6764 = vmatprep.subr.bf16.mxu0 0
        %6765 = vmatpush1.bf16.msra.mxu0 %v6752
        %6766 = vmatprep.subr.bf16.mxu0 0
        %6767 = vmatpush1.bf16.msra.mxu0 %v6751
        %6768 = vmatprep.subr.bf16.mxu0 0
        %6769 = vmatpush1.bf16.msra.mxu0 %v6750
        %6770 = vmatprep.subr.bf16.mxu0 0
        %6771 = vmatpush1.bf16.msra.mxu0 %v6749
        %6772 = vmatprep.subr.bf16.mxu0 0
        %6773 = vmatpush1.bf16.msra.mxu0 %v6748
        %6774 = vmatprep.subr.bf16.mxu0 0
        %6775 = vmatpush1.bf16.msra.mxu0 %v6747
        %6776 = vmatprep.subr.bf16.mxu0 0
        %6777 = vmatpush1.bf16.msra.mxu0 %v6746
        %6778 = vmatprep.subr.bf16.mxu0 0
        %6779 = vmatpush2.bf16.msra.mxu0 0
        %6780 = vmatprep.subr.bf16.mxu0 0
        %6781 = vmatpush2.bf16.msra.mxu0 0
        %6782 = vmatprep.subr.bf16.mxu0 0
        %6783 = vmatpush2.bf16.msra.mxu0 0
        %6784 = vmatprep.subr.bf16.mxu0 0
        %6785 = vmatpush2.bf16.msra.mxu0 0
        %6786 = vmatprep.subr.bf16.mxu0 0
        %6787 = vmatpush2.bf16.msra.mxu0 0
        %6788 = vmatprep.subr.bf16.mxu0 0
        %6789 = vmatpush2.bf16.msra.mxu0 0
        %6790 = vmatprep.subr.bf16.mxu0 0
        %6791 = vmatpush2.bf16.msra.mxu0 0
        %6792 = vmatprep.subr.bf16.mxu0 0
        %6793 = vmatpush2.bf16.msra.mxu0 0
        %6794 = vmatprep.mubr.bf16.mxu0 0
        %6795 = vmatmul.mubr.bf16.gmra.mxu0 %v4869
        %v6796 = vpop.f32.mrf.mxu0
        %v6797 = vadd.f32 0.0, %v6796
        %v6798 = vpop.f32.mrf.mxu0
        %v6799 = vpop.f32.mrf.mxu0
        %v6800 = vadd.f32 0.0, %v6799
        %v6801 = vpop.f32.mrf.mxu0
        %6802 = vmatprep.mubr.bf16.mxu0 0
        %6803 = vmatmul.mubr.bf16.gmra.mxu0 %v4870
        %v6804 = vpop.f32.mrf.mxu0
        %v6805 = vadd.f32 0.0, %v6804
        %v6806 = vpop.f32.mrf.mxu0
        %v6807 = vpop.f32.mrf.mxu0
        %v6808 = vadd.f32 0.0, %v6807
        %v6809 = vpop.f32.mrf.mxu0
        %6810 = vdwg.mxu0
        %v6827 = vunpack.c.l.b16 %v6310
        %v6828 = vunpack.c.l.b16 %v6311
        %v6829 = vunpack.c.l.b16 %v6312
        %v6830 = vunpack.c.l.b16 %v6313
        %v6831 = vunpack.c.l.b16 %v6314
        %v6832 = vunpack.c.l.b16 %v6315
        %v6833 = vunpack.c.l.b16 %v6316
        %v6834 = vunpack.c.l.b16 %v6317
        %v6835 = vunpack.c.l.b16 %v6318
        %v6836 = vunpack.c.l.b16 %v6319
        %v6837 = vunpack.c.l.b16 %v6320
        %v6838 = vunpack.c.l.b16 %v6321
        %v6839 = vunpack.c.l.b16 %v6322
        %v6840 = vunpack.c.l.b16 %v6323
        %v6841 = vunpack.c.l.b16 %v6324
        %v6842 = vunpack.c.l.b16 %v6325
        %v6843 = vpack.c.b16 %v6828, %v6827
        %v6844 = vpack.c.b16 %v6830, %v6829
        %v6845 = vpack.c.b16 %v6832, %v6831
        %v6846 = vpack.c.b16 %v6834, %v6833
        %v6847 = vpack.c.b16 %v6836, %v6835
        %v6848 = vpack.c.b16 %v6838, %v6837
        %v6849 = vpack.c.b16 %v6840, %v6839
        %v6850 = vpack.c.b16 %v6842, %v6841
        %6859 = vmatprep.subr.bf16.mxu0 0
        %6860 = vmatpush1.bf16.msra.mxu0 %v6850
        %6861 = vmatprep.subr.bf16.mxu0 0
        %6862 = vmatpush1.bf16.msra.mxu0 %v6849
        %6863 = vmatprep.subr.bf16.mxu0 0
        %6864 = vmatpush1.bf16.msra.mxu0 %v6848
        %6865 = vmatprep.subr.bf16.mxu0 0
        %6866 = vmatpush1.bf16.msra.mxu0 %v6847
        %6867 = vmatprep.subr.bf16.mxu0 0
        %6868 = vmatpush1.bf16.msra.mxu0 %v6846
        %6869 = vmatprep.subr.bf16.mxu0 0
        %6870 = vmatpush1.bf16.msra.mxu0 %v6845
        %6871 = vmatprep.subr.bf16.mxu0 0
        %6872 = vmatpush1.bf16.msra.mxu0 %v6844
        %6873 = vmatprep.subr.bf16.mxu0 0
        %6874 = vmatpush1.bf16.msra.mxu0 %v6843
        %6875 = vmatprep.subr.bf16.mxu0 0
        %6876 = vmatpush2.bf16.msra.mxu0 0
        %6877 = vmatprep.subr.bf16.mxu0 0
        %6878 = vmatpush2.bf16.msra.mxu0 0
        %6879 = vmatprep.subr.bf16.mxu0 0
        %6880 = vmatpush2.bf16.msra.mxu0 0
        %6881 = vmatprep.subr.bf16.mxu0 0
        %6882 = vmatpush2.bf16.msra.mxu0 0
        %6883 = vmatprep.subr.bf16.mxu0 0
        %6884 = vmatpush2.bf16.msra.mxu0 0
        %6885 = vmatprep.subr.bf16.mxu0 0
        %6886 = vmatpush2.bf16.msra.mxu0 0
        %6887 = vmatprep.subr.bf16.mxu0 0
        %6888 = vmatpush2.bf16.msra.mxu0 0
        %6889 = vmatprep.subr.bf16.mxu0 0
        %6890 = vmatpush2.bf16.msra.mxu0 0
        %6891 = vmatprep.mubr.bf16.mxu0 0
        %6892 = vmatmul.mubr.bf16.gmra.mxu0 %v4869
        %v6893 = vpop.f32.mrf.mxu0
        %v6894 = vadd.f32 0.0, %v6893
        %v6895 = vpop.f32.mrf.mxu0
        %v6896 = vpop.f32.mrf.mxu0
        %v6897 = vadd.f32 0.0, %v6896
        %v6898 = vpop.f32.mrf.mxu0
        %6899 = vmatprep.mubr.bf16.mxu0 0
        %6900 = vmatmul.mubr.bf16.gmra.mxu0 %v4870
        %v6901 = vpop.f32.mrf.mxu0
        %v6902 = vadd.f32 0.0, %v6901
        %v6903 = vpop.f32.mrf.mxu0
        %v6904 = vpop.f32.mrf.mxu0
        %v6905 = vadd.f32 0.0, %v6904
        %v6906 = vpop.f32.mrf.mxu0
        %6907 = vdwg.mxu0
        %v6908 = vpack.c.bf16 %v5054, %v5051
        %v6909 = vpack.c.bf16 %v5062, %v5059
        %v6910 = vpack.c.bf16 %v5151, %v5148
        %v6911 = vpack.c.bf16 %v5159, %v5156
        %v6912 = vpack.c.bf16 %v5248, %v5245
        %v6913 = vpack.c.bf16 %v5256, %v5253
        %v6914 = vpack.c.bf16 %v5345, %v5342
        %v6915 = vpack.c.bf16 %v5353, %v5350
        %v6916 = vpack.c.bf16 %v5442, %v5439
        %v6917 = vpack.c.bf16 %v5450, %v5447
        %v6918 = vpack.c.bf16 %v5539, %v5536
        %v6919 = vpack.c.bf16 %v5547, %v5544
        %v6920 = vpack.c.bf16 %v5733, %v5730
        %v6921 = vpack.c.bf16 %v5741, %v5738
        %v6922 = vpack.c.bf16 %v5830, %v5827
        %v6923 = vpack.c.bf16 %v5838, %v5835
        %v6924 = vpack.c.bf16 %v5927, %v5924
        %v6925 = vpack.c.bf16 %v5935, %v5932
        %v6926 = vpack.c.bf16 %v6024, %v6021
        %v6927 = vpack.c.bf16 %v6032, %v6029
        %v6928 = vpack.c.bf16 %v6121, %v6118
        %v6929 = vpack.c.bf16 %v6129, %v6126
        %v6930 = vpack.c.bf16 %v6218, %v6215
        %v6931 = vpack.c.bf16 %v6226, %v6223
        %v6933 = vsel %vm2676, %v6908, 0
        %v6936 = vsel %vm2676, %v6909, 0
        %v6939 = vsel %vm2676, %v6920, 0
        %v6942 = vsel %vm2676, %v6921, 0
        %6944 = vmatprep.subr.bf16.mxu0 0
        %6945 = vmatpush1.bf16.xpose.msra.mxu0 0
        %6946 = vmatprep.subr.bf16.mxu0 0
        %6947 = vmatpush1.bf16.xpose.msra.mxu0 0
        %6948 = vmatprep.subr.bf16.mxu0 0
        %6949 = vmatpush1.bf16.xpose.msra.mxu0 0
        %6950 = vmatprep.subr.bf16.mxu0 0
        %6951 = vmatpush1.bf16.xpose.msra.mxu0 0
        %6952 = vmatprep.subr.bf16.mxu0 0
        %6953 = vmatpush1.bf16.xpose.msra.mxu0 0
        %6954 = vmatprep.subr.bf16.mxu0 0
        %6955 = vmatpush1.bf16.xpose.msra.mxu0 0
        %6956 = vmatprep.subr.bf16.mxu0 0
        %6957 = vmatpush1.bf16.xpose.msra.mxu0 %v6942
        %6958 = vmatprep.subr.bf16.mxu0 0
        %6959 = vmatpush1.bf16.xpose.msra.mxu0 %v6939
        %6960 = vmatprep.subr.bf16.mxu0 0
        %6961 = vmatpush2.bf16.xpose.msra.mxu0 0
        %6962 = vmatprep.subr.bf16.mxu0 0
        %6963 = vmatpush2.bf16.xpose.msra.mxu0 0
        %6964 = vmatprep.subr.bf16.mxu0 0
        %6965 = vmatpush2.bf16.xpose.msra.mxu0 0
        %6966 = vmatprep.subr.bf16.mxu0 0
        %6967 = vmatpush2.bf16.xpose.msra.mxu0 0
        %6968 = vmatprep.subr.bf16.mxu0 0
        %6969 = vmatpush2.bf16.xpose.msra.mxu0 0
        %6970 = vmatprep.subr.bf16.mxu0 0
        %6971 = vmatpush2.bf16.xpose.msra.mxu0 0
        %6972 = vmatprep.subr.bf16.mxu0 0
        %6973 = vmatpush2.bf16.xpose.msra.mxu0 0
        %6974 = vmatprep.subr.bf16.mxu0 0
        %6975 = vmatpush2.bf16.xpose.msra.mxu0 0
        %6976 = vmatprep.mubr.bf16.mxu0 0
        %6977 = vmatmul.mubr.bf16.gmra.mxu0 %v6933
        %v6978 = vpop.f32.mrf.mxu0
        %v6979 = vadd.f32 0.0, %v6978
        %v6980 = vpop.f32.mrf.mxu0
        %v6981 = vpop.f32.mrf.mxu0
        %v6982 = vadd.f32 0.0, %v6981
        %v6983 = vpop.f32.mrf.mxu0
        %6984 = vmatprep.mubr.bf16.mxu0 0
        %6985 = vmatmul.mubr.bf16.gmra.mxu0 %v6936
        %v6986 = vpop.f32.mrf.mxu0
        %v6987 = vadd.f32 0.0, %v6986
        %v6988 = vpop.f32.mrf.mxu0
        %v6989 = vpop.f32.mrf.mxu0
        %v6990 = vadd.f32 0.0, %v6989
        %v6991 = vpop.f32.mrf.mxu0
        %6992 = vdwg.mxu0
        %v6994 = vsel %vm2676, %v6910, 0
        %v6997 = vsel %vm2676, %v6911, 0
        %v7000 = vsel %vm2676, %v6922, 0
        %v7003 = vsel %vm2676, %v6923, 0
        %7005 = vmatprep.subr.bf16.mxu0 0
        %7006 = vmatpush1.bf16.xpose.msra.mxu0 0
        %7007 = vmatprep.subr.bf16.mxu0 0
        %7008 = vmatpush1.bf16.xpose.msra.mxu0 0
        %7009 = vmatprep.subr.bf16.mxu0 0
        %7010 = vmatpush1.bf16.xpose.msra.mxu0 0
        %7011 = vmatprep.subr.bf16.mxu0 0
        %7012 = vmatpush1.bf16.xpose.msra.mxu0 0
        %7013 = vmatprep.subr.bf16.mxu0 0
        %7014 = vmatpush1.bf16.xpose.msra.mxu0 0
        %7015 = vmatprep.subr.bf16.mxu0 0
        %7016 = vmatpush1.bf16.xpose.msra.mxu0 0
        %7017 = vmatprep.subr.bf16.mxu0 0
        %7018 = vmatpush1.bf16.xpose.msra.mxu0 %v7003
        %7019 = vmatprep.subr.bf16.mxu0 0
        %7020 = vmatpush1.bf16.xpose.msra.mxu0 %v7000
        %7021 = vmatprep.subr.bf16.mxu0 0
        %7022 = vmatpush2.bf16.xpose.msra.mxu0 0
        %7023 = vmatprep.subr.bf16.mxu0 0
        %7024 = vmatpush2.bf16.xpose.msra.mxu0 0
        %7025 = vmatprep.subr.bf16.mxu0 0
        %7026 = vmatpush2.bf16.xpose.msra.mxu0 0
        %7027 = vmatprep.subr.bf16.mxu0 0
        %7028 = vmatpush2.bf16.xpose.msra.mxu0 0
        %7029 = vmatprep.subr.bf16.mxu0 0
        %7030 = vmatpush2.bf16.xpose.msra.mxu0 0
        %7031 = vmatprep.subr.bf16.mxu0 0
        %7032 = vmatpush2.bf16.xpose.msra.mxu0 0
        %7033 = vmatprep.subr.bf16.mxu0 0
        %7034 = vmatpush2.bf16.xpose.msra.mxu0 0
        %7035 = vmatprep.subr.bf16.mxu0 0
        %7036 = vmatpush2.bf16.xpose.msra.mxu0 0
        %7037 = vmatprep.mubr.bf16.mxu0 0
        %7038 = vmatmul.mubr.bf16.gmra.mxu0 %v6994
        %v7039 = vpop.f32.mrf.mxu0
        %v7040 = vadd.f32 0.0, %v7039
        %v7041 = vpop.f32.mrf.mxu0
        %v7042 = vpop.f32.mrf.mxu0
        %v7043 = vadd.f32 0.0, %v7042
        %v7044 = vpop.f32.mrf.mxu0
        %7045 = vmatprep.mubr.bf16.mxu0 0
        %7046 = vmatmul.mubr.bf16.gmra.mxu0 %v6997
        %v7047 = vpop.f32.mrf.mxu0
        %v7048 = vadd.f32 0.0, %v7047
        %v7049 = vpop.f32.mrf.mxu0
        %v7050 = vpop.f32.mrf.mxu0
        %v7051 = vadd.f32 0.0, %v7050
        %v7052 = vpop.f32.mrf.mxu0
        %7053 = vdwg.mxu0
        %v7055 = vsel %vm2676, %v6912, 0
        %v7058 = vsel %vm2676, %v6913, 0
        %v7061 = vsel %vm2676, %v6924, 0
        %v7064 = vsel %vm2676, %v6925, 0
        %7066 = vmatprep.subr.bf16.mxu0 0
        %7067 = vmatpush1.bf16.xpose.msra.mxu0 0
        %7068 = vmatprep.subr.bf16.mxu0 0
        %7069 = vmatpush1.bf16.xpose.msra.mxu0 0
        %7070 = vmatprep.subr.bf16.mxu0 0
        %7071 = vmatpush1.bf16.xpose.msra.mxu0 0
        %7072 = vmatprep.subr.bf16.mxu0 0
        %7073 = vmatpush1.bf16.xpose.msra.mxu0 0
        %7074 = vmatprep.subr.bf16.mxu0 0
        %7075 = vmatpush1.bf16.xpose.msra.mxu0 0
        %7076 = vmatprep.subr.bf16.mxu0 0
        %7077 = vmatpush1.bf16.xpose.msra.mxu0 0
        %7078 = vmatprep.subr.bf16.mxu0 0
        %7079 = vmatpush1.bf16.xpose.msra.mxu0 %v7064
        %7080 = vmatprep.subr.bf16.mxu0 0
        %7081 = vmatpush1.bf16.xpose.msra.mxu0 %v7061
        %7082 = vmatprep.subr.bf16.mxu0 0
        %7083 = vmatpush2.bf16.xpose.msra.mxu0 0
        %7084 = vmatprep.subr.bf16.mxu0 0
        %7085 = vmatpush2.bf16.xpose.msra.mxu0 0
        %7086 = vmatprep.subr.bf16.mxu0 0
        %7087 = vmatpush2.bf16.xpose.msra.mxu0 0
        %7088 = vmatprep.subr.bf16.mxu0 0
        %7089 = vmatpush2.bf16.xpose.msra.mxu0 0
        %7090 = vmatprep.subr.bf16.mxu0 0
        %7091 = vmatpush2.bf16.xpose.msra.mxu0 0
        %7092 = vmatprep.subr.bf16.mxu0 0
        %7093 = vmatpush2.bf16.xpose.msra.mxu0 0
        %7094 = vmatprep.subr.bf16.mxu0 0
        %7095 = vmatpush2.bf16.xpose.msra.mxu0 0
        %7096 = vmatprep.subr.bf16.mxu0 0
        %7097 = vmatpush2.bf16.xpose.msra.mxu0 0
        %7098 = vmatprep.mubr.bf16.mxu0 0
        %7099 = vmatmul.mubr.bf16.gmra.mxu0 %v7055
        %v7100 = vpop.f32.mrf.mxu0
        %v7101 = vadd.f32 0.0, %v7100
        %v7102 = vpop.f32.mrf.mxu0
        %v7103 = vpop.f32.mrf.mxu0
        %v7104 = vadd.f32 0.0, %v7103
        %v7105 = vpop.f32.mrf.mxu0
        %7106 = vmatprep.mubr.bf16.mxu0 0
        %7107 = vmatmul.mubr.bf16.gmra.mxu0 %v7058
        %v7108 = vpop.f32.mrf.mxu0
        %v7109 = vadd.f32 0.0, %v7108
        %v7110 = vpop.f32.mrf.mxu0
        %v7111 = vpop.f32.mrf.mxu0
        %v7112 = vadd.f32 0.0, %v7111
        %v7113 = vpop.f32.mrf.mxu0
        %7114 = vdwg.mxu0
        %v7116 = vsel %vm2676, %v6914, 0
        %v7119 = vsel %vm2676, %v6915, 0
        %v7122 = vsel %vm2676, %v6926, 0
        %v7125 = vsel %vm2676, %v6927, 0
        %7127 = vmatprep.subr.bf16.mxu0 0
        %7128 = vmatpush1.bf16.xpose.msra.mxu0 0
        %7129 = vmatprep.subr.bf16.mxu0 0
        %7130 = vmatpush1.bf16.xpose.msra.mxu0 0
        %7131 = vmatprep.subr.bf16.mxu0 0
        %7132 = vmatpush1.bf16.xpose.msra.mxu0 0
        %7133 = vmatprep.subr.bf16.mxu0 0
        %7134 = vmatpush1.bf16.xpose.msra.mxu0 0
        %7135 = vmatprep.subr.bf16.mxu0 0
        %7136 = vmatpush1.bf16.xpose.msra.mxu0 0
        %7137 = vmatprep.subr.bf16.mxu0 0
        %7138 = vmatpush1.bf16.xpose.msra.mxu0 0
        %7139 = vmatprep.subr.bf16.mxu0 0
        %7140 = vmatpush1.bf16.xpose.msra.mxu0 %v7125
        %7141 = vmatprep.subr.bf16.mxu0 0
        %7142 = vmatpush1.bf16.xpose.msra.mxu0 %v7122
        %7143 = vmatprep.subr.bf16.mxu0 0
        %7144 = vmatpush2.bf16.xpose.msra.mxu0 0
        %7145 = vmatprep.subr.bf16.mxu0 0
        %7146 = vmatpush2.bf16.xpose.msra.mxu0 0
        %7147 = vmatprep.subr.bf16.mxu0 0
        %7148 = vmatpush2.bf16.xpose.msra.mxu0 0
        %7149 = vmatprep.subr.bf16.mxu0 0
        %7150 = vmatpush2.bf16.xpose.msra.mxu0 0
        %7151 = vmatprep.subr.bf16.mxu0 0
        %7152 = vmatpush2.bf16.xpose.msra.mxu0 0
        %7153 = vmatprep.subr.bf16.mxu0 0
        %7154 = vmatpush2.bf16.xpose.msra.mxu0 0
        %7155 = vmatprep.subr.bf16.mxu0 0
        %7156 = vmatpush2.bf16.xpose.msra.mxu0 0
        %7157 = vmatprep.subr.bf16.mxu0 0
        %7158 = vmatpush2.bf16.xpose.msra.mxu0 0
        %7159 = vmatprep.mubr.bf16.mxu0 0
        %7160 = vmatmul.mubr.bf16.gmra.mxu0 %v7116
        %v7161 = vpop.f32.mrf.mxu0
        %v7162 = vadd.f32 0.0, %v7161
        %v7163 = vpop.f32.mrf.mxu0
        %v7164 = vpop.f32.mrf.mxu0
        %v7165 = vadd.f32 0.0, %v7164
        %v7166 = vpop.f32.mrf.mxu0
        %7167 = vmatprep.mubr.bf16.mxu0 0
        %7168 = vmatmul.mubr.bf16.gmra.mxu0 %v7119
        %v7169 = vpop.f32.mrf.mxu0
        %v7170 = vadd.f32 0.0, %v7169
        %v7171 = vpop.f32.mrf.mxu0
        %v7172 = vpop.f32.mrf.mxu0
        %v7173 = vadd.f32 0.0, %v7172
        %v7174 = vpop.f32.mrf.mxu0
        %7175 = vdwg.mxu0
        %v7177 = vsel %vm2676, %v6916, 0
        %v7180 = vsel %vm2676, %v6917, 0
        %v7183 = vsel %vm2676, %v6928, 0
        %v7186 = vsel %vm2676, %v6929, 0
        %7188 = vmatprep.subr.bf16.mxu0 0
        %7189 = vmatpush1.bf16.xpose.msra.mxu0 0
        %7190 = vmatprep.subr.bf16.mxu0 0
        %7191 = vmatpush1.bf16.xpose.msra.mxu0 0
        %7192 = vmatprep.subr.bf16.mxu0 0
        %7193 = vmatpush1.bf16.xpose.msra.mxu0 0
        %7194 = vmatprep.subr.bf16.mxu0 0
        %7195 = vmatpush1.bf16.xpose.msra.mxu0 0
        %7196 = vmatprep.subr.bf16.mxu0 0
        %7197 = vmatpush1.bf16.xpose.msra.mxu0 0
        %7198 = vmatprep.subr.bf16.mxu0 0
        %7199 = vmatpush1.bf16.xpose.msra.mxu0 0
        %7200 = vmatprep.subr.bf16.mxu0 0
        %7201 = vmatpush1.bf16.xpose.msra.mxu0 %v7186
        %7202 = vmatprep.subr.bf16.mxu0 0
        %7203 = vmatpush1.bf16.xpose.msra.mxu0 %v7183
        %7204 = vmatprep.subr.bf16.mxu0 0
        %7205 = vmatpush2.bf16.xpose.msra.mxu0 0
        %7206 = vmatprep.subr.bf16.mxu0 0
        %7207 = vmatpush2.bf16.xpose.msra.mxu0 0
        %7208 = vmatprep.subr.bf16.mxu0 0
        %7209 = vmatpush2.bf16.xpose.msra.mxu0 0
        %7210 = vmatprep.subr.bf16.mxu0 0
        %7211 = vmatpush2.bf16.xpose.msra.mxu0 0
        %7212 = vmatprep.subr.bf16.mxu0 0
        %7213 = vmatpush2.bf16.xpose.msra.mxu0 0
        %7214 = vmatprep.subr.bf16.mxu0 0
        %7215 = vmatpush2.bf16.xpose.msra.mxu0 0
        %7216 = vmatprep.subr.bf16.mxu0 0
        %7217 = vmatpush2.bf16.xpose.msra.mxu0 0
        %7218 = vmatprep.subr.bf16.mxu0 0
        %7219 = vmatpush2.bf16.xpose.msra.mxu0 0
        %7220 = vmatprep.mubr.bf16.mxu0 0
        %7221 = vmatmul.mubr.bf16.gmra.mxu0 %v7177
        %v7222 = vpop.f32.mrf.mxu0
        %v7223 = vadd.f32 0.0, %v7222
        %v7224 = vpop.f32.mrf.mxu0
        %v7225 = vpop.f32.mrf.mxu0
        %v7226 = vadd.f32 0.0, %v7225
        %v7227 = vpop.f32.mrf.mxu0
        %7228 = vmatprep.mubr.bf16.mxu0 0
        %7229 = vmatmul.mubr.bf16.gmra.mxu0 %v7180
        %v7230 = vpop.f32.mrf.mxu0
        %v7231 = vadd.f32 0.0, %v7230
        %v7232 = vpop.f32.mrf.mxu0
        %v7233 = vpop.f32.mrf.mxu0
        %v7234 = vadd.f32 0.0, %v7233
        %v7235 = vpop.f32.mrf.mxu0
        %7236 = vdwg.mxu0
        %v7238 = vsel %vm2676, %v6918, 0
        %v7241 = vsel %vm2676, %v6919, 0
        %v7244 = vsel %vm2676, %v6930, 0
        %v7247 = vsel %vm2676, %v6931, 0
        %7249 = vmatprep.subr.bf16.mxu0 0
        %7250 = vmatpush1.bf16.xpose.msra.mxu0 0
        %7251 = vmatprep.subr.bf16.mxu0 0
        %7252 = vmatpush1.bf16.xpose.msra.mxu0 0
        %7253 = vmatprep.subr.bf16.mxu0 0
        %7254 = vmatpush1.bf16.xpose.msra.mxu0 0
        %7255 = vmatprep.subr.bf16.mxu0 0
        %7256 = vmatpush1.bf16.xpose.msra.mxu0 0
        %7257 = vmatprep.subr.bf16.mxu0 0
        %7258 = vmatpush1.bf16.xpose.msra.mxu0 0
        %7259 = vmatprep.subr.bf16.mxu0 0
        %7260 = vmatpush1.bf16.xpose.msra.mxu0 0
        %7261 = vmatprep.subr.bf16.mxu0 0
        %7262 = vmatpush1.bf16.xpose.msra.mxu0 %v7247
        %7263 = vmatprep.subr.bf16.mxu0 0
        %7264 = vmatpush1.bf16.xpose.msra.mxu0 %v7244
        %7265 = vmatprep.subr.bf16.mxu0 0
        %7266 = vmatpush2.bf16.xpose.msra.mxu0 0
        %7267 = vmatprep.subr.bf16.mxu0 0
        %7268 = vmatpush2.bf16.xpose.msra.mxu0 0
        %7269 = vmatprep.subr.bf16.mxu0 0
        %7270 = vmatpush2.bf16.xpose.msra.mxu0 0
        %7271 = vmatprep.subr.bf16.mxu0 0
        %7272 = vmatpush2.bf16.xpose.msra.mxu0 0
        %7273 = vmatprep.subr.bf16.mxu0 0
        %7274 = vmatpush2.bf16.xpose.msra.mxu0 0
        %7275 = vmatprep.subr.bf16.mxu0 0
        %7276 = vmatpush2.bf16.xpose.msra.mxu0 0
        %7277 = vmatprep.subr.bf16.mxu0 0
        %7278 = vmatpush2.bf16.xpose.msra.mxu0 0
        %7279 = vmatprep.subr.bf16.mxu0 0
        %7280 = vmatpush2.bf16.xpose.msra.mxu0 0
        %7281 = vmatprep.mubr.bf16.mxu0 0
        %7282 = vmatmul.mubr.bf16.gmra.mxu0 %v7238
        %v7283 = vpop.f32.mrf.mxu0
        %v7284 = vadd.f32 0.0, %v7283
        %v7285 = vpop.f32.mrf.mxu0
        %v7286 = vpop.f32.mrf.mxu0
        %v7287 = vadd.f32 0.0, %v7286
        %v7288 = vpop.f32.mrf.mxu0
        %7289 = vmatprep.mubr.bf16.mxu0 0
        %7290 = vmatmul.mubr.bf16.gmra.mxu0 %v7241
        %v7291 = vpop.f32.mrf.mxu0
        %v7292 = vadd.f32 0.0, %v7291
        %v7293 = vpop.f32.mrf.mxu0
        %v7294 = vpop.f32.mrf.mxu0
        %v7295 = vadd.f32 0.0, %v7294
        %v7296 = vpop.f32.mrf.mxu0
        %7297 = vdwg.mxu0
        %v7298 = vsel %vm3047, %v6979, -1e+30
        %v7299 = vsel %vm3048, %v6982, -1e+30
        %v7300 = vsel %vm3049, %v6987, -1e+30
        %v7301 = vsel %vm3050, %v6990, -1e+30
        %v7302 = vsel %vm3047, %v7040, -1e+30
        %v7303 = vsel %vm3048, %v7043, -1e+30
        %v7304 = vsel %vm3049, %v7048, -1e+30
        %v7305 = vsel %vm3050, %v7051, -1e+30
        %v7306 = vsel %vm3047, %v7101, -1e+30
        %v7307 = vsel %vm3048, %v7104, -1e+30
        %v7308 = vsel %vm3049, %v7109, -1e+30
        %v7309 = vsel %vm3050, %v7112, -1e+30
        %v7310 = vsel %vm3047, %v7162, -1e+30
        %v7311 = vsel %vm3048, %v7165, -1e+30
        %v7312 = vsel %vm3049, %v7170, -1e+30
        %v7313 = vsel %vm3050, %v7173, -1e+30
        %v7314 = vsel %vm3047, %v7223, -1e+30
        %v7315 = vsel %vm3048, %v7226, -1e+30
        %v7316 = vsel %vm3049, %v7231, -1e+30
        %v7317 = vsel %vm3050, %v7234, -1e+30
        %v7318 = vsel %vm3047, %v7284, -1e+30
        %v7319 = vsel %vm3048, %v7287, -1e+30
        %v7320 = vsel %vm3049, %v7292, -1e+30
        %v7321 = vsel %vm3050, %v7295, -1e+30
        %v7322 = vsel %vm3075, %v7298, -inf
        %7323 = vmax.xlane.f32.xlu0 %v7322
        %v7324 = vpop.xlane.xlu0 %7323
        %v7325 = vsel %vm3075, %v7299, -inf
        %7326 = vmax.xlane.f32.xlu0 %v7325
        %v7327 = vpop.xlane.xlu0 %7326
        %v7328 = vsel %vm3075, %v7300, -inf
        %7329 = vmax.xlane.f32.xlu0 %v7328
        %v7330 = vpop.xlane.xlu0 %7329
        %v7331 = vsel %vm3075, %v7301, -inf
        %7332 = vmax.xlane.f32.xlu0 %v7331
        %v7333 = vpop.xlane.xlu0 %7332
        %v7334 = vsel %vm3075, %v7302, -inf
        %7335 = vmax.xlane.f32.xlu0 %v7334
        %v7336 = vpop.xlane.xlu0 %7335
        %v7337 = vsel %vm3075, %v7303, -inf
        %7338 = vmax.xlane.f32.xlu0 %v7337
        %v7339 = vpop.xlane.xlu0 %7338
        %v7340 = vsel %vm3075, %v7304, -inf
        %7341 = vmax.xlane.f32.xlu0 %v7340
        %v7342 = vpop.xlane.xlu0 %7341
        %v7343 = vsel %vm3075, %v7305, -inf
        %7344 = vmax.xlane.f32.xlu0 %v7343
        %v7345 = vpop.xlane.xlu0 %7344
        %v7346 = vsel %vm3075, %v7306, -inf
        %7347 = vmax.xlane.f32.xlu0 %v7346
        %v7348 = vpop.xlane.xlu0 %7347
        %v7349 = vsel %vm3075, %v7307, -inf
        %7350 = vmax.xlane.f32.xlu0 %v7349
        %v7351 = vpop.xlane.xlu0 %7350
        %v7352 = vsel %vm3075, %v7308, -inf
        %7353 = vmax.xlane.f32.xlu0 %v7352
        %v7354 = vpop.xlane.xlu0 %7353
        %v7355 = vsel %vm3075, %v7309, -inf
        %7356 = vmax.xlane.f32.xlu0 %v7355
        %v7357 = vpop.xlane.xlu0 %7356
        %v7358 = vsel %vm3075, %v7310, -inf
        %7359 = vmax.xlane.f32.xlu0 %v7358
        %v7360 = vpop.xlane.xlu0 %7359
        %v7361 = vsel %vm3075, %v7311, -inf
        %7362 = vmax.xlane.f32.xlu0 %v7361
        %v7363 = vpop.xlane.xlu0 %7362
        %v7364 = vsel %vm3075, %v7312, -inf
        %7365 = vmax.xlane.f32.xlu0 %v7364
        %v7366 = vpop.xlane.xlu0 %7365
        %v7367 = vsel %vm3075, %v7313, -inf
        %7368 = vmax.xlane.f32.xlu0 %v7367
        %v7369 = vpop.xlane.xlu0 %7368
        %v7370 = vsel %vm3075, %v7314, -inf
        %7371 = vmax.xlane.f32.xlu0 %v7370
        %v7372 = vpop.xlane.xlu0 %7371
        %v7373 = vsel %vm3075, %v7315, -inf
        %7374 = vmax.xlane.f32.xlu0 %v7373
        %v7375 = vpop.xlane.xlu0 %7374
        %v7376 = vsel %vm3075, %v7316, -inf
        %7377 = vmax.xlane.f32.xlu0 %v7376
        %v7378 = vpop.xlane.xlu0 %7377
        %v7379 = vsel %vm3075, %v7317, -inf
        %7380 = vmax.xlane.f32.xlu0 %v7379
        %v7381 = vpop.xlane.xlu0 %7380
        %v7382 = vsel %vm3075, %v7318, -inf
        %7383 = vmax.xlane.f32.xlu0 %v7382
        %v7384 = vpop.xlane.xlu0 %7383
        %v7385 = vsel %vm3075, %v7319, -inf
        %7386 = vmax.xlane.f32.xlu0 %v7385
        %v7387 = vpop.xlane.xlu0 %7386
        %v7388 = vsel %vm3075, %v7320, -inf
        %7389 = vmax.xlane.f32.xlu0 %v7388
        %v7390 = vpop.xlane.xlu0 %7389
        %v7391 = vsel %vm3075, %v7321, -inf
        %7392 = vmax.xlane.f32.xlu0 %v7391
        %v7393 = vpop.xlane.xlu0 %7392
        %v7394 = vsub.f32 %v7298, %v7324
        %v7395 = vsub.f32 %v7299, %v7327
        %v7396 = vsub.f32 %v7300, %v7330
        %v7397 = vsub.f32 %v7301, %v7333
        %v7398 = vsub.f32 %v7302, %v7336
        %v7399 = vsub.f32 %v7303, %v7339
        %v7400 = vsub.f32 %v7304, %v7342
        %v7401 = vsub.f32 %v7305, %v7345
        %v7402 = vsub.f32 %v7306, %v7348
        %v7403 = vsub.f32 %v7307, %v7351
        %v7404 = vsub.f32 %v7308, %v7354
        %v7405 = vsub.f32 %v7309, %v7357
        %v7406 = vsub.f32 %v7310, %v7360
        %v7407 = vsub.f32 %v7311, %v7363
        %v7408 = vsub.f32 %v7312, %v7366
        %v7409 = vsub.f32 %v7313, %v7369
        %v7410 = vsub.f32 %v7314, %v7372
        %v7411 = vsub.f32 %v7315, %v7375
        %v7412 = vsub.f32 %v7316, %v7378
        %v7413 = vsub.f32 %v7317, %v7381
        %v7414 = vsub.f32 %v7318, %v7384
        %v7415 = vsub.f32 %v7319, %v7387
        %v7416 = vsub.f32 %v7320, %v7390
        %v7417 = vsub.f32 %v7321, %v7393
        %v7418 = vmul.f32 %v7394, 1.442695
        %v7419 = vpow.pop %v7418
        %v7420 = vmul.f32 %v7395, 1.442695
        %v7421 = vpow.pop %v7420
        %v7422 = vmul.f32 %v7396, 1.442695
        %v7423 = vpow.pop %v7422
        %v7424 = vmul.f32 %v7397, 1.442695
        %v7425 = vpow.pop %v7424
        %v7426 = vmul.f32 %v7398, 1.442695
        %v7427 = vpow.pop %v7426
        %v7428 = vmul.f32 %v7399, 1.442695
        %v7429 = vpow.pop %v7428
        %v7430 = vmul.f32 %v7400, 1.442695
        %v7431 = vpow.pop %v7430
        %v7432 = vmul.f32 %v7401, 1.442695
        %v7433 = vpow.pop %v7432
        %v7434 = vmul.f32 %v7402, 1.442695
        %v7435 = vpow.pop %v7434
        %v7436 = vmul.f32 %v7403, 1.442695
        %v7437 = vpow.pop %v7436
        %v7438 = vmul.f32 %v7404, 1.442695
        %v7439 = vpow.pop %v7438
        %v7440 = vmul.f32 %v7405, 1.442695
        %v7441 = vpow.pop %v7440
        %v7442 = vmul.f32 %v7406, 1.442695
        %v7443 = vpow.pop %v7442
        %v7444 = vmul.f32 %v7407, 1.442695
        %v7445 = vpow.pop %v7444
        %v7446 = vmul.f32 %v7408, 1.442695
        %v7447 = vpow.pop %v7446
        %v7448 = vmul.f32 %v7409, 1.442695
        %v7449 = vpow.pop %v7448
        %v7450 = vmul.f32 %v7410, 1.442695
        %v7451 = vpow.pop %v7450
        %v7452 = vmul.f32 %v7411, 1.442695
        %v7453 = vpow.pop %v7452
        %v7454 = vmul.f32 %v7412, 1.442695
        %v7455 = vpow.pop %v7454
        %v7456 = vmul.f32 %v7413, 1.442695
        %v7457 = vpow.pop %v7456
        %v7458 = vmul.f32 %v7414, 1.442695
        %v7459 = vpow.pop %v7458
        %v7460 = vmul.f32 %v7415, 1.442695
        %v7461 = vpow.pop %v7460
        %v7462 = vmul.f32 %v7416, 1.442695
        %v7463 = vpow.pop %v7462
        %v7464 = vmul.f32 %v7417, 1.442695
        %v7465 = vpow.pop %v7464
        %v7466 = vsel %vm3075, %v7419, 0.0
        %7467 = vadd.xlane.f32.xlu0 %v7466
        %v7468 = vpop.xlane.xlu0 %7467
        %v7469 = vsel %vm3075, %v7421, 0.0
        %7470 = vadd.xlane.f32.xlu0 %v7469
        %v7471 = vpop.xlane.xlu0 %7470
        %v7472 = vsel %vm3075, %v7423, 0.0
        %7473 = vadd.xlane.f32.xlu0 %v7472
        %v7474 = vpop.xlane.xlu0 %7473
        %v7475 = vsel %vm3075, %v7425, 0.0
        %7476 = vadd.xlane.f32.xlu0 %v7475
        %v7477 = vpop.xlane.xlu0 %7476
        %v7478 = vsel %vm3075, %v7427, 0.0
        %7479 = vadd.xlane.f32.xlu0 %v7478
        %v7480 = vpop.xlane.xlu0 %7479
        %v7481 = vsel %vm3075, %v7429, 0.0
        %7482 = vadd.xlane.f32.xlu0 %v7481
        %v7483 = vpop.xlane.xlu0 %7482
        %v7484 = vsel %vm3075, %v7431, 0.0
        %7485 = vadd.xlane.f32.xlu0 %v7484
        %v7486 = vpop.xlane.xlu0 %7485
        %v7487 = vsel %vm3075, %v7433, 0.0
        %7488 = vadd.xlane.f32.xlu0 %v7487
        %v7489 = vpop.xlane.xlu0 %7488
        %v7490 = vsel %vm3075, %v7435, 0.0
        %7491 = vadd.xlane.f32.xlu0 %v7490
        %v7492 = vpop.xlane.xlu0 %7491
        %v7493 = vsel %vm3075, %v7437, 0.0
        %7494 = vadd.xlane.f32.xlu0 %v7493
        %v7495 = vpop.xlane.xlu0 %7494
        %v7496 = vsel %vm3075, %v7439, 0.0
        %7497 = vadd.xlane.f32.xlu0 %v7496
        %v7498 = vpop.xlane.xlu0 %7497
        %v7499 = vsel %vm3075, %v7441, 0.0
        %7500 = vadd.xlane.f32.xlu0 %v7499
        %v7501 = vpop.xlane.xlu0 %7500
        %v7502 = vsel %vm3075, %v7443, 0.0
        %7503 = vadd.xlane.f32.xlu0 %v7502
        %v7504 = vpop.xlane.xlu0 %7503
        %v7505 = vsel %vm3075, %v7445, 0.0
        %7506 = vadd.xlane.f32.xlu0 %v7505
        %v7507 = vpop.xlane.xlu0 %7506
        %v7508 = vsel %vm3075, %v7447, 0.0
        %7509 = vadd.xlane.f32.xlu0 %v7508
        %v7510 = vpop.xlane.xlu0 %7509
        %v7511 = vsel %vm3075, %v7449, 0.0
        %7512 = vadd.xlane.f32.xlu0 %v7511
        %v7513 = vpop.xlane.xlu0 %7512
        %v7514 = vsel %vm3075, %v7451, 0.0
        %7515 = vadd.xlane.f32.xlu0 %v7514
        %v7516 = vpop.xlane.xlu0 %7515
        %v7517 = vsel %vm3075, %v7453, 0.0
        %7518 = vadd.xlane.f32.xlu0 %v7517
        %v7519 = vpop.xlane.xlu0 %7518
        %v7520 = vsel %vm3075, %v7455, 0.0
        %7521 = vadd.xlane.f32.xlu0 %v7520
        %v7522 = vpop.xlane.xlu0 %7521
        %v7523 = vsel %vm3075, %v7457, 0.0
        %7524 = vadd.xlane.f32.xlu0 %v7523
        %v7525 = vpop.xlane.xlu0 %7524
        %v7526 = vsel %vm3075, %v7459, 0.0
        %7527 = vadd.xlane.f32.xlu0 %v7526
        %v7528 = vpop.xlane.xlu0 %7527
        %v7529 = vsel %vm3075, %v7461, 0.0
        %7530 = vadd.xlane.f32.xlu0 %v7529
        %v7531 = vpop.xlane.xlu0 %7530
        %v7532 = vsel %vm3075, %v7463, 0.0
        %7533 = vadd.xlane.f32.xlu0 %v7532
        %v7534 = vpop.xlane.xlu0 %7533
        %v7535 = vsel %vm3075, %v7465, 0.0
        %7536 = vadd.xlane.f32.xlu0 %v7535
        %v7537 = vpop.xlane.xlu0 %7536
        %v7538 = vrcp.pop %v7468
        %v7539 = vrcp.pop %v7471
        %v7540 = vrcp.pop %v7474
        %v7541 = vrcp.pop %v7477
        %v7542 = vrcp.pop %v7480
        %v7543 = vrcp.pop %v7483
        %v7544 = vrcp.pop %v7486
        %v7545 = vrcp.pop %v7489
        %v7546 = vrcp.pop %v7492
        %v7547 = vrcp.pop %v7495
        %v7548 = vrcp.pop %v7498
        %v7549 = vrcp.pop %v7501
        %v7550 = vrcp.pop %v7504
        %v7551 = vrcp.pop %v7507
        %v7552 = vrcp.pop %v7510
        %v7553 = vrcp.pop %v7513
        %v7554 = vrcp.pop %v7516
        %v7555 = vrcp.pop %v7519
        %v7556 = vrcp.pop %v7522
        %v7557 = vrcp.pop %v7525
        %v7558 = vrcp.pop %v7528
        %v7559 = vrcp.pop %v7531
        %v7560 = vrcp.pop %v7534
        %v7561 = vrcp.pop %v7537
        %v7562 = vpack.c.bf16 %v7421, %v7419
        %v7563 = vpack.c.bf16 %v7425, %v7423
        %v7564 = vpack.c.bf16 %v7429, %v7427
        %v7565 = vpack.c.bf16 %v7433, %v7431
        %v7566 = vpack.c.bf16 %v7437, %v7435
        %v7567 = vpack.c.bf16 %v7441, %v7439
        %v7568 = vpack.c.bf16 %v7445, %v7443
        %v7569 = vpack.c.bf16 %v7449, %v7447
        %v7570 = vpack.c.bf16 %v7453, %v7451
        %v7571 = vpack.c.bf16 %v7457, %v7455
        %v7572 = vpack.c.bf16 %v7461, %v7459
        %v7573 = vpack.c.bf16 %v7465, %v7463
        %v7574 = vpack.c.bf16 %v6412, %v6409
        %v7575 = vpack.c.bf16 %v6420, %v6417
        %v7576 = vpack.c.bf16 %v6509, %v6506
        %v7577 = vpack.c.bf16 %v6517, %v6514
        %v7578 = vpack.c.bf16 %v6606, %v6603
        %v7579 = vpack.c.bf16 %v6614, %v6611
        %v7580 = vpack.c.bf16 %v6703, %v6700
        %v7581 = vpack.c.bf16 %v6711, %v6708
        %v7582 = vpack.c.bf16 %v6800, %v6797
        %v7583 = vpack.c.bf16 %v6808, %v6805
        %v7584 = vpack.c.bf16 %v6897, %v6894
        %v7585 = vpack.c.bf16 %v6905, %v6902
        %v7587 = vsel %vm3075, %v7562, 0
        %v7590 = vsel %vm3075, %v7563, 0
        %7592 = vmatprep.subr.bf16.mxu0 0
        %7593 = vmatpush1.bf16.msra.mxu0 0
        %7594 = vmatprep.subr.bf16.mxu0 0
        %7595 = vmatpush1.bf16.msra.mxu0 0
        %7596 = vmatprep.subr.bf16.mxu0 0
        %7597 = vmatpush1.bf16.msra.mxu0 0
        %7598 = vmatprep.subr.bf16.mxu0 0
        %7599 = vmatpush1.bf16.msra.mxu0 0
        %7600 = vmatprep.subr.bf16.mxu0 0
        %7601 = vmatpush1.bf16.msra.mxu0 0
        %7602 = vmatprep.subr.bf16.mxu0 0
        %7603 = vmatpush1.bf16.msra.mxu0 0
        %7604 = vmatprep.subr.bf16.mxu0 0
        %7605 = vmatpush1.bf16.msra.mxu0 %v7575
        %7606 = vmatprep.subr.bf16.mxu0 0
        %7607 = vmatpush1.bf16.msra.mxu0 %v7574
        %7608 = vmatprep.subr.bf16.mxu0 0
        %7609 = vmatpush2.bf16.msra.mxu0 0
        %7610 = vmatprep.subr.bf16.mxu0 0
        %7611 = vmatpush2.bf16.msra.mxu0 0
        %7612 = vmatprep.subr.bf16.mxu0 0
        %7613 = vmatpush2.bf16.msra.mxu0 0
        %7614 = vmatprep.subr.bf16.mxu0 0
        %7615 = vmatpush2.bf16.msra.mxu0 0
        %7616 = vmatprep.subr.bf16.mxu0 0
        %7617 = vmatpush2.bf16.msra.mxu0 0
        %7618 = vmatprep.subr.bf16.mxu0 0
        %7619 = vmatpush2.bf16.msra.mxu0 0
        %7620 = vmatprep.subr.bf16.mxu0 0
        %7621 = vmatpush2.bf16.msra.mxu0 0
        %7622 = vmatprep.subr.bf16.mxu0 0
        %7623 = vmatpush2.bf16.msra.mxu0 0
        %7624 = vmatprep.mubr.bf16.mxu0 0
        %7625 = vmatmul.mubr.bf16.gmra.mxu0 %v7587
        %v7626 = vpop.f32.mrf.mxu0
        %v7627 = vadd.f32 0.0, %v7626
        %v7628 = vpop.f32.mrf.mxu0
        %v7629 = vpop.f32.mrf.mxu0
        %v7630 = vadd.f32 0.0, %v7629
        %v7631 = vpop.f32.mrf.mxu0
        %7632 = vmatprep.mubr.bf16.mxu0 0
        %7633 = vmatmul.mubr.bf16.gmra.mxu0 %v7590
        %v7634 = vpop.f32.mrf.mxu0
        %v7635 = vadd.f32 0.0, %v7634
        %v7636 = vpop.f32.mrf.mxu0
        %v7637 = vpop.f32.mrf.mxu0
        %v7638 = vadd.f32 0.0, %v7637
        %v7639 = vpop.f32.mrf.mxu0
        %7640 = vdwg.mxu0
        %v7642 = vsel %vm3075, %v7564, 0
        %v7645 = vsel %vm3075, %v7565, 0
        %7647 = vmatprep.subr.bf16.mxu0 0
        %7648 = vmatpush1.bf16.msra.mxu0 0
        %7649 = vmatprep.subr.bf16.mxu0 0
        %7650 = vmatpush1.bf16.msra.mxu0 0
        %7651 = vmatprep.subr.bf16.mxu0 0
        %7652 = vmatpush1.bf16.msra.mxu0 0
        %7653 = vmatprep.subr.bf16.mxu0 0
        %7654 = vmatpush1.bf16.msra.mxu0 0
        %7655 = vmatprep.subr.bf16.mxu0 0
        %7656 = vmatpush1.bf16.msra.mxu0 0
        %7657 = vmatprep.subr.bf16.mxu0 0
        %7658 = vmatpush1.bf16.msra.mxu0 0
        %7659 = vmatprep.subr.bf16.mxu0 0
        %7660 = vmatpush1.bf16.msra.mxu0 %v7577
        %7661 = vmatprep.subr.bf16.mxu0 0
        %7662 = vmatpush1.bf16.msra.mxu0 %v7576
        %7663 = vmatprep.subr.bf16.mxu0 0
        %7664 = vmatpush2.bf16.msra.mxu0 0
        %7665 = vmatprep.subr.bf16.mxu0 0
        %7666 = vmatpush2.bf16.msra.mxu0 0
        %7667 = vmatprep.subr.bf16.mxu0 0
        %7668 = vmatpush2.bf16.msra.mxu0 0
        %7669 = vmatprep.subr.bf16.mxu0 0
        %7670 = vmatpush2.bf16.msra.mxu0 0
        %7671 = vmatprep.subr.bf16.mxu0 0
        %7672 = vmatpush2.bf16.msra.mxu0 0
        %7673 = vmatprep.subr.bf16.mxu0 0
        %7674 = vmatpush2.bf16.msra.mxu0 0
        %7675 = vmatprep.subr.bf16.mxu0 0
        %7676 = vmatpush2.bf16.msra.mxu0 0
        %7677 = vmatprep.subr.bf16.mxu0 0
        %7678 = vmatpush2.bf16.msra.mxu0 0
        %7679 = vmatprep.mubr.bf16.mxu0 0
        %7680 = vmatmul.mubr.bf16.gmra.mxu0 %v7642
        %v7681 = vpop.f32.mrf.mxu0
        %v7682 = vadd.f32 0.0, %v7681
        %v7683 = vpop.f32.mrf.mxu0
        %v7684 = vpop.f32.mrf.mxu0
        %v7685 = vadd.f32 0.0, %v7684
        %v7686 = vpop.f32.mrf.mxu0
        %7687 = vmatprep.mubr.bf16.mxu0 0
        %7688 = vmatmul.mubr.bf16.gmra.mxu0 %v7645
        %v7689 = vpop.f32.mrf.mxu0
        %v7690 = vadd.f32 0.0, %v7689
        %v7691 = vpop.f32.mrf.mxu0
        %v7692 = vpop.f32.mrf.mxu0
        %v7693 = vadd.f32 0.0, %v7692
        %v7694 = vpop.f32.mrf.mxu0
        %7695 = vdwg.mxu0
        %v7697 = vsel %vm3075, %v7566, 0
        %v7700 = vsel %vm3075, %v7567, 0
        %7702 = vmatprep.subr.bf16.mxu0 0
        %7703 = vmatpush1.bf16.msra.mxu0 0
        %7704 = vmatprep.subr.bf16.mxu0 0
        %7705 = vmatpush1.bf16.msra.mxu0 0
        %7706 = vmatprep.subr.bf16.mxu0 0
        %7707 = vmatpush1.bf16.msra.mxu0 0
        %7708 = vmatprep.subr.bf16.mxu0 0
        %7709 = vmatpush1.bf16.msra.mxu0 0
        %7710 = vmatprep.subr.bf16.mxu0 0
        %7711 = vmatpush1.bf16.msra.mxu0 0
        %7712 = vmatprep.subr.bf16.mxu0 0
        %7713 = vmatpush1.bf16.msra.mxu0 0
        %7714 = vmatprep.subr.bf16.mxu0 0
        %7715 = vmatpush1.bf16.msra.mxu0 %v7579
        %7716 = vmatprep.subr.bf16.mxu0 0
        %7717 = vmatpush1.bf16.msra.mxu0 %v7578
        %7718 = vmatprep.subr.bf16.mxu0 0
        %7719 = vmatpush2.bf16.msra.mxu0 0
        %7720 = vmatprep.subr.bf16.mxu0 0
        %7721 = vmatpush2.bf16.msra.mxu0 0
        %7722 = vmatprep.subr.bf16.mxu0 0
        %7723 = vmatpush2.bf16.msra.mxu0 0
        %7724 = vmatprep.subr.bf16.mxu0 0
        %7725 = vmatpush2.bf16.msra.mxu0 0
        %7726 = vmatprep.subr.bf16.mxu0 0
        %7727 = vmatpush2.bf16.msra.mxu0 0
        %7728 = vmatprep.subr.bf16.mxu0 0
        %7729 = vmatpush2.bf16.msra.mxu0 0
        %7730 = vmatprep.subr.bf16.mxu0 0
        %7731 = vmatpush2.bf16.msra.mxu0 0
        %7732 = vmatprep.subr.bf16.mxu0 0
        %7733 = vmatpush2.bf16.msra.mxu0 0
        %7734 = vmatprep.mubr.bf16.mxu0 0
        %7735 = vmatmul.mubr.bf16.gmra.mxu0 %v7697
        %v7736 = vpop.f32.mrf.mxu0
        %v7737 = vadd.f32 0.0, %v7736
        %v7738 = vpop.f32.mrf.mxu0
        %v7739 = vpop.f32.mrf.mxu0
        %v7740 = vadd.f32 0.0, %v7739
        %v7741 = vpop.f32.mrf.mxu0
        %7742 = vmatprep.mubr.bf16.mxu0 0
        %7743 = vmatmul.mubr.bf16.gmra.mxu0 %v7700
        %v7744 = vpop.f32.mrf.mxu0
        %v7745 = vadd.f32 0.0, %v7744
        %v7746 = vpop.f32.mrf.mxu0
        %v7747 = vpop.f32.mrf.mxu0
        %v7748 = vadd.f32 0.0, %v7747
        %v7749 = vpop.f32.mrf.mxu0
        %7750 = vdwg.mxu0
        %v7752 = vsel %vm3075, %v7568, 0
        %v7755 = vsel %vm3075, %v7569, 0
        %7757 = vmatprep.subr.bf16.mxu0 0
        %7758 = vmatpush1.bf16.msra.mxu0 0
        %7759 = vmatprep.subr.bf16.mxu0 0
        %7760 = vmatpush1.bf16.msra.mxu0 0
        %7761 = vmatprep.subr.bf16.mxu0 0
        %7762 = vmatpush1.bf16.msra.mxu0 0
        %7763 = vmatprep.subr.bf16.mxu0 0
        %7764 = vmatpush1.bf16.msra.mxu0 0
        %7765 = vmatprep.subr.bf16.mxu0 0
        %7766 = vmatpush1.bf16.msra.mxu0 0
        %7767 = vmatprep.subr.bf16.mxu0 0
        %7768 = vmatpush1.bf16.msra.mxu0 0
        %7769 = vmatprep.subr.bf16.mxu0 0
        %7770 = vmatpush1.bf16.msra.mxu0 %v7581
        %7771 = vmatprep.subr.bf16.mxu0 0
        %7772 = vmatpush1.bf16.msra.mxu0 %v7580
        %7773 = vmatprep.subr.bf16.mxu0 0
        %7774 = vmatpush2.bf16.msra.mxu0 0
        %7775 = vmatprep.subr.bf16.mxu0 0
        %7776 = vmatpush2.bf16.msra.mxu0 0
        %7777 = vmatprep.subr.bf16.mxu0 0
        %7778 = vmatpush2.bf16.msra.mxu0 0
        %7779 = vmatprep.subr.bf16.mxu0 0
        %7780 = vmatpush2.bf16.msra.mxu0 0
        %7781 = vmatprep.subr.bf16.mxu0 0
        %7782 = vmatpush2.bf16.msra.mxu0 0
        %7783 = vmatprep.subr.bf16.mxu0 0
        %7784 = vmatpush2.bf16.msra.mxu0 0
        %7785 = vmatprep.subr.bf16.mxu0 0
        %7786 = vmatpush2.bf16.msra.mxu0 0
        %7787 = vmatprep.subr.bf16.mxu0 0
        %7788 = vmatpush2.bf16.msra.mxu0 0
        %7789 = vmatprep.mubr.bf16.mxu0 0
        %7790 = vmatmul.mubr.bf16.gmra.mxu0 %v7752
        %v7791 = vpop.f32.mrf.mxu0
        %v7792 = vadd.f32 0.0, %v7791
        %v7793 = vpop.f32.mrf.mxu0
        %v7794 = vpop.f32.mrf.mxu0
        %v7795 = vadd.f32 0.0, %v7794
        %v7796 = vpop.f32.mrf.mxu0
        %7797 = vmatprep.mubr.bf16.mxu0 0
        %7798 = vmatmul.mubr.bf16.gmra.mxu0 %v7755
        %v7799 = vpop.f32.mrf.mxu0
        %v7800 = vadd.f32 0.0, %v7799
        %v7801 = vpop.f32.mrf.mxu0
        %v7802 = vpop.f32.mrf.mxu0
        %v7803 = vadd.f32 0.0, %v7802
        %v7804 = vpop.f32.mrf.mxu0
        %7805 = vdwg.mxu0
        %v7807 = vsel %vm3075, %v7570, 0
        %v7810 = vsel %vm3075, %v7571, 0
        %7812 = vmatprep.subr.bf16.mxu0 0
        %7813 = vmatpush1.bf16.msra.mxu0 0
        %7814 = vmatprep.subr.bf16.mxu0 0
        %7815 = vmatpush1.bf16.msra.mxu0 0
        %7816 = vmatprep.subr.bf16.mxu0 0
        %7817 = vmatpush1.bf16.msra.mxu0 0
        %7818 = vmatprep.subr.bf16.mxu0 0
        %7819 = vmatpush1.bf16.msra.mxu0 0
        %7820 = vmatprep.subr.bf16.mxu0 0
        %7821 = vmatpush1.bf16.msra.mxu0 0
        %7822 = vmatprep.subr.bf16.mxu0 0
        %7823 = vmatpush1.bf16.msra.mxu0 0
        %7824 = vmatprep.subr.bf16.mxu0 0
        %7825 = vmatpush1.bf16.msra.mxu0 %v7583
        %7826 = vmatprep.subr.bf16.mxu0 0
        %7827 = vmatpush1.bf16.msra.mxu0 %v7582
        %7828 = vmatprep.subr.bf16.mxu0 0
        %7829 = vmatpush2.bf16.msra.mxu0 0
        %7830 = vmatprep.subr.bf16.mxu0 0
        %7831 = vmatpush2.bf16.msra.mxu0 0
        %7832 = vmatprep.subr.bf16.mxu0 0
        %7833 = vmatpush2.bf16.msra.mxu0 0
        %7834 = vmatprep.subr.bf16.mxu0 0
        %7835 = vmatpush2.bf16.msra.mxu0 0
        %7836 = vmatprep.subr.bf16.mxu0 0
        %7837 = vmatpush2.bf16.msra.mxu0 0
        %7838 = vmatprep.subr.bf16.mxu0 0
        %7839 = vmatpush2.bf16.msra.mxu0 0
        %7840 = vmatprep.subr.bf16.mxu0 0
        %7841 = vmatpush2.bf16.msra.mxu0 0
        %7842 = vmatprep.subr.bf16.mxu0 0
        %7843 = vmatpush2.bf16.msra.mxu0 0
        %7844 = vmatprep.mubr.bf16.mxu0 0
        %7845 = vmatmul.mubr.bf16.gmra.mxu0 %v7807
        %v7846 = vpop.f32.mrf.mxu0
        %v7847 = vadd.f32 0.0, %v7846
        %v7848 = vpop.f32.mrf.mxu0
        %v7849 = vpop.f32.mrf.mxu0
        %v7850 = vadd.f32 0.0, %v7849
        %v7851 = vpop.f32.mrf.mxu0
        %7852 = vmatprep.mubr.bf16.mxu0 0
        %7853 = vmatmul.mubr.bf16.gmra.mxu0 %v7810
        %v7854 = vpop.f32.mrf.mxu0
        %v7855 = vadd.f32 0.0, %v7854
        %v7856 = vpop.f32.mrf.mxu0
        %v7857 = vpop.f32.mrf.mxu0
        %v7858 = vadd.f32 0.0, %v7857
        %v7859 = vpop.f32.mrf.mxu0
        %7860 = vdwg.mxu0
        %v7862 = vsel %vm3075, %v7572, 0
        %v7865 = vsel %vm3075, %v7573, 0
        %7867 = vmatprep.subr.bf16.mxu0 0
        %7868 = vmatpush1.bf16.msra.mxu0 0
        %7869 = vmatprep.subr.bf16.mxu0 0
        %7870 = vmatpush1.bf16.msra.mxu0 0
        %7871 = vmatprep.subr.bf16.mxu0 0
        %7872 = vmatpush1.bf16.msra.mxu0 0
        %7873 = vmatprep.subr.bf16.mxu0 0
        %7874 = vmatpush1.bf16.msra.mxu0 0
        %7875 = vmatprep.subr.bf16.mxu0 0
        %7876 = vmatpush1.bf16.msra.mxu0 0
        %7877 = vmatprep.subr.bf16.mxu0 0
        %7878 = vmatpush1.bf16.msra.mxu0 0
        %7879 = vmatprep.subr.bf16.mxu0 0
        %7880 = vmatpush1.bf16.msra.mxu0 %v7585
        %7881 = vmatprep.subr.bf16.mxu0 0
        %7882 = vmatpush1.bf16.msra.mxu0 %v7584
        %7883 = vmatprep.subr.bf16.mxu0 0
        %7884 = vmatpush2.bf16.msra.mxu0 0
        %7885 = vmatprep.subr.bf16.mxu0 0
        %7886 = vmatpush2.bf16.msra.mxu0 0
        %7887 = vmatprep.subr.bf16.mxu0 0
        %7888 = vmatpush2.bf16.msra.mxu0 0
        %7889 = vmatprep.subr.bf16.mxu0 0
        %7890 = vmatpush2.bf16.msra.mxu0 0
        %7891 = vmatprep.subr.bf16.mxu0 0
        %7892 = vmatpush2.bf16.msra.mxu0 0
        %7893 = vmatprep.subr.bf16.mxu0 0
        %7894 = vmatpush2.bf16.msra.mxu0 0
        %7895 = vmatprep.subr.bf16.mxu0 0
        %7896 = vmatpush2.bf16.msra.mxu0 0
        %7897 = vmatprep.subr.bf16.mxu0 0
        %7898 = vmatpush2.bf16.msra.mxu0 0
        %7899 = vmatprep.mubr.bf16.mxu0 0
        %7900 = vmatmul.mubr.bf16.gmra.mxu0 %v7862
        %v7901 = vpop.f32.mrf.mxu0
        %v7902 = vadd.f32 0.0, %v7901
        %v7903 = vpop.f32.mrf.mxu0
        %v7904 = vpop.f32.mrf.mxu0
        %v7905 = vadd.f32 0.0, %v7904
        %v7906 = vpop.f32.mrf.mxu0
        %7907 = vmatprep.mubr.bf16.mxu0 0
        %7908 = vmatmul.mubr.bf16.gmra.mxu0 %v7865
        %v7909 = vpop.f32.mrf.mxu0
        %v7910 = vadd.f32 0.0, %v7909
        %v7911 = vpop.f32.mrf.mxu0
        %v7912 = vpop.f32.mrf.mxu0
        %v7913 = vadd.f32 0.0, %v7912
        %v7914 = vpop.f32.mrf.mxu0
        %7915 = vdwg.mxu0
        %v7916 = vmul.f32 %v7627, %v7538
        %v7917 = vmul.f32 %v7630, %v7539
        %v7918 = vmul.f32 %v7635, %v7540
        %v7919 = vmul.f32 %v7638, %v7541
        %v7920 = vmul.f32 %v7682, %v7542
        %v7921 = vmul.f32 %v7685, %v7543
        %v7922 = vmul.f32 %v7690, %v7544
        %v7923 = vmul.f32 %v7693, %v7545
        %v7924 = vmul.f32 %v7737, %v7546
        %v7925 = vmul.f32 %v7740, %v7547
        %v7926 = vmul.f32 %v7745, %v7548
        %v7927 = vmul.f32 %v7748, %v7549
        %v7928 = vmul.f32 %v7792, %v7550
        %v7929 = vmul.f32 %v7795, %v7551
        %v7930 = vmul.f32 %v7800, %v7552
        %v7931 = vmul.f32 %v7803, %v7553
        %v7932 = vmul.f32 %v7847, %v7554
        %v7933 = vmul.f32 %v7850, %v7555
        %v7934 = vmul.f32 %v7855, %v7556
        %v7935 = vmul.f32 %v7858, %v7557
        %v7936 = vmul.f32 %v7902, %v7558
        %v7937 = vmul.f32 %v7905, %v7559
        %v7938 = vmul.f32 %v7910, %v7560
        %v7939 = vmul.f32 %v7913, %v7561
        %v7940 = vpack.c.bf16 %v7917, %v7916
        %v7941 = vpack.c.bf16 %v7919, %v7918
        %v7942 = vpack.c.bf16 %v7921, %v7920
        %v7943 = vpack.c.bf16 %v7923, %v7922
        %v7944 = vpack.c.bf16 %v7925, %v7924
        %v7945 = vpack.c.bf16 %v7927, %v7926
        %v7946 = vpack.c.bf16 %v7929, %v7928
        %v7947 = vpack.c.bf16 %v7931, %v7930
        %v7948 = vpack.c.bf16 %v7933, %v7932
        %v7949 = vpack.c.bf16 %v7935, %v7934
        %v7950 = vpack.c.bf16 %v7937, %v7936
        %v7951 = vpack.c.bf16 %v7939, %v7938
        %s7952 = scalar_lea.vmem %s6, 48
        %v7953 = vld [vmem:[%s7952] sm:$0xf]
        %v7954 = vld [vmem:[%s7952 + $0x4] sm:$0xf]
        %v7955 = vld [vmem:[%s7952 + $0x8] sm:$0xf]
        %v7956 = vld [vmem:[%s7952 + $0xc] sm:$0xf]
        %v7957 = vld [vmem:[%s7952 + $0x10] sm:$0xf]
        %v7958 = vld [vmem:[%s7952 + $0x14] sm:$0xf]
        %v7959 = vld [vmem:[%s7952 + $0x18] sm:$0xf]
        %v7960 = vld [vmem:[%s7952 + $0x1c] sm:$0xf]
        %v7961 = vld [vmem:[%s7952 + $0x20] sm:$0xf]
        %v7962 = vld [vmem:[%s7952 + $0x24] sm:$0xf]
        %v7963 = vld [vmem:[%s7952 + $0x28] sm:$0xf]
        %v7964 = vld [vmem:[%s7952 + $0x2c] sm:$0xf]
        %v7967 = vunpack.c.l.b16 %v7953
        %v7968 = vunpack.c.l.b16 %v7954
        %v7969 = vpack.c.b16 %v7968, %v7967
        %v7972 = vsel %vm2676, %v7940, 0
        %v7975 = vsel %vm2676, %v7941, 0
        %7977 = vmatprep.subr.bf16.mxu0 0
        %7978 = vmatpush1.bf16.msra.mxu0 0
        %7979 = vmatprep.subr.bf16.mxu0 0
        %7980 = vmatpush1.bf16.msra.mxu0 0
        %7981 = vmatprep.subr.bf16.mxu0 0
        %7982 = vmatpush1.bf16.msra.mxu0 0
        %7983 = vmatprep.subr.bf16.mxu0 0
        %7984 = vmatpush1.bf16.msra.mxu0 0
        %7985 = vmatprep.subr.bf16.mxu0 0
        %7986 = vmatpush1.bf16.msra.mxu0 0
        %7987 = vmatprep.subr.bf16.mxu0 0
        %7988 = vmatpush1.bf16.msra.mxu0 0
        %7989 = vmatprep.subr.bf16.mxu0 0
        %7990 = vmatpush1.bf16.msra.mxu0 0
        %7991 = vmatprep.subr.bf16.mxu0 0
        %7992 = vmatpush1.bf16.msra.mxu0 %v7969
        %7993 = vmatprep.subr.bf16.mxu0 0
        %7994 = vmatpush2.bf16.msra.mxu0 0
        %7995 = vmatprep.subr.bf16.mxu0 0
        %7996 = vmatpush2.bf16.msra.mxu0 0
        %7997 = vmatprep.subr.bf16.mxu0 0
        %7998 = vmatpush2.bf16.msra.mxu0 0
        %7999 = vmatprep.subr.bf16.mxu0 0
        %8000 = vmatpush2.bf16.msra.mxu0 0
        %8001 = vmatprep.subr.bf16.mxu0 0
        %8002 = vmatpush2.bf16.msra.mxu0 0
        %8003 = vmatprep.subr.bf16.mxu0 0
        %8004 = vmatpush2.bf16.msra.mxu0 0
        %8005 = vmatprep.subr.bf16.mxu0 0
        %8006 = vmatpush2.bf16.msra.mxu0 0
        %8007 = vmatprep.subr.bf16.mxu0 0
        %8008 = vmatpush2.bf16.msra.mxu0 0
        %8009 = vmatprep.mubr.bf16.mxu0 0
        %8010 = vmatmul.mubr.bf16.gmra.mxu0 %v7972
        %v8011 = vpop.f32.mrf.mxu0
        %v8012 = vadd.f32 0.0, %v8011
        %v8013 = vpop.f32.mrf.mxu0
        %v8014 = vpop.f32.mrf.mxu0
        %v8015 = vadd.f32 0.0, %v8014
        %v8016 = vpop.f32.mrf.mxu0
        %8017 = vmatprep.mubr.bf16.mxu0 0
        %8018 = vmatmul.mubr.bf16.gmra.mxu0 %v7975
        %v8019 = vpop.f32.mrf.mxu0
        %v8020 = vadd.f32 0.0, %v8019
        %v8021 = vpop.f32.mrf.mxu0
        %v8022 = vpop.f32.mrf.mxu0
        %v8023 = vadd.f32 0.0, %v8022
        %v8024 = vpop.f32.mrf.mxu0
        %8025 = vdwg.mxu0
        %v8028 = vunpack.c.l.b16 %v7955
        %v8029 = vunpack.c.l.b16 %v7956
        %v8030 = vpack.c.b16 %v8029, %v8028
        %v8033 = vsel %vm2676, %v7942, 0
        %v8036 = vsel %vm2676, %v7943, 0
        %8038 = vmatprep.subr.bf16.mxu0 0
        %8039 = vmatpush1.bf16.msra.mxu0 0
        %8040 = vmatprep.subr.bf16.mxu0 0
        %8041 = vmatpush1.bf16.msra.mxu0 0
        %8042 = vmatprep.subr.bf16.mxu0 0
        %8043 = vmatpush1.bf16.msra.mxu0 0
        %8044 = vmatprep.subr.bf16.mxu0 0
        %8045 = vmatpush1.bf16.msra.mxu0 0
        %8046 = vmatprep.subr.bf16.mxu0 0
        %8047 = vmatpush1.bf16.msra.mxu0 0
        %8048 = vmatprep.subr.bf16.mxu0 0
        %8049 = vmatpush1.bf16.msra.mxu0 0
        %8050 = vmatprep.subr.bf16.mxu0 0
        %8051 = vmatpush1.bf16.msra.mxu0 0
        %8052 = vmatprep.subr.bf16.mxu0 0
        %8053 = vmatpush1.bf16.msra.mxu0 %v8030
        %8054 = vmatprep.subr.bf16.mxu0 0
        %8055 = vmatpush2.bf16.msra.mxu0 0
        %8056 = vmatprep.subr.bf16.mxu0 0
        %8057 = vmatpush2.bf16.msra.mxu0 0
        %8058 = vmatprep.subr.bf16.mxu0 0
        %8059 = vmatpush2.bf16.msra.mxu0 0
        %8060 = vmatprep.subr.bf16.mxu0 0
        %8061 = vmatpush2.bf16.msra.mxu0 0
        %8062 = vmatprep.subr.bf16.mxu0 0
        %8063 = vmatpush2.bf16.msra.mxu0 0
        %8064 = vmatprep.subr.bf16.mxu0 0
        %8065 = vmatpush2.bf16.msra.mxu0 0
        %8066 = vmatprep.subr.bf16.mxu0 0
        %8067 = vmatpush2.bf16.msra.mxu0 0
        %8068 = vmatprep.subr.bf16.mxu0 0
        %8069 = vmatpush2.bf16.msra.mxu0 0
        %8070 = vmatprep.mubr.bf16.mxu0 0
        %8071 = vmatmul.mubr.bf16.gmra.mxu0 %v8033
        %v8072 = vpop.f32.mrf.mxu0
        %v8073 = vadd.f32 0.0, %v8072
        %v8074 = vpop.f32.mrf.mxu0
        %v8075 = vpop.f32.mrf.mxu0
        %v8076 = vadd.f32 0.0, %v8075
        %v8077 = vpop.f32.mrf.mxu0
        %8078 = vmatprep.mubr.bf16.mxu0 0
        %8079 = vmatmul.mubr.bf16.gmra.mxu0 %v8036
        %v8080 = vpop.f32.mrf.mxu0
        %v8081 = vadd.f32 0.0, %v8080
        %v8082 = vpop.f32.mrf.mxu0
        %v8083 = vpop.f32.mrf.mxu0
        %v8084 = vadd.f32 0.0, %v8083
        %v8085 = vpop.f32.mrf.mxu0
        %8086 = vdwg.mxu0
        %v8089 = vunpack.c.l.b16 %v7957
        %v8090 = vunpack.c.l.b16 %v7958
        %v8091 = vpack.c.b16 %v8090, %v8089
        %v8094 = vsel %vm2676, %v7944, 0
        %v8097 = vsel %vm2676, %v7945, 0
        %8099 = vmatprep.subr.bf16.mxu0 0
        %8100 = vmatpush1.bf16.msra.mxu0 0
        %8101 = vmatprep.subr.bf16.mxu0 0
        %8102 = vmatpush1.bf16.msra.mxu0 0
        %8103 = vmatprep.subr.bf16.mxu0 0
        %8104 = vmatpush1.bf16.msra.mxu0 0
        %8105 = vmatprep.subr.bf16.mxu0 0
        %8106 = vmatpush1.bf16.msra.mxu0 0
        %8107 = vmatprep.subr.bf16.mxu0 0
        %8108 = vmatpush1.bf16.msra.mxu0 0
        %8109 = vmatprep.subr.bf16.mxu0 0
        %8110 = vmatpush1.bf16.msra.mxu0 0
        %8111 = vmatprep.subr.bf16.mxu0 0
        %8112 = vmatpush1.bf16.msra.mxu0 0
        %8113 = vmatprep.subr.bf16.mxu0 0
        %8114 = vmatpush1.bf16.msra.mxu0 %v8091
        %8115 = vmatprep.subr.bf16.mxu0 0
        %8116 = vmatpush2.bf16.msra.mxu0 0
        %8117 = vmatprep.subr.bf16.mxu0 0
        %8118 = vmatpush2.bf16.msra.mxu0 0
        %8119 = vmatprep.subr.bf16.mxu0 0
        %8120 = vmatpush2.bf16.msra.mxu0 0
        %8121 = vmatprep.subr.bf16.mxu0 0
        %8122 = vmatpush2.bf16.msra.mxu0 0
        %8123 = vmatprep.subr.bf16.mxu0 0
        %8124 = vmatpush2.bf16.msra.mxu0 0
        %8125 = vmatprep.subr.bf16.mxu0 0
        %8126 = vmatpush2.bf16.msra.mxu0 0
        %8127 = vmatprep.subr.bf16.mxu0 0
        %8128 = vmatpush2.bf16.msra.mxu0 0
        %8129 = vmatprep.subr.bf16.mxu0 0
        %8130 = vmatpush2.bf16.msra.mxu0 0
        %8131 = vmatprep.mubr.bf16.mxu0 0
        %8132 = vmatmul.mubr.bf16.gmra.mxu0 %v8094
        %v8133 = vpop.f32.mrf.mxu0
        %v8134 = vadd.f32 0.0, %v8133
        %v8135 = vpop.f32.mrf.mxu0
        %v8136 = vpop.f32.mrf.mxu0
        %v8137 = vadd.f32 0.0, %v8136
        %v8138 = vpop.f32.mrf.mxu0
        %8139 = vmatprep.mubr.bf16.mxu0 0
        %8140 = vmatmul.mubr.bf16.gmra.mxu0 %v8097
        %v8141 = vpop.f32.mrf.mxu0
        %v8142 = vadd.f32 0.0, %v8141
        %v8143 = vpop.f32.mrf.mxu0
        %v8144 = vpop.f32.mrf.mxu0
        %v8145 = vadd.f32 0.0, %v8144
        %v8146 = vpop.f32.mrf.mxu0
        %8147 = vdwg.mxu0
        %v8150 = vunpack.c.l.b16 %v7959
        %v8151 = vunpack.c.l.b16 %v7960
        %v8152 = vpack.c.b16 %v8151, %v8150
        %v8155 = vsel %vm2676, %v7946, 0
        %v8158 = vsel %vm2676, %v7947, 0
        %8160 = vmatprep.subr.bf16.mxu0 0
        %8161 = vmatpush1.bf16.msra.mxu0 0
        %8162 = vmatprep.subr.bf16.mxu0 0
        %8163 = vmatpush1.bf16.msra.mxu0 0
        %8164 = vmatprep.subr.bf16.mxu0 0
        %8165 = vmatpush1.bf16.msra.mxu0 0
        %8166 = vmatprep.subr.bf16.mxu0 0
        %8167 = vmatpush1.bf16.msra.mxu0 0
        %8168 = vmatprep.subr.bf16.mxu0 0
        %8169 = vmatpush1.bf16.msra.mxu0 0
        %8170 = vmatprep.subr.bf16.mxu0 0
        %8171 = vmatpush1.bf16.msra.mxu0 0
        %8172 = vmatprep.subr.bf16.mxu0 0
        %8173 = vmatpush1.bf16.msra.mxu0 0
        %8174 = vmatprep.subr.bf16.mxu0 0
        %8175 = vmatpush1.bf16.msra.mxu0 %v8152
        %8176 = vmatprep.subr.bf16.mxu0 0
        %8177 = vmatpush2.bf16.msra.mxu0 0
        %8178 = vmatprep.subr.bf16.mxu0 0
        %8179 = vmatpush2.bf16.msra.mxu0 0
        %8180 = vmatprep.subr.bf16.mxu0 0
        %8181 = vmatpush2.bf16.msra.mxu0 0
        %8182 = vmatprep.subr.bf16.mxu0 0
        %8183 = vmatpush2.bf16.msra.mxu0 0
        %8184 = vmatprep.subr.bf16.mxu0 0
        %8185 = vmatpush2.bf16.msra.mxu0 0
        %8186 = vmatprep.subr.bf16.mxu0 0
        %8187 = vmatpush2.bf16.msra.mxu0 0
        %8188 = vmatprep.subr.bf16.mxu0 0
        %8189 = vmatpush2.bf16.msra.mxu0 0
        %8190 = vmatprep.subr.bf16.mxu0 0
        %8191 = vmatpush2.bf16.msra.mxu0 0
        %8192 = vmatprep.mubr.bf16.mxu0 0
        %8193 = vmatmul.mubr.bf16.gmra.mxu0 %v8155
        %v8194 = vpop.f32.mrf.mxu0
        %v8195 = vadd.f32 0.0, %v8194
        %v8196 = vpop.f32.mrf.mxu0
        %v8197 = vpop.f32.mrf.mxu0
        %v8198 = vadd.f32 0.0, %v8197
        %v8199 = vpop.f32.mrf.mxu0
        %8200 = vmatprep.mubr.bf16.mxu0 0
        %8201 = vmatmul.mubr.bf16.gmra.mxu0 %v8158
        %v8202 = vpop.f32.mrf.mxu0
        %v8203 = vadd.f32 0.0, %v8202
        %v8204 = vpop.f32.mrf.mxu0
        %v8205 = vpop.f32.mrf.mxu0
        %v8206 = vadd.f32 0.0, %v8205
        %v8207 = vpop.f32.mrf.mxu0
        %8208 = vdwg.mxu0
        %v8211 = vunpack.c.l.b16 %v7961
        %v8212 = vunpack.c.l.b16 %v7962
        %v8213 = vpack.c.b16 %v8212, %v8211
        %v8216 = vsel %vm2676, %v7948, 0
        %v8219 = vsel %vm2676, %v7949, 0
        %8221 = vmatprep.subr.bf16.mxu0 0
        %8222 = vmatpush1.bf16.msra.mxu0 0
        %8223 = vmatprep.subr.bf16.mxu0 0
        %8224 = vmatpush1.bf16.msra.mxu0 0
        %8225 = vmatprep.subr.bf16.mxu0 0
        %8226 = vmatpush1.bf16.msra.mxu0 0
        %8227 = vmatprep.subr.bf16.mxu0 0
        %8228 = vmatpush1.bf16.msra.mxu0 0
        %8229 = vmatprep.subr.bf16.mxu0 0
        %8230 = vmatpush1.bf16.msra.mxu0 0
        %8231 = vmatprep.subr.bf16.mxu0 0
        %8232 = vmatpush1.bf16.msra.mxu0 0
        %8233 = vmatprep.subr.bf16.mxu0 0
        %8234 = vmatpush1.bf16.msra.mxu0 0
        %8235 = vmatprep.subr.bf16.mxu0 0
        %8236 = vmatpush1.bf16.msra.mxu0 %v8213
        %8237 = vmatprep.subr.bf16.mxu0 0
        %8238 = vmatpush2.bf16.msra.mxu0 0
        %8239 = vmatprep.subr.bf16.mxu0 0
        %8240 = vmatpush2.bf16.msra.mxu0 0
        %8241 = vmatprep.subr.bf16.mxu0 0
        %8242 = vmatpush2.bf16.msra.mxu0 0
        %8243 = vmatprep.subr.bf16.mxu0 0
        %8244 = vmatpush2.bf16.msra.mxu0 0
        %8245 = vmatprep.subr.bf16.mxu0 0
        %8246 = vmatpush2.bf16.msra.mxu0 0
        %8247 = vmatprep.subr.bf16.mxu0 0
        %8248 = vmatpush2.bf16.msra.mxu0 0
        %8249 = vmatprep.subr.bf16.mxu0 0
        %8250 = vmatpush2.bf16.msra.mxu0 0
        %8251 = vmatprep.subr.bf16.mxu0 0
        %8252 = vmatpush2.bf16.msra.mxu0 0
        %8253 = vmatprep.mubr.bf16.mxu0 0
        %8254 = vmatmul.mubr.bf16.gmra.mxu0 %v8216
        %v8255 = vpop.f32.mrf.mxu0
        %v8256 = vadd.f32 0.0, %v8255
        %v8257 = vpop.f32.mrf.mxu0
        %v8258 = vpop.f32.mrf.mxu0
        %v8259 = vadd.f32 0.0, %v8258
        %v8260 = vpop.f32.mrf.mxu0
        %8261 = vmatprep.mubr.bf16.mxu0 0
        %8262 = vmatmul.mubr.bf16.gmra.mxu0 %v8219
        %v8263 = vpop.f32.mrf.mxu0
        %v8264 = vadd.f32 0.0, %v8263
        %v8265 = vpop.f32.mrf.mxu0
        %v8266 = vpop.f32.mrf.mxu0
        %v8267 = vadd.f32 0.0, %v8266
        %v8268 = vpop.f32.mrf.mxu0
        %8269 = vdwg.mxu0
        %v8272 = vunpack.c.l.b16 %v7963
        %v8273 = vunpack.c.l.b16 %v7964
        %v8274 = vpack.c.b16 %v8273, %v8272
        %v8277 = vsel %vm2676, %v7950, 0
        %v8280 = vsel %vm2676, %v7951, 0
        %8282 = vmatprep.subr.bf16.mxu0 0
        %8283 = vmatpush1.bf16.msra.mxu0 0
        %8284 = vmatprep.subr.bf16.mxu0 0
        %8285 = vmatpush1.bf16.msra.mxu0 0
        %8286 = vmatprep.subr.bf16.mxu0 0
        %8287 = vmatpush1.bf16.msra.mxu0 0
        %8288 = vmatprep.subr.bf16.mxu0 0
        %8289 = vmatpush1.bf16.msra.mxu0 0
        %8290 = vmatprep.subr.bf16.mxu0 0
        %8291 = vmatpush1.bf16.msra.mxu0 0
        %8292 = vmatprep.subr.bf16.mxu0 0
        %8293 = vmatpush1.bf16.msra.mxu0 0
        %8294 = vmatprep.subr.bf16.mxu0 0
        %8295 = vmatpush1.bf16.msra.mxu0 0
        %8296 = vmatprep.subr.bf16.mxu0 0
        %8297 = vmatpush1.bf16.msra.mxu0 %v8274
        %8298 = vmatprep.subr.bf16.mxu0 0
        %8299 = vmatpush2.bf16.msra.mxu0 0
        %8300 = vmatprep.subr.bf16.mxu0 0
        %8301 = vmatpush2.bf16.msra.mxu0 0
        %8302 = vmatprep.subr.bf16.mxu0 0
        %8303 = vmatpush2.bf16.msra.mxu0 0
        %8304 = vmatprep.subr.bf16.mxu0 0
        %8305 = vmatpush2.bf16.msra.mxu0 0
        %8306 = vmatprep.subr.bf16.mxu0 0
        %8307 = vmatpush2.bf16.msra.mxu0 0
        %8308 = vmatprep.subr.bf16.mxu0 0
        %8309 = vmatpush2.bf16.msra.mxu0 0
        %8310 = vmatprep.subr.bf16.mxu0 0
        %8311 = vmatpush2.bf16.msra.mxu0 0
        %8312 = vmatprep.subr.bf16.mxu0 0
        %8313 = vmatpush2.bf16.msra.mxu0 0
        %8314 = vmatprep.mubr.bf16.mxu0 0
        %8315 = vmatmul.mubr.bf16.gmra.mxu0 %v8277
        %v8316 = vpop.f32.mrf.mxu0
        %v8317 = vadd.f32 0.0, %v8316
        %v8318 = vpop.f32.mrf.mxu0
        %v8319 = vpop.f32.mrf.mxu0
        %v8320 = vadd.f32 0.0, %v8319
        %v8321 = vpop.f32.mrf.mxu0
        %8322 = vmatprep.mubr.bf16.mxu0 0
        %8323 = vmatmul.mubr.bf16.gmra.mxu0 %v8280
        %v8324 = vpop.f32.mrf.mxu0
        %v8325 = vadd.f32 0.0, %v8324
        %v8326 = vpop.f32.mrf.mxu0
        %v8327 = vpop.f32.mrf.mxu0
        %v8328 = vadd.f32 0.0, %v8327
        %v8329 = vpop.f32.mrf.mxu0
        %8330 = vdwg.mxu0
        %v8331 = vadd.f32 %v8012, %v8073
        %v8332 = vadd.f32 %v8331, %v8134
        %v8333 = vadd.f32 %v8332, %v8195
        %v8334 = vadd.f32 %v8333, %v8256
        %v8335 = vadd.f32 %v8334, %v8317
        %v8336 = vadd.f32 %v8015, %v8076
        %v8337 = vadd.f32 %v8336, %v8137
        %v8338 = vadd.f32 %v8337, %v8198
        %v8339 = vadd.f32 %v8338, %v8259
        %v8340 = vadd.f32 %v8339, %v8320
        %v8341 = vadd.f32 %v8020, %v8081
        %v8342 = vadd.f32 %v8341, %v8142
        %v8343 = vadd.f32 %v8342, %v8203
        %v8344 = vadd.f32 %v8343, %v8264
        %v8345 = vadd.f32 %v8344, %v8325
        %v8346 = vadd.f32 %v8023, %v8084
        %v8347 = vadd.f32 %v8346, %v8145
        %v8348 = vadd.f32 %v8347, %v8206
        %v8349 = vadd.f32 %v8348, %v8267
        %v8350 = vadd.f32 %v8349, %v8328
        %v8351 = vadd.f32 %v4789, %v8335
        %v8352 = vadd.f32 %v4790, %v8340
        %v8353 = vadd.f32 %v4791, %v8345
        %v8354 = vadd.f32 %v4792, %v8350
        %s8355 = scalar_lea.vmem %s7, 1
        %v8356 = vld [vmem:[%s8355] sm:$0x1]
        %v8358 = vlaneseq
        %v8359 = vshrl.u32 %v8358, 7
        %v8360 = vsub.s32 0, %v8359
        %v8361 = vrot.slane %v8356, %v8360
        %v8363 = vadd.f32 %v8351, %v8361
        %v8364 = vadd.f32 %v8352, %v8361
        %v8365 = vadd.f32 %v8353, %v8361
        %v8366 = vadd.f32 %v8354, %v8361
        %s8367 = scalar_lea.vmem %s8, 1
        %v8368 = vld [vmem:[%s8367] sm:$0x1]
        %s8369 = scalar_lea.vmem %s9, 1
        %v8370 = vld [vmem:[%s8369] sm:$0x1]
        %v8371 = vmul.f32 %v8363, %v541
        %v8372 = vmul.f32 %v8364, %v541
        %v8373 = vmul.f32 %v8365, %v541
        %v8374 = vmul.f32 %v8366, %v541
        %8375 = vadd.xlane.f32.xlu0 %v8371
        %v8376 = vpop.xlane.xlu0 %8375
        %8377 = vadd.xlane.f32.xlu0 %v8372
        %v8378 = vpop.xlane.xlu0 %8377
        %8379 = vadd.xlane.f32.xlu0 %v8373
        %v8380 = vpop.xlane.xlu0 %8379
        %8381 = vadd.xlane.f32.xlu0 %v8374
        %v8382 = vpop.xlane.xlu0 %8381
        %v8383 = vmul.f32 %v8376, 0.010416667
        %v8384 = vmul.f32 %v8378, 0.010416667
        %v8385 = vmul.f32 %v8380, 0.010416667
        %v8386 = vmul.f32 %v8382, 0.010416667
        %v8387 = vsub.f32 %v8363, %v8383
        %v8388 = vsub.f32 %v8364, %v8384
        %v8389 = vsub.f32 %v8365, %v8385
        %v8390 = vsub.f32 %v8366, %v8386
        %v8391 = vmul.f32 %v8387, %v541
        %v8392 = vmul.f32 %v8388, %v541
        %v8393 = vmul.f32 %v8389, %v541
        %v8394 = vmul.f32 %v8390, %v541
        %v8395 = vmul.f32 %v8391, %v8391
        %v8396 = vmul.f32 %v8392, %v8392
        %v8397 = vmul.f32 %v8393, %v8393
        %v8398 = vmul.f32 %v8394, %v8394
        %8399 = vadd.xlane.f32.xlu0 %v8395
        %v8400 = vpop.xlane.xlu0 %8399
        %8401 = vadd.xlane.f32.xlu0 %v8396
        %v8402 = vpop.xlane.xlu0 %8401
        %8403 = vadd.xlane.f32.xlu0 %v8397
        %v8404 = vpop.xlane.xlu0 %8403
        %8405 = vadd.xlane.f32.xlu0 %v8398
        %v8406 = vpop.xlane.xlu0 %8405
        %v8407 = vmul.f32 %v8400, 0.010416667
        %v8408 = vmul.f32 %v8402, 0.010416667
        %v8409 = vmul.f32 %v8404, 0.010416667
        %v8410 = vmul.f32 %v8406, 0.010416667
        %v8411 = vadd.f32 %v8407, 1e-05
        %v8412 = vadd.f32 %v8408, 1e-05
        %v8413 = vadd.f32 %v8409, 1e-05
        %v8414 = vadd.f32 %v8410, 1e-05
        %v8415 = vrsqrt.pop %v8411
        %v8416 = vrsqrt.pop %v8412
        %v8417 = vrsqrt.pop %v8413
        %v8418 = vrsqrt.pop %v8414
        %v8419 = vmul.f32 %v8391, %v8415
        %v8420 = vmul.f32 %v8392, %v8416
        %v8421 = vmul.f32 %v8393, %v8417
        %v8422 = vmul.f32 %v8394, %v8418
        %v8424 = vlaneseq
        %v8425 = vshrl.u32 %v8424, 7
        %v8426 = vsub.s32 0, %v8425
        %v8427 = vrot.slane %v8368, %v8426
        %v8429 = vmul.f32 %v8419, %v8427
        %v8430 = vmul.f32 %v8420, %v8427
        %v8431 = vmul.f32 %v8421, %v8427
        %v8432 = vmul.f32 %v8422, %v8427
        %v8434 = vlaneseq
        %v8435 = vshrl.u32 %v8434, 7
        %v8436 = vsub.s32 0, %v8435
        %v8437 = vrot.slane %v8370, %v8436
        %v8439 = vadd.f32 %v8429, %v8437
        %v8440 = vadd.f32 %v8430, %v8437
        %v8441 = vadd.f32 %v8431, %v8437
        %v8442 = vadd.f32 %v8432, %v8437
        %v8443 = vpack.c.bf16 %v8440, %v8439
        %v8444 = vpack.c.bf16 %v8442, %v8441
        %s8445 = scalar_lea.vmem %s10, 192
        %v8446 = vld [vmem:[%s8445] sm:$0xff]
        %v8447 = vld [vmem:[%s8445 + $0x8] sm:$0xf]
        %v8448 = vld [vmem:[%s8445 + $0xc] sm:$0xff]
        %v8449 = vld [vmem:[%s8445 + $0x14] sm:$0xf]
        %v8450 = vld [vmem:[%s8445 + $0x18] sm:$0xff]
        %v8451 = vld [vmem:[%s8445 + $0x20] sm:$0xf]
        %v8452 = vld [vmem:[%s8445 + $0x24] sm:$0xff]
        %v8453 = vld [vmem:[%s8445 + $0x2c] sm:$0xf]
        %v8454 = vld [vmem:[%s8445 + $0x30] sm:$0xff]
        %v8455 = vld [vmem:[%s8445 + $0x38] sm:$0xf]
        %v8456 = vld [vmem:[%s8445 + $0x3c] sm:$0xff]
        %v8457 = vld [vmem:[%s8445 + $0x44] sm:$0xf]
        %v8458 = vld [vmem:[%s8445 + $0x48] sm:$0xff]
        %v8459 = vld [vmem:[%s8445 + $0x50] sm:$0xf]
        %v8460 = vld [vmem:[%s8445 + $0x54] sm:$0xff]
        %v8461 = vld [vmem:[%s8445 + $0x5c] sm:$0xf]
        %v8462 = vld [vmem:[%s8445 + $0x60] sm:$0xff]
        %v8463 = vld [vmem:[%s8445 + $0x68] sm:$0xf]
        %v8464 = vld [vmem:[%s8445 + $0x6c] sm:$0xff]
        %v8465 = vld [vmem:[%s8445 + $0x74] sm:$0xf]
        %v8466 = vld [vmem:[%s8445 + $0x78] sm:$0xff]
        %v8467 = vld [vmem:[%s8445 + $0x80] sm:$0xf]
        %v8468 = vld [vmem:[%s8445 + $0x84] sm:$0xff]
        %v8469 = vld [vmem:[%s8445 + $0x8c] sm:$0xf]
        %v8470 = vld [vmem:[%s8445 + $0x90] sm:$0xff]
        %v8471 = vld [vmem:[%s8445 + $0x98] sm:$0xf]
        %v8472 = vld [vmem:[%s8445 + $0x9c] sm:$0xff]
        %v8473 = vld [vmem:[%s8445 + $0xa4] sm:$0xf]
        %v8474 = vld [vmem:[%s8445 + $0xa8] sm:$0xff]
        %v8475 = vld [vmem:[%s8445 + $0xb0] sm:$0xf]
        %v8476 = vld [vmem:[%s8445 + $0xb4] sm:$0xff]
        %v8477 = vld [vmem:[%s8445 + $0xbc] sm:$0xf]
        %s8478 = scalar_lea.vmem %s11, 3
        %v8479 = vld [vmem:[%s8478] sm:$0x7]
        %v8481 = vlaneseq
        %v8482 = vshrl.u32 %v8481, 7
        %v8483 = vsub.s32 0, %v8482
        %v8484 = vrot.slane %v8479, %v8483
        %v8485 = vlaneseq
        %v8486 = vshrl.u32 %v8485, 7
        %v8487 = vsub.s32 1, %v8486
        %v8488 = vrot.slane %v8479, %v8487
        %v8489 = vlaneseq
        %v8490 = vshrl.u32 %v8489, 7
        %v8491 = vsub.s32 2, %v8490
        %v8492 = vrot.slane %v8479, %v8491
        %v8528 = vunpack.c.l.b16 %v8446
        %v8529 = vunpack.c.h.b16 %v8446
        %v8530 = vunpack.c.l.b16 %v8447
        %v8531 = vunpack.c.l.b16 %v8448
        %v8532 = vunpack.c.h.b16 %v8448
        %v8533 = vunpack.c.l.b16 %v8449
        %v8534 = vunpack.c.l.b16 %v8450
        %v8535 = vunpack.c.h.b16 %v8450
        %v8536 = vunpack.c.l.b16 %v8451
        %v8537 = vunpack.c.l.b16 %v8452
        %v8538 = vunpack.c.h.b16 %v8452
        %v8539 = vunpack.c.l.b16 %v8453
        %v8540 = vunpack.c.l.b16 %v8454
        %v8541 = vunpack.c.h.b16 %v8454
        %v8542 = vunpack.c.l.b16 %v8455
        %v8543 = vunpack.c.l.b16 %v8456
        %v8544 = vunpack.c.h.b16 %v8456
        %v8545 = vunpack.c.l.b16 %v8457
        %v8546 = vunpack.c.l.b16 %v8458
        %v8547 = vunpack.c.h.b16 %v8458
        %v8548 = vunpack.c.l.b16 %v8459
        %v8549 = vunpack.c.l.b16 %v8460
        %v8550 = vunpack.c.h.b16 %v8460
        %v8551 = vunpack.c.l.b16 %v8461
        %v8552 = vunpack.c.l.b16 %v8462
        %v8553 = vunpack.c.h.b16 %v8462
        %v8554 = vunpack.c.l.b16 %v8463
        %v8555 = vunpack.c.l.b16 %v8464
        %v8556 = vunpack.c.h.b16 %v8464
        %v8557 = vunpack.c.l.b16 %v8465
        %v8558 = vunpack.c.l.b16 %v8466
        %v8559 = vunpack.c.h.b16 %v8466
        %v8560 = vunpack.c.l.b16 %v8467
        %v8561 = vunpack.c.l.b16 %v8468
        %v8562 = vunpack.c.h.b16 %v8468
        %v8563 = vunpack.c.l.b16 %v8469
        %v8564 = vunpack.c.l.b16 %v8470
        %v8565 = vunpack.c.h.b16 %v8470
        %v8566 = vunpack.c.l.b16 %v8471
        %v8567 = vunpack.c.l.b16 %v8472
        %v8568 = vunpack.c.h.b16 %v8472
        %v8569 = vunpack.c.l.b16 %v8473
        %v8570 = vunpack.c.l.b16 %v8474
        %v8571 = vunpack.c.h.b16 %v8474
        %v8572 = vunpack.c.l.b16 %v8475
        %v8573 = vunpack.c.l.b16 %v8476
        %v8574 = vunpack.c.h.b16 %v8476
        %v8575 = vunpack.c.l.b16 %v8477
        %v8576 = vpack.c.b16 %v8531, %v8528
        %v8577 = vpack.c.b16 %v8532, %v8529
        %v8578 = vpack.c.b16 %v8533, %v8530
        %v8579 = vpack.c.b16 %v8537, %v8534
        %v8580 = vpack.c.b16 %v8538, %v8535
        %v8581 = vpack.c.b16 %v8539, %v8536
        %v8582 = vpack.c.b16 %v8543, %v8540
        %v8583 = vpack.c.b16 %v8544, %v8541
        %v8584 = vpack.c.b16 %v8545, %v8542
        %v8585 = vpack.c.b16 %v8549, %v8546
        %v8586 = vpack.c.b16 %v8550, %v8547
        %v8587 = vpack.c.b16 %v8551, %v8548
        %v8588 = vpack.c.b16 %v8555, %v8552
        %v8589 = vpack.c.b16 %v8556, %v8553
        %v8590 = vpack.c.b16 %v8557, %v8554
        %v8591 = vpack.c.b16 %v8561, %v8558
        %v8592 = vpack.c.b16 %v8562, %v8559
        %v8593 = vpack.c.b16 %v8563, %v8560
        %v8594 = vpack.c.b16 %v8567, %v8564
        %v8595 = vpack.c.b16 %v8568, %v8565
        %v8596 = vpack.c.b16 %v8569, %v8566
        %v8597 = vpack.c.b16 %v8573, %v8570
        %v8598 = vpack.c.b16 %v8574, %v8571
        %v8599 = vpack.c.b16 %v8575, %v8572
        %8624 = vmatprep.subr.bf16.mxu0 %v8598
        %8625 = vmatpush1.bf16.msra.mxu0 %v8597
        %8626 = vmatprep.subr.bf16.mxu0 %v8595
        %8627 = vmatpush1.bf16.msra.mxu0 %v8594
        %8628 = vmatprep.subr.bf16.mxu0 %v8592
        %8629 = vmatpush1.bf16.msra.mxu0 %v8591
        %8630 = vmatprep.subr.bf16.mxu0 %v8589
        %8631 = vmatpush1.bf16.msra.mxu0 %v8588
        %8632 = vmatprep.subr.bf16.mxu0 %v8586
        %8633 = vmatpush1.bf16.msra.mxu0 %v8585
        %8634 = vmatprep.subr.bf16.mxu0 %v8583
        %8635 = vmatpush1.bf16.msra.mxu0 %v8582
        %8636 = vmatprep.subr.bf16.mxu0 %v8580
        %8637 = vmatpush1.bf16.msra.mxu0 %v8579
        %8638 = vmatprep.subr.bf16.mxu0 %v8577
        %8639 = vmatpush1.bf16.msra.mxu0 %v8576
        %8640 = vmatprep.subr.bf16.mxu0 0
        %8641 = vmatpush2.bf16.msra.mxu0 0
        %8642 = vmatprep.subr.bf16.mxu0 0
        %8643 = vmatpush2.bf16.msra.mxu0 0
        %8644 = vmatprep.subr.bf16.mxu0 0
        %8645 = vmatpush2.bf16.msra.mxu0 0
        %8646 = vmatprep.subr.bf16.mxu0 0
        %8647 = vmatpush2.bf16.msra.mxu0 0
        %8648 = vmatprep.subr.bf16.mxu0 0
        %8649 = vmatpush2.bf16.msra.mxu0 0
        %8650 = vmatprep.subr.bf16.mxu0 0
        %8651 = vmatpush2.bf16.msra.mxu0 0
        %8652 = vmatprep.subr.bf16.mxu0 0
        %8653 = vmatpush2.bf16.msra.mxu0 0
        %8654 = vmatprep.subr.bf16.mxu0 0
        %8655 = vmatpush2.bf16.msra.mxu0 0
        %8656 = vmatprep.mubr.bf16.mxu0 0
        %8657 = vmatmul.mubr.bf16.gmra.mxu0 %v8443
        %v8658 = vpop.f32.mrf.mxu0
        %v8659 = vadd.f32 %v8484, %v8658
        %v8660 = vpop.f32.mrf.mxu0
        %v8661 = vadd.f32 %v8488, %v8660
        %v8662 = vpop.f32.mrf.mxu0
        %v8663 = vadd.f32 %v8484, %v8662
        %v8664 = vpop.f32.mrf.mxu0
        %v8665 = vadd.f32 %v8488, %v8664
        %8666 = vmatprep.mubr.bf16.mxu0 0
        %8667 = vmatmul.mubr.bf16.gmra.mxu0 %v8444
        %v8668 = vpop.f32.mrf.mxu0
        %v8669 = vadd.f32 %v8484, %v8668
        %v8670 = vpop.f32.mrf.mxu0
        %v8671 = vadd.f32 %v8488, %v8670
        %v8672 = vpop.f32.mrf.mxu0
        %v8673 = vadd.f32 %v8484, %v8672
        %v8674 = vpop.f32.mrf.mxu0
        %v8675 = vadd.f32 %v8488, %v8674
        %8676 = vdwg.mxu0
        %8677 = vmatprep.subr.bf16.mxu0 0
        %8678 = vmatpush1.bf16.msra.mxu0 %v8599
        %8679 = vmatprep.subr.bf16.mxu0 0
        %8680 = vmatpush1.bf16.msra.mxu0 %v8596
        %8681 = vmatprep.subr.bf16.mxu0 0
        %8682 = vmatpush1.bf16.msra.mxu0 %v8593
        %8683 = vmatprep.subr.bf16.mxu0 0
        %8684 = vmatpush1.bf16.msra.mxu0 %v8590
        %8685 = vmatprep.subr.bf16.mxu0 0
        %8686 = vmatpush1.bf16.msra.mxu0 %v8587
        %8687 = vmatprep.subr.bf16.mxu0 0
        %8688 = vmatpush1.bf16.msra.mxu0 %v8584
        %8689 = vmatprep.subr.bf16.mxu0 0
        %8690 = vmatpush1.bf16.msra.mxu0 %v8581
        %8691 = vmatprep.subr.bf16.mxu0 0
        %8692 = vmatpush1.bf16.msra.mxu0 %v8578
        %8693 = vmatprep.subr.bf16.mxu0 0
        %8694 = vmatpush2.bf16.msra.mxu0 0
        %8695 = vmatprep.subr.bf16.mxu0 0
        %8696 = vmatpush2.bf16.msra.mxu0 0
        %8697 = vmatprep.subr.bf16.mxu0 0
        %8698 = vmatpush2.bf16.msra.mxu0 0
        %8699 = vmatprep.subr.bf16.mxu0 0
        %8700 = vmatpush2.bf16.msra.mxu0 0
        %8701 = vmatprep.subr.bf16.mxu0 0
        %8702 = vmatpush2.bf16.msra.mxu0 0
        %8703 = vmatprep.subr.bf16.mxu0 0
        %8704 = vmatpush2.bf16.msra.mxu0 0
        %8705 = vmatprep.subr.bf16.mxu0 0
        %8706 = vmatpush2.bf16.msra.mxu0 0
        %8707 = vmatprep.subr.bf16.mxu0 0
        %8708 = vmatpush2.bf16.msra.mxu0 0
        %8709 = vmatprep.mubr.bf16.mxu0 0
        %8710 = vmatmul.mubr.bf16.gmra.mxu0 %v8443
        %v8711 = vpop.f32.mrf.mxu0
        %v8712 = vadd.f32 %v8492, %v8711
        %v8713 = vpop.f32.mrf.mxu0
        %v8714 = vpop.f32.mrf.mxu0
        %v8715 = vadd.f32 %v8492, %v8714
        %v8716 = vpop.f32.mrf.mxu0
        %8717 = vmatprep.mubr.bf16.mxu0 0
        %8718 = vmatmul.mubr.bf16.gmra.mxu0 %v8444
        %v8719 = vpop.f32.mrf.mxu0
        %v8720 = vadd.f32 %v8492, %v8719
        %v8721 = vpop.f32.mrf.mxu0
        %v8722 = vpop.f32.mrf.mxu0
        %v8723 = vadd.f32 %v8492, %v8722
        %v8724 = vpop.f32.mrf.mxu0
        %8725 = vdwg.mxu0
        %v8726 = vmax.f32 %v8659, 0.0
        %v8727 = vmax.f32 %v8661, 0.0
        %v8728 = vmax.f32 %v8712, 0.0
        %v8729 = vmax.f32 %v8663, 0.0
        %v8730 = vmax.f32 %v8665, 0.0
        %v8731 = vmax.f32 %v8715, 0.0
        %v8732 = vmax.f32 %v8669, 0.0
        %v8733 = vmax.f32 %v8671, 0.0
        %v8734 = vmax.f32 %v8720, 0.0
        %v8735 = vmax.f32 %v8673, 0.0
        %v8736 = vmax.f32 %v8675, 0.0
        %v8737 = vmax.f32 %v8723, 0.0
        %v8738 = vpack.c.bf16 %v8729, %v8726
        %v8739 = vpack.c.bf16 %v8730, %v8727
        %v8740 = vpack.c.bf16 %v8731, %v8728
        %v8741 = vpack.c.bf16 %v8735, %v8732
        %v8742 = vpack.c.bf16 %v8736, %v8733
        %v8743 = vpack.c.bf16 %v8737, %v8734
        %s8744 = scalar_lea.vmem %s12, 192
        %v8745 = vld [vmem:[%s8744] sm:$0xf]
        %v8746 = vld [vmem:[%s8744 + $0x4] sm:$0xf]
        %v8747 = vld [vmem:[%s8744 + $0x8] sm:$0xf]
        %v8748 = vld [vmem:[%s8744 + $0xc] sm:$0xf]
        %v8749 = vld [vmem:[%s8744 + $0x10] sm:$0xf]
        %v8750 = vld [vmem:[%s8744 + $0x14] sm:$0xf]
        %v8751 = vld [vmem:[%s8744 + $0x18] sm:$0xf]
        %v8752 = vld [vmem:[%s8744 + $0x1c] sm:$0xf]
        %v8753 = vld [vmem:[%s8744 + $0x20] sm:$0xf]
        %v8754 = vld [vmem:[%s8744 + $0x24] sm:$0xf]
        %v8755 = vld [vmem:[%s8744 + $0x28] sm:$0xf]
        %v8756 = vld [vmem:[%s8744 + $0x2c] sm:$0xf]
        %v8757 = vld [vmem:[%s8744 + $0x30] sm:$0xf]
        %v8758 = vld [vmem:[%s8744 + $0x34] sm:$0xf]
        %v8759 = vld [vmem:[%s8744 + $0x38] sm:$0xf]
        %v8760 = vld [vmem:[%s8744 + $0x3c] sm:$0xf]
        %v8761 = vld [vmem:[%s8744 + $0x40] sm:$0xf]
        %v8762 = vld [vmem:[%s8744 + $0x44] sm:$0xf]
        %v8763 = vld [vmem:[%s8744 + $0x48] sm:$0xf]
        %v8764 = vld [vmem:[%s8744 + $0x4c] sm:$0xf]
        %v8765 = vld [vmem:[%s8744 + $0x50] sm:$0xf]
        %v8766 = vld [vmem:[%s8744 + $0x54] sm:$0xf]
        %v8767 = vld [vmem:[%s8744 + $0x58] sm:$0xf]
        %v8768 = vld [vmem:[%s8744 + $0x5c] sm:$0xf]
        %v8769 = vld [vmem:[%s8744 + $0x60] sm:$0xf]
        %v8770 = vld [vmem:[%s8744 + $0x64] sm:$0xf]
        %v8771 = vld [vmem:[%s8744 + $0x68] sm:$0xf]
        %v8772 = vld [vmem:[%s8744 + $0x6c] sm:$0xf]
        %v8773 = vld [vmem:[%s8744 + $0x70] sm:$0xf]
        %v8774 = vld [vmem:[%s8744 + $0x74] sm:$0xf]
        %v8775 = vld [vmem:[%s8744 + $0x78] sm:$0xf]
        %v8776 = vld [vmem:[%s8744 + $0x7c] sm:$0xf]
        %v8777 = vld [vmem:[%s8744 + $0x80] sm:$0xf]
        %v8778 = vld [vmem:[%s8744 + $0x84] sm:$0xf]
        %v8779 = vld [vmem:[%s8744 + $0x88] sm:$0xf]
        %v8780 = vld [vmem:[%s8744 + $0x8c] sm:$0xf]
        %v8781 = vld [vmem:[%s8744 + $0x90] sm:$0xf]
        %v8782 = vld [vmem:[%s8744 + $0x94] sm:$0xf]
        %v8783 = vld [vmem:[%s8744 + $0x98] sm:$0xf]
        %v8784 = vld [vmem:[%s8744 + $0x9c] sm:$0xf]
        %v8785 = vld [vmem:[%s8744 + $0xa0] sm:$0xf]
        %v8786 = vld [vmem:[%s8744 + $0xa4] sm:$0xf]
        %v8787 = vld [vmem:[%s8744 + $0xa8] sm:$0xf]
        %v8788 = vld [vmem:[%s8744 + $0xac] sm:$0xf]
        %v8789 = vld [vmem:[%s8744 + $0xb0] sm:$0xf]
        %v8790 = vld [vmem:[%s8744 + $0xb4] sm:$0xf]
        %v8791 = vld [vmem:[%s8744 + $0xb8] sm:$0xf]
        %v8792 = vld [vmem:[%s8744 + $0xbc] sm:$0xf]
        %s8793 = scalar_lea.vmem %s13, 1
        %v8794 = vld [vmem:[%s8793] sm:$0x1]
        %v8796 = vlaneseq
        %v8797 = vshrl.u32 %v8796, 7
        %v8798 = vsub.s32 0, %v8797
        %v8799 = vrot.slane %v8794, %v8798
        %v8849 = vunpack.c.l.b16 %v8745
        %v8850 = vunpack.c.l.b16 %v8746
        %v8851 = vunpack.c.l.b16 %v8747
        %v8852 = vunpack.c.l.b16 %v8748
        %v8853 = vunpack.c.l.b16 %v8749
        %v8854 = vunpack.c.l.b16 %v8750
        %v8855 = vunpack.c.l.b16 %v8751
        %v8856 = vunpack.c.l.b16 %v8752
        %v8857 = vunpack.c.l.b16 %v8753
        %v8858 = vunpack.c.l.b16 %v8754
        %v8859 = vunpack.c.l.b16 %v8755
        %v8860 = vunpack.c.l.b16 %v8756
        %v8861 = vunpack.c.l.b16 %v8757
        %v8862 = vunpack.c.l.b16 %v8758
        %v8863 = vunpack.c.l.b16 %v8759
        %v8864 = vunpack.c.l.b16 %v8760
        %v8865 = vunpack.c.l.b16 %v8761
        %v8866 = vunpack.c.l.b16 %v8762
        %v8867 = vunpack.c.l.b16 %v8763
        %v8868 = vunpack.c.l.b16 %v8764
        %v8869 = vunpack.c.l.b16 %v8765
        %v8870 = vunpack.c.l.b16 %v8766
        %v8871 = vunpack.c.l.b16 %v8767
        %v8872 = vunpack.c.l.b16 %v8768
        %v8873 = vunpack.c.l.b16 %v8769
        %v8874 = vunpack.c.l.b16 %v8770
        %v8875 = vunpack.c.l.b16 %v8771
        %v8876 = vunpack.c.l.b16 %v8772
        %v8877 = vunpack.c.l.b16 %v8773
        %v8878 = vunpack.c.l.b16 %v8774
        %v8879 = vunpack.c.l.b16 %v8775
        %v8880 = vunpack.c.l.b16 %v8776
        %v8881 = vunpack.c.l.b16 %v8777
        %v8882 = vunpack.c.l.b16 %v8778
        %v8883 = vunpack.c.l.b16 %v8779
        %v8884 = vunpack.c.l.b16 %v8780
        %v8885 = vunpack.c.l.b16 %v8781
        %v8886 = vunpack.c.l.b16 %v8782
        %v8887 = vunpack.c.l.b16 %v8783
        %v8888 = vunpack.c.l.b16 %v8784
        %v8889 = vunpack.c.l.b16 %v8785
        %v8890 = vunpack.c.l.b16 %v8786
        %v8891 = vunpack.c.l.b16 %v8787
        %v8892 = vunpack.c.l.b16 %v8788
        %v8893 = vunpack.c.l.b16 %v8789
        %v8894 = vunpack.c.l.b16 %v8790
        %v8895 = vunpack.c.l.b16 %v8791
        %v8896 = vunpack.c.l.b16 %v8792
        %v8897 = vpack.c.b16 %v8850, %v8849
        %v8898 = vpack.c.b16 %v8852, %v8851
        %v8899 = vpack.c.b16 %v8854, %v8853
        %v8900 = vpack.c.b16 %v8856, %v8855
        %v8901 = vpack.c.b16 %v8858, %v8857
        %v8902 = vpack.c.b16 %v8860, %v8859
        %v8903 = vpack.c.b16 %v8862, %v8861
        %v8904 = vpack.c.b16 %v8864, %v8863
        %v8905 = vpack.c.b16 %v8866, %v8865
        %v8906 = vpack.c.b16 %v8868, %v8867
        %v8907 = vpack.c.b16 %v8870, %v8869
        %v8908 = vpack.c.b16 %v8872, %v8871
        %v8909 = vpack.c.b16 %v8874, %v8873
        %v8910 = vpack.c.b16 %v8876, %v8875
        %v8911 = vpack.c.b16 %v8878, %v8877
        %v8912 = vpack.c.b16 %v8880, %v8879
        %v8913 = vpack.c.b16 %v8882, %v8881
        %v8914 = vpack.c.b16 %v8884, %v8883
        %v8915 = vpack.c.b16 %v8886, %v8885
        %v8916 = vpack.c.b16 %v8888, %v8887
        %v8917 = vpack.c.b16 %v8890, %v8889
        %v8918 = vpack.c.b16 %v8892, %v8891
        %v8919 = vpack.c.b16 %v8894, %v8893
        %v8920 = vpack.c.b16 %v8896, %v8895
        %8945 = vmatprep.subr.bf16.mxu0 0
        %8946 = vmatpush1.bf16.msra.mxu0 %v8904
        %8947 = vmatprep.subr.bf16.mxu0 0
        %8948 = vmatpush1.bf16.msra.mxu0 %v8903
        %8949 = vmatprep.subr.bf16.mxu0 0
        %8950 = vmatpush1.bf16.msra.mxu0 %v8902
        %8951 = vmatprep.subr.bf16.mxu0 0
        %8952 = vmatpush1.bf16.msra.mxu0 %v8901
        %8953 = vmatprep.subr.bf16.mxu0 0
        %8954 = vmatpush1.bf16.msra.mxu0 %v8900
        %8955 = vmatprep.subr.bf16.mxu0 0
        %8956 = vmatpush1.bf16.msra.mxu0 %v8899
        %8957 = vmatprep.subr.bf16.mxu0 0
        %8958 = vmatpush1.bf16.msra.mxu0 %v8898
        %8959 = vmatprep.subr.bf16.mxu0 0
        %8960 = vmatpush1.bf16.msra.mxu0 %v8897
        %8961 = vmatprep.subr.bf16.mxu0 0
        %8962 = vmatpush2.bf16.msra.mxu0 %v8912
        %8963 = vmatprep.subr.bf16.mxu0 0
        %8964 = vmatpush2.bf16.msra.mxu0 %v8911
        %8965 = vmatprep.subr.bf16.mxu0 0
        %8966 = vmatpush2.bf16.msra.mxu0 %v8910
        %8967 = vmatprep.subr.bf16.mxu0 0
        %8968 = vmatpush2.bf16.msra.mxu0 %v8909
        %8969 = vmatprep.subr.bf16.mxu0 0
        %8970 = vmatpush2.bf16.msra.mxu0 %v8908
        %8971 = vmatprep.subr.bf16.mxu0 0
        %8972 = vmatpush2.bf16.msra.mxu0 %v8907
        %8973 = vmatprep.subr.bf16.mxu0 0
        %8974 = vmatpush2.bf16.msra.mxu0 %v8906
        %8975 = vmatprep.subr.bf16.mxu0 0
        %8976 = vmatpush2.bf16.msra.mxu0 %v8905
        %8977 = vmatprep.mubr.bf16.mxu0 %v8739
        %8978 = vmatmul.mubr.bf16.gmra.mxu0 %v8738
        %v8979 = vpop.f32.mrf.mxu0
        %v8980 = vadd.f32 %v8799, %v8979
        %v8981 = vpop.f32.mrf.mxu0
        %v8982 = vpop.f32.mrf.mxu0
        %v8983 = vadd.f32 %v8799, %v8982
        %v8984 = vpop.f32.mrf.mxu0
        %8985 = vmatprep.mubr.bf16.mxu0 %v8742
        %8986 = vmatmul.mubr.bf16.gmra.mxu0 %v8741
        %v8987 = vpop.f32.mrf.mxu0
        %v8988 = vadd.f32 %v8799, %v8987
        %v8989 = vpop.f32.mrf.mxu0
        %v8990 = vpop.f32.mrf.mxu0
        %v8991 = vadd.f32 %v8799, %v8990
        %v8992 = vpop.f32.mrf.mxu0
        %8993 = vdwg.mxu0
        %8994 = vmatprep.subr.bf16.mxu0 0
        %8995 = vmatpush1.bf16.msra.mxu0 %v8920
        %8996 = vmatprep.subr.bf16.mxu0 0
        %8997 = vmatpush1.bf16.msra.mxu0 %v8919
        %8998 = vmatprep.subr.bf16.mxu0 0
        %8999 = vmatpush1.bf16.msra.mxu0 %v8918
        %9000 = vmatprep.subr.bf16.mxu0 0
        %9001 = vmatpush1.bf16.msra.mxu0 %v8917
        %9002 = vmatprep.subr.bf16.mxu0 0
        %9003 = vmatpush1.bf16.msra.mxu0 %v8916
        %9004 = vmatprep.subr.bf16.mxu0 0
        %9005 = vmatpush1.bf16.msra.mxu0 %v8915
        %9006 = vmatprep.subr.bf16.mxu0 0
        %9007 = vmatpush1.bf16.msra.mxu0 %v8914
        %9008 = vmatprep.subr.bf16.mxu0 0
        %9009 = vmatpush1.bf16.msra.mxu0 %v8913
        %9010 = vmatprep.subr.bf16.mxu0 0
        %9011 = vmatpush2.bf16.msra.mxu0 0
        %9012 = vmatprep.subr.bf16.mxu0 0
        %9013 = vmatpush2.bf16.msra.mxu0 0
        %9014 = vmatprep.subr.bf16.mxu0 0
        %9015 = vmatpush2.bf16.msra.mxu0 0
        %9016 = vmatprep.subr.bf16.mxu0 0
        %9017 = vmatpush2.bf16.msra.mxu0 0
        %9018 = vmatprep.subr.bf16.mxu0 0
        %9019 = vmatpush2.bf16.msra.mxu0 0
        %9020 = vmatprep.subr.bf16.mxu0 0
        %9021 = vmatpush2.bf16.msra.mxu0 0
        %9022 = vmatprep.subr.bf16.mxu0 0
        %9023 = vmatpush2.bf16.msra.mxu0 0
        %9024 = vmatprep.subr.bf16.mxu0 0
        %9025 = vmatpush2.bf16.msra.mxu0 0
        %9026 = vmatprep.mubr.bf16.mxu0 0
        %9027 = vmatmul.mubr.bf16.gmra.mxu0 %v8740
        %v9028 = vpop.f32.mrf.mxu0
        %v9029 = vadd.f32 %v8980, %v9028
        %v9030 = vpop.f32.mrf.mxu0
        %v9031 = vpop.f32.mrf.mxu0
        %v9032 = vadd.f32 %v8983, %v9031
        %v9033 = vpop.f32.mrf.mxu0
        %9034 = vmatprep.mubr.bf16.mxu0 0
        %9035 = vmatmul.mubr.bf16.gmra.mxu0 %v8743
        %v9036 = vpop.f32.mrf.mxu0
        %v9037 = vadd.f32 %v8988, %v9036
        %v9038 = vpop.f32.mrf.mxu0
        %v9039 = vpop.f32.mrf.mxu0
        %v9040 = vadd.f32 %v8991, %v9039
        %v9041 = vpop.f32.mrf.mxu0
        %9042 = vdwg.mxu0
        %v9043 = vadd.f32 %v8363, %v9029
        %v9044 = vadd.f32 %v8364, %v9032
        %v9045 = vadd.f32 %v8365, %v9037
        %v9046 = vadd.f32 %v8366, %v9040
        %v9047 = vpack.c.bf16 %v9044, %v9043
        %v9048 = vpack.c.bf16 %v9046, %v9045
        %v9049 = vld [vmem:[%s14] sm:$0xf]
        %v9050 = vld [vmem:[%s14 + $0x4] sm:$0xf]
        %v9051 = vld [vmem:[%s14 + $0x8] sm:$0xf]
        %v9052 = vld [vmem:[%s14 + $0xc] sm:$0xf]
        %v9053 = vld [vmem:[%s14 + $0x10] sm:$0xf]
        %v9054 = vld [vmem:[%s14 + $0x14] sm:$0xf]
        %v9055 = vld [vmem:[%s14 + $0x18] sm:$0xf]
        %v9056 = vld [vmem:[%s14 + $0x1c] sm:$0xf]
        %v9057 = vld [vmem:[%s14 + $0x20] sm:$0xf]
        %v9058 = vld [vmem:[%s14 + $0x24] sm:$0xf]
        %v9059 = vld [vmem:[%s14 + $0x28] sm:$0xf]
        %v9060 = vld [vmem:[%s14 + $0x2c] sm:$0xf]
        %v9061 = vld [vmem:[%s14 + $0x30] sm:$0xf]
        %v9062 = vld [vmem:[%s14 + $0x34] sm:$0xf]
        %v9063 = vld [vmem:[%s14 + $0x38] sm:$0xf]
        %v9064 = vld [vmem:[%s14 + $0x3c] sm:$0xf]
        %v9065 = vld [vmem:[%s15] sm:$0x1]
        %v9067 = vlaneseq
        %v9068 = vshrl.u32 %v9067, 7
        %v9069 = vsub.s32 0, %v9068
        %v9070 = vrot.slane %v9065, %v9069
        %v9088 = vunpack.c.l.b16 %v9049
        %v9089 = vunpack.c.l.b16 %v9050
        %v9090 = vunpack.c.l.b16 %v9051
        %v9091 = vunpack.c.l.b16 %v9052
        %v9092 = vunpack.c.l.b16 %v9053
        %v9093 = vunpack.c.l.b16 %v9054
        %v9094 = vunpack.c.l.b16 %v9055
        %v9095 = vunpack.c.l.b16 %v9056
        %v9096 = vunpack.c.l.b16 %v9057
        %v9097 = vunpack.c.l.b16 %v9058
        %v9098 = vunpack.c.l.b16 %v9059
        %v9099 = vunpack.c.l.b16 %v9060
        %v9100 = vunpack.c.l.b16 %v9061
        %v9101 = vunpack.c.l.b16 %v9062
        %v9102 = vunpack.c.l.b16 %v9063
        %v9103 = vunpack.c.l.b16 %v9064
        %v9104 = vpack.c.b16 %v9089, %v9088
        %v9105 = vpack.c.b16 %v9091, %v9090
        %v9106 = vpack.c.b16 %v9093, %v9092
        %v9107 = vpack.c.b16 %v9095, %v9094
        %v9108 = vpack.c.b16 %v9097, %v9096
        %v9109 = vpack.c.b16 %v9099, %v9098
        %v9110 = vpack.c.b16 %v9101, %v9100
        %v9111 = vpack.c.b16 %v9103, %v9102
        %9120 = vmatprep.subr.bf16.mxu0 0
        %9121 = vmatpush1.bf16.msra.mxu0 %v9111
        %9122 = vmatprep.subr.bf16.mxu0 0
        %9123 = vmatpush1.bf16.msra.mxu0 %v9110
        %9124 = vmatprep.subr.bf16.mxu0 0
        %9125 = vmatpush1.bf16.msra.mxu0 %v9109
        %9126 = vmatprep.subr.bf16.mxu0 0
        %9127 = vmatpush1.bf16.msra.mxu0 %v9108
        %9128 = vmatprep.subr.bf16.mxu0 0
        %9129 = vmatpush1.bf16.msra.mxu0 %v9107
        %9130 = vmatprep.subr.bf16.mxu0 0
        %9131 = vmatpush1.bf16.msra.mxu0 %v9106
        %9132 = vmatprep.subr.bf16.mxu0 0
        %9133 = vmatpush1.bf16.msra.mxu0 %v9105
        %9134 = vmatprep.subr.bf16.mxu0 0
        %9135 = vmatpush1.bf16.msra.mxu0 %v9104
        %9136 = vmatprep.subr.bf16.mxu0 0
        %9137 = vmatpush2.bf16.msra.mxu0 0
        %9138 = vmatprep.subr.bf16.mxu0 0
        %9139 = vmatpush2.bf16.msra.mxu0 0
        %9140 = vmatprep.subr.bf16.mxu0 0
        %9141 = vmatpush2.bf16.msra.mxu0 0
        %9142 = vmatprep.subr.bf16.mxu0 0
        %9143 = vmatpush2.bf16.msra.mxu0 0
        %9144 = vmatprep.subr.bf16.mxu0 0
        %9145 = vmatpush2.bf16.msra.mxu0 0
        %9146 = vmatprep.subr.bf16.mxu0 0
        %9147 = vmatpush2.bf16.msra.mxu0 0
        %9148 = vmatprep.subr.bf16.mxu0 0
        %9149 = vmatpush2.bf16.msra.mxu0 0
        %9150 = vmatprep.subr.bf16.mxu0 0
        %9151 = vmatpush2.bf16.msra.mxu0 0
        %9152 = vmatprep.mubr.bf16.mxu0 0
        %9153 = vmatmul.mubr.bf16.gmra.mxu0 %v9047
        %v9154 = vpop.f32.mrf.mxu0
        %v9155 = vadd.f32 %v9070, %v9154
        %v9156 = vpop.f32.mrf.mxu0
        %v9157 = vpop.f32.mrf.mxu0
        %v9158 = vadd.f32 %v9070, %v9157
        %v9159 = vpop.f32.mrf.mxu0
        %9160 = vmatprep.mubr.bf16.mxu0 0
        %9161 = vmatmul.mubr.bf16.gmra.mxu0 %v9048
        %v9162 = vpop.f32.mrf.mxu0
        %v9163 = vadd.f32 %v9070, %v9162
        %v9164 = vpop.f32.mrf.mxu0
        %v9165 = vpop.f32.mrf.mxu0
        %v9166 = vadd.f32 %v9070, %v9165
        %v9167 = vpop.f32.mrf.mxu0
        %9168 = vdwg.mxu0
        %9169 = vst [vmem:[%s515] sm:$0xff] %v9155
        %9170 = vst [vmem:[%s515 + $0x8] sm:$0xff] %v9158
        %9171 = vst [vmem:[%s515 + $0x10] sm:$0xff] %v9163
        %9172 = vst [vmem:[%s515 + $0x18] sm:$0xff] %v9166
        %s9173 = sand.u32 %s379, 1
        %s9174 = scalar_lea.sflag [#allocation3], %s9173
        %s9175 = sand.u32 %s379, 1
        %s9176 = smul.addr %s9175, 32
        %s9177 = scalar_lea.vmem [#allocation2], %s9176
        // Predicated region
        $region85: #{tpu_custom_call.1} parent=83 // pred_check
          %p9178 = pneg %p389
        $region86: #{tpu_custom_call.1} parent=83 // pred_check_branch
          %9180 = sbr.rel (%p9178) target = $region88
        $region87: #{tpu_custom_call.1} parent=83 // pred_region
          %s9181 = smul.u32 4, %s30
          %s9183 = ssub.s32 512, 512
          %9184 = vsyncadd %s9174, %s9183
          %s9185 = smul.addr %s9181, 128
          %s9186 = scalar_lea.hbm %s16, %s9185
          %s9187 = sshll.u32 %s9177, 4
          %s9188 = int_to_ptr.vmem [resolvable:$true] %s9187
          %9193 = dma.vmem_to_hbm [thread:$0]  %s9188, 512, %s9186, %s9174, 128, 128, 8
        $region88: #{tpu_custom_call.1} parent=83 // pred_fallthru
          _
      $region84: #{tpu_custom_call.1} parent=5 // pred_fallthru
        _
      %p9194 = scmp.le.s32.totalorder 2, %s25
      // Predicated region
      $region89: #{tpu_custom_call.1} parent=5 // pred_check
        %p9195 = pneg %p9194
      $region90: #{tpu_custom_call.1} parent=5 // pred_check_branch
        %9197 = sbr.rel (%p9195) target = $region92
      $region91: #{tpu_custom_call.1} parent=5 // pred_region
        %s9198 = ssub.s32 %s25, 2
        // Predicated region
        $region93: #{tpu_custom_call.1} parent=91 // pred_check
          %p9199 = pneg %p395
        $region94: #{tpu_custom_call.1} parent=91 // pred_check_branch
          %9201 = sbr.rel (%p9199) target = $region96
        $region95: #{tpu_custom_call.1} parent=91 // pred_region
          %s9202 = sand.u32 %s380, 1
          %s9203 = scalar_lea.sflag [#allocation3], %s9202
          %s9204 = sand.u32 %s380, 1
          %s9205 = smul.addr %s9204, 32
          %s9206 = scalar_lea.vmem [#allocation2], %s9205
          %9207 = dma.done %s9203, 512
        $region96: #{tpu_custom_call.1} parent=91 // pred_fallthru
          _
      $region92: #{tpu_custom_call.1} parent=5 // pred_fallthru
        _
    $region6: #{tpu_custom_call.1} parent=1 // loop_footer
      %s29 = sadd.s32 1, %s25
    $region7: #{tpu_custom_call.1} parent=1 // loop_footer_branch
      %24 = sbr.rel target = $region3
    $region8: #{tpu_custom_call.1} parent=1 // loop_exit
      _
    %9208 = vsyncpa [#allocation3], 1
    %s9209 = scalar_lea.sflag [#allocation3], 1
    %9210 = vsyncpa %s9209, 1

</llo_original>
